<compile_context>
chip_gen: v7x
topology: tpu7x:2x2x1
jax: 0.10.0
libtpu: 0.0.40
codegen_flags: <defaults>
</compile_context>

<pallas_src>
import functools

import jax
import jax.numpy as jnp
from jax.experimental import pallas as pl
from jax.experimental.pallas import tpu as pltpu


# -----------------------------------------------------------------------------
# Model definition (matches the PyTorch module)
# -----------------------------------------------------------------------------
_LAYER_DIMS = [
    (784, 1000),   # fc1
    (1000, 500),   # fc2
    (500, 250),    # fc3
    (250, 30),     # fc4
    (30, 250),     # fc5
    (250, 500),    # fc6
    (500, 1000),   # fc7
    (1000, 784),   # fc8
]
# ReLU after fc1..fc3 and fc5..fc7; not after fc4 (bottleneck) or fc8 (output).
_RELU_FLAGS = (True, True, True, False, True, True, True, False)


def _round_up(x: int, m: int) -> int:
    return ((x + m - 1) // m) * m


def _pad_dim(d: int) -> int:
    # 256-align larger dims (full v6e/v7x MXU tiles); 128-align small ones.
    return _round_up(d, 256) if d >= 256 else _round_up(d, 128)


_PADDED_DIMS = [_pad_dim(d) for d in [784] + [o for (_, o) in _LAYER_DIMS]]
# -> [1024, 1024, 512, 256, 128, 256, 512, 1024, 1024]


# -----------------------------------------------------------------------------
# Fused kernel: all 8 layers, activations resident in VMEM
# -----------------------------------------------------------------------------
def _fused_kernel(x_ref, *refs, relu_flags):
    """refs = (w1, b1, ..., w8, b8, o_ref). One batch tile per grid step."""
    o_ref = refs[-1]
    wb = refs[:-1]

    h = x_ref[...]                                  # (TM, D0) f32
    for li, relu in enumerate(relu_flags):
        w = wb[2 * li][...]                         # (K_pad, N_pad) bf16
        b = wb[2 * li + 1][...]                     # (1, N_pad) f32
        # bf16 x bf16 on the MXU, f32 accumulation.
        y = jnp.dot(h.astype(w.dtype), w, preferred_element_type=jnp.float32)
        y = y + b                                   # f32 epilogue
        if relu:
            y = jnp.maximum(y, 0.0)
        h = y
    o_ref[...] = h.astype(o_ref.dtype)


def autoencoder_forward(params, inputs, *, weights_dtype=jnp.bfloat16):
    """inputs: [B, C, H, W] with C*H*W == 784. Returns [B, 784] f32."""
    B = inputs.shape[0]
    x = inputs.reshape(B, -1).astype(jnp.float32)
    assert x.shape[1] == 784

    # --- pad (+ quantize) weights / biases to lane-dense shapes -------------
    flat_args = []
    for li, ((k, n), (w_t, b)) in enumerate(zip(_LAYER_DIMS, params)):
        kp, np_ = _PADDED_DIMS[li], _PADDED_DIMS[li + 1]
        w_pad = jnp.zeros((kp, np_), weights_dtype).at[:k, :n].set(
            w_t.astype(weights_dtype))
        b_pad = jnp.zeros((1, np_), jnp.float32).at[0, :n].set(
            b.astype(jnp.float32))
        flat_args += [w_pad, b_pad]

    # --- batch padding / tiling ---------------------------------------------
    TM_MAX = 256
    if B <= TM_MAX:
        m_pad = max(16, _round_up(B, 16))   # sublane/bf16-packing alignment
        tm = m_pad
    else:
        m_pad = _round_up(B, TM_MAX)
        tm = TM_MAX
    grid_m = m_pad // tm

    d0, dl = _PADDED_DIMS[0], _PADDED_DIMS[-1]
    x_pad = jnp.zeros((m_pad, d0), jnp.float32).at[:B, :784].set(x)

    kernel = functools.partial(_fused_kernel, relu_flags=_RELU_FLAGS)

    # Weights/biases: whole arrays resident in VMEM (single-buffered, shared
    # across all batch tiles). Activations: blocked over the batch axis.
    resident = pl.BlockSpec(memory_space=pltpu.MemorySpace.VMEM)
    in_specs = [pl.BlockSpec((tm, d0), lambda i: (i, 0))]
    in_specs += [resident for _ in flat_args]

    out = pl.pallas_call(
        kernel,
        out_shape=jax.ShapeDtypeStruct((m_pad, dl), jnp.float32),
        grid=(grid_m,),
        in_specs=in_specs,
        out_specs=pl.BlockSpec((tm, dl), lambda i: (i, 0)),
        compiler_params=pltpu.CompilerParams(
            dimension_semantics=("parallel",),   # batch tiles -> 2 TCs on v7x
            vmem_limit_bytes=32 << 20,           # right-sized (fits v7x 64MiB)
        ),
    )(x_pad, *flat_args)

    return out[:B, :784]


# -----------------------------------------------------------------------------
# Parameters (deterministic, mimics nn.Linear U(-1/sqrt(fan_in), +1/sqrt(fan_in)))
# Weights stored as [in, out] (transpose of PyTorch's [out, in]).
# -----------------------------------------------------------------------------
def init_params(key):
    params = []
    for (fan_in, fan_out) in _LAYER_DIMS:
        key, kw, kb = jax.random.split(key, 3)
        bound = 1.0 / jnp.sqrt(jnp.float32(fan_in))
        w_t = jax.random.uniform(kw, (fan_in, fan_out), jnp.float32,
                                 minval=-bound, maxval=bound)
        b = jax.random.uniform(kb, (fan_out,), jnp.float32,
                               minval=-bound, maxval=bound)
        params.append((w_t, b))
    return params


# -----------------------------------------------------------------------------
# Pure-JAX references
# -----------------------------------------------------------------------------
def reference_f32(params, inputs):
    """Exact f32 semantics of the original PyTorch module."""
    x = inputs.reshape(inputs.shape[0], -1).astype(jnp.float32)
    for (w_t, b), relu in zip(params, _RELU_FLAGS):
        x = x @ w_t + b
        if relu:
            x = jnp.maximum(x, 0.0)
    return x


def reference_matched(params, inputs, weights_dtype=jnp.bfloat16):
    """Same dtype strategy as the kernel (bf16 matmul operands, f32 accum)."""
    x = inputs.reshape(inputs.shape[0], -1).astype(jnp.float32)
    for (w_t, b), relu in zip(params, _RELU_FLAGS):
        y = jnp.dot(x.astype(weights_dtype), w_t.astype(weights_dtype),
                    preferred_element_type=jnp.float32) + b
        if relu:
            y = jnp.maximum(y, 0.0)
        x = y
    return x


if __name__ == "__main__":
    key = jax.random.PRNGKey(0)
    key, kp, kx = jax.random.split(key, 3)

    params = init_params(kp)
    # NCHW input, flattened dim 1*28*28 == 784, same as the PyTorch module.
    x = jax.random.normal(kx, (2, 1, 28, 28), dtype=jnp.float32)

    out = jax.block_until_ready(autoencoder_forward(params, x))
    assert out.shape == (2, 784), out.shape

    # Tight check against a reference using the identical bf16 weight path.
    ref_m = reference_matched(params, x)
    assert jnp.allclose(out, ref_m, atol=2e-3, rtol=2e-3), \
        float(jnp.max(jnp.abs(out - ref_m)))

    # Loose sanity check against the exact-f32 module semantics (bf16 weight
    # streaming introduces only a small quantization error).
    ref_f = reference_f32(params, x)
    assert float(jnp.max(jnp.abs(out - ref_f))) < 0.1

    print("KERNEL_OK")
</pallas_src>

<mosaic_0001>
module attributes {stable_mosaic.version = 11 : i64} {
  func.func @_fused_kernel(%arg0: i32, %arg1: memref<16x1024xf32, #tpu.memory_space<vmem>>, %arg2: memref<1024x1024xbf16, #tpu.memory_space<vmem>>, %arg3: memref<1x1024xf32, #tpu.memory_space<vmem>>, %arg4: memref<1024x512xbf16, #tpu.memory_space<vmem>>, %arg5: memref<1x512xf32, #tpu.memory_space<vmem>>, %arg6: memref<512x256xbf16, #tpu.memory_space<vmem>>, %arg7: memref<1x256xf32, #tpu.memory_space<vmem>>, %arg8: memref<256x128xbf16, #tpu.memory_space<vmem>>, %arg9: memref<1x128xf32, #tpu.memory_space<vmem>>, %arg10: memref<128x256xbf16, #tpu.memory_space<vmem>>, %arg11: memref<1x256xf32, #tpu.memory_space<vmem>>, %arg12: memref<256x512xbf16, #tpu.memory_space<vmem>>, %arg13: memref<1x512xf32, #tpu.memory_space<vmem>>, %arg14: memref<512x1024xbf16, #tpu.memory_space<vmem>>, %arg15: memref<1x1024xf32, #tpu.memory_space<vmem>>, %arg16: memref<1024x1024xbf16, #tpu.memory_space<vmem>>, %arg17: memref<1x1024xf32, #tpu.memory_space<vmem>>, %arg18: memref<16x1024xf32, #tpu.memory_space<vmem>>) attributes {dimension_semantics = [#tpu.dimension_semantics<parallel>], iteration_bounds = array<i64: 1>, scalar_prefetch = 0 : i64, scratch_operands = 0 : i64, tpu.core_type = #tpu.core_type<tc>, window_params = [{transform_indices = @transform_0, window_bounds = array<i64: 16, 1024>}, {pipeline_mode = #tpu.pipeline_mode<synchronous>, transform_indices = @transform_1, window_bounds = array<i64: 1024, 1024>}, {pipeline_mode = #tpu.pipeline_mode<synchronous>, transform_indices = @transform_2, window_bounds = array<i64: 1, 1024>}, {pipeline_mode = #tpu.pipeline_mode<synchronous>, transform_indices = @transform_3, window_bounds = array<i64: 1024, 512>}, {pipeline_mode = #tpu.pipeline_mode<synchronous>, transform_indices = @transform_4, window_bounds = array<i64: 1, 512>}, {pipeline_mode = #tpu.pipeline_mode<synchronous>, transform_indices = @transform_5, window_bounds = array<i64: 512, 256>}, {pipeline_mode = #tpu.pipeline_mode<synchronous>, transform_indices = @transform_6, window_bounds = array<i64: 1, 256>}, {pipeline_mode = #tpu.pipeline_mode<synchronous>, transform_indices = @transform_7, window_bounds = array<i64: 256, 128>}, {pipeline_mode = #tpu.pipeline_mode<synchronous>, transform_indices = @transform_8, window_bounds = array<i64: 1, 128>}, {pipeline_mode = #tpu.pipeline_mode<synchronous>, transform_indices = @transform_9, window_bounds = array<i64: 128, 256>}, {pipeline_mode = #tpu.pipeline_mode<synchronous>, transform_indices = @transform_10, window_bounds = array<i64: 1, 256>}, {pipeline_mode = #tpu.pipeline_mode<synchronous>, transform_indices = @transform_11, window_bounds = array<i64: 256, 512>}, {pipeline_mode = #tpu.pipeline_mode<synchronous>, transform_indices = @transform_12, window_bounds = array<i64: 1, 512>}, {pipeline_mode = #tpu.pipeline_mode<synchronous>, transform_indices = @transform_13, window_bounds = array<i64: 512, 1024>}, {pipeline_mode = #tpu.pipeline_mode<synchronous>, transform_indices = @transform_14, window_bounds = array<i64: 1, 1024>}, {pipeline_mode = #tpu.pipeline_mode<synchronous>, transform_indices = @transform_15, window_bounds = array<i64: 1024, 1024>}, {pipeline_mode = #tpu.pipeline_mode<synchronous>, transform_indices = @transform_16, window_bounds = array<i64: 1, 1024>}, {transform_indices = @transform_17, window_bounds = array<i64: 16, 1024>}]} {
    %c0 = arith.constant 0 : index
    %c0_0 = arith.constant 0 : index
    %0 = vector.load %arg1[%c0, %c0_0] : memref<16x1024xf32, #tpu.memory_space<vmem>>, vector<16x1024xf32>
    %c0_1 = arith.constant 0 : index
    %c0_2 = arith.constant 0 : index
    %1 = vector.load %arg2[%c0_1, %c0_2] : memref<1024x1024xbf16, #tpu.memory_space<vmem>>, vector<1024x1024xbf16>
    %c0_3 = arith.constant 0 : index
    %c0_4 = arith.constant 0 : index
    %2 = vector.load %arg3[%c0_3, %c0_4] : memref<1x1024xf32, #tpu.memory_space<vmem>>, vector<1x1024xf32>
    %3 = arith.truncf %0 : vector<16x1024xf32> to vector<16x1024xbf16>
    %cst = arith.constant dense<0.000000e+00> : vector<16x1024xf32>
    %4 = tpu.matmul %3, %1, %cst {dimension_numbers = #tpu.dot_dimension_numbers<[1], [0], [0], [1], [0, 0, 1, 1], [], []>} : vector<16x1024xbf16>, vector<1024x1024xbf16>, vector<16x1024xf32> -> vector<16x1024xf32>
    %5 = vector.broadcast %2 : vector<1x1024xf32> to vector<16x1024xf32>
    %6 = arith.addf %4, %5 : vector<16x1024xf32>
    %cst_5 = arith.constant 0.000000e+00 : f32
    %7 = vector.broadcast %cst_5 : f32 to vector<16x1024xf32>
    %8 = arith.maximumf %6, %7 : vector<16x1024xf32>
    %c0_6 = arith.constant 0 : index
    %c0_7 = arith.constant 0 : index
    %9 = vector.load %arg4[%c0_6, %c0_7] : memref<1024x512xbf16, #tpu.memory_space<vmem>>, vector<1024x512xbf16>
    %c0_8 = arith.constant 0 : index
    %c0_9 = arith.constant 0 : index
    %10 = vector.load %arg5[%c0_8, %c0_9] : memref<1x512xf32, #tpu.memory_space<vmem>>, vector<1x512xf32>
    %11 = arith.truncf %8 : vector<16x1024xf32> to vector<16x1024xbf16>
    %cst_10 = arith.constant dense<0.000000e+00> : vector<16x512xf32>
    %12 = tpu.matmul %11, %9, %cst_10 {dimension_numbers = #tpu.dot_dimension_numbers<[1], [0], [0], [1], [0, 0, 1, 1], [], []>} : vector<16x1024xbf16>, vector<1024x512xbf16>, vector<16x512xf32> -> vector<16x512xf32>
    %13 = vector.broadcast %10 : vector<1x512xf32> to vector<16x512xf32>
    %14 = arith.addf %12, %13 : vector<16x512xf32>
    %cst_11 = arith.constant 0.000000e+00 : f32
    %15 = vector.broadcast %cst_11 : f32 to vector<16x512xf32>
    %16 = arith.maximumf %14, %15 : vector<16x512xf32>
    %c0_12 = arith.constant 0 : index
    %c0_13 = arith.constant 0 : index
    %17 = vector.load %arg6[%c0_12, %c0_13] : memref<512x256xbf16, #tpu.memory_space<vmem>>, vector<512x256xbf16>
    %c0_14 = arith.constant 0 : index
    %c0_15 = arith.constant 0 : index
    %18 = vector.load %arg7[%c0_14, %c0_15] : memref<1x256xf32, #tpu.memory_space<vmem>>, vector<1x256xf32>
    %19 = arith.truncf %16 : vector<16x512xf32> to vector<16x512xbf16>
    %cst_16 = arith.constant dense<0.000000e+00> : vector<16x256xf32>
    %20 = tpu.matmul %19, %17, %cst_16 {dimension_numbers = #tpu.dot_dimension_numbers<[1], [0], [0], [1], [0, 0, 1, 1], [], []>} : vector<16x512xbf16>, vector<512x256xbf16>, vector<16x256xf32> -> vector<16x256xf32>
    %21 = vector.broadcast %18 : vector<1x256xf32> to vector<16x256xf32>
    %22 = arith.addf %20, %21 : vector<16x256xf32>
    %cst_17 = arith.constant 0.000000e+00 : f32
    %23 = vector.broadcast %cst_17 : f32 to vector<16x256xf32>
    %24 = arith.maximumf %22, %23 : vector<16x256xf32>
    %c0_18 = arith.constant 0 : index
    %c0_19 = arith.constant 0 : index
    %25 = vector.load %arg8[%c0_18, %c0_19] : memref<256x128xbf16, #tpu.memory_space<vmem>>, vector<256x128xbf16>
    %c0_20 = arith.constant 0 : index
    %c0_21 = arith.constant 0 : index
    %26 = vector.load %arg9[%c0_20, %c0_21] : memref<1x128xf32, #tpu.memory_space<vmem>>, vector<1x128xf32>
    %27 = arith.truncf %24 : vector<16x256xf32> to vector<16x256xbf16>
    %cst_22 = arith.constant dense<0.000000e+00> : vector<16x128xf32>
    %28 = tpu.matmul %27, %25, %cst_22 {dimension_numbers = #tpu.dot_dimension_numbers<[1], [0], [0], [1], [0, 0, 1, 1], [], []>} : vector<16x256xbf16>, vector<256x128xbf16>, vector<16x128xf32> -> vector<16x128xf32>
    %29 = vector.broadcast %26 : vector<1x128xf32> to vector<16x128xf32>
    %30 = arith.addf %28, %29 : vector<16x128xf32>
    %c0_23 = arith.constant 0 : index
    %c0_24 = arith.constant 0 : index
    %31 = vector.load %arg10[%c0_23, %c0_24] : memref<128x256xbf16, #tpu.memory_space<vmem>>, vector<128x256xbf16>
    %c0_25 = arith.constant 0 : index
    %c0_26 = arith.constant 0 : index
    %32 = vector.load %arg11[%c0_25, %c0_26] : memref<1x256xf32, #tpu.memory_space<vmem>>, vector<1x256xf32>
    %33 = arith.truncf %30 : vector<16x128xf32> to vector<16x128xbf16>
    %cst_27 = arith.constant dense<0.000000e+00> : vector<16x256xf32>
    %34 = tpu.matmul %33, %31, %cst_27 {dimension_numbers = #tpu.dot_dimension_numbers<[1], [0], [0], [1], [0, 0, 1, 1], [], []>} : vector<16x128xbf16>, vector<128x256xbf16>, vector<16x256xf32> -> vector<16x256xf32>
    %35 = vector.broadcast %32 : vector<1x256xf32> to vector<16x256xf32>
    %36 = arith.addf %34, %35 : vector<16x256xf32>
    %cst_28 = arith.constant 0.000000e+00 : f32
    %37 = vector.broadcast %cst_28 : f32 to vector<16x256xf32>
    %38 = arith.maximumf %36, %37 : vector<16x256xf32>
    %c0_29 = arith.constant 0 : index
    %c0_30 = arith.constant 0 : index
    %39 = vector.load %arg12[%c0_29, %c0_30] : memref<256x512xbf16, #tpu.memory_space<vmem>>, vector<256x512xbf16>
    %c0_31 = arith.constant 0 : index
    %c0_32 = arith.constant 0 : index
    %40 = vector.load %arg13[%c0_31, %c0_32] : memref<1x512xf32, #tpu.memory_space<vmem>>, vector<1x512xf32>
    %41 = arith.truncf %38 : vector<16x256xf32> to vector<16x256xbf16>
    %cst_33 = arith.constant dense<0.000000e+00> : vector<16x512xf32>
    %42 = tpu.matmul %41, %39, %cst_33 {dimension_numbers = #tpu.dot_dimension_numbers<[1], [0], [0], [1], [0, 0, 1, 1], [], []>} : vector<16x256xbf16>, vector<256x512xbf16>, vector<16x512xf32> -> vector<16x512xf32>
    %43 = vector.broadcast %40 : vector<1x512xf32> to vector<16x512xf32>
    %44 = arith.addf %42, %43 : vector<16x512xf32>
    %cst_34 = arith.constant 0.000000e+00 : f32
    %45 = vector.broadcast %cst_34 : f32 to vector<16x512xf32>
    %46 = arith.maximumf %44, %45 : vector<16x512xf32>
    %c0_35 = arith.constant 0 : index
    %c0_36 = arith.constant 0 : index
    %47 = vector.load %arg14[%c0_35, %c0_36] : memref<512x1024xbf16, #tpu.memory_space<vmem>>, vector<512x1024xbf16>
    %c0_37 = arith.constant 0 : index
    %c0_38 = arith.constant 0 : index
    %48 = vector.load %arg15[%c0_37, %c0_38] : memref<1x1024xf32, #tpu.memory_space<vmem>>, vector<1x1024xf32>
    %49 = arith.truncf %46 : vector<16x512xf32> to vector<16x512xbf16>
    %cst_39 = arith.constant dense<0.000000e+00> : vector<16x1024xf32>
    %50 = tpu.matmul %49, %47, %cst_39 {dimension_numbers = #tpu.dot_dimension_numbers<[1], [0], [0], [1], [0, 0, 1, 1], [], []>} : vector<16x512xbf16>, vector<512x1024xbf16>, vector<16x1024xf32> -> vector<16x1024xf32>
    %51 = vector.broadcast %48 : vector<1x1024xf32> to vector<16x1024xf32>
    %52 = arith.addf %50, %51 : vector<16x1024xf32>
    %cst_40 = arith.constant 0.000000e+00 : f32
    %53 = vector.broadcast %cst_40 : f32 to vector<16x1024xf32>
    %54 = arith.maximumf %52, %53 : vector<16x1024xf32>
    %c0_41 = arith.constant 0 : index
    %c0_42 = arith.constant 0 : index
    %55 = vector.load %arg16[%c0_41, %c0_42] : memref<1024x1024xbf16, #tpu.memory_space<vmem>>, vector<1024x1024xbf16>
    %c0_43 = arith.constant 0 : index
    %c0_44 = arith.constant 0 : index
    %56 = vector.load %arg17[%c0_43, %c0_44] : memref<1x1024xf32, #tpu.memory_space<vmem>>, vector<1x1024xf32>
    %57 = arith.truncf %54 : vector<16x1024xf32> to vector<16x1024xbf16>
    %cst_45 = arith.constant dense<0.000000e+00> : vector<16x1024xf32>
    %58 = tpu.matmul %57, %55, %cst_45 {dimension_numbers = #tpu.dot_dimension_numbers<[1], [0], [0], [1], [0, 0, 1, 1], [], []>} : vector<16x1024xbf16>, vector<1024x1024xbf16>, vector<16x1024xf32> -> vector<16x1024xf32>
    %59 = vector.broadcast %56 : vector<1x1024xf32> to vector<16x1024xf32>
    %60 = arith.addf %58, %59 : vector<16x1024xf32>
    %c0_46 = arith.constant 0 : index
    %c0_47 = arith.constant 0 : index
    %61 = vector.load %arg18[%c0_46, %c0_47] : memref<16x1024xf32, #tpu.memory_space<vmem>>, vector<16x1024xf32>
    tpu.vector_store %arg18[%c0_46, %c0_47], %60 {strides = array<i32>} : memref<16x1024xf32, #tpu.memory_space<vmem>>, vector<16x1024xf32>,
    return
  }
  func.func @transform_0(%arg0: i32) -> (i32, i32) {
    %c0_i32 = arith.constant 0 : i32
    %c0_i32_0 = arith.constant 0 : i32
    return %arg0, %c0_i32 : i32, i32
  }
  func.func @transform_1(%arg0: i32) -> (i32, i32) {
    %c0_i32 = arith.constant 0 : i32
    %c0_i32_0 = arith.constant 0 : i32
    %c0_i32_1 = arith.constant 0 : i32
    return %c0_i32, %c0_i32_0 : i32, i32
  }
  func.func @transform_2(%arg0: i32) -> (i32, i32) {
    %c0_i32 = arith.constant 0 : i32
    %c0_i32_0 = arith.constant 0 : i32
    %c0_i32_1 = arith.constant 0 : i32
    return %c0_i32, %c0_i32_0 : i32, i32
  }
  func.func @transform_3(%arg0: i32) -> (i32, i32) {
    %c0_i32 = arith.constant 0 : i32
    %c0_i32_0 = arith.constant 0 : i32
    %c0_i32_1 = arith.constant 0 : i32
    return %c0_i32, %c0_i32_0 : i32, i32
  }
  func.func @transform_4(%arg0: i32) -> (i32, i32) {
    %c0_i32 = arith.constant 0 : i32
    %c0_i32_0 = arith.constant 0 : i32
    %c0_i32_1 = arith.constant 0 : i32
    return %c0_i32, %c0_i32_0 : i32, i32
  }
  func.func @transform_5(%arg0: i32) -> (i32, i32) {
    %c0_i32 = arith.constant 0 : i32
    %c0_i32_0 = arith.constant 0 : i32
    %c0_i32_1 = arith.constant 0 : i32
    return %c0_i32, %c0_i32_0 : i32, i32
  }
  func.func @transform_6(%arg0: i32) -> (i32, i32) {
    %c0_i32 = arith.constant 0 : i32
    %c0_i32_0 = arith.constant 0 : i32
    %c0_i32_1 = arith.constant 0 : i32
    return %c0_i32, %c0_i32_0 : i32, i32
  }
  func.func @transform_7(%arg0: i32) -> (i32, i32) {
    %c0_i32 = arith.constant 0 : i32
    %c0_i32_0 = arith.constant 0 : i32
    %c0_i32_1 = arith.constant 0 : i32
    return %c0_i32, %c0_i32_0 : i32, i32
  }
  func.func @transform_8(%arg0: i32) -> (i32, i32) {
    %c0_i32 = arith.constant 0 : i32
    %c0_i32_0 = arith.constant 0 : i32
    %c0_i32_1 = arith.constant 0 : i32
    return %c0_i32, %c0_i32_0 : i32, i32
  }
  func.func @transform_9(%arg0: i32) -> (i32, i32) {
    %c0_i32 = arith.constant 0 : i32
    %c0_i32_0 = arith.constant 0 : i32
    %c0_i32_1 = arith.constant 0 : i32
    return %c0_i32, %c0_i32_0 : i32, i32
  }
  func.func @transform_10(%arg0: i32) -> (i32, i32) {
    %c0_i32 = arith.constant 0 : i32
    %c0_i32_0 = arith.constant 0 : i32
    %c0_i32_1 = arith.constant 0 : i32
    return %c0_i32, %c0_i32_0 : i32, i32
  }
  func.func @transform_11(%arg0: i32) -> (i32, i32) {
    %c0_i32 = arith.constant 0 : i32
    %c0_i32_0 = arith.constant 0 : i32
    %c0_i32_1 = arith.constant 0 : i32
    return %c0_i32, %c0_i32_0 : i32, i32
  }
  func.func @transform_12(%arg0: i32) -> (i32, i32) {
    %c0_i32 = arith.constant 0 : i32
    %c0_i32_0 = arith.constant 0 : i32
    %c0_i32_1 = arith.constant 0 : i32
    return %c0_i32, %c0_i32_0 : i32, i32
  }
  func.func @transform_13(%arg0: i32) -> (i32, i32) {
    %c0_i32 = arith.constant 0 : i32
    %c0_i32_0 = arith.constant 0 : i32
    %c0_i32_1 = arith.constant 0 : i32
    return %c0_i32, %c0_i32_0 : i32, i32
  }
  func.func @transform_14(%arg0: i32) -> (i32, i32) {
    %c0_i32 = arith.constant 0 : i32
    %c0_i32_0 = arith.constant 0 : i32
    %c0_i32_1 = arith.constant 0 : i32
    return %c0_i32, %c0_i32_0 : i32, i32
  }
  func.func @transform_15(%arg0: i32) -> (i32, i32) {
    %c0_i32 = arith.constant 0 : i32
    %c0_i32_0 = arith.constant 0 : i32
    %c0_i32_1 = arith.constant 0 : i32
    return %c0_i32, %c0_i32_0 : i32, i32
  }
  func.func @transform_16(%arg0: i32) -> (i32, i32) {
    %c0_i32 = arith.constant 0 : i32
    %c0_i32_0 = arith.constant 0 : i32
    %c0_i32_1 = arith.constant 0 : i32
    return %c0_i32, %c0_i32_0 : i32, i32
  }
  func.func @transform_17(%arg0: i32) -> (i32, i32) {
    %c0_i32 = arith.constant 0 : i32
    %c0_i32_0 = arith.constant 0 : i32
    return %arg0, %c0_i32 : i32, i32
  }
}

</mosaic_0001>

<llo_original>
// kernel: tpu_custom_call.1
$region0: #{tpu_custom_call.1}
  #allocation0 [shape = 'u32[]', space=smem, size = 0x4, offset = 0x4, fixed_abs, tag = 'smem constant byte address 0x4 - core index']
  #allocation1 [shape = 'u32[144,128]{1,0:T(1,128)}', space=vmem, size = 0x12000, scoped, tag = 'internal scratch']
  %s0 = inlined_call_operand.hbm [shape: f32[16,1024], index: 0, kind: input, shape index: {}]
  %s1 = inlined_call_operand.hbm [shape: bf16[1024,1024], index: 1, kind: input, shape index: {}]
  %s2 = inlined_call_operand.hbm [shape: f32[1,1024], index: 2, kind: input, shape index: {}]
  %s3 = inlined_call_operand.hbm [shape: bf16[1024,512], index: 3, kind: input, shape index: {}]
  %s4 = inlined_call_operand.hbm [shape: f32[1,512], index: 4, kind: input, shape index: {}]
  %s5 = inlined_call_operand.hbm [shape: bf16[512,256], index: 5, kind: input, shape index: {}]
  %s6 = inlined_call_operand.hbm [shape: f32[1,256], index: 6, kind: input, shape index: {}]
  %s7 = inlined_call_operand.hbm [shape: bf16[256,128], index: 7, kind: input, shape index: {}]
  %s8 = inlined_call_operand.hbm [shape: f32[1,128], index: 8, kind: input, shape index: {}]
  %s9 = inlined_call_operand.hbm [shape: bf16[128,256], index: 9, kind: input, shape index: {}]
  %s10 = inlined_call_operand.hbm [shape: f32[1,256], index: 10, kind: input, shape index: {}]
  %s11 = inlined_call_operand.hbm [shape: bf16[256,512], index: 11, kind: input, shape index: {}]
  %s12 = inlined_call_operand.hbm [shape: f32[1,512], index: 12, kind: input, shape index: {}]
  %s13 = inlined_call_operand.hbm [shape: bf16[512,1024], index: 13, kind: input, shape index: {}]
  %s14 = inlined_call_operand.hbm [shape: f32[1,1024], index: 14, kind: input, shape index: {}]
  %s15 = inlined_call_operand.hbm [shape: bf16[1024,1024], index: 15, kind: input, shape index: {}]
  %s16 = inlined_call_operand.hbm [shape: f32[1,1024], index: 16, kind: input, shape index: {}]
  %s17 = inlined_call_operand.hbm [shape: f32[16,1024], index: 17, kind: output, shape index: {}]
  %s18 = sld [smem:[#allocation0]]
  $region146: #{tpu_custom_call.1} parent=0
    _
  %s20 = ssub.s32 1, %s18
  %s21 = scalar_select 0, %s20, %s18
  $region1: #{tpu_custom_call.1} parent=0
    #allocation2 [shape = 'u8[65536]{0}', space=vmem, size = 0x10000, scoped, tag = 'input window, operand 0, single buffered']
    #allocation3 [shape = 's32[1]{0}', space=sflag, size = 0x4, scoped, tag = 'scoped memory for tpu_custom_call.1']
    #allocation4 [shape = 's32[1]{0}', space=sflag, size = 0x4, scoped, tag = 'scoped memory for tpu_custom_call.1']
    #allocation5 [shape = 'u8[2097152]{0}', space=vmem, size = 0x200000, scoped, tag = 'input window, operand 1, single buffered']
    #allocation6 [shape = 's32[1]{0}', space=sflag, size = 0x4, scoped, tag = 'scoped memory for tpu_custom_call.1']
    #allocation7 [shape = 'u8[4096]{0}', space=vmem, size = 0x1000, scoped, tag = 'input window, operand 2, single buffered']
    #allocation8 [shape = 'u8[1048576]{0}', space=vmem, size = 0x100000, scoped, tag = 'input window, operand 3, single buffered']
    #allocation9 [shape = 's32[1]{0}', space=sflag, size = 0x4, scoped, tag = 'scoped memory for tpu_custom_call.1']
    #allocation10 [shape = 'u8[2048]{0}', space=vmem, size = 0x800, scoped, tag = 'input window, operand 4, single buffered']
    #allocation11 [shape = 'u8[262144]{0}', space=vmem, size = 0x40000, scoped, tag = 'input window, operand 5, single buffered']
    #allocation12 [shape = 's32[1]{0}', space=sflag, size = 0x4, scoped, tag = 'scoped memory for tpu_custom_call.1']
    #allocation13 [shape = 'u8[1024]{0}', space=vmem, size = 0x400, scoped, tag = 'input window, operand 6, single buffered']
    #allocation14 [shape = 'u8[65536]{0}', space=vmem, size = 0x10000, scoped, tag = 'input window, operand 7, single buffered']
    #allocation15 [shape = 's32[1]{0}', space=sflag, size = 0x4, scoped, tag = 'scoped memory for tpu_custom_call.1']
    #allocation16 [shape = 'u8[512]{0}', space=vmem, size = 0x400, scoped, tag = 'input window, operand 8, single buffered']
    #allocation17 [shape = 'u8[65536]{0}', space=vmem, size = 0x10000, scoped, tag = 'input window, operand 9, single buffered']
    #allocation18 [shape = 's32[1]{0}', space=sflag, size = 0x4, scoped, tag = 'scoped memory for tpu_custom_call.1']
    #allocation19 [shape = 'u8[1024]{0}', space=vmem, size = 0x400, scoped, tag = 'input window, operand 10, single buffered']
    #allocation20 [shape = 'u8[262144]{0}', space=vmem, size = 0x40000, scoped, tag = 'input window, operand 11, single buffered']
    #allocation21 [shape = 's32[1]{0}', space=sflag, size = 0x4, scoped, tag = 'scoped memory for tpu_custom_call.1']
    #allocation22 [shape = 'u8[2048]{0}', space=vmem, size = 0x800, scoped, tag = 'input window, operand 12, single buffered']
    #allocation23 [shape = 'u8[1048576]{0}', space=vmem, size = 0x100000, scoped, tag = 'input window, operand 13, single buffered']
    #allocation24 [shape = 's32[1]{0}', space=sflag, size = 0x4, scoped, tag = 'scoped memory for tpu_custom_call.1']
    #allocation25 [shape = 'u8[4096]{0}', space=vmem, size = 0x1000, scoped, tag = 'input window, operand 14, single buffered']
    #allocation26 [shape = 'u8[2097152]{0}', space=vmem, size = 0x200000, scoped, tag = 'input window, operand 15, single buffered']
    #allocation27 [shape = 's32[1]{0}', space=sflag, size = 0x4, scoped, tag = 'scoped memory for tpu_custom_call.1']
    #allocation28 [shape = 'u8[4096]{0}', space=vmem, size = 0x1000, scoped, tag = 'input window, operand 16, single buffered']
    #allocation29 [shape = 'u8[65536]{0}', space=vmem, size = 0x10000, scoped, tag = 'output window, operand 0, single buffered']
    %22 = vsyncpa [#allocation3], 0
    %23 = vsyncpa [#allocation6], 0
    %24 = vsyncpa [#allocation9], 0
    %25 = vsyncpa [#allocation12], 0
    %26 = vsyncpa [#allocation15], 0
    %27 = vsyncpa [#allocation18], 0
    %28 = vsyncpa [#allocation21], 0
    %29 = vsyncpa [#allocation24], 0
    %30 = vsyncpa [#allocation27], 0
    %31 = vsyncpa [#allocation4], 0
    // Predicated region
    $region2: #{tpu_custom_call.1} parent=1 // pred_check
      _
    $region3: #{tpu_custom_call.1} parent=1 // pred_check_branch
      %33 = sbr.rel (0) target = $region5
    $region4: #{tpu_custom_call.1} parent=1 // pred_region
      %s35 = ssub.s32 2048, 2048
      %36 = vsyncadd [#allocation3], %s35
      %s37 = sshll.u32 [#allocation2], 4
      %s38 = int_to_ptr.vmem [resolvable:$true] %s37
      %43 = dma.hbm_to_vmem [thread:$0]  %s0, 2048, %s38, [#allocation3], 1024, 1024, 64
    $region5: #{tpu_custom_call.1} parent=1 // pred_fallthru
      _
    // Predicated region
    $region6: #{tpu_custom_call.1} parent=1 // pred_check
      _
    $region7: #{tpu_custom_call.1} parent=1 // pred_check_branch
      %45 = sbr.rel (0) target = $region9
    $region8: #{tpu_custom_call.1} parent=1 // pred_region
      %s47 = ssub.s32 65536, 65536
      %48 = vsyncadd [#allocation6], %s47
      %s49 = sshll.u32 [#allocation5], 4
      %s50 = int_to_ptr.vmem [resolvable:$true] %s49
      %55 = dma.hbm_to_vmem [thread:$0]  %s1, 65536, %s50, [#allocation6], 512, 512, 32
    $region9: #{tpu_custom_call.1} parent=1 // pred_fallthru
      _
    // Predicated region
    $region10: #{tpu_custom_call.1} parent=1 // pred_check
      _
    $region11: #{tpu_custom_call.1} parent=1 // pred_check_branch
      %57 = sbr.rel (0) target = $region13
    $region12: #{tpu_custom_call.1} parent=1 // pred_region
      %s59 = ssub.s32 128, 128
      %60 = vsyncadd [#allocation6], %s59
      %s62 = sshll.u32 [#allocation7], 4
      %s63 = int_to_ptr.vmem [resolvable:$true] %s62
      %65 = dma.hbm_to_vmem [thread:$0]  %s2, 128, %s63, [#allocation6]
    $region13: #{tpu_custom_call.1} parent=1 // pred_fallthru
      _
    // Predicated region
    $region14: #{tpu_custom_call.1} parent=1 // pred_check
      _
    $region15: #{tpu_custom_call.1} parent=1 // pred_check_branch
      %67 = sbr.rel (0) target = $region17
    $region16: #{tpu_custom_call.1} parent=1 // pred_region
      %s69 = ssub.s32 32768, 32768
      %70 = vsyncadd [#allocation9], %s69
      %s71 = sshll.u32 [#allocation8], 4
      %s72 = int_to_ptr.vmem [resolvable:$true] %s71
      %77 = dma.hbm_to_vmem [thread:$0]  %s3, 32768, %s72, [#allocation9], 256, 256, 16
    $region17: #{tpu_custom_call.1} parent=1 // pred_fallthru
      _
    // Predicated region
    $region18: #{tpu_custom_call.1} parent=1 // pred_check
      _
    $region19: #{tpu_custom_call.1} parent=1 // pred_check_branch
      %79 = sbr.rel (0) target = $region21
    $region20: #{tpu_custom_call.1} parent=1 // pred_region
      %s81 = ssub.s32 64, 64
      %82 = vsyncadd [#allocation9], %s81
      %s84 = sshll.u32 [#allocation10], 4
      %s85 = int_to_ptr.vmem [resolvable:$true] %s84
      %87 = dma.hbm_to_vmem [thread:$0]  %s4, 64, %s85, [#allocation9]
    $region21: #{tpu_custom_call.1} parent=1 // pred_fallthru
      _
    // Predicated region
    $region22: #{tpu_custom_call.1} parent=1 // pred_check
      _
    $region23: #{tpu_custom_call.1} parent=1 // pred_check_branch
      %89 = sbr.rel (0) target = $region25
    $region24: #{tpu_custom_call.1} parent=1 // pred_region
      %s91 = ssub.s32 8192, 8192
      %92 = vsyncadd [#allocation12], %s91
      %s93 = sshll.u32 [#allocation11], 4
      %s94 = int_to_ptr.vmem [resolvable:$true] %s93
      %99 = dma.hbm_to_vmem [thread:$0]  %s5, 8192, %s94, [#allocation12], 128, 128, 8
    $region25: #{tpu_custom_call.1} parent=1 // pred_fallthru
      _
    // Predicated region
    $region26: #{tpu_custom_call.1} parent=1 // pred_check
      _
    $region27: #{tpu_custom_call.1} parent=1 // pred_check_branch
      %101 = sbr.rel (0) target = $region29
    $region28: #{tpu_custom_call.1} parent=1 // pred_region
      %s103 = ssub.s32 32, 32
      %104 = vsyncadd [#allocation12], %s103
      %s106 = sshll.u32 [#allocation13], 4
      %s107 = int_to_ptr.vmem [resolvable:$true] %s106
      %109 = dma.hbm_to_vmem [thread:$0]  %s6, 32, %s107, [#allocation12]
    $region29: #{tpu_custom_call.1} parent=1 // pred_fallthru
      _
    // Predicated region
    $region30: #{tpu_custom_call.1} parent=1 // pred_check
      _
    $region31: #{tpu_custom_call.1} parent=1 // pred_check_branch
      %111 = sbr.rel (0) target = $region33
    $region32: #{tpu_custom_call.1} parent=1 // pred_region
      %s113 = ssub.s32 2048, 2048
      %114 = vsyncadd [#allocation15], %s113
      %s115 = sshll.u32 [#allocation14], 4
      %s116 = int_to_ptr.vmem [resolvable:$true] %s115
      %121 = dma.hbm_to_vmem [thread:$0]  %s7, 2048, %s116, [#allocation15], 64, 64, 4
    $region33: #{tpu_custom_call.1} parent=1 // pred_fallthru
      _
    // Predicated region
    $region34: #{tpu_custom_call.1} parent=1 // pred_check
      _
    $region35: #{tpu_custom_call.1} parent=1 // pred_check_branch
      %123 = sbr.rel (0) target = $region37
    $region36: #{tpu_custom_call.1} parent=1 // pred_region
      %s125 = ssub.s32 16, 16
      %126 = vsyncadd [#allocation15], %s125
      %s128 = sshll.u32 [#allocation16], 4
      %s129 = int_to_ptr.vmem [resolvable:$true] %s128
      %131 = dma.hbm_to_vmem [thread:$0]  %s8, 16, %s129, [#allocation15]
    $region37: #{tpu_custom_call.1} parent=1 // pred_fallthru
      _
    // Predicated region
    $region38: #{tpu_custom_call.1} parent=1 // pred_check
      _
    $region39: #{tpu_custom_call.1} parent=1 // pred_check_branch
      %133 = sbr.rel (0) target = $region41
    $region40: #{tpu_custom_call.1} parent=1 // pred_region
      %s135 = ssub.s32 2048, 2048
      %136 = vsyncadd [#allocation18], %s135
      %s137 = sshll.u32 [#allocation17], 4
      %s138 = int_to_ptr.vmem [resolvable:$true] %s137
      %143 = dma.hbm_to_vmem [thread:$0]  %s9, 2048, %s138, [#allocation18], 128, 128, 8
    $region41: #{tpu_custom_call.1} parent=1 // pred_fallthru
      _
    // Predicated region
    $region42: #{tpu_custom_call.1} parent=1 // pred_check
      _
    $region43: #{tpu_custom_call.1} parent=1 // pred_check_branch
      %145 = sbr.rel (0) target = $region45
    $region44: #{tpu_custom_call.1} parent=1 // pred_region
      %s147 = ssub.s32 32, 32
      %148 = vsyncadd [#allocation18], %s147
      %s150 = sshll.u32 [#allocation19], 4
      %s151 = int_to_ptr.vmem [resolvable:$true] %s150
      %153 = dma.hbm_to_vmem [thread:$0]  %s10, 32, %s151, [#allocation18]
    $region45: #{tpu_custom_call.1} parent=1 // pred_fallthru
      _
    // Predicated region
    $region46: #{tpu_custom_call.1} parent=1 // pred_check
      _
    $region47: #{tpu_custom_call.1} parent=1 // pred_check_branch
      %155 = sbr.rel (0) target = $region49
    $region48: #{tpu_custom_call.1} parent=1 // pred_region
      %s157 = ssub.s32 8192, 8192
      %158 = vsyncadd [#allocation21], %s157
      %s159 = sshll.u32 [#allocation20], 4
      %s160 = int_to_ptr.vmem [resolvable:$true] %s159
      %165 = dma.hbm_to_vmem [thread:$0]  %s11, 8192, %s160, [#allocation21], 256, 256, 16
    $region49: #{tpu_custom_call.1} parent=1 // pred_fallthru
      _
    // Predicated region
    $region50: #{tpu_custom_call.1} parent=1 // pred_check
      _
    $region51: #{tpu_custom_call.1} parent=1 // pred_check_branch
      %167 = sbr.rel (0) target = $region53
    $region52: #{tpu_custom_call.1} parent=1 // pred_region
      %s169 = ssub.s32 64, 64
      %170 = vsyncadd [#allocation21], %s169
      %s172 = sshll.u32 [#allocation22], 4
      %s173 = int_to_ptr.vmem [resolvable:$true] %s172
      %175 = dma.hbm_to_vmem [thread:$0]  %s12, 64, %s173, [#allocation21]
    $region53: #{tpu_custom_call.1} parent=1 // pred_fallthru
      _
    // Predicated region
    $region54: #{tpu_custom_call.1} parent=1 // pred_check
      _
    $region55: #{tpu_custom_call.1} parent=1 // pred_check_branch
      %177 = sbr.rel (0) target = $region57
    $region56: #{tpu_custom_call.1} parent=1 // pred_region
      %s179 = ssub.s32 32768, 32768
      %180 = vsyncadd [#allocation24], %s179
      %s181 = sshll.u32 [#allocation23], 4
      %s182 = int_to_ptr.vmem [resolvable:$true] %s181
      %187 = dma.hbm_to_vmem [thread:$0]  %s13, 32768, %s182, [#allocation24], 512, 512, 32
    $region57: #{tpu_custom_call.1} parent=1 // pred_fallthru
      _
    // Predicated region
    $region58: #{tpu_custom_call.1} parent=1 // pred_check
      _
    $region59: #{tpu_custom_call.1} parent=1 // pred_check_branch
      %189 = sbr.rel (0) target = $region61
    $region60: #{tpu_custom_call.1} parent=1 // pred_region
      %s191 = ssub.s32 128, 128
      %192 = vsyncadd [#allocation24], %s191
      %s194 = sshll.u32 [#allocation25], 4
      %s195 = int_to_ptr.vmem [resolvable:$true] %s194
      %197 = dma.hbm_to_vmem [thread:$0]  %s14, 128, %s195, [#allocation24]
    $region61: #{tpu_custom_call.1} parent=1 // pred_fallthru
      _
    // Predicated region
    $region62: #{tpu_custom_call.1} parent=1 // pred_check
      _
    $region63: #{tpu_custom_call.1} parent=1 // pred_check_branch
      %199 = sbr.rel (0) target = $region65
    $region64: #{tpu_custom_call.1} parent=1 // pred_region
      %s201 = ssub.s32 65536, 65536
      %202 = vsyncadd [#allocation27], %s201
      %s203 = sshll.u32 [#allocation26], 4
      %s204 = int_to_ptr.vmem [resolvable:$true] %s203
      %209 = dma.hbm_to_vmem [thread:$0]  %s15, 65536, %s204, [#allocation27], 512, 512, 32
    $region65: #{tpu_custom_call.1} parent=1 // pred_fallthru
      _
    // Predicated region
    $region66: #{tpu_custom_call.1} parent=1 // pred_check
      _
    $region67: #{tpu_custom_call.1} parent=1 // pred_check_branch
      %211 = sbr.rel (0) target = $region69
    $region68: #{tpu_custom_call.1} parent=1 // pred_region
      %s213 = ssub.s32 128, 128
      %214 = vsyncadd [#allocation27], %s213
      %s216 = sshll.u32 [#allocation28], 4
      %s217 = int_to_ptr.vmem [resolvable:$true] %s216
      %219 = dma.hbm_to_vmem [thread:$0]  %s16, 128, %s217, [#allocation27]
    $region69: #{tpu_custom_call.1} parent=1 // pred_fallthru
      _
    // Predicated region
    $region70: #{tpu_custom_call.1} parent=1 // pred_check
      _
    $region71: #{tpu_custom_call.1} parent=1 // pred_check_branch
      %221 = sbr.rel (0) target = $region73
    $region72: #{tpu_custom_call.1} parent=1 // pred_region
      %222 = dma.done [#allocation3], 2048
    $region73: #{tpu_custom_call.1} parent=1 // pred_fallthru
      _
    // Predicated region
    $region74: #{tpu_custom_call.1} parent=1 // pred_check
      _
    $region75: #{tpu_custom_call.1} parent=1 // pred_check_branch
      %224 = sbr.rel (0) target = $region77
    $region76: #{tpu_custom_call.1} parent=1 // pred_region
      %225 = dma.done [#allocation6], 65536
    $region77: #{tpu_custom_call.1} parent=1 // pred_fallthru
      _
    // Predicated region
    $region78: #{tpu_custom_call.1} parent=1 // pred_check
      _
    $region79: #{tpu_custom_call.1} parent=1 // pred_check_branch
      %227 = sbr.rel (0) target = $region81
    $region80: #{tpu_custom_call.1} parent=1 // pred_region
      %228 = dma.done [#allocation6], 128
    $region81: #{tpu_custom_call.1} parent=1 // pred_fallthru
      _
    // Predicated region
    $region82: #{tpu_custom_call.1} parent=1 // pred_check
      _
    $region83: #{tpu_custom_call.1} parent=1 // pred_check_branch
      %230 = sbr.rel (0) target = $region85
    $region84: #{tpu_custom_call.1} parent=1 // pred_region
      %231 = dma.done [#allocation9], 32768
    $region85: #{tpu_custom_call.1} parent=1 // pred_fallthru
      _
    // Predicated region
    $region86: #{tpu_custom_call.1} parent=1 // pred_check
      _
    $region87: #{tpu_custom_call.1} parent=1 // pred_check_branch
      %233 = sbr.rel (0) target = $region89
    $region88: #{tpu_custom_call.1} parent=1 // pred_region
      %234 = dma.done [#allocation9], 64
    $region89: #{tpu_custom_call.1} parent=1 // pred_fallthru
      _
    // Predicated region
    $region90: #{tpu_custom_call.1} parent=1 // pred_check
      _
    $region91: #{tpu_custom_call.1} parent=1 // pred_check_branch
      %236 = sbr.rel (0) target = $region93
    $region92: #{tpu_custom_call.1} parent=1 // pred_region
      %237 = dma.done [#allocation12], 8192
    $region93: #{tpu_custom_call.1} parent=1 // pred_fallthru
      _
    // Predicated region
    $region94: #{tpu_custom_call.1} parent=1 // pred_check
      _
    $region95: #{tpu_custom_call.1} parent=1 // pred_check_branch
      %239 = sbr.rel (0) target = $region97
    $region96: #{tpu_custom_call.1} parent=1 // pred_region
      %240 = dma.done [#allocation12], 32
    $region97: #{tpu_custom_call.1} parent=1 // pred_fallthru
      _
    // Predicated region
    $region98: #{tpu_custom_call.1} parent=1 // pred_check
      _
    $region99: #{tpu_custom_call.1} parent=1 // pred_check_branch
      %242 = sbr.rel (0) target = $region101
    $region100: #{tpu_custom_call.1} parent=1 // pred_region
      %243 = dma.done [#allocation15], 2048
    $region101: #{tpu_custom_call.1} parent=1 // pred_fallthru
      _
    // Predicated region
    $region102: #{tpu_custom_call.1} parent=1 // pred_check
      _
    $region103: #{tpu_custom_call.1} parent=1 // pred_check_branch
      %245 = sbr.rel (0) target = $region105
    $region104: #{tpu_custom_call.1} parent=1 // pred_region
      %246 = dma.done [#allocation15], 16
    $region105: #{tpu_custom_call.1} parent=1 // pred_fallthru
      _
    // Predicated region
    $region106: #{tpu_custom_call.1} parent=1 // pred_check
      _
    $region107: #{tpu_custom_call.1} parent=1 // pred_check_branch
      %248 = sbr.rel (0) target = $region109
    $region108: #{tpu_custom_call.1} parent=1 // pred_region
      %249 = dma.done [#allocation18], 2048
    $region109: #{tpu_custom_call.1} parent=1 // pred_fallthru
      _
    // Predicated region
    $region110: #{tpu_custom_call.1} parent=1 // pred_check
      _
    $region111: #{tpu_custom_call.1} parent=1 // pred_check_branch
      %251 = sbr.rel (0) target = $region113
    $region112: #{tpu_custom_call.1} parent=1 // pred_region
      %252 = dma.done [#allocation18], 32
    $region113: #{tpu_custom_call.1} parent=1 // pred_fallthru
      _
    // Predicated region
    $region114: #{tpu_custom_call.1} parent=1 // pred_check
      _
    $region115: #{tpu_custom_call.1} parent=1 // pred_check_branch
      %254 = sbr.rel (0) target = $region117
    $region116: #{tpu_custom_call.1} parent=1 // pred_region
      %255 = dma.done [#allocation21], 8192
    $region117: #{tpu_custom_call.1} parent=1 // pred_fallthru
      _
    // Predicated region
    $region118: #{tpu_custom_call.1} parent=1 // pred_check
      _
    $region119: #{tpu_custom_call.1} parent=1 // pred_check_branch
      %257 = sbr.rel (0) target = $region121
    $region120: #{tpu_custom_call.1} parent=1 // pred_region
      %258 = dma.done [#allocation21], 64
    $region121: #{tpu_custom_call.1} parent=1 // pred_fallthru
      _
    // Predicated region
    $region122: #{tpu_custom_call.1} parent=1 // pred_check
      _
    $region123: #{tpu_custom_call.1} parent=1 // pred_check_branch
      %260 = sbr.rel (0) target = $region125
    $region124: #{tpu_custom_call.1} parent=1 // pred_region
      %261 = dma.done [#allocation24], 32768
    $region125: #{tpu_custom_call.1} parent=1 // pred_fallthru
      _
    // Predicated region
    $region126: #{tpu_custom_call.1} parent=1 // pred_check
      _
    $region127: #{tpu_custom_call.1} parent=1 // pred_check_branch
      %263 = sbr.rel (0) target = $region129
    $region128: #{tpu_custom_call.1} parent=1 // pred_region
      %264 = dma.done [#allocation24], 128
    $region129: #{tpu_custom_call.1} parent=1 // pred_fallthru
      _
    // Predicated region
    $region130: #{tpu_custom_call.1} parent=1 // pred_check
      _
    $region131: #{tpu_custom_call.1} parent=1 // pred_check_branch
      %266 = sbr.rel (0) target = $region133
    $region132: #{tpu_custom_call.1} parent=1 // pred_region
      %267 = dma.done [#allocation27], 65536
    $region133: #{tpu_custom_call.1} parent=1 // pred_fallthru
      _
    // Predicated region
    $region134: #{tpu_custom_call.1} parent=1 // pred_check
      _
    $region135: #{tpu_custom_call.1} parent=1 // pred_check_branch
      %269 = sbr.rel (0) target = $region137
    $region136: #{tpu_custom_call.1} parent=1 // pred_region
      %270 = dma.done [#allocation27], 128
    $region137: #{tpu_custom_call.1} parent=1 // pred_fallthru
      _
    %v272 = vld [vmem:[#allocation2] sm:$0xff]
    %v273 = vld [vmem:[#allocation2 + $0x8] sm:$0xff]
    %v274 = vld [vmem:[#allocation2 + $0x10] sm:$0xff]
    %v275 = vld [vmem:[#allocation2 + $0x18] sm:$0xff]
    %v276 = vld [vmem:[#allocation2 + $0x20] sm:$0xff]
    %v277 = vld [vmem:[#allocation2 + $0x28] sm:$0xff]
    %v278 = vld [vmem:[#allocation2 + $0x30] sm:$0xff]
    %v279 = vld [vmem:[#allocation2 + $0x38] sm:$0xff]
    %v280 = vld [vmem:[#allocation2 + $0x40] sm:$0xff]
    %v281 = vld [vmem:[#allocation2 + $0x48] sm:$0xff]
    %v282 = vld [vmem:[#allocation2 + $0x50] sm:$0xff]
    %v283 = vld [vmem:[#allocation2 + $0x58] sm:$0xff]
    %v284 = vld [vmem:[#allocation2 + $0x60] sm:$0xff]
    %v285 = vld [vmem:[#allocation2 + $0x68] sm:$0xff]
    %v286 = vld [vmem:[#allocation2 + $0x70] sm:$0xff]
    %v287 = vld [vmem:[#allocation2 + $0x78] sm:$0xff]
    %v288 = vld [vmem:[#allocation5] sm:$0xff]
    %v289 = vld [vmem:[#allocation5 + $0x8] sm:$0xff]
    %v290 = vld [vmem:[#allocation5 + $0x10] sm:$0xff]
    %v291 = vld [vmem:[#allocation5 + $0x18] sm:$0xff]
    %v292 = vld [vmem:[#allocation5 + $0x20] sm:$0xff]
    %v293 = vld [vmem:[#allocation5 + $0x28] sm:$0xff]
    %v294 = vld [vmem:[#allocation5 + $0x30] sm:$0xff]
    %v295 = vld [vmem:[#allocation5 + $0x38] sm:$0xff]
    %v296 = vld [vmem:[#allocation5 + $0x40] sm:$0xff]
    %v297 = vld [vmem:[#allocation5 + $0x48] sm:$0xff]
    %v298 = vld [vmem:[#allocation5 + $0x50] sm:$0xff]
    %v299 = vld [vmem:[#allocation5 + $0x58] sm:$0xff]
    %v300 = vld [vmem:[#allocation5 + $0x60] sm:$0xff]
    %v301 = vld [vmem:[#allocation5 + $0x68] sm:$0xff]
    %v302 = vld [vmem:[#allocation5 + $0x70] sm:$0xff]
    %v303 = vld [vmem:[#allocation5 + $0x78] sm:$0xff]
    %v304 = vld [vmem:[#allocation5 + $0x80] sm:$0xff]
    %v305 = vld [vmem:[#allocation5 + $0x88] sm:$0xff]
    %v306 = vld [vmem:[#allocation5 + $0x90] sm:$0xff]
    %v307 = vld [vmem:[#allocation5 + $0x98] sm:$0xff]
    %v308 = vld [vmem:[#allocation5 + $0xa0] sm:$0xff]
    %v309 = vld [vmem:[#allocation5 + $0xa8] sm:$0xff]
    %v310 = vld [vmem:[#allocation5 + $0xb0] sm:$0xff]
    %v311 = vld [vmem:[#allocation5 + $0xb8] sm:$0xff]
    %v312 = vld [vmem:[#allocation5 + $0xc0] sm:$0xff]
    %v313 = vld [vmem:[#allocation5 + $0xc8] sm:$0xff]
    %v314 = vld [vmem:[#allocation5 + $0xd0] sm:$0xff]
    %v315 = vld [vmem:[#allocation5 + $0xd8] sm:$0xff]
    %v316 = vld [vmem:[#allocation5 + $0xe0] sm:$0xff]
    %v317 = vld [vmem:[#allocation5 + $0xe8] sm:$0xff]
    %v318 = vld [vmem:[#allocation5 + $0xf0] sm:$0xff]
    %v319 = vld [vmem:[#allocation5 + $0xf8] sm:$0xff]
    %v320 = vld [vmem:[#allocation5 + $0x100] sm:$0xff]
    %v321 = vld [vmem:[#allocation5 + $0x108] sm:$0xff]
    %v322 = vld [vmem:[#allocation5 + $0x110] sm:$0xff]
    %v323 = vld [vmem:[#allocation5 + $0x118] sm:$0xff]
    %v324 = vld [vmem:[#allocation5 + $0x120] sm:$0xff]
    %v325 = vld [vmem:[#allocation5 + $0x128] sm:$0xff]
    %v326 = vld [vmem:[#allocation5 + $0x130] sm:$0xff]
    %v327 = vld [vmem:[#allocation5 + $0x138] sm:$0xff]
    %v328 = vld [vmem:[#allocation5 + $0x140] sm:$0xff]
    %v329 = vld [vmem:[#allocation5 + $0x148] sm:$0xff]
    %v330 = vld [vmem:[#allocation5 + $0x150] sm:$0xff]
    %v331 = vld [vmem:[#allocation5 + $0x158] sm:$0xff]
    %v332 = vld [vmem:[#allocation5 + $0x160] sm:$0xff]
    %v333 = vld [vmem:[#allocation5 + $0x168] sm:$0xff]
    %v334 = vld [vmem:[#allocation5 + $0x170] sm:$0xff]
    %v335 = vld [vmem:[#allocation5 + $0x178] sm:$0xff]
    %v336 = vld [vmem:[#allocation5 + $0x180] sm:$0xff]
    %v337 = vld [vmem:[#allocation5 + $0x188] sm:$0xff]
    %v338 = vld [vmem:[#allocation5 + $0x190] sm:$0xff]
    %v339 = vld [vmem:[#allocation5 + $0x198] sm:$0xff]
    %v340 = vld [vmem:[#allocation5 + $0x1a0] sm:$0xff]
    %v341 = vld [vmem:[#allocation5 + $0x1a8] sm:$0xff]
    %v342 = vld [vmem:[#allocation5 + $0x1b0] sm:$0xff]
    %v343 = vld [vmem:[#allocation5 + $0x1b8] sm:$0xff]
    %v344 = vld [vmem:[#allocation5 + $0x1c0] sm:$0xff]
    %v345 = vld [vmem:[#allocation5 + $0x1c8] sm:$0xff]
    %v346 = vld [vmem:[#allocation5 + $0x1d0] sm:$0xff]
    %v347 = vld [vmem:[#allocation5 + $0x1d8] sm:$0xff]
    %v348 = vld [vmem:[#allocation5 + $0x1e0] sm:$0xff]
    %v349 = vld [vmem:[#allocation5 + $0x1e8] sm:$0xff]
    %v350 = vld [vmem:[#allocation5 + $0x1f0] sm:$0xff]
    %v351 = vld [vmem:[#allocation5 + $0x1f8] sm:$0xff]
    %v352 = vld [vmem:[#allocation5 + $0x200] sm:$0xff]
    %v353 = vld [vmem:[#allocation5 + $0x208] sm:$0xff]
    %v354 = vld [vmem:[#allocation5 + $0x210] sm:$0xff]
    %v355 = vld [vmem:[#allocation5 + $0x218] sm:$0xff]
    %v356 = vld [vmem:[#allocation5 + $0x220] sm:$0xff]
    %v357 = vld [vmem:[#allocation5 + $0x228] sm:$0xff]
    %v358 = vld [vmem:[#allocation5 + $0x230] sm:$0xff]
    %v359 = vld [vmem:[#allocation5 + $0x238] sm:$0xff]
    %v360 = vld [vmem:[#allocation5 + $0x240] sm:$0xff]
    %v361 = vld [vmem:[#allocation5 + $0x248] sm:$0xff]
    %v362 = vld [vmem:[#allocation5 + $0x250] sm:$0xff]
    %v363 = vld [vmem:[#allocation5 + $0x258] sm:$0xff]
    %v364 = vld [vmem:[#allocation5 + $0x260] sm:$0xff]
    %v365 = vld [vmem:[#allocation5 + $0x268] sm:$0xff]
    %v366 = vld [vmem:[#allocation5 + $0x270] sm:$0xff]
    %v367 = vld [vmem:[#allocation5 + $0x278] sm:$0xff]
    %v368 = vld [vmem:[#allocation5 + $0x280] sm:$0xff]
    %v369 = vld [vmem:[#allocation5 + $0x288] sm:$0xff]
    %v370 = vld [vmem:[#allocation5 + $0x290] sm:$0xff]
    %v371 = vld [vmem:[#allocation5 + $0x298] sm:$0xff]
    %v372 = vld [vmem:[#allocation5 + $0x2a0] sm:$0xff]
    %v373 = vld [vmem:[#allocation5 + $0x2a8] sm:$0xff]
    %v374 = vld [vmem:[#allocation5 + $0x2b0] sm:$0xff]
    %v375 = vld [vmem:[#allocation5 + $0x2b8] sm:$0xff]
    %v376 = vld [vmem:[#allocation5 + $0x2c0] sm:$0xff]
    %v377 = vld [vmem:[#allocation5 + $0x2c8] sm:$0xff]
    %v378 = vld [vmem:[#allocation5 + $0x2d0] sm:$0xff]
    %v379 = vld [vmem:[#allocation5 + $0x2d8] sm:$0xff]
    %v380 = vld [vmem:[#allocation5 + $0x2e0] sm:$0xff]
    %v381 = vld [vmem:[#allocation5 + $0x2e8] sm:$0xff]
    %v382 = vld [vmem:[#allocation5 + $0x2f0] sm:$0xff]
    %v383 = vld [vmem:[#allocation5 + $0x2f8] sm:$0xff]
    %v384 = vld [vmem:[#allocation5 + $0x300] sm:$0xff]
    %v385 = vld [vmem:[#allocation5 + $0x308] sm:$0xff]
    %v386 = vld [vmem:[#allocation5 + $0x310] sm:$0xff]
    %v387 = vld [vmem:[#allocation5 + $0x318] sm:$0xff]
    %v388 = vld [vmem:[#allocation5 + $0x320] sm:$0xff]
    %v389 = vld [vmem:[#allocation5 + $0x328] sm:$0xff]
    %v390 = vld [vmem:[#allocation5 + $0x330] sm:$0xff]
    %v391 = vld [vmem:[#allocation5 + $0x338] sm:$0xff]
    %v392 = vld [vmem:[#allocation5 + $0x340] sm:$0xff]
    %v393 = vld [vmem:[#allocation5 + $0x348] sm:$0xff]
    %v394 = vld [vmem:[#allocation5 + $0x350] sm:$0xff]
    %v395 = vld [vmem:[#allocation5 + $0x358] sm:$0xff]
    %v396 = vld [vmem:[#allocation5 + $0x360] sm:$0xff]
    %v397 = vld [vmem:[#allocation5 + $0x368] sm:$0xff]
    %v398 = vld [vmem:[#allocation5 + $0x370] sm:$0xff]
    %v399 = vld [vmem:[#allocation5 + $0x378] sm:$0xff]
    %v400 = vld [vmem:[#allocation5 + $0x380] sm:$0xff]
    %v401 = vld [vmem:[#allocation5 + $0x388] sm:$0xff]
    %v402 = vld [vmem:[#allocation5 + $0x390] sm:$0xff]
    %v403 = vld [vmem:[#allocation5 + $0x398] sm:$0xff]
    %v404 = vld [vmem:[#allocation5 + $0x3a0] sm:$0xff]
    %v405 = vld [vmem:[#allocation5 + $0x3a8] sm:$0xff]
    %v406 = vld [vmem:[#allocation5 + $0x3b0] sm:$0xff]
    %v407 = vld [vmem:[#allocation5 + $0x3b8] sm:$0xff]
    %v408 = vld [vmem:[#allocation5 + $0x3c0] sm:$0xff]
    %v409 = vld [vmem:[#allocation5 + $0x3c8] sm:$0xff]
    %v410 = vld [vmem:[#allocation5 + $0x3d0] sm:$0xff]
    %v411 = vld [vmem:[#allocation5 + $0x3d8] sm:$0xff]
    %v412 = vld [vmem:[#allocation5 + $0x3e0] sm:$0xff]
    %v413 = vld [vmem:[#allocation5 + $0x3e8] sm:$0xff]
    %v414 = vld [vmem:[#allocation5 + $0x3f0] sm:$0xff]
    %v415 = vld [vmem:[#allocation5 + $0x3f8] sm:$0xff]
    %v416 = vld [vmem:[#allocation5 + $0x400] sm:$0xff]
    %v417 = vld [vmem:[#allocation5 + $0x408] sm:$0xff]
    %v418 = vld [vmem:[#allocation5 + $0x410] sm:$0xff]
    %v419 = vld [vmem:[#allocation5 + $0x418] sm:$0xff]
    %v420 = vld [vmem:[#allocation5 + $0x420] sm:$0xff]
    %v421 = vld [vmem:[#allocation5 + $0x428] sm:$0xff]
    %v422 = vld [vmem:[#allocation5 + $0x430] sm:$0xff]
    %v423 = vld [vmem:[#allocation5 + $0x438] sm:$0xff]
    %v424 = vld [vmem:[#allocation5 + $0x440] sm:$0xff]
    %v425 = vld [vmem:[#allocation5 + $0x448] sm:$0xff]
    %v426 = vld [vmem:[#allocation5 + $0x450] sm:$0xff]
    %v427 = vld [vmem:[#allocation5 + $0x458] sm:$0xff]
    %v428 = vld [vmem:[#allocation5 + $0x460] sm:$0xff]
    %v429 = vld [vmem:[#allocation5 + $0x468] sm:$0xff]
    %v430 = vld [vmem:[#allocation5 + $0x470] sm:$0xff]
    %v431 = vld [vmem:[#allocation5 + $0x478] sm:$0xff]
    %v432 = vld [vmem:[#allocation5 + $0x480] sm:$0xff]
    %v433 = vld [vmem:[#allocation5 + $0x488] sm:$0xff]
    %v434 = vld [vmem:[#allocation5 + $0x490] sm:$0xff]
    %v435 = vld [vmem:[#allocation5 + $0x498] sm:$0xff]
    %v436 = vld [vmem:[#allocation5 + $0x4a0] sm:$0xff]
    %v437 = vld [vmem:[#allocation5 + $0x4a8] sm:$0xff]
    %v438 = vld [vmem:[#allocation5 + $0x4b0] sm:$0xff]
    %v439 = vld [vmem:[#allocation5 + $0x4b8] sm:$0xff]
    %v440 = vld [vmem:[#allocation5 + $0x4c0] sm:$0xff]
    %v441 = vld [vmem:[#allocation5 + $0x4c8] sm:$0xff]
    %v442 = vld [vmem:[#allocation5 + $0x4d0] sm:$0xff]
    %v443 = vld [vmem:[#allocation5 + $0x4d8] sm:$0xff]
    %v444 = vld [vmem:[#allocation5 + $0x4e0] sm:$0xff]
    %v445 = vld [vmem:[#allocation5 + $0x4e8] sm:$0xff]
    %v446 = vld [vmem:[#allocation5 + $0x4f0] sm:$0xff]
    %v447 = vld [vmem:[#allocation5 + $0x4f8] sm:$0xff]
    %v448 = vld [vmem:[#allocation5 + $0x500] sm:$0xff]
    %v449 = vld [vmem:[#allocation5 + $0x508] sm:$0xff]
    %v450 = vld [vmem:[#allocation5 + $0x510] sm:$0xff]
    %v451 = vld [vmem:[#allocation5 + $0x518] sm:$0xff]
    %v452 = vld [vmem:[#allocation5 + $0x520] sm:$0xff]
    %v453 = vld [vmem:[#allocation5 + $0x528] sm:$0xff]
    %v454 = vld [vmem:[#allocation5 + $0x530] sm:$0xff]
    %v455 = vld [vmem:[#allocation5 + $0x538] sm:$0xff]
    %v456 = vld [vmem:[#allocation5 + $0x540] sm:$0xff]
    %v457 = vld [vmem:[#allocation5 + $0x548] sm:$0xff]
    %v458 = vld [vmem:[#allocation5 + $0x550] sm:$0xff]
    %v459 = vld [vmem:[#allocation5 + $0x558] sm:$0xff]
    %v460 = vld [vmem:[#allocation5 + $0x560] sm:$0xff]
    %v461 = vld [vmem:[#allocation5 + $0x568] sm:$0xff]
    %v462 = vld [vmem:[#allocation5 + $0x570] sm:$0xff]
    %v463 = vld [vmem:[#allocation5 + $0x578] sm:$0xff]
    %v464 = vld [vmem:[#allocation5 + $0x580] sm:$0xff]
    %v465 = vld [vmem:[#allocation5 + $0x588] sm:$0xff]
    %v466 = vld [vmem:[#allocation5 + $0x590] sm:$0xff]
    %v467 = vld [vmem:[#allocation5 + $0x598] sm:$0xff]
    %v468 = vld [vmem:[#allocation5 + $0x5a0] sm:$0xff]
    %v469 = vld [vmem:[#allocation5 + $0x5a8] sm:$0xff]
    %v470 = vld [vmem:[#allocation5 + $0x5b0] sm:$0xff]
    %v471 = vld [vmem:[#allocation5 + $0x5b8] sm:$0xff]
    %v472 = vld [vmem:[#allocation5 + $0x5c0] sm:$0xff]
    %v473 = vld [vmem:[#allocation5 + $0x5c8] sm:$0xff]
    %v474 = vld [vmem:[#allocation5 + $0x5d0] sm:$0xff]
    %v475 = vld [vmem:[#allocation5 + $0x5d8] sm:$0xff]
    %v476 = vld [vmem:[#allocation5 + $0x5e0] sm:$0xff]
    %v477 = vld [vmem:[#allocation5 + $0x5e8] sm:$0xff]
    %v478 = vld [vmem:[#allocation5 + $0x5f0] sm:$0xff]
    %v479 = vld [vmem:[#allocation5 + $0x5f8] sm:$0xff]
    %v480 = vld [vmem:[#allocation5 + $0x600] sm:$0xff]
    %v481 = vld [vmem:[#allocation5 + $0x608] sm:$0xff]
    %v482 = vld [vmem:[#allocation5 + $0x610] sm:$0xff]
    %v483 = vld [vmem:[#allocation5 + $0x618] sm:$0xff]
    %v484 = vld [vmem:[#allocation5 + $0x620] sm:$0xff]
    %v485 = vld [vmem:[#allocation5 + $0x628] sm:$0xff]
    %v486 = vld [vmem:[#allocation5 + $0x630] sm:$0xff]
    %v487 = vld [vmem:[#allocation5 + $0x638] sm:$0xff]
    %v488 = vld [vmem:[#allocation5 + $0x640] sm:$0xff]
    %v489 = vld [vmem:[#allocation5 + $0x648] sm:$0xff]
    %v490 = vld [vmem:[#allocation5 + $0x650] sm:$0xff]
    %v491 = vld [vmem:[#allocation5 + $0x658] sm:$0xff]
    %v492 = vld [vmem:[#allocation5 + $0x660] sm:$0xff]
    %v493 = vld [vmem:[#allocation5 + $0x668] sm:$0xff]
    %v494 = vld [vmem:[#allocation5 + $0x670] sm:$0xff]
    %v495 = vld [vmem:[#allocation5 + $0x678] sm:$0xff]
    %v496 = vld [vmem:[#allocation5 + $0x680] sm:$0xff]
    %v497 = vld [vmem:[#allocation5 + $0x688] sm:$0xff]
    %v498 = vld [vmem:[#allocation5 + $0x690] sm:$0xff]
    %v499 = vld [vmem:[#allocation5 + $0x698] sm:$0xff]
    %v500 = vld [vmem:[#allocation5 + $0x6a0] sm:$0xff]
    %v501 = vld [vmem:[#allocation5 + $0x6a8] sm:$0xff]
    %v502 = vld [vmem:[#allocation5 + $0x6b0] sm:$0xff]
    %v503 = vld [vmem:[#allocation5 + $0x6b8] sm:$0xff]
    %v504 = vld [vmem:[#allocation5 + $0x6c0] sm:$0xff]
    %v505 = vld [vmem:[#allocation5 + $0x6c8] sm:$0xff]
    %v506 = vld [vmem:[#allocation5 + $0x6d0] sm:$0xff]
    %v507 = vld [vmem:[#allocation5 + $0x6d8] sm:$0xff]
    %v508 = vld [vmem:[#allocation5 + $0x6e0] sm:$0xff]
    %v509 = vld [vmem:[#allocation5 + $0x6e8] sm:$0xff]
    %v510 = vld [vmem:[#allocation5 + $0x6f0] sm:$0xff]
    %v511 = vld [vmem:[#allocation5 + $0x6f8] sm:$0xff]
    %v512 = vld [vmem:[#allocation5 + $0x700] sm:$0xff]
    %v513 = vld [vmem:[#allocation5 + $0x708] sm:$0xff]
    %v514 = vld [vmem:[#allocation5 + $0x710] sm:$0xff]
    %v515 = vld [vmem:[#allocation5 + $0x718] sm:$0xff]
    %v516 = vld [vmem:[#allocation5 + $0x720] sm:$0xff]
    %v517 = vld [vmem:[#allocation5 + $0x728] sm:$0xff]
    %v518 = vld [vmem:[#allocation5 + $0x730] sm:$0xff]
    %v519 = vld [vmem:[#allocation5 + $0x738] sm:$0xff]
    %v520 = vld [vmem:[#allocation5 + $0x740] sm:$0xff]
    %v521 = vld [vmem:[#allocation5 + $0x748] sm:$0xff]
    %v522 = vld [vmem:[#allocation5 + $0x750] sm:$0xff]
    %v523 = vld [vmem:[#allocation5 + $0x758] sm:$0xff]
    %v524 = vld [vmem:[#allocation5 + $0x760] sm:$0xff]
    %v525 = vld [vmem:[#allocation5 + $0x768] sm:$0xff]
    %v526 = vld [vmem:[#allocation5 + $0x770] sm:$0xff]
    %v527 = vld [vmem:[#allocation5 + $0x778] sm:$0xff]
    %v528 = vld [vmem:[#allocation5 + $0x780] sm:$0xff]
    %v529 = vld [vmem:[#allocation5 + $0x788] sm:$0xff]
    %v530 = vld [vmem:[#allocation5 + $0x790] sm:$0xff]
    %v531 = vld [vmem:[#allocation5 + $0x798] sm:$0xff]
    %v532 = vld [vmem:[#allocation5 + $0x7a0] sm:$0xff]
    %v533 = vld [vmem:[#allocation5 + $0x7a8] sm:$0xff]
    %v534 = vld [vmem:[#allocation5 + $0x7b0] sm:$0xff]
    %v535 = vld [vmem:[#allocation5 + $0x7b8] sm:$0xff]
    %v536 = vld [vmem:[#allocation5 + $0x7c0] sm:$0xff]
    %v537 = vld [vmem:[#allocation5 + $0x7c8] sm:$0xff]
    %v538 = vld [vmem:[#allocation5 + $0x7d0] sm:$0xff]
    %v539 = vld [vmem:[#allocation5 + $0x7d8] sm:$0xff]
    %v540 = vld [vmem:[#allocation5 + $0x7e0] sm:$0xff]
    %v541 = vld [vmem:[#allocation5 + $0x7e8] sm:$0xff]
    %v542 = vld [vmem:[#allocation5 + $0x7f0] sm:$0xff]
    %v543 = vld [vmem:[#allocation5 + $0x7f8] sm:$0xff]
    %v544 = vld [vmem:[#allocation5 + $0x800] sm:$0xff]
    %v545 = vld [vmem:[#allocation5 + $0x808] sm:$0xff]
    %v546 = vld [vmem:[#allocation5 + $0x810] sm:$0xff]
    %v547 = vld [vmem:[#allocation5 + $0x818] sm:$0xff]
    %v548 = vld [vmem:[#allocation5 + $0x820] sm:$0xff]
    %v549 = vld [vmem:[#allocation5 + $0x828] sm:$0xff]
    %v550 = vld [vmem:[#allocation5 + $0x830] sm:$0xff]
    %v551 = vld [vmem:[#allocation5 + $0x838] sm:$0xff]
    %v552 = vld [vmem:[#allocation5 + $0x840] sm:$0xff]
    %v553 = vld [vmem:[#allocation5 + $0x848] sm:$0xff]
    %v554 = vld [vmem:[#allocation5 + $0x850] sm:$0xff]
    %v555 = vld [vmem:[#allocation5 + $0x858] sm:$0xff]
    %v556 = vld [vmem:[#allocation5 + $0x860] sm:$0xff]
    %v557 = vld [vmem:[#allocation5 + $0x868] sm:$0xff]
    %v558 = vld [vmem:[#allocation5 + $0x870] sm:$0xff]
    %v559 = vld [vmem:[#allocation5 + $0x878] sm:$0xff]
    %v560 = vld [vmem:[#allocation5 + $0x880] sm:$0xff]
    %v561 = vld [vmem:[#allocation5 + $0x888] sm:$0xff]
    %v562 = vld [vmem:[#allocation5 + $0x890] sm:$0xff]
    %v563 = vld [vmem:[#allocation5 + $0x898] sm:$0xff]
    %v564 = vld [vmem:[#allocation5 + $0x8a0] sm:$0xff]
    %v565 = vld [vmem:[#allocation5 + $0x8a8] sm:$0xff]
    %v566 = vld [vmem:[#allocation5 + $0x8b0] sm:$0xff]
    %v567 = vld [vmem:[#allocation5 + $0x8b8] sm:$0xff]
    %v568 = vld [vmem:[#allocation5 + $0x8c0] sm:$0xff]
    %v569 = vld [vmem:[#allocation5 + $0x8c8] sm:$0xff]
    %v570 = vld [vmem:[#allocation5 + $0x8d0] sm:$0xff]
    %v571 = vld [vmem:[#allocation5 + $0x8d8] sm:$0xff]
    %v572 = vld [vmem:[#allocation5 + $0x8e0] sm:$0xff]
    %v573 = vld [vmem:[#allocation5 + $0x8e8] sm:$0xff]
    %v574 = vld [vmem:[#allocation5 + $0x8f0] sm:$0xff]
    %v575 = vld [vmem:[#allocation5 + $0x8f8] sm:$0xff]
    %v576 = vld [vmem:[#allocation5 + $0x900] sm:$0xff]
    %v577 = vld [vmem:[#allocation5 + $0x908] sm:$0xff]
    %v578 = vld [vmem:[#allocation5 + $0x910] sm:$0xff]
    %v579 = vld [vmem:[#allocation5 + $0x918] sm:$0xff]
    %v580 = vld [vmem:[#allocation5 + $0x920] sm:$0xff]
    %v581 = vld [vmem:[#allocation5 + $0x928] sm:$0xff]
    %v582 = vld [vmem:[#allocation5 + $0x930] sm:$0xff]
    %v583 = vld [vmem:[#allocation5 + $0x938] sm:$0xff]
    %v584 = vld [vmem:[#allocation5 + $0x940] sm:$0xff]
    %v585 = vld [vmem:[#allocation5 + $0x948] sm:$0xff]
    %v586 = vld [vmem:[#allocation5 + $0x950] sm:$0xff]
    %v587 = vld [vmem:[#allocation5 + $0x958] sm:$0xff]
    %v588 = vld [vmem:[#allocation5 + $0x960] sm:$0xff]
    %v589 = vld [vmem:[#allocation5 + $0x968] sm:$0xff]
    %v590 = vld [vmem:[#allocation5 + $0x970] sm:$0xff]
    %v591 = vld [vmem:[#allocation5 + $0x978] sm:$0xff]
    %v592 = vld [vmem:[#allocation5 + $0x980] sm:$0xff]
    %v593 = vld [vmem:[#allocation5 + $0x988] sm:$0xff]
    %v594 = vld [vmem:[#allocation5 + $0x990] sm:$0xff]
    %v595 = vld [vmem:[#allocation5 + $0x998] sm:$0xff]
    %v596 = vld [vmem:[#allocation5 + $0x9a0] sm:$0xff]
    %v597 = vld [vmem:[#allocation5 + $0x9a8] sm:$0xff]
    %v598 = vld [vmem:[#allocation5 + $0x9b0] sm:$0xff]
    %v599 = vld [vmem:[#allocation5 + $0x9b8] sm:$0xff]
    %v600 = vld [vmem:[#allocation5 + $0x9c0] sm:$0xff]
    %v601 = vld [vmem:[#allocation5 + $0x9c8] sm:$0xff]
    %v602 = vld [vmem:[#allocation5 + $0x9d0] sm:$0xff]
    %v603 = vld [vmem:[#allocation5 + $0x9d8] sm:$0xff]
    %v604 = vld [vmem:[#allocation5 + $0x9e0] sm:$0xff]
    %v605 = vld [vmem:[#allocation5 + $0x9e8] sm:$0xff]
    %v606 = vld [vmem:[#allocation5 + $0x9f0] sm:$0xff]
    %v607 = vld [vmem:[#allocation5 + $0x9f8] sm:$0xff]
    %v608 = vld [vmem:[#allocation5 + $0xa00] sm:$0xff]
    %v609 = vld [vmem:[#allocation5 + $0xa08] sm:$0xff]
    %v610 = vld [vmem:[#allocation5 + $0xa10] sm:$0xff]
    %v611 = vld [vmem:[#allocation5 + $0xa18] sm:$0xff]
    %v612 = vld [vmem:[#allocation5 + $0xa20] sm:$0xff]
    %v613 = vld [vmem:[#allocation5 + $0xa28] sm:$0xff]
    %v614 = vld [vmem:[#allocation5 + $0xa30] sm:$0xff]
    %v615 = vld [vmem:[#allocation5 + $0xa38] sm:$0xff]
    %v616 = vld [vmem:[#allocation5 + $0xa40] sm:$0xff]
    %v617 = vld [vmem:[#allocation5 + $0xa48] sm:$0xff]
    %v618 = vld [vmem:[#allocation5 + $0xa50] sm:$0xff]
    %v619 = vld [vmem:[#allocation5 + $0xa58] sm:$0xff]
    %v620 = vld [vmem:[#allocation5 + $0xa60] sm:$0xff]
    %v621 = vld [vmem:[#allocation5 + $0xa68] sm:$0xff]
    %v622 = vld [vmem:[#allocation5 + $0xa70] sm:$0xff]
    %v623 = vld [vmem:[#allocation5 + $0xa78] sm:$0xff]
    %v624 = vld [vmem:[#allocation5 + $0xa80] sm:$0xff]
    %v625 = vld [vmem:[#allocation5 + $0xa88] sm:$0xff]
    %v626 = vld [vmem:[#allocation5 + $0xa90] sm:$0xff]
    %v627 = vld [vmem:[#allocation5 + $0xa98] sm:$0xff]
    %v628 = vld [vmem:[#allocation5 + $0xaa0] sm:$0xff]
    %v629 = vld [vmem:[#allocation5 + $0xaa8] sm:$0xff]
    %v630 = vld [vmem:[#allocation5 + $0xab0] sm:$0xff]
    %v631 = vld [vmem:[#allocation5 + $0xab8] sm:$0xff]
    %v632 = vld [vmem:[#allocation5 + $0xac0] sm:$0xff]
    %v633 = vld [vmem:[#allocation5 + $0xac8] sm:$0xff]
    %v634 = vld [vmem:[#allocation5 + $0xad0] sm:$0xff]
    %v635 = vld [vmem:[#allocation5 + $0xad8] sm:$0xff]
    %v636 = vld [vmem:[#allocation5 + $0xae0] sm:$0xff]
    %v637 = vld [vmem:[#allocation5 + $0xae8] sm:$0xff]
    %v638 = vld [vmem:[#allocation5 + $0xaf0] sm:$0xff]
    %v639 = vld [vmem:[#allocation5 + $0xaf8] sm:$0xff]
    %v640 = vld [vmem:[#allocation5 + $0xb00] sm:$0xff]
    %v641 = vld [vmem:[#allocation5 + $0xb08] sm:$0xff]
    %v642 = vld [vmem:[#allocation5 + $0xb10] sm:$0xff]
    %v643 = vld [vmem:[#allocation5 + $0xb18] sm:$0xff]
    %v644 = vld [vmem:[#allocation5 + $0xb20] sm:$0xff]
    %v645 = vld [vmem:[#allocation5 + $0xb28] sm:$0xff]
    %v646 = vld [vmem:[#allocation5 + $0xb30] sm:$0xff]
    %v647 = vld [vmem:[#allocation5 + $0xb38] sm:$0xff]
    %v648 = vld [vmem:[#allocation5 + $0xb40] sm:$0xff]
    %v649 = vld [vmem:[#allocation5 + $0xb48] sm:$0xff]
    %v650 = vld [vmem:[#allocation5 + $0xb50] sm:$0xff]
    %v651 = vld [vmem:[#allocation5 + $0xb58] sm:$0xff]
    %v652 = vld [vmem:[#allocation5 + $0xb60] sm:$0xff]
    %v653 = vld [vmem:[#allocation5 + $0xb68] sm:$0xff]
    %v654 = vld [vmem:[#allocation5 + $0xb70] sm:$0xff]
    %v655 = vld [vmem:[#allocation5 + $0xb78] sm:$0xff]
    %v656 = vld [vmem:[#allocation5 + $0xb80] sm:$0xff]
    %v657 = vld [vmem:[#allocation5 + $0xb88] sm:$0xff]
    %v658 = vld [vmem:[#allocation5 + $0xb90] sm:$0xff]
    %v659 = vld [vmem:[#allocation5 + $0xb98] sm:$0xff]
    %v660 = vld [vmem:[#allocation5 + $0xba0] sm:$0xff]
    %v661 = vld [vmem:[#allocation5 + $0xba8] sm:$0xff]
    %v662 = vld [vmem:[#allocation5 + $0xbb0] sm:$0xff]
    %v663 = vld [vmem:[#allocation5 + $0xbb8] sm:$0xff]
    %v664 = vld [vmem:[#allocation5 + $0xbc0] sm:$0xff]
    %v665 = vld [vmem:[#allocation5 + $0xbc8] sm:$0xff]
    %v666 = vld [vmem:[#allocation5 + $0xbd0] sm:$0xff]
    %v667 = vld [vmem:[#allocation5 + $0xbd8] sm:$0xff]
    %v668 = vld [vmem:[#allocation5 + $0xbe0] sm:$0xff]
    %v669 = vld [vmem:[#allocation5 + $0xbe8] sm:$0xff]
    %v670 = vld [vmem:[#allocation5 + $0xbf0] sm:$0xff]
    %v671 = vld [vmem:[#allocation5 + $0xbf8] sm:$0xff]
    %v672 = vld [vmem:[#allocation5 + $0xc00] sm:$0xff]
    %v673 = vld [vmem:[#allocation5 + $0xc08] sm:$0xff]
    %v674 = vld [vmem:[#allocation5 + $0xc10] sm:$0xff]
    %v675 = vld [vmem:[#allocation5 + $0xc18] sm:$0xff]
    %v676 = vld [vmem:[#allocation5 + $0xc20] sm:$0xff]
    %v677 = vld [vmem:[#allocation5 + $0xc28] sm:$0xff]
    %v678 = vld [vmem:[#allocation5 + $0xc30] sm:$0xff]
    %v679 = vld [vmem:[#allocation5 + $0xc38] sm:$0xff]
    %v680 = vld [vmem:[#allocation5 + $0xc40] sm:$0xff]
    %v681 = vld [vmem:[#allocation5 + $0xc48] sm:$0xff]
    %v682 = vld [vmem:[#allocation5 + $0xc50] sm:$0xff]
    %v683 = vld [vmem:[#allocation5 + $0xc58] sm:$0xff]
    %v684 = vld [vmem:[#allocation5 + $0xc60] sm:$0xff]
    %v685 = vld [vmem:[#allocation5 + $0xc68] sm:$0xff]
    %v686 = vld [vmem:[#allocation5 + $0xc70] sm:$0xff]
    %v687 = vld [vmem:[#allocation5 + $0xc78] sm:$0xff]
    %v688 = vld [vmem:[#allocation5 + $0xc80] sm:$0xff]
    %v689 = vld [vmem:[#allocation5 + $0xc88] sm:$0xff]
    %v690 = vld [vmem:[#allocation5 + $0xc90] sm:$0xff]
    %v691 = vld [vmem:[#allocation5 + $0xc98] sm:$0xff]
    %v692 = vld [vmem:[#allocation5 + $0xca0] sm:$0xff]
    %v693 = vld [vmem:[#allocation5 + $0xca8] sm:$0xff]
    %v694 = vld [vmem:[#allocation5 + $0xcb0] sm:$0xff]
    %v695 = vld [vmem:[#allocation5 + $0xcb8] sm:$0xff]
    %v696 = vld [vmem:[#allocation5 + $0xcc0] sm:$0xff]
    %v697 = vld [vmem:[#allocation5 + $0xcc8] sm:$0xff]
    %v698 = vld [vmem:[#allocation5 + $0xcd0] sm:$0xff]
    %v699 = vld [vmem:[#allocation5 + $0xcd8] sm:$0xff]
    %v700 = vld [vmem:[#allocation5 + $0xce0] sm:$0xff]
    %v701 = vld [vmem:[#allocation5 + $0xce8] sm:$0xff]
    %v702 = vld [vmem:[#allocation5 + $0xcf0] sm:$0xff]
    %v703 = vld [vmem:[#allocation5 + $0xcf8] sm:$0xff]
    %v704 = vld [vmem:[#allocation5 + $0xd00] sm:$0xff]
    %v705 = vld [vmem:[#allocation5 + $0xd08] sm:$0xff]
    %v706 = vld [vmem:[#allocation5 + $0xd10] sm:$0xff]
    %v707 = vld [vmem:[#allocation5 + $0xd18] sm:$0xff]
    %v708 = vld [vmem:[#allocation5 + $0xd20] sm:$0xff]
    %v709 = vld [vmem:[#allocation5 + $0xd28] sm:$0xff]
    %v710 = vld [vmem:[#allocation5 + $0xd30] sm:$0xff]
    %v711 = vld [vmem:[#allocation5 + $0xd38] sm:$0xff]
    %v712 = vld [vmem:[#allocation5 + $0xd40] sm:$0xff]
    %v713 = vld [vmem:[#allocation5 + $0xd48] sm:$0xff]
    %v714 = vld [vmem:[#allocation5 + $0xd50] sm:$0xff]
    %v715 = vld [vmem:[#allocation5 + $0xd58] sm:$0xff]
    %v716 = vld [vmem:[#allocation5 + $0xd60] sm:$0xff]
    %v717 = vld [vmem:[#allocation5 + $0xd68] sm:$0xff]
    %v718 = vld [vmem:[#allocation5 + $0xd70] sm:$0xff]
    %v719 = vld [vmem:[#allocation5 + $0xd78] sm:$0xff]
    %v720 = vld [vmem:[#allocation5 + $0xd80] sm:$0xff]
    %v721 = vld [vmem:[#allocation5 + $0xd88] sm:$0xff]
    %v722 = vld [vmem:[#allocation5 + $0xd90] sm:$0xff]
    %v723 = vld [vmem:[#allocation5 + $0xd98] sm:$0xff]
    %v724 = vld [vmem:[#allocation5 + $0xda0] sm:$0xff]
    %v725 = vld [vmem:[#allocation5 + $0xda8] sm:$0xff]
    %v726 = vld [vmem:[#allocation5 + $0xdb0] sm:$0xff]
    %v727 = vld [vmem:[#allocation5 + $0xdb8] sm:$0xff]
    %v728 = vld [vmem:[#allocation5 + $0xdc0] sm:$0xff]
    %v729 = vld [vmem:[#allocation5 + $0xdc8] sm:$0xff]
    %v730 = vld [vmem:[#allocation5 + $0xdd0] sm:$0xff]
    %v731 = vld [vmem:[#allocation5 + $0xdd8] sm:$0xff]
    %v732 = vld [vmem:[#allocation5 + $0xde0] sm:$0xff]
    %v733 = vld [vmem:[#allocation5 + $0xde8] sm:$0xff]
    %v734 = vld [vmem:[#allocation5 + $0xdf0] sm:$0xff]
    %v735 = vld [vmem:[#allocation5 + $0xdf8] sm:$0xff]
    %v736 = vld [vmem:[#allocation5 + $0xe00] sm:$0xff]
    %v737 = vld [vmem:[#allocation5 + $0xe08] sm:$0xff]
    %v738 = vld [vmem:[#allocation5 + $0xe10] sm:$0xff]
    %v739 = vld [vmem:[#allocation5 + $0xe18] sm:$0xff]
    %v740 = vld [vmem:[#allocation5 + $0xe20] sm:$0xff]
    %v741 = vld [vmem:[#allocation5 + $0xe28] sm:$0xff]
    %v742 = vld [vmem:[#allocation5 + $0xe30] sm:$0xff]
    %v743 = vld [vmem:[#allocation5 + $0xe38] sm:$0xff]
    %v744 = vld [vmem:[#allocation5 + $0xe40] sm:$0xff]
    %v745 = vld [vmem:[#allocation5 + $0xe48] sm:$0xff]
    %v746 = vld [vmem:[#allocation5 + $0xe50] sm:$0xff]
    %v747 = vld [vmem:[#allocation5 + $0xe58] sm:$0xff]
    %v748 = vld [vmem:[#allocation5 + $0xe60] sm:$0xff]
    %v749 = vld [vmem:[#allocation5 + $0xe68] sm:$0xff]
    %v750 = vld [vmem:[#allocation5 + $0xe70] sm:$0xff]
    %v751 = vld [vmem:[#allocation5 + $0xe78] sm:$0xff]
    %v752 = vld [vmem:[#allocation5 + $0xe80] sm:$0xff]
    %v753 = vld [vmem:[#allocation5 + $0xe88] sm:$0xff]
    %v754 = vld [vmem:[#allocation5 + $0xe90] sm:$0xff]
    %v755 = vld [vmem:[#allocation5 + $0xe98] sm:$0xff]
    %v756 = vld [vmem:[#allocation5 + $0xea0] sm:$0xff]
    %v757 = vld [vmem:[#allocation5 + $0xea8] sm:$0xff]
    %v758 = vld [vmem:[#allocation5 + $0xeb0] sm:$0xff]
    %v759 = vld [vmem:[#allocation5 + $0xeb8] sm:$0xff]
    %v760 = vld [vmem:[#allocation5 + $0xec0] sm:$0xff]
    %v761 = vld [vmem:[#allocation5 + $0xec8] sm:$0xff]
    %v762 = vld [vmem:[#allocation5 + $0xed0] sm:$0xff]
    %v763 = vld [vmem:[#allocation5 + $0xed8] sm:$0xff]
    %v764 = vld [vmem:[#allocation5 + $0xee0] sm:$0xff]
    %v765 = vld [vmem:[#allocation5 + $0xee8] sm:$0xff]
    %v766 = vld [vmem:[#allocation5 + $0xef0] sm:$0xff]
    %v767 = vld [vmem:[#allocation5 + $0xef8] sm:$0xff]
    %v768 = vld [vmem:[#allocation5 + $0xf00] sm:$0xff]
    %v769 = vld [vmem:[#allocation5 + $0xf08] sm:$0xff]
    %v770 = vld [vmem:[#allocation5 + $0xf10] sm:$0xff]
    %v771 = vld [vmem:[#allocation5 + $0xf18] sm:$0xff]
    %v772 = vld [vmem:[#allocation5 + $0xf20] sm:$0xff]
    %v773 = vld [vmem:[#allocation5 + $0xf28] sm:$0xff]
    %v774 = vld [vmem:[#allocation5 + $0xf30] sm:$0xff]
    %v775 = vld [vmem:[#allocation5 + $0xf38] sm:$0xff]
    %v776 = vld [vmem:[#allocation5 + $0xf40] sm:$0xff]
    %v777 = vld [vmem:[#allocation5 + $0xf48] sm:$0xff]
    %v778 = vld [vmem:[#allocation5 + $0xf50] sm:$0xff]
    %v779 = vld [vmem:[#allocation5 + $0xf58] sm:$0xff]
    %v780 = vld [vmem:[#allocation5 + $0xf60] sm:$0xff]
    %v781 = vld [vmem:[#allocation5 + $0xf68] sm:$0xff]
    %v782 = vld [vmem:[#allocation5 + $0xf70] sm:$0xff]
    %v783 = vld [vmem:[#allocation5 + $0xf78] sm:$0xff]
    %v784 = vld [vmem:[#allocation5 + $0xf80] sm:$0xff]
    %v785 = vld [vmem:[#allocation5 + $0xf88] sm:$0xff]
    %v786 = vld [vmem:[#allocation5 + $0xf90] sm:$0xff]
    %v787 = vld [vmem:[#allocation5 + $0xf98] sm:$0xff]
    %v788 = vld [vmem:[#allocation5 + $0xfa0] sm:$0xff]
    %v789 = vld [vmem:[#allocation5 + $0xfa8] sm:$0xff]
    %v790 = vld [vmem:[#allocation5 + $0xfb0] sm:$0xff]
    %v791 = vld [vmem:[#allocation5 + $0xfb8] sm:$0xff]
    %v792 = vld [vmem:[#allocation5 + $0xfc0] sm:$0xff]
    %v793 = vld [vmem:[#allocation5 + $0xfc8] sm:$0xff]
    %v794 = vld [vmem:[#allocation5 + $0xfd0] sm:$0xff]
    %v795 = vld [vmem:[#allocation5 + $0xfd8] sm:$0xff]
    %v796 = vld [vmem:[#allocation5 + $0xfe0] sm:$0xff]
    %v797 = vld [vmem:[#allocation5 + $0xfe8] sm:$0xff]
    %v798 = vld [vmem:[#allocation5 + $0xff0] sm:$0xff]
    %v799 = vld [vmem:[#allocation5 + $0xff8] sm:$0xff]
    %v800 = vld [vmem:[#allocation7] sm:$0xff]
    %v801 = vpack.c.bf16 %v280, %v272
    %v802 = vpack.c.bf16 %v281, %v273
    %v803 = vpack.c.bf16 %v282, %v274
    %v804 = vpack.c.bf16 %v283, %v275
    %v805 = vpack.c.bf16 %v284, %v276
    %v806 = vpack.c.bf16 %v285, %v277
    %v807 = vpack.c.bf16 %v286, %v278
    %v808 = vpack.c.bf16 %v287, %v279
    %v810 = vlaneseq
    %v811 = vshrl.u32 %v810, 7
    %v812 = vsub.s32 0, %v811
    %v813 = vrot.slane %v800, %v812
    %v814 = vlaneseq
    %v815 = vshrl.u32 %v814, 7
    %v816 = vsub.s32 1, %v815
    %v817 = vrot.slane %v800, %v816
    %v818 = vlaneseq
    %v819 = vshrl.u32 %v818, 7
    %v820 = vsub.s32 2, %v819
    %v821 = vrot.slane %v800, %v820
    %v822 = vlaneseq
    %v823 = vshrl.u32 %v822, 7
    %v824 = vsub.s32 3, %v823
    %v825 = vrot.slane %v800, %v824
    %v826 = vlaneseq
    %v827 = vshrl.u32 %v826, 7
    %v828 = vsub.s32 4, %v827
    %v829 = vrot.slane %v800, %v828
    %v830 = vlaneseq
    %v831 = vshrl.u32 %v830, 7
    %v832 = vsub.s32 5, %v831
    %v833 = vrot.slane %v800, %v832
    %v834 = vlaneseq
    %v835 = vshrl.u32 %v834, 7
    %v836 = vsub.s32 6, %v835
    %v837 = vrot.slane %v800, %v836
    %v838 = vlaneseq
    %v839 = vshrl.u32 %v838, 7
    %v840 = vsub.s32 7, %v839
    %v841 = vrot.slane %v800, %v840
    %v1362 = vunpack.c.l.b16 %v288
    %v1363 = vunpack.c.h.b16 %v288
    %v1364 = vunpack.c.l.b16 %v289
    %v1365 = vunpack.c.h.b16 %v289
    %v1366 = vunpack.c.l.b16 %v290
    %v1367 = vunpack.c.h.b16 %v290
    %v1368 = vunpack.c.l.b16 %v291
    %v1369 = vunpack.c.h.b16 %v291
    %v1370 = vunpack.c.l.b16 %v292
    %v1371 = vunpack.c.h.b16 %v292
    %v1372 = vunpack.c.l.b16 %v293
    %v1373 = vunpack.c.h.b16 %v293
    %v1374 = vunpack.c.l.b16 %v294
    %v1375 = vunpack.c.h.b16 %v294
    %v1376 = vunpack.c.l.b16 %v295
    %v1377 = vunpack.c.h.b16 %v295
    %v1378 = vunpack.c.l.b16 %v296
    %v1379 = vunpack.c.h.b16 %v296
    %v1380 = vunpack.c.l.b16 %v297
    %v1381 = vunpack.c.h.b16 %v297
    %v1382 = vunpack.c.l.b16 %v298
    %v1383 = vunpack.c.h.b16 %v298
    %v1384 = vunpack.c.l.b16 %v299
    %v1385 = vunpack.c.h.b16 %v299
    %v1386 = vunpack.c.l.b16 %v300
    %v1387 = vunpack.c.h.b16 %v300
    %v1388 = vunpack.c.l.b16 %v301
    %v1389 = vunpack.c.h.b16 %v301
    %v1390 = vunpack.c.l.b16 %v302
    %v1391 = vunpack.c.h.b16 %v302
    %v1392 = vunpack.c.l.b16 %v303
    %v1393 = vunpack.c.h.b16 %v303
    %v1394 = vunpack.c.l.b16 %v304
    %v1395 = vunpack.c.h.b16 %v304
    %v1396 = vunpack.c.l.b16 %v305
    %v1397 = vunpack.c.h.b16 %v305
    %v1398 = vunpack.c.l.b16 %v306
    %v1399 = vunpack.c.h.b16 %v306
    %v1400 = vunpack.c.l.b16 %v307
    %v1401 = vunpack.c.h.b16 %v307
    %v1402 = vunpack.c.l.b16 %v308
    %v1403 = vunpack.c.h.b16 %v308
    %v1404 = vunpack.c.l.b16 %v309
    %v1405 = vunpack.c.h.b16 %v309
    %v1406 = vunpack.c.l.b16 %v310
    %v1407 = vunpack.c.h.b16 %v310
    %v1408 = vunpack.c.l.b16 %v311
    %v1409 = vunpack.c.h.b16 %v311
    %v1410 = vunpack.c.l.b16 %v312
    %v1411 = vunpack.c.h.b16 %v312
    %v1412 = vunpack.c.l.b16 %v313
    %v1413 = vunpack.c.h.b16 %v313
    %v1414 = vunpack.c.l.b16 %v314
    %v1415 = vunpack.c.h.b16 %v314
    %v1416 = vunpack.c.l.b16 %v315
    %v1417 = vunpack.c.h.b16 %v315
    %v1418 = vunpack.c.l.b16 %v316
    %v1419 = vunpack.c.h.b16 %v316
    %v1420 = vunpack.c.l.b16 %v317
    %v1421 = vunpack.c.h.b16 %v317
    %v1422 = vunpack.c.l.b16 %v318
    %v1423 = vunpack.c.h.b16 %v318
    %v1424 = vunpack.c.l.b16 %v319
    %v1425 = vunpack.c.h.b16 %v319
    %v1426 = vunpack.c.l.b16 %v320
    %v1427 = vunpack.c.h.b16 %v320
    %v1428 = vunpack.c.l.b16 %v321
    %v1429 = vunpack.c.h.b16 %v321
    %v1430 = vunpack.c.l.b16 %v322
    %v1431 = vunpack.c.h.b16 %v322
    %v1432 = vunpack.c.l.b16 %v323
    %v1433 = vunpack.c.h.b16 %v323
    %v1434 = vunpack.c.l.b16 %v324
    %v1435 = vunpack.c.h.b16 %v324
    %v1436 = vunpack.c.l.b16 %v325
    %v1437 = vunpack.c.h.b16 %v325
    %v1438 = vunpack.c.l.b16 %v326
    %v1439 = vunpack.c.h.b16 %v326
    %v1440 = vunpack.c.l.b16 %v327
    %v1441 = vunpack.c.h.b16 %v327
    %v1442 = vunpack.c.l.b16 %v328
    %v1443 = vunpack.c.h.b16 %v328
    %v1444 = vunpack.c.l.b16 %v329
    %v1445 = vunpack.c.h.b16 %v329
    %v1446 = vunpack.c.l.b16 %v330
    %v1447 = vunpack.c.h.b16 %v330
    %v1448 = vunpack.c.l.b16 %v331
    %v1449 = vunpack.c.h.b16 %v331
    %v1450 = vunpack.c.l.b16 %v332
    %v1451 = vunpack.c.h.b16 %v332
    %v1452 = vunpack.c.l.b16 %v333
    %v1453 = vunpack.c.h.b16 %v333
    %v1454 = vunpack.c.l.b16 %v334
    %v1455 = vunpack.c.h.b16 %v334
    %v1456 = vunpack.c.l.b16 %v335
    %v1457 = vunpack.c.h.b16 %v335
    %v1458 = vunpack.c.l.b16 %v336
    %v1459 = vunpack.c.h.b16 %v336
    %v1460 = vunpack.c.l.b16 %v337
    %v1461 = vunpack.c.h.b16 %v337
    %v1462 = vunpack.c.l.b16 %v338
    %v1463 = vunpack.c.h.b16 %v338
    %v1464 = vunpack.c.l.b16 %v339
    %v1465 = vunpack.c.h.b16 %v339
    %v1466 = vunpack.c.l.b16 %v340
    %v1467 = vunpack.c.h.b16 %v340
    %v1468 = vunpack.c.l.b16 %v341
    %v1469 = vunpack.c.h.b16 %v341
    %v1470 = vunpack.c.l.b16 %v342
    %v1471 = vunpack.c.h.b16 %v342
    %v1472 = vunpack.c.l.b16 %v343
    %v1473 = vunpack.c.h.b16 %v343
    %v1474 = vunpack.c.l.b16 %v344
    %v1475 = vunpack.c.h.b16 %v344
    %v1476 = vunpack.c.l.b16 %v345
    %v1477 = vunpack.c.h.b16 %v345
    %v1478 = vunpack.c.l.b16 %v346
    %v1479 = vunpack.c.h.b16 %v346
    %v1480 = vunpack.c.l.b16 %v347
    %v1481 = vunpack.c.h.b16 %v347
    %v1482 = vunpack.c.l.b16 %v348
    %v1483 = vunpack.c.h.b16 %v348
    %v1484 = vunpack.c.l.b16 %v349
    %v1485 = vunpack.c.h.b16 %v349
    %v1486 = vunpack.c.l.b16 %v350
    %v1487 = vunpack.c.h.b16 %v350
    %v1488 = vunpack.c.l.b16 %v351
    %v1489 = vunpack.c.h.b16 %v351
    %v1490 = vunpack.c.l.b16 %v352
    %v1491 = vunpack.c.h.b16 %v352
    %v1492 = vunpack.c.l.b16 %v353
    %v1493 = vunpack.c.h.b16 %v353
    %v1494 = vunpack.c.l.b16 %v354
    %v1495 = vunpack.c.h.b16 %v354
    %v1496 = vunpack.c.l.b16 %v355
    %v1497 = vunpack.c.h.b16 %v355
    %v1498 = vunpack.c.l.b16 %v356
    %v1499 = vunpack.c.h.b16 %v356
    %v1500 = vunpack.c.l.b16 %v357
    %v1501 = vunpack.c.h.b16 %v357
    %v1502 = vunpack.c.l.b16 %v358
    %v1503 = vunpack.c.h.b16 %v358
    %v1504 = vunpack.c.l.b16 %v359
    %v1505 = vunpack.c.h.b16 %v359
    %v1506 = vunpack.c.l.b16 %v360
    %v1507 = vunpack.c.h.b16 %v360
    %v1508 = vunpack.c.l.b16 %v361
    %v1509 = vunpack.c.h.b16 %v361
    %v1510 = vunpack.c.l.b16 %v362
    %v1511 = vunpack.c.h.b16 %v362
    %v1512 = vunpack.c.l.b16 %v363
    %v1513 = vunpack.c.h.b16 %v363
    %v1514 = vunpack.c.l.b16 %v364
    %v1515 = vunpack.c.h.b16 %v364
    %v1516 = vunpack.c.l.b16 %v365
    %v1517 = vunpack.c.h.b16 %v365
    %v1518 = vunpack.c.l.b16 %v366
    %v1519 = vunpack.c.h.b16 %v366
    %v1520 = vunpack.c.l.b16 %v367
    %v1521 = vunpack.c.h.b16 %v367
    %v1522 = vunpack.c.l.b16 %v368
    %v1523 = vunpack.c.h.b16 %v368
    %v1524 = vunpack.c.l.b16 %v369
    %v1525 = vunpack.c.h.b16 %v369
    %v1526 = vunpack.c.l.b16 %v370
    %v1527 = vunpack.c.h.b16 %v370
    %v1528 = vunpack.c.l.b16 %v371
    %v1529 = vunpack.c.h.b16 %v371
    %v1530 = vunpack.c.l.b16 %v372
    %v1531 = vunpack.c.h.b16 %v372
    %v1532 = vunpack.c.l.b16 %v373
    %v1533 = vunpack.c.h.b16 %v373
    %v1534 = vunpack.c.l.b16 %v374
    %v1535 = vunpack.c.h.b16 %v374
    %v1536 = vunpack.c.l.b16 %v375
    %v1537 = vunpack.c.h.b16 %v375
    %v1538 = vunpack.c.l.b16 %v376
    %v1539 = vunpack.c.h.b16 %v376
    %v1540 = vunpack.c.l.b16 %v377
    %v1541 = vunpack.c.h.b16 %v377
    %v1542 = vunpack.c.l.b16 %v378
    %v1543 = vunpack.c.h.b16 %v378
    %v1544 = vunpack.c.l.b16 %v379
    %v1545 = vunpack.c.h.b16 %v379
    %v1546 = vunpack.c.l.b16 %v380
    %v1547 = vunpack.c.h.b16 %v380
    %v1548 = vunpack.c.l.b16 %v381
    %v1549 = vunpack.c.h.b16 %v381
    %v1550 = vunpack.c.l.b16 %v382
    %v1551 = vunpack.c.h.b16 %v382
    %v1552 = vunpack.c.l.b16 %v383
    %v1553 = vunpack.c.h.b16 %v383
    %v1554 = vunpack.c.l.b16 %v384
    %v1555 = vunpack.c.h.b16 %v384
    %v1556 = vunpack.c.l.b16 %v385
    %v1557 = vunpack.c.h.b16 %v385
    %v1558 = vunpack.c.l.b16 %v386
    %v1559 = vunpack.c.h.b16 %v386
    %v1560 = vunpack.c.l.b16 %v387
    %v1561 = vunpack.c.h.b16 %v387
    %v1562 = vunpack.c.l.b16 %v388
    %v1563 = vunpack.c.h.b16 %v388
    %v1564 = vunpack.c.l.b16 %v389
    %v1565 = vunpack.c.h.b16 %v389
    %v1566 = vunpack.c.l.b16 %v390
    %v1567 = vunpack.c.h.b16 %v390
    %v1568 = vunpack.c.l.b16 %v391
    %v1569 = vunpack.c.h.b16 %v391
    %v1570 = vunpack.c.l.b16 %v392
    %v1571 = vunpack.c.h.b16 %v392
    %v1572 = vunpack.c.l.b16 %v393
    %v1573 = vunpack.c.h.b16 %v393
    %v1574 = vunpack.c.l.b16 %v394
    %v1575 = vunpack.c.h.b16 %v394
    %v1576 = vunpack.c.l.b16 %v395
    %v1577 = vunpack.c.h.b16 %v395
    %v1578 = vunpack.c.l.b16 %v396
    %v1579 = vunpack.c.h.b16 %v396
    %v1580 = vunpack.c.l.b16 %v397
    %v1581 = vunpack.c.h.b16 %v397
    %v1582 = vunpack.c.l.b16 %v398
    %v1583 = vunpack.c.h.b16 %v398
    %v1584 = vunpack.c.l.b16 %v399
    %v1585 = vunpack.c.h.b16 %v399
    %v1586 = vunpack.c.l.b16 %v400
    %v1587 = vunpack.c.h.b16 %v400
    %v1588 = vunpack.c.l.b16 %v401
    %v1589 = vunpack.c.h.b16 %v401
    %v1590 = vunpack.c.l.b16 %v402
    %v1591 = vunpack.c.h.b16 %v402
    %v1592 = vunpack.c.l.b16 %v403
    %v1593 = vunpack.c.h.b16 %v403
    %v1594 = vunpack.c.l.b16 %v404
    %v1595 = vunpack.c.h.b16 %v404
    %v1596 = vunpack.c.l.b16 %v405
    %v1597 = vunpack.c.h.b16 %v405
    %v1598 = vunpack.c.l.b16 %v406
    %v1599 = vunpack.c.h.b16 %v406
    %v1600 = vunpack.c.l.b16 %v407
    %v1601 = vunpack.c.h.b16 %v407
    %v1602 = vunpack.c.l.b16 %v408
    %v1603 = vunpack.c.h.b16 %v408
    %v1604 = vunpack.c.l.b16 %v409
    %v1605 = vunpack.c.h.b16 %v409
    %v1606 = vunpack.c.l.b16 %v410
    %v1607 = vunpack.c.h.b16 %v410
    %v1608 = vunpack.c.l.b16 %v411
    %v1609 = vunpack.c.h.b16 %v411
    %v1610 = vunpack.c.l.b16 %v412
    %v1611 = vunpack.c.h.b16 %v412
    %v1612 = vunpack.c.l.b16 %v413
    %v1613 = vunpack.c.h.b16 %v413
    %v1614 = vunpack.c.l.b16 %v414
    %v1615 = vunpack.c.h.b16 %v414
    %v1616 = vunpack.c.l.b16 %v415
    %v1617 = vunpack.c.h.b16 %v415
    %v1618 = vunpack.c.l.b16 %v416
    %v1619 = vunpack.c.h.b16 %v416
    %v1620 = vunpack.c.l.b16 %v417
    %v1621 = vunpack.c.h.b16 %v417
    %v1622 = vunpack.c.l.b16 %v418
    %v1623 = vunpack.c.h.b16 %v418
    %v1624 = vunpack.c.l.b16 %v419
    %v1625 = vunpack.c.h.b16 %v419
    %v1626 = vunpack.c.l.b16 %v420
    %v1627 = vunpack.c.h.b16 %v420
    %v1628 = vunpack.c.l.b16 %v421
    %v1629 = vunpack.c.h.b16 %v421
    %v1630 = vunpack.c.l.b16 %v422
    %v1631 = vunpack.c.h.b16 %v422
    %v1632 = vunpack.c.l.b16 %v423
    %v1633 = vunpack.c.h.b16 %v423
    %v1634 = vunpack.c.l.b16 %v424
    %v1635 = vunpack.c.h.b16 %v424
    %v1636 = vunpack.c.l.b16 %v425
    %v1637 = vunpack.c.h.b16 %v425
    %v1638 = vunpack.c.l.b16 %v426
    %v1639 = vunpack.c.h.b16 %v426
    %v1640 = vunpack.c.l.b16 %v427
    %v1641 = vunpack.c.h.b16 %v427
    %v1642 = vunpack.c.l.b16 %v428
    %v1643 = vunpack.c.h.b16 %v428
    %v1644 = vunpack.c.l.b16 %v429
    %v1645 = vunpack.c.h.b16 %v429
    %v1646 = vunpack.c.l.b16 %v430
    %v1647 = vunpack.c.h.b16 %v430
    %v1648 = vunpack.c.l.b16 %v431
    %v1649 = vunpack.c.h.b16 %v431
    %v1650 = vunpack.c.l.b16 %v432
    %v1651 = vunpack.c.h.b16 %v432
    %v1652 = vunpack.c.l.b16 %v433
    %v1653 = vunpack.c.h.b16 %v433
    %v1654 = vunpack.c.l.b16 %v434
    %v1655 = vunpack.c.h.b16 %v434
    %v1656 = vunpack.c.l.b16 %v435
    %v1657 = vunpack.c.h.b16 %v435
    %v1658 = vunpack.c.l.b16 %v436
    %v1659 = vunpack.c.h.b16 %v436
    %v1660 = vunpack.c.l.b16 %v437
    %v1661 = vunpack.c.h.b16 %v437
    %v1662 = vunpack.c.l.b16 %v438
    %v1663 = vunpack.c.h.b16 %v438
    %v1664 = vunpack.c.l.b16 %v439
    %v1665 = vunpack.c.h.b16 %v439
    %v1666 = vunpack.c.l.b16 %v440
    %v1667 = vunpack.c.h.b16 %v440
    %v1668 = vunpack.c.l.b16 %v441
    %v1669 = vunpack.c.h.b16 %v441
    %v1670 = vunpack.c.l.b16 %v442
    %v1671 = vunpack.c.h.b16 %v442
    %v1672 = vunpack.c.l.b16 %v443
    %v1673 = vunpack.c.h.b16 %v443
    %v1674 = vunpack.c.l.b16 %v444
    %v1675 = vunpack.c.h.b16 %v444
    %v1676 = vunpack.c.l.b16 %v445
    %v1677 = vunpack.c.h.b16 %v445
    %v1678 = vunpack.c.l.b16 %v446
    %v1679 = vunpack.c.h.b16 %v446
    %v1680 = vunpack.c.l.b16 %v447
    %v1681 = vunpack.c.h.b16 %v447
    %v1682 = vunpack.c.l.b16 %v448
    %v1683 = vunpack.c.h.b16 %v448
    %v1684 = vunpack.c.l.b16 %v449
    %v1685 = vunpack.c.h.b16 %v449
    %v1686 = vunpack.c.l.b16 %v450
    %v1687 = vunpack.c.h.b16 %v450
    %v1688 = vunpack.c.l.b16 %v451
    %v1689 = vunpack.c.h.b16 %v451
    %v1690 = vunpack.c.l.b16 %v452
    %v1691 = vunpack.c.h.b16 %v452
    %v1692 = vunpack.c.l.b16 %v453
    %v1693 = vunpack.c.h.b16 %v453
    %v1694 = vunpack.c.l.b16 %v454
    %v1695 = vunpack.c.h.b16 %v454
    %v1696 = vunpack.c.l.b16 %v455
    %v1697 = vunpack.c.h.b16 %v455
    %v1698 = vunpack.c.l.b16 %v456
    %v1699 = vunpack.c.h.b16 %v456
    %v1700 = vunpack.c.l.b16 %v457
    %v1701 = vunpack.c.h.b16 %v457
    %v1702 = vunpack.c.l.b16 %v458
    %v1703 = vunpack.c.h.b16 %v458
    %v1704 = vunpack.c.l.b16 %v459
    %v1705 = vunpack.c.h.b16 %v459
    %v1706 = vunpack.c.l.b16 %v460
    %v1707 = vunpack.c.h.b16 %v460
    %v1708 = vunpack.c.l.b16 %v461
    %v1709 = vunpack.c.h.b16 %v461
    %v1710 = vunpack.c.l.b16 %v462
    %v1711 = vunpack.c.h.b16 %v462
    %v1712 = vunpack.c.l.b16 %v463
    %v1713 = vunpack.c.h.b16 %v463
    %v1714 = vunpack.c.l.b16 %v464
    %v1715 = vunpack.c.h.b16 %v464
    %v1716 = vunpack.c.l.b16 %v465
    %v1717 = vunpack.c.h.b16 %v465
    %v1718 = vunpack.c.l.b16 %v466
    %v1719 = vunpack.c.h.b16 %v466
    %v1720 = vunpack.c.l.b16 %v467
    %v1721 = vunpack.c.h.b16 %v467
    %v1722 = vunpack.c.l.b16 %v468
    %v1723 = vunpack.c.h.b16 %v468
    %v1724 = vunpack.c.l.b16 %v469
    %v1725 = vunpack.c.h.b16 %v469
    %v1726 = vunpack.c.l.b16 %v470
    %v1727 = vunpack.c.h.b16 %v470
    %v1728 = vunpack.c.l.b16 %v471
    %v1729 = vunpack.c.h.b16 %v471
    %v1730 = vunpack.c.l.b16 %v472
    %v1731 = vunpack.c.h.b16 %v472
    %v1732 = vunpack.c.l.b16 %v473
    %v1733 = vunpack.c.h.b16 %v473
    %v1734 = vunpack.c.l.b16 %v474
    %v1735 = vunpack.c.h.b16 %v474
    %v1736 = vunpack.c.l.b16 %v475
    %v1737 = vunpack.c.h.b16 %v475
    %v1738 = vunpack.c.l.b16 %v476
    %v1739 = vunpack.c.h.b16 %v476
    %v1740 = vunpack.c.l.b16 %v477
    %v1741 = vunpack.c.h.b16 %v477
    %v1742 = vunpack.c.l.b16 %v478
    %v1743 = vunpack.c.h.b16 %v478
    %v1744 = vunpack.c.l.b16 %v479
    %v1745 = vunpack.c.h.b16 %v479
    %v1746 = vunpack.c.l.b16 %v480
    %v1747 = vunpack.c.h.b16 %v480
    %v1748 = vunpack.c.l.b16 %v481
    %v1749 = vunpack.c.h.b16 %v481
    %v1750 = vunpack.c.l.b16 %v482
    %v1751 = vunpack.c.h.b16 %v482
    %v1752 = vunpack.c.l.b16 %v483
    %v1753 = vunpack.c.h.b16 %v483
    %v1754 = vunpack.c.l.b16 %v484
    %v1755 = vunpack.c.h.b16 %v484
    %v1756 = vunpack.c.l.b16 %v485
    %v1757 = vunpack.c.h.b16 %v485
    %v1758 = vunpack.c.l.b16 %v486
    %v1759 = vunpack.c.h.b16 %v486
    %v1760 = vunpack.c.l.b16 %v487
    %v1761 = vunpack.c.h.b16 %v487
    %v1762 = vunpack.c.l.b16 %v488
    %v1763 = vunpack.c.h.b16 %v488
    %v1764 = vunpack.c.l.b16 %v489
    %v1765 = vunpack.c.h.b16 %v489
    %v1766 = vunpack.c.l.b16 %v490
    %v1767 = vunpack.c.h.b16 %v490
    %v1768 = vunpack.c.l.b16 %v491
    %v1769 = vunpack.c.h.b16 %v491
    %v1770 = vunpack.c.l.b16 %v492
    %v1771 = vunpack.c.h.b16 %v492
    %v1772 = vunpack.c.l.b16 %v493
    %v1773 = vunpack.c.h.b16 %v493
    %v1774 = vunpack.c.l.b16 %v494
    %v1775 = vunpack.c.h.b16 %v494
    %v1776 = vunpack.c.l.b16 %v495
    %v1777 = vunpack.c.h.b16 %v495
    %v1778 = vunpack.c.l.b16 %v496
    %v1779 = vunpack.c.h.b16 %v496
    %v1780 = vunpack.c.l.b16 %v497
    %v1781 = vunpack.c.h.b16 %v497
    %v1782 = vunpack.c.l.b16 %v498
    %v1783 = vunpack.c.h.b16 %v498
    %v1784 = vunpack.c.l.b16 %v499
    %v1785 = vunpack.c.h.b16 %v499
    %v1786 = vunpack.c.l.b16 %v500
    %v1787 = vunpack.c.h.b16 %v500
    %v1788 = vunpack.c.l.b16 %v501
    %v1789 = vunpack.c.h.b16 %v501
    %v1790 = vunpack.c.l.b16 %v502
    %v1791 = vunpack.c.h.b16 %v502
    %v1792 = vunpack.c.l.b16 %v503
    %v1793 = vunpack.c.h.b16 %v503
    %v1794 = vunpack.c.l.b16 %v504
    %v1795 = vunpack.c.h.b16 %v504
    %v1796 = vunpack.c.l.b16 %v505
    %v1797 = vunpack.c.h.b16 %v505
    %v1798 = vunpack.c.l.b16 %v506
    %v1799 = vunpack.c.h.b16 %v506
    %v1800 = vunpack.c.l.b16 %v507
    %v1801 = vunpack.c.h.b16 %v507
    %v1802 = vunpack.c.l.b16 %v508
    %v1803 = vunpack.c.h.b16 %v508
    %v1804 = vunpack.c.l.b16 %v509
    %v1805 = vunpack.c.h.b16 %v509
    %v1806 = vunpack.c.l.b16 %v510
    %v1807 = vunpack.c.h.b16 %v510
    %v1808 = vunpack.c.l.b16 %v511
    %v1809 = vunpack.c.h.b16 %v511
    %v1810 = vunpack.c.l.b16 %v512
    %v1811 = vunpack.c.h.b16 %v512
    %v1812 = vunpack.c.l.b16 %v513
    %v1813 = vunpack.c.h.b16 %v513
    %v1814 = vunpack.c.l.b16 %v514
    %v1815 = vunpack.c.h.b16 %v514
    %v1816 = vunpack.c.l.b16 %v515
    %v1817 = vunpack.c.h.b16 %v515
    %v1818 = vunpack.c.l.b16 %v516
    %v1819 = vunpack.c.h.b16 %v516
    %v1820 = vunpack.c.l.b16 %v517
    %v1821 = vunpack.c.h.b16 %v517
    %v1822 = vunpack.c.l.b16 %v518
    %v1823 = vunpack.c.h.b16 %v518
    %v1824 = vunpack.c.l.b16 %v519
    %v1825 = vunpack.c.h.b16 %v519
    %v1826 = vunpack.c.l.b16 %v520
    %v1827 = vunpack.c.h.b16 %v520
    %v1828 = vunpack.c.l.b16 %v521
    %v1829 = vunpack.c.h.b16 %v521
    %v1830 = vunpack.c.l.b16 %v522
    %v1831 = vunpack.c.h.b16 %v522
    %v1832 = vunpack.c.l.b16 %v523
    %v1833 = vunpack.c.h.b16 %v523
    %v1834 = vunpack.c.l.b16 %v524
    %v1835 = vunpack.c.h.b16 %v524
    %v1836 = vunpack.c.l.b16 %v525
    %v1837 = vunpack.c.h.b16 %v525
    %v1838 = vunpack.c.l.b16 %v526
    %v1839 = vunpack.c.h.b16 %v526
    %v1840 = vunpack.c.l.b16 %v527
    %v1841 = vunpack.c.h.b16 %v527
    %v1842 = vunpack.c.l.b16 %v528
    %v1843 = vunpack.c.h.b16 %v528
    %v1844 = vunpack.c.l.b16 %v529
    %v1845 = vunpack.c.h.b16 %v529
    %v1846 = vunpack.c.l.b16 %v530
    %v1847 = vunpack.c.h.b16 %v530
    %v1848 = vunpack.c.l.b16 %v531
    %v1849 = vunpack.c.h.b16 %v531
    %v1850 = vunpack.c.l.b16 %v532
    %v1851 = vunpack.c.h.b16 %v532
    %v1852 = vunpack.c.l.b16 %v533
    %v1853 = vunpack.c.h.b16 %v533
    %v1854 = vunpack.c.l.b16 %v534
    %v1855 = vunpack.c.h.b16 %v534
    %v1856 = vunpack.c.l.b16 %v535
    %v1857 = vunpack.c.h.b16 %v535
    %v1858 = vunpack.c.l.b16 %v536
    %v1859 = vunpack.c.h.b16 %v536
    %v1860 = vunpack.c.l.b16 %v537
    %v1861 = vunpack.c.h.b16 %v537
    %v1862 = vunpack.c.l.b16 %v538
    %v1863 = vunpack.c.h.b16 %v538
    %v1864 = vunpack.c.l.b16 %v539
    %v1865 = vunpack.c.h.b16 %v539
    %v1866 = vunpack.c.l.b16 %v540
    %v1867 = vunpack.c.h.b16 %v540
    %v1868 = vunpack.c.l.b16 %v541
    %v1869 = vunpack.c.h.b16 %v541
    %v1870 = vunpack.c.l.b16 %v542
    %v1871 = vunpack.c.h.b16 %v542
    %v1872 = vunpack.c.l.b16 %v543
    %v1873 = vunpack.c.h.b16 %v543
    %v1874 = vunpack.c.l.b16 %v544
    %v1875 = vunpack.c.h.b16 %v544
    %v1876 = vunpack.c.l.b16 %v545
    %v1877 = vunpack.c.h.b16 %v545
    %v1878 = vunpack.c.l.b16 %v546
    %v1879 = vunpack.c.h.b16 %v546
    %v1880 = vunpack.c.l.b16 %v547
    %v1881 = vunpack.c.h.b16 %v547
    %v1882 = vunpack.c.l.b16 %v548
    %v1883 = vunpack.c.h.b16 %v548
    %v1884 = vunpack.c.l.b16 %v549
    %v1885 = vunpack.c.h.b16 %v549
    %v1886 = vunpack.c.l.b16 %v550
    %v1887 = vunpack.c.h.b16 %v550
    %v1888 = vunpack.c.l.b16 %v551
    %v1889 = vunpack.c.h.b16 %v551
    %v1890 = vunpack.c.l.b16 %v552
    %v1891 = vunpack.c.h.b16 %v552
    %v1892 = vunpack.c.l.b16 %v553
    %v1893 = vunpack.c.h.b16 %v553
    %v1894 = vunpack.c.l.b16 %v554
    %v1895 = vunpack.c.h.b16 %v554
    %v1896 = vunpack.c.l.b16 %v555
    %v1897 = vunpack.c.h.b16 %v555
    %v1898 = vunpack.c.l.b16 %v556
    %v1899 = vunpack.c.h.b16 %v556
    %v1900 = vunpack.c.l.b16 %v557
    %v1901 = vunpack.c.h.b16 %v557
    %v1902 = vunpack.c.l.b16 %v558
    %v1903 = vunpack.c.h.b16 %v558
    %v1904 = vunpack.c.l.b16 %v559
    %v1905 = vunpack.c.h.b16 %v559
    %v1906 = vunpack.c.l.b16 %v560
    %v1907 = vunpack.c.h.b16 %v560
    %v1908 = vunpack.c.l.b16 %v561
    %v1909 = vunpack.c.h.b16 %v561
    %v1910 = vunpack.c.l.b16 %v562
    %v1911 = vunpack.c.h.b16 %v562
    %v1912 = vunpack.c.l.b16 %v563
    %v1913 = vunpack.c.h.b16 %v563
    %v1914 = vunpack.c.l.b16 %v564
    %v1915 = vunpack.c.h.b16 %v564
    %v1916 = vunpack.c.l.b16 %v565
    %v1917 = vunpack.c.h.b16 %v565
    %v1918 = vunpack.c.l.b16 %v566
    %v1919 = vunpack.c.h.b16 %v566
    %v1920 = vunpack.c.l.b16 %v567
    %v1921 = vunpack.c.h.b16 %v567
    %v1922 = vunpack.c.l.b16 %v568
    %v1923 = vunpack.c.h.b16 %v568
    %v1924 = vunpack.c.l.b16 %v569
    %v1925 = vunpack.c.h.b16 %v569
    %v1926 = vunpack.c.l.b16 %v570
    %v1927 = vunpack.c.h.b16 %v570
    %v1928 = vunpack.c.l.b16 %v571
    %v1929 = vunpack.c.h.b16 %v571
    %v1930 = vunpack.c.l.b16 %v572
    %v1931 = vunpack.c.h.b16 %v572
    %v1932 = vunpack.c.l.b16 %v573
    %v1933 = vunpack.c.h.b16 %v573
    %v1934 = vunpack.c.l.b16 %v574
    %v1935 = vunpack.c.h.b16 %v574
    %v1936 = vunpack.c.l.b16 %v575
    %v1937 = vunpack.c.h.b16 %v575
    %v1938 = vunpack.c.l.b16 %v576
    %v1939 = vunpack.c.h.b16 %v576
    %v1940 = vunpack.c.l.b16 %v577
    %v1941 = vunpack.c.h.b16 %v577
    %v1942 = vunpack.c.l.b16 %v578
    %v1943 = vunpack.c.h.b16 %v578
    %v1944 = vunpack.c.l.b16 %v579
    %v1945 = vunpack.c.h.b16 %v579
    %v1946 = vunpack.c.l.b16 %v580
    %v1947 = vunpack.c.h.b16 %v580
    %v1948 = vunpack.c.l.b16 %v581
    %v1949 = vunpack.c.h.b16 %v581
    %v1950 = vunpack.c.l.b16 %v582
    %v1951 = vunpack.c.h.b16 %v582
    %v1952 = vunpack.c.l.b16 %v583
    %v1953 = vunpack.c.h.b16 %v583
    %v1954 = vunpack.c.l.b16 %v584
    %v1955 = vunpack.c.h.b16 %v584
    %v1956 = vunpack.c.l.b16 %v585
    %v1957 = vunpack.c.h.b16 %v585
    %v1958 = vunpack.c.l.b16 %v586
    %v1959 = vunpack.c.h.b16 %v586
    %v1960 = vunpack.c.l.b16 %v587
    %v1961 = vunpack.c.h.b16 %v587
    %v1962 = vunpack.c.l.b16 %v588
    %v1963 = vunpack.c.h.b16 %v588
    %v1964 = vunpack.c.l.b16 %v589
    %v1965 = vunpack.c.h.b16 %v589
    %v1966 = vunpack.c.l.b16 %v590
    %v1967 = vunpack.c.h.b16 %v590
    %v1968 = vunpack.c.l.b16 %v591
    %v1969 = vunpack.c.h.b16 %v591
    %v1970 = vunpack.c.l.b16 %v592
    %v1971 = vunpack.c.h.b16 %v592
    %v1972 = vunpack.c.l.b16 %v593
    %v1973 = vunpack.c.h.b16 %v593
    %v1974 = vunpack.c.l.b16 %v594
    %v1975 = vunpack.c.h.b16 %v594
    %v1976 = vunpack.c.l.b16 %v595
    %v1977 = vunpack.c.h.b16 %v595
    %v1978 = vunpack.c.l.b16 %v596
    %v1979 = vunpack.c.h.b16 %v596
    %v1980 = vunpack.c.l.b16 %v597
    %v1981 = vunpack.c.h.b16 %v597
    %v1982 = vunpack.c.l.b16 %v598
    %v1983 = vunpack.c.h.b16 %v598
    %v1984 = vunpack.c.l.b16 %v599
    %v1985 = vunpack.c.h.b16 %v599
    %v1986 = vunpack.c.l.b16 %v600
    %v1987 = vunpack.c.h.b16 %v600
    %v1988 = vunpack.c.l.b16 %v601
    %v1989 = vunpack.c.h.b16 %v601
    %v1990 = vunpack.c.l.b16 %v602
    %v1991 = vunpack.c.h.b16 %v602
    %v1992 = vunpack.c.l.b16 %v603
    %v1993 = vunpack.c.h.b16 %v603
    %v1994 = vunpack.c.l.b16 %v604
    %v1995 = vunpack.c.h.b16 %v604
    %v1996 = vunpack.c.l.b16 %v605
    %v1997 = vunpack.c.h.b16 %v605
    %v1998 = vunpack.c.l.b16 %v606
    %v1999 = vunpack.c.h.b16 %v606
    %v2000 = vunpack.c.l.b16 %v607
    %v2001 = vunpack.c.h.b16 %v607
    %v2002 = vunpack.c.l.b16 %v608
    %v2003 = vunpack.c.h.b16 %v608
    %v2004 = vunpack.c.l.b16 %v609
    %v2005 = vunpack.c.h.b16 %v609
    %v2006 = vunpack.c.l.b16 %v610
    %v2007 = vunpack.c.h.b16 %v610
    %v2008 = vunpack.c.l.b16 %v611
    %v2009 = vunpack.c.h.b16 %v611
    %v2010 = vunpack.c.l.b16 %v612
    %v2011 = vunpack.c.h.b16 %v612
    %v2012 = vunpack.c.l.b16 %v613
    %v2013 = vunpack.c.h.b16 %v613
    %v2014 = vunpack.c.l.b16 %v614
    %v2015 = vunpack.c.h.b16 %v614
    %v2016 = vunpack.c.l.b16 %v615
    %v2017 = vunpack.c.h.b16 %v615
    %v2018 = vunpack.c.l.b16 %v616
    %v2019 = vunpack.c.h.b16 %v616
    %v2020 = vunpack.c.l.b16 %v617
    %v2021 = vunpack.c.h.b16 %v617
    %v2022 = vunpack.c.l.b16 %v618
    %v2023 = vunpack.c.h.b16 %v618
    %v2024 = vunpack.c.l.b16 %v619
    %v2025 = vunpack.c.h.b16 %v619
    %v2026 = vunpack.c.l.b16 %v620
    %v2027 = vunpack.c.h.b16 %v620
    %v2028 = vunpack.c.l.b16 %v621
    %v2029 = vunpack.c.h.b16 %v621
    %v2030 = vunpack.c.l.b16 %v622
    %v2031 = vunpack.c.h.b16 %v622
    %v2032 = vunpack.c.l.b16 %v623
    %v2033 = vunpack.c.h.b16 %v623
    %v2034 = vunpack.c.l.b16 %v624
    %v2035 = vunpack.c.h.b16 %v624
    %v2036 = vunpack.c.l.b16 %v625
    %v2037 = vunpack.c.h.b16 %v625
    %v2038 = vunpack.c.l.b16 %v626
    %v2039 = vunpack.c.h.b16 %v626
    %v2040 = vunpack.c.l.b16 %v627
    %v2041 = vunpack.c.h.b16 %v627
    %v2042 = vunpack.c.l.b16 %v628
    %v2043 = vunpack.c.h.b16 %v628
    %v2044 = vunpack.c.l.b16 %v629
    %v2045 = vunpack.c.h.b16 %v629
    %v2046 = vunpack.c.l.b16 %v630
    %v2047 = vunpack.c.h.b16 %v630
    %v2048 = vunpack.c.l.b16 %v631
    %v2049 = vunpack.c.h.b16 %v631
    %v2050 = vunpack.c.l.b16 %v632
    %v2051 = vunpack.c.h.b16 %v632
    %v2052 = vunpack.c.l.b16 %v633
    %v2053 = vunpack.c.h.b16 %v633
    %v2054 = vunpack.c.l.b16 %v634
    %v2055 = vunpack.c.h.b16 %v634
    %v2056 = vunpack.c.l.b16 %v635
    %v2057 = vunpack.c.h.b16 %v635
    %v2058 = vunpack.c.l.b16 %v636
    %v2059 = vunpack.c.h.b16 %v636
    %v2060 = vunpack.c.l.b16 %v637
    %v2061 = vunpack.c.h.b16 %v637
    %v2062 = vunpack.c.l.b16 %v638
    %v2063 = vunpack.c.h.b16 %v638
    %v2064 = vunpack.c.l.b16 %v639
    %v2065 = vunpack.c.h.b16 %v639
    %v2066 = vunpack.c.l.b16 %v640
    %v2067 = vunpack.c.h.b16 %v640
    %v2068 = vunpack.c.l.b16 %v641
    %v2069 = vunpack.c.h.b16 %v641
    %v2070 = vunpack.c.l.b16 %v642
    %v2071 = vunpack.c.h.b16 %v642
    %v2072 = vunpack.c.l.b16 %v643
    %v2073 = vunpack.c.h.b16 %v643
    %v2074 = vunpack.c.l.b16 %v644
    %v2075 = vunpack.c.h.b16 %v644
    %v2076 = vunpack.c.l.b16 %v645
    %v2077 = vunpack.c.h.b16 %v645
    %v2078 = vunpack.c.l.b16 %v646
    %v2079 = vunpack.c.h.b16 %v646
    %v2080 = vunpack.c.l.b16 %v647
    %v2081 = vunpack.c.h.b16 %v647
    %v2082 = vunpack.c.l.b16 %v648
    %v2083 = vunpack.c.h.b16 %v648
    %v2084 = vunpack.c.l.b16 %v649
    %v2085 = vunpack.c.h.b16 %v649
    %v2086 = vunpack.c.l.b16 %v650
    %v2087 = vunpack.c.h.b16 %v650
    %v2088 = vunpack.c.l.b16 %v651
    %v2089 = vunpack.c.h.b16 %v651
    %v2090 = vunpack.c.l.b16 %v652
    %v2091 = vunpack.c.h.b16 %v652
    %v2092 = vunpack.c.l.b16 %v653
    %v2093 = vunpack.c.h.b16 %v653
    %v2094 = vunpack.c.l.b16 %v654
    %v2095 = vunpack.c.h.b16 %v654
    %v2096 = vunpack.c.l.b16 %v655
    %v2097 = vunpack.c.h.b16 %v655
    %v2098 = vunpack.c.l.b16 %v656
    %v2099 = vunpack.c.h.b16 %v656
    %v2100 = vunpack.c.l.b16 %v657
    %v2101 = vunpack.c.h.b16 %v657
    %v2102 = vunpack.c.l.b16 %v658
    %v2103 = vunpack.c.h.b16 %v658
    %v2104 = vunpack.c.l.b16 %v659
    %v2105 = vunpack.c.h.b16 %v659
    %v2106 = vunpack.c.l.b16 %v660
    %v2107 = vunpack.c.h.b16 %v660
    %v2108 = vunpack.c.l.b16 %v661
    %v2109 = vunpack.c.h.b16 %v661
    %v2110 = vunpack.c.l.b16 %v662
    %v2111 = vunpack.c.h.b16 %v662
    %v2112 = vunpack.c.l.b16 %v663
    %v2113 = vunpack.c.h.b16 %v663
    %v2114 = vunpack.c.l.b16 %v664
    %v2115 = vunpack.c.h.b16 %v664
    %v2116 = vunpack.c.l.b16 %v665
    %v2117 = vunpack.c.h.b16 %v665
    %v2118 = vunpack.c.l.b16 %v666
    %v2119 = vunpack.c.h.b16 %v666
    %v2120 = vunpack.c.l.b16 %v667
    %v2121 = vunpack.c.h.b16 %v667
    %v2122 = vunpack.c.l.b16 %v668
    %v2123 = vunpack.c.h.b16 %v668
    %v2124 = vunpack.c.l.b16 %v669
    %v2125 = vunpack.c.h.b16 %v669
    %v2126 = vunpack.c.l.b16 %v670
    %v2127 = vunpack.c.h.b16 %v670
    %v2128 = vunpack.c.l.b16 %v671
    %v2129 = vunpack.c.h.b16 %v671
    %v2130 = vunpack.c.l.b16 %v672
    %v2131 = vunpack.c.h.b16 %v672
    %v2132 = vunpack.c.l.b16 %v673
    %v2133 = vunpack.c.h.b16 %v673
    %v2134 = vunpack.c.l.b16 %v674
    %v2135 = vunpack.c.h.b16 %v674
    %v2136 = vunpack.c.l.b16 %v675
    %v2137 = vunpack.c.h.b16 %v675
    %v2138 = vunpack.c.l.b16 %v676
    %v2139 = vunpack.c.h.b16 %v676
    %v2140 = vunpack.c.l.b16 %v677
    %v2141 = vunpack.c.h.b16 %v677
    %v2142 = vunpack.c.l.b16 %v678
    %v2143 = vunpack.c.h.b16 %v678
    %v2144 = vunpack.c.l.b16 %v679
    %v2145 = vunpack.c.h.b16 %v679
    %v2146 = vunpack.c.l.b16 %v680
    %v2147 = vunpack.c.h.b16 %v680
    %v2148 = vunpack.c.l.b16 %v681
    %v2149 = vunpack.c.h.b16 %v681
    %v2150 = vunpack.c.l.b16 %v682
    %v2151 = vunpack.c.h.b16 %v682
    %v2152 = vunpack.c.l.b16 %v683
    %v2153 = vunpack.c.h.b16 %v683
    %v2154 = vunpack.c.l.b16 %v684
    %v2155 = vunpack.c.h.b16 %v684
    %v2156 = vunpack.c.l.b16 %v685
    %v2157 = vunpack.c.h.b16 %v685
    %v2158 = vunpack.c.l.b16 %v686
    %v2159 = vunpack.c.h.b16 %v686
    %v2160 = vunpack.c.l.b16 %v687
    %v2161 = vunpack.c.h.b16 %v687
    %v2162 = vunpack.c.l.b16 %v688
    %v2163 = vunpack.c.h.b16 %v688
    %v2164 = vunpack.c.l.b16 %v689
    %v2165 = vunpack.c.h.b16 %v689
    %v2166 = vunpack.c.l.b16 %v690
    %v2167 = vunpack.c.h.b16 %v690
    %v2168 = vunpack.c.l.b16 %v691
    %v2169 = vunpack.c.h.b16 %v691
    %v2170 = vunpack.c.l.b16 %v692
    %v2171 = vunpack.c.h.b16 %v692
    %v2172 = vunpack.c.l.b16 %v693
    %v2173 = vunpack.c.h.b16 %v693
    %v2174 = vunpack.c.l.b16 %v694
    %v2175 = vunpack.c.h.b16 %v694
    %v2176 = vunpack.c.l.b16 %v695
    %v2177 = vunpack.c.h.b16 %v695
    %v2178 = vunpack.c.l.b16 %v696
    %v2179 = vunpack.c.h.b16 %v696
    %v2180 = vunpack.c.l.b16 %v697
    %v2181 = vunpack.c.h.b16 %v697
    %v2182 = vunpack.c.l.b16 %v698
    %v2183 = vunpack.c.h.b16 %v698
    %v2184 = vunpack.c.l.b16 %v699
    %v2185 = vunpack.c.h.b16 %v699
    %v2186 = vunpack.c.l.b16 %v700
    %v2187 = vunpack.c.h.b16 %v700
    %v2188 = vunpack.c.l.b16 %v701
    %v2189 = vunpack.c.h.b16 %v701
    %v2190 = vunpack.c.l.b16 %v702
    %v2191 = vunpack.c.h.b16 %v702
    %v2192 = vunpack.c.l.b16 %v703
    %v2193 = vunpack.c.h.b16 %v703
    %v2194 = vunpack.c.l.b16 %v704
    %v2195 = vunpack.c.h.b16 %v704
    %v2196 = vunpack.c.l.b16 %v705
    %v2197 = vunpack.c.h.b16 %v705
    %v2198 = vunpack.c.l.b16 %v706
    %v2199 = vunpack.c.h.b16 %v706
    %v2200 = vunpack.c.l.b16 %v707
    %v2201 = vunpack.c.h.b16 %v707
    %v2202 = vunpack.c.l.b16 %v708
    %v2203 = vunpack.c.h.b16 %v708
    %v2204 = vunpack.c.l.b16 %v709
    %v2205 = vunpack.c.h.b16 %v709
    %v2206 = vunpack.c.l.b16 %v710
    %v2207 = vunpack.c.h.b16 %v710
    %v2208 = vunpack.c.l.b16 %v711
    %v2209 = vunpack.c.h.b16 %v711
    %v2210 = vunpack.c.l.b16 %v712
    %v2211 = vunpack.c.h.b16 %v712
    %v2212 = vunpack.c.l.b16 %v713
    %v2213 = vunpack.c.h.b16 %v713
    %v2214 = vunpack.c.l.b16 %v714
    %v2215 = vunpack.c.h.b16 %v714
    %v2216 = vunpack.c.l.b16 %v715
    %v2217 = vunpack.c.h.b16 %v715
    %v2218 = vunpack.c.l.b16 %v716
    %v2219 = vunpack.c.h.b16 %v716
    %v2220 = vunpack.c.l.b16 %v717
    %v2221 = vunpack.c.h.b16 %v717
    %v2222 = vunpack.c.l.b16 %v718
    %v2223 = vunpack.c.h.b16 %v718
    %v2224 = vunpack.c.l.b16 %v719
    %v2225 = vunpack.c.h.b16 %v719
    %v2226 = vunpack.c.l.b16 %v720
    %v2227 = vunpack.c.h.b16 %v720
    %v2228 = vunpack.c.l.b16 %v721
    %v2229 = vunpack.c.h.b16 %v721
    %v2230 = vunpack.c.l.b16 %v722
    %v2231 = vunpack.c.h.b16 %v722
    %v2232 = vunpack.c.l.b16 %v723
    %v2233 = vunpack.c.h.b16 %v723
    %v2234 = vunpack.c.l.b16 %v724
    %v2235 = vunpack.c.h.b16 %v724
    %v2236 = vunpack.c.l.b16 %v725
    %v2237 = vunpack.c.h.b16 %v725
    %v2238 = vunpack.c.l.b16 %v726
    %v2239 = vunpack.c.h.b16 %v726
    %v2240 = vunpack.c.l.b16 %v727
    %v2241 = vunpack.c.h.b16 %v727
    %v2242 = vunpack.c.l.b16 %v728
    %v2243 = vunpack.c.h.b16 %v728
    %v2244 = vunpack.c.l.b16 %v729
    %v2245 = vunpack.c.h.b16 %v729
    %v2246 = vunpack.c.l.b16 %v730
    %v2247 = vunpack.c.h.b16 %v730
    %v2248 = vunpack.c.l.b16 %v731
    %v2249 = vunpack.c.h.b16 %v731
    %v2250 = vunpack.c.l.b16 %v732
    %v2251 = vunpack.c.h.b16 %v732
    %v2252 = vunpack.c.l.b16 %v733
    %v2253 = vunpack.c.h.b16 %v733
    %v2254 = vunpack.c.l.b16 %v734
    %v2255 = vunpack.c.h.b16 %v734
    %v2256 = vunpack.c.l.b16 %v735
    %v2257 = vunpack.c.h.b16 %v735
    %v2258 = vunpack.c.l.b16 %v736
    %v2259 = vunpack.c.h.b16 %v736
    %v2260 = vunpack.c.l.b16 %v737
    %v2261 = vunpack.c.h.b16 %v737
    %v2262 = vunpack.c.l.b16 %v738
    %v2263 = vunpack.c.h.b16 %v738
    %v2264 = vunpack.c.l.b16 %v739
    %v2265 = vunpack.c.h.b16 %v739
    %v2266 = vunpack.c.l.b16 %v740
    %v2267 = vunpack.c.h.b16 %v740
    %v2268 = vunpack.c.l.b16 %v741
    %v2269 = vunpack.c.h.b16 %v741
    %v2270 = vunpack.c.l.b16 %v742
    %v2271 = vunpack.c.h.b16 %v742
    %v2272 = vunpack.c.l.b16 %v743
    %v2273 = vunpack.c.h.b16 %v743
    %v2274 = vunpack.c.l.b16 %v744
    %v2275 = vunpack.c.h.b16 %v744
    %v2276 = vunpack.c.l.b16 %v745
    %v2277 = vunpack.c.h.b16 %v745
    %v2278 = vunpack.c.l.b16 %v746
    %v2279 = vunpack.c.h.b16 %v746
    %v2280 = vunpack.c.l.b16 %v747
    %v2281 = vunpack.c.h.b16 %v747
    %v2282 = vunpack.c.l.b16 %v748
    %v2283 = vunpack.c.h.b16 %v748
    %v2284 = vunpack.c.l.b16 %v749
    %v2285 = vunpack.c.h.b16 %v749
    %v2286 = vunpack.c.l.b16 %v750
    %v2287 = vunpack.c.h.b16 %v750
    %v2288 = vunpack.c.l.b16 %v751
    %v2289 = vunpack.c.h.b16 %v751
    %v2290 = vunpack.c.l.b16 %v752
    %v2291 = vunpack.c.h.b16 %v752
    %v2292 = vunpack.c.l.b16 %v753
    %v2293 = vunpack.c.h.b16 %v753
    %v2294 = vunpack.c.l.b16 %v754
    %v2295 = vunpack.c.h.b16 %v754
    %v2296 = vunpack.c.l.b16 %v755
    %v2297 = vunpack.c.h.b16 %v755
    %v2298 = vunpack.c.l.b16 %v756
    %v2299 = vunpack.c.h.b16 %v756
    %v2300 = vunpack.c.l.b16 %v757
    %v2301 = vunpack.c.h.b16 %v757
    %v2302 = vunpack.c.l.b16 %v758
    %v2303 = vunpack.c.h.b16 %v758
    %v2304 = vunpack.c.l.b16 %v759
    %v2305 = vunpack.c.h.b16 %v759
    %v2306 = vunpack.c.l.b16 %v760
    %v2307 = vunpack.c.h.b16 %v760
    %v2308 = vunpack.c.l.b16 %v761
    %v2309 = vunpack.c.h.b16 %v761
    %v2310 = vunpack.c.l.b16 %v762
    %v2311 = vunpack.c.h.b16 %v762
    %v2312 = vunpack.c.l.b16 %v763
    %v2313 = vunpack.c.h.b16 %v763
    %v2314 = vunpack.c.l.b16 %v764
    %v2315 = vunpack.c.h.b16 %v764
    %v2316 = vunpack.c.l.b16 %v765
    %v2317 = vunpack.c.h.b16 %v765
    %v2318 = vunpack.c.l.b16 %v766
    %v2319 = vunpack.c.h.b16 %v766
    %v2320 = vunpack.c.l.b16 %v767
    %v2321 = vunpack.c.h.b16 %v767
    %v2322 = vunpack.c.l.b16 %v768
    %v2323 = vunpack.c.h.b16 %v768
    %v2324 = vunpack.c.l.b16 %v769
    %v2325 = vunpack.c.h.b16 %v769
    %v2326 = vunpack.c.l.b16 %v770
    %v2327 = vunpack.c.h.b16 %v770
    %v2328 = vunpack.c.l.b16 %v771
    %v2329 = vunpack.c.h.b16 %v771
    %v2330 = vunpack.c.l.b16 %v772
    %v2331 = vunpack.c.h.b16 %v772
    %v2332 = vunpack.c.l.b16 %v773
    %v2333 = vunpack.c.h.b16 %v773
    %v2334 = vunpack.c.l.b16 %v774
    %v2335 = vunpack.c.h.b16 %v774
    %v2336 = vunpack.c.l.b16 %v775
    %v2337 = vunpack.c.h.b16 %v775
    %v2338 = vunpack.c.l.b16 %v776
    %v2339 = vunpack.c.h.b16 %v776
    %v2340 = vunpack.c.l.b16 %v777
    %v2341 = vunpack.c.h.b16 %v777
    %v2342 = vunpack.c.l.b16 %v778
    %v2343 = vunpack.c.h.b16 %v778
    %v2344 = vunpack.c.l.b16 %v779
    %v2345 = vunpack.c.h.b16 %v779
    %v2346 = vunpack.c.l.b16 %v780
    %v2347 = vunpack.c.h.b16 %v780
    %v2348 = vunpack.c.l.b16 %v781
    %v2349 = vunpack.c.h.b16 %v781
    %v2350 = vunpack.c.l.b16 %v782
    %v2351 = vunpack.c.h.b16 %v782
    %v2352 = vunpack.c.l.b16 %v783
    %v2353 = vunpack.c.h.b16 %v783
    %v2354 = vunpack.c.l.b16 %v784
    %v2355 = vunpack.c.h.b16 %v784
    %v2356 = vunpack.c.l.b16 %v785
    %v2357 = vunpack.c.h.b16 %v785
    %v2358 = vunpack.c.l.b16 %v786
    %v2359 = vunpack.c.h.b16 %v786
    %v2360 = vunpack.c.l.b16 %v787
    %v2361 = vunpack.c.h.b16 %v787
    %v2362 = vunpack.c.l.b16 %v788
    %v2363 = vunpack.c.h.b16 %v788
    %v2364 = vunpack.c.l.b16 %v789
    %v2365 = vunpack.c.h.b16 %v789
    %v2366 = vunpack.c.l.b16 %v790
    %v2367 = vunpack.c.h.b16 %v790
    %v2368 = vunpack.c.l.b16 %v791
    %v2369 = vunpack.c.h.b16 %v791
    %v2370 = vunpack.c.l.b16 %v792
    %v2371 = vunpack.c.h.b16 %v792
    %v2372 = vunpack.c.l.b16 %v793
    %v2373 = vunpack.c.h.b16 %v793
    %v2374 = vunpack.c.l.b16 %v794
    %v2375 = vunpack.c.h.b16 %v794
    %v2376 = vunpack.c.l.b16 %v795
    %v2377 = vunpack.c.h.b16 %v795
    %v2378 = vunpack.c.l.b16 %v796
    %v2379 = vunpack.c.h.b16 %v796
    %v2380 = vunpack.c.l.b16 %v797
    %v2381 = vunpack.c.h.b16 %v797
    %v2382 = vunpack.c.l.b16 %v798
    %v2383 = vunpack.c.h.b16 %v798
    %v2384 = vunpack.c.l.b16 %v799
    %v2385 = vunpack.c.h.b16 %v799
    %v2386 = vpack.c.b16 %v1370, %v1362
    %v2387 = vpack.c.b16 %v1371, %v1363
    %v2388 = vpack.c.b16 %v1372, %v1364
    %v2389 = vpack.c.b16 %v1373, %v1365
    %v2390 = vpack.c.b16 %v1374, %v1366
    %v2391 = vpack.c.b16 %v1375, %v1367
    %v2392 = vpack.c.b16 %v1376, %v1368
    %v2393 = vpack.c.b16 %v1377, %v1369
    %v2394 = vpack.c.b16 %v1386, %v1378
    %v2395 = vpack.c.b16 %v1387, %v1379
    %v2396 = vpack.c.b16 %v1388, %v1380
    %v2397 = vpack.c.b16 %v1389, %v1381
    %v2398 = vpack.c.b16 %v1390, %v1382
    %v2399 = vpack.c.b16 %v1391, %v1383
    %v2400 = vpack.c.b16 %v1392, %v1384
    %v2401 = vpack.c.b16 %v1393, %v1385
    %v2402 = vpack.c.b16 %v1402, %v1394
    %v2403 = vpack.c.b16 %v1403, %v1395
    %v2404 = vpack.c.b16 %v1404, %v1396
    %v2405 = vpack.c.b16 %v1405, %v1397
    %v2406 = vpack.c.b16 %v1406, %v1398
    %v2407 = vpack.c.b16 %v1407, %v1399
    %v2408 = vpack.c.b16 %v1408, %v1400
    %v2409 = vpack.c.b16 %v1409, %v1401
    %v2410 = vpack.c.b16 %v1418, %v1410
    %v2411 = vpack.c.b16 %v1419, %v1411
    %v2412 = vpack.c.b16 %v1420, %v1412
    %v2413 = vpack.c.b16 %v1421, %v1413
    %v2414 = vpack.c.b16 %v1422, %v1414
    %v2415 = vpack.c.b16 %v1423, %v1415
    %v2416 = vpack.c.b16 %v1424, %v1416
    %v2417 = vpack.c.b16 %v1425, %v1417
    %v2418 = vpack.c.b16 %v1434, %v1426
    %v2419 = vpack.c.b16 %v1435, %v1427
    %v2420 = vpack.c.b16 %v1436, %v1428
    %v2421 = vpack.c.b16 %v1437, %v1429
    %v2422 = vpack.c.b16 %v1438, %v1430
    %v2423 = vpack.c.b16 %v1439, %v1431
    %v2424 = vpack.c.b16 %v1440, %v1432
    %v2425 = vpack.c.b16 %v1441, %v1433
    %v2426 = vpack.c.b16 %v1450, %v1442
    %v2427 = vpack.c.b16 %v1451, %v1443
    %v2428 = vpack.c.b16 %v1452, %v1444
    %v2429 = vpack.c.b16 %v1453, %v1445
    %v2430 = vpack.c.b16 %v1454, %v1446
    %v2431 = vpack.c.b16 %v1455, %v1447
    %v2432 = vpack.c.b16 %v1456, %v1448
    %v2433 = vpack.c.b16 %v1457, %v1449
    %v2434 = vpack.c.b16 %v1466, %v1458
    %v2435 = vpack.c.b16 %v1467, %v1459
    %v2436 = vpack.c.b16 %v1468, %v1460
    %v2437 = vpack.c.b16 %v1469, %v1461
    %v2438 = vpack.c.b16 %v1470, %v1462
    %v2439 = vpack.c.b16 %v1471, %v1463
    %v2440 = vpack.c.b16 %v1472, %v1464
    %v2441 = vpack.c.b16 %v1473, %v1465
    %v2442 = vpack.c.b16 %v1482, %v1474
    %v2443 = vpack.c.b16 %v1483, %v1475
    %v2444 = vpack.c.b16 %v1484, %v1476
    %v2445 = vpack.c.b16 %v1485, %v1477
    %v2446 = vpack.c.b16 %v1486, %v1478
    %v2447 = vpack.c.b16 %v1487, %v1479
    %v2448 = vpack.c.b16 %v1488, %v1480
    %v2449 = vpack.c.b16 %v1489, %v1481
    %v2450 = vpack.c.b16 %v1498, %v1490
    %v2451 = vpack.c.b16 %v1499, %v1491
    %v2452 = vpack.c.b16 %v1500, %v1492
    %v2453 = vpack.c.b16 %v1501, %v1493
    %v2454 = vpack.c.b16 %v1502, %v1494
    %v2455 = vpack.c.b16 %v1503, %v1495
    %v2456 = vpack.c.b16 %v1504, %v1496
    %v2457 = vpack.c.b16 %v1505, %v1497
    %v2458 = vpack.c.b16 %v1514, %v1506
    %v2459 = vpack.c.b16 %v1515, %v1507
    %v2460 = vpack.c.b16 %v1516, %v1508
    %v2461 = vpack.c.b16 %v1517, %v1509
    %v2462 = vpack.c.b16 %v1518, %v1510
    %v2463 = vpack.c.b16 %v1519, %v1511
    %v2464 = vpack.c.b16 %v1520, %v1512
    %v2465 = vpack.c.b16 %v1521, %v1513
    %v2466 = vpack.c.b16 %v1530, %v1522
    %v2467 = vpack.c.b16 %v1531, %v1523
    %v2468 = vpack.c.b16 %v1532, %v1524
    %v2469 = vpack.c.b16 %v1533, %v1525
    %v2470 = vpack.c.b16 %v1534, %v1526
    %v2471 = vpack.c.b16 %v1535, %v1527
    %v2472 = vpack.c.b16 %v1536, %v1528
    %v2473 = vpack.c.b16 %v1537, %v1529
    %v2474 = vpack.c.b16 %v1546, %v1538
    %v2475 = vpack.c.b16 %v1547, %v1539
    %v2476 = vpack.c.b16 %v1548, %v1540
    %v2477 = vpack.c.b16 %v1549, %v1541
    %v2478 = vpack.c.b16 %v1550, %v1542
    %v2479 = vpack.c.b16 %v1551, %v1543
    %v2480 = vpack.c.b16 %v1552, %v1544
    %v2481 = vpack.c.b16 %v1553, %v1545
    %v2482 = vpack.c.b16 %v1562, %v1554
    %v2483 = vpack.c.b16 %v1563, %v1555
    %v2484 = vpack.c.b16 %v1564, %v1556
    %v2485 = vpack.c.b16 %v1565, %v1557
    %v2486 = vpack.c.b16 %v1566, %v1558
    %v2487 = vpack.c.b16 %v1567, %v1559
    %v2488 = vpack.c.b16 %v1568, %v1560
    %v2489 = vpack.c.b16 %v1569, %v1561
    %v2490 = vpack.c.b16 %v1578, %v1570
    %v2491 = vpack.c.b16 %v1579, %v1571
    %v2492 = vpack.c.b16 %v1580, %v1572
    %v2493 = vpack.c.b16 %v1581, %v1573
    %v2494 = vpack.c.b16 %v1582, %v1574
    %v2495 = vpack.c.b16 %v1583, %v1575
    %v2496 = vpack.c.b16 %v1584, %v1576
    %v2497 = vpack.c.b16 %v1585, %v1577
    %v2498 = vpack.c.b16 %v1594, %v1586
    %v2499 = vpack.c.b16 %v1595, %v1587
    %v2500 = vpack.c.b16 %v1596, %v1588
    %v2501 = vpack.c.b16 %v1597, %v1589
    %v2502 = vpack.c.b16 %v1598, %v1590
    %v2503 = vpack.c.b16 %v1599, %v1591
    %v2504 = vpack.c.b16 %v1600, %v1592
    %v2505 = vpack.c.b16 %v1601, %v1593
    %v2506 = vpack.c.b16 %v1610, %v1602
    %v2507 = vpack.c.b16 %v1611, %v1603
    %v2508 = vpack.c.b16 %v1612, %v1604
    %v2509 = vpack.c.b16 %v1613, %v1605
    %v2510 = vpack.c.b16 %v1614, %v1606
    %v2511 = vpack.c.b16 %v1615, %v1607
    %v2512 = vpack.c.b16 %v1616, %v1608
    %v2513 = vpack.c.b16 %v1617, %v1609
    %v2514 = vpack.c.b16 %v1626, %v1618
    %v2515 = vpack.c.b16 %v1627, %v1619
    %v2516 = vpack.c.b16 %v1628, %v1620
    %v2517 = vpack.c.b16 %v1629, %v1621
    %v2518 = vpack.c.b16 %v1630, %v1622
    %v2519 = vpack.c.b16 %v1631, %v1623
    %v2520 = vpack.c.b16 %v1632, %v1624
    %v2521 = vpack.c.b16 %v1633, %v1625
    %v2522 = vpack.c.b16 %v1642, %v1634
    %v2523 = vpack.c.b16 %v1643, %v1635
    %v2524 = vpack.c.b16 %v1644, %v1636
    %v2525 = vpack.c.b16 %v1645, %v1637
    %v2526 = vpack.c.b16 %v1646, %v1638
    %v2527 = vpack.c.b16 %v1647, %v1639
    %v2528 = vpack.c.b16 %v1648, %v1640
    %v2529 = vpack.c.b16 %v1649, %v1641
    %v2530 = vpack.c.b16 %v1658, %v1650
    %v2531 = vpack.c.b16 %v1659, %v1651
    %v2532 = vpack.c.b16 %v1660, %v1652
    %v2533 = vpack.c.b16 %v1661, %v1653
    %v2534 = vpack.c.b16 %v1662, %v1654
    %v2535 = vpack.c.b16 %v1663, %v1655
    %v2536 = vpack.c.b16 %v1664, %v1656
    %v2537 = vpack.c.b16 %v1665, %v1657
    %v2538 = vpack.c.b16 %v1674, %v1666
    %v2539 = vpack.c.b16 %v1675, %v1667
    %v2540 = vpack.c.b16 %v1676, %v1668
    %v2541 = vpack.c.b16 %v1677, %v1669
    %v2542 = vpack.c.b16 %v1678, %v1670
    %v2543 = vpack.c.b16 %v1679, %v1671
    %v2544 = vpack.c.b16 %v1680, %v1672
    %v2545 = vpack.c.b16 %v1681, %v1673
    %v2546 = vpack.c.b16 %v1690, %v1682
    %v2547 = vpack.c.b16 %v1691, %v1683
    %v2548 = vpack.c.b16 %v1692, %v1684
    %v2549 = vpack.c.b16 %v1693, %v1685
    %v2550 = vpack.c.b16 %v1694, %v1686
    %v2551 = vpack.c.b16 %v1695, %v1687
    %v2552 = vpack.c.b16 %v1696, %v1688
    %v2553 = vpack.c.b16 %v1697, %v1689
    %v2554 = vpack.c.b16 %v1706, %v1698
    %v2555 = vpack.c.b16 %v1707, %v1699
    %v2556 = vpack.c.b16 %v1708, %v1700
    %v2557 = vpack.c.b16 %v1709, %v1701
    %v2558 = vpack.c.b16 %v1710, %v1702
    %v2559 = vpack.c.b16 %v1711, %v1703
    %v2560 = vpack.c.b16 %v1712, %v1704
    %v2561 = vpack.c.b16 %v1713, %v1705
    %v2562 = vpack.c.b16 %v1722, %v1714
    %v2563 = vpack.c.b16 %v1723, %v1715
    %v2564 = vpack.c.b16 %v1724, %v1716
    %v2565 = vpack.c.b16 %v1725, %v1717
    %v2566 = vpack.c.b16 %v1726, %v1718
    %v2567 = vpack.c.b16 %v1727, %v1719
    %v2568 = vpack.c.b16 %v1728, %v1720
    %v2569 = vpack.c.b16 %v1729, %v1721
    %v2570 = vpack.c.b16 %v1738, %v1730
    %v2571 = vpack.c.b16 %v1739, %v1731
    %v2572 = vpack.c.b16 %v1740, %v1732
    %v2573 = vpack.c.b16 %v1741, %v1733
    %v2574 = vpack.c.b16 %v1742, %v1734
    %v2575 = vpack.c.b16 %v1743, %v1735
    %v2576 = vpack.c.b16 %v1744, %v1736
    %v2577 = vpack.c.b16 %v1745, %v1737
    %v2578 = vpack.c.b16 %v1754, %v1746
    %v2579 = vpack.c.b16 %v1755, %v1747
    %v2580 = vpack.c.b16 %v1756, %v1748
    %v2581 = vpack.c.b16 %v1757, %v1749
    %v2582 = vpack.c.b16 %v1758, %v1750
    %v2583 = vpack.c.b16 %v1759, %v1751
    %v2584 = vpack.c.b16 %v1760, %v1752
    %v2585 = vpack.c.b16 %v1761, %v1753
    %v2586 = vpack.c.b16 %v1770, %v1762
    %v2587 = vpack.c.b16 %v1771, %v1763
    %v2588 = vpack.c.b16 %v1772, %v1764
    %v2589 = vpack.c.b16 %v1773, %v1765
    %v2590 = vpack.c.b16 %v1774, %v1766
    %v2591 = vpack.c.b16 %v1775, %v1767
    %v2592 = vpack.c.b16 %v1776, %v1768
    %v2593 = vpack.c.b16 %v1777, %v1769
    %v2594 = vpack.c.b16 %v1786, %v1778
    %v2595 = vpack.c.b16 %v1787, %v1779
    %v2596 = vpack.c.b16 %v1788, %v1780
    %v2597 = vpack.c.b16 %v1789, %v1781
    %v2598 = vpack.c.b16 %v1790, %v1782
    %v2599 = vpack.c.b16 %v1791, %v1783
    %v2600 = vpack.c.b16 %v1792, %v1784
    %v2601 = vpack.c.b16 %v1793, %v1785
    %v2602 = vpack.c.b16 %v1802, %v1794
    %v2603 = vpack.c.b16 %v1803, %v1795
    %v2604 = vpack.c.b16 %v1804, %v1796
    %v2605 = vpack.c.b16 %v1805, %v1797
    %v2606 = vpack.c.b16 %v1806, %v1798
    %v2607 = vpack.c.b16 %v1807, %v1799
    %v2608 = vpack.c.b16 %v1808, %v1800
    %v2609 = vpack.c.b16 %v1809, %v1801
    %v2610 = vpack.c.b16 %v1818, %v1810
    %v2611 = vpack.c.b16 %v1819, %v1811
    %v2612 = vpack.c.b16 %v1820, %v1812
    %v2613 = vpack.c.b16 %v1821, %v1813
    %v2614 = vpack.c.b16 %v1822, %v1814
    %v2615 = vpack.c.b16 %v1823, %v1815
    %v2616 = vpack.c.b16 %v1824, %v1816
    %v2617 = vpack.c.b16 %v1825, %v1817
    %v2618 = vpack.c.b16 %v1834, %v1826
    %v2619 = vpack.c.b16 %v1835, %v1827
    %v2620 = vpack.c.b16 %v1836, %v1828
    %v2621 = vpack.c.b16 %v1837, %v1829
    %v2622 = vpack.c.b16 %v1838, %v1830
    %v2623 = vpack.c.b16 %v1839, %v1831
    %v2624 = vpack.c.b16 %v1840, %v1832
    %v2625 = vpack.c.b16 %v1841, %v1833
    %v2626 = vpack.c.b16 %v1850, %v1842
    %v2627 = vpack.c.b16 %v1851, %v1843
    %v2628 = vpack.c.b16 %v1852, %v1844
    %v2629 = vpack.c.b16 %v1853, %v1845
    %v2630 = vpack.c.b16 %v1854, %v1846
    %v2631 = vpack.c.b16 %v1855, %v1847
    %v2632 = vpack.c.b16 %v1856, %v1848
    %v2633 = vpack.c.b16 %v1857, %v1849
    %v2634 = vpack.c.b16 %v1866, %v1858
    %v2635 = vpack.c.b16 %v1867, %v1859
    %v2636 = vpack.c.b16 %v1868, %v1860
    %v2637 = vpack.c.b16 %v1869, %v1861
    %v2638 = vpack.c.b16 %v1870, %v1862
    %v2639 = vpack.c.b16 %v1871, %v1863
    %v2640 = vpack.c.b16 %v1872, %v1864
    %v2641 = vpack.c.b16 %v1873, %v1865
    %v2642 = vpack.c.b16 %v1882, %v1874
    %v2643 = vpack.c.b16 %v1883, %v1875
    %v2644 = vpack.c.b16 %v1884, %v1876
    %v2645 = vpack.c.b16 %v1885, %v1877
    %v2646 = vpack.c.b16 %v1886, %v1878
    %v2647 = vpack.c.b16 %v1887, %v1879
    %v2648 = vpack.c.b16 %v1888, %v1880
    %v2649 = vpack.c.b16 %v1889, %v1881
    %v2650 = vpack.c.b16 %v1898, %v1890
    %v2651 = vpack.c.b16 %v1899, %v1891
    %v2652 = vpack.c.b16 %v1900, %v1892
    %v2653 = vpack.c.b16 %v1901, %v1893
    %v2654 = vpack.c.b16 %v1902, %v1894
    %v2655 = vpack.c.b16 %v1903, %v1895
    %v2656 = vpack.c.b16 %v1904, %v1896
    %v2657 = vpack.c.b16 %v1905, %v1897
    %v2658 = vpack.c.b16 %v1914, %v1906
    %v2659 = vpack.c.b16 %v1915, %v1907
    %v2660 = vpack.c.b16 %v1916, %v1908
    %v2661 = vpack.c.b16 %v1917, %v1909
    %v2662 = vpack.c.b16 %v1918, %v1910
    %v2663 = vpack.c.b16 %v1919, %v1911
    %v2664 = vpack.c.b16 %v1920, %v1912
    %v2665 = vpack.c.b16 %v1921, %v1913
    %v2666 = vpack.c.b16 %v1930, %v1922
    %v2667 = vpack.c.b16 %v1931, %v1923
    %v2668 = vpack.c.b16 %v1932, %v1924
    %v2669 = vpack.c.b16 %v1933, %v1925
    %v2670 = vpack.c.b16 %v1934, %v1926
    %v2671 = vpack.c.b16 %v1935, %v1927
    %v2672 = vpack.c.b16 %v1936, %v1928
    %v2673 = vpack.c.b16 %v1937, %v1929
    %v2674 = vpack.c.b16 %v1946, %v1938
    %v2675 = vpack.c.b16 %v1947, %v1939
    %v2676 = vpack.c.b16 %v1948, %v1940
    %v2677 = vpack.c.b16 %v1949, %v1941
    %v2678 = vpack.c.b16 %v1950, %v1942
    %v2679 = vpack.c.b16 %v1951, %v1943
    %v2680 = vpack.c.b16 %v1952, %v1944
    %v2681 = vpack.c.b16 %v1953, %v1945
    %v2682 = vpack.c.b16 %v1962, %v1954
    %v2683 = vpack.c.b16 %v1963, %v1955
    %v2684 = vpack.c.b16 %v1964, %v1956
    %v2685 = vpack.c.b16 %v1965, %v1957
    %v2686 = vpack.c.b16 %v1966, %v1958
    %v2687 = vpack.c.b16 %v1967, %v1959
    %v2688 = vpack.c.b16 %v1968, %v1960
    %v2689 = vpack.c.b16 %v1969, %v1961
    %v2690 = vpack.c.b16 %v1978, %v1970
    %v2691 = vpack.c.b16 %v1979, %v1971
    %v2692 = vpack.c.b16 %v1980, %v1972
    %v2693 = vpack.c.b16 %v1981, %v1973
    %v2694 = vpack.c.b16 %v1982, %v1974
    %v2695 = vpack.c.b16 %v1983, %v1975
    %v2696 = vpack.c.b16 %v1984, %v1976
    %v2697 = vpack.c.b16 %v1985, %v1977
    %v2698 = vpack.c.b16 %v1994, %v1986
    %v2699 = vpack.c.b16 %v1995, %v1987
    %v2700 = vpack.c.b16 %v1996, %v1988
    %v2701 = vpack.c.b16 %v1997, %v1989
    %v2702 = vpack.c.b16 %v1998, %v1990
    %v2703 = vpack.c.b16 %v1999, %v1991
    %v2704 = vpack.c.b16 %v2000, %v1992
    %v2705 = vpack.c.b16 %v2001, %v1993
    %v2706 = vpack.c.b16 %v2010, %v2002
    %v2707 = vpack.c.b16 %v2011, %v2003
    %v2708 = vpack.c.b16 %v2012, %v2004
    %v2709 = vpack.c.b16 %v2013, %v2005
    %v2710 = vpack.c.b16 %v2014, %v2006
    %v2711 = vpack.c.b16 %v2015, %v2007
    %v2712 = vpack.c.b16 %v2016, %v2008
    %v2713 = vpack.c.b16 %v2017, %v2009
    %v2714 = vpack.c.b16 %v2026, %v2018
    %v2715 = vpack.c.b16 %v2027, %v2019
    %v2716 = vpack.c.b16 %v2028, %v2020
    %v2717 = vpack.c.b16 %v2029, %v2021
    %v2718 = vpack.c.b16 %v2030, %v2022
    %v2719 = vpack.c.b16 %v2031, %v2023
    %v2720 = vpack.c.b16 %v2032, %v2024
    %v2721 = vpack.c.b16 %v2033, %v2025
    %v2722 = vpack.c.b16 %v2042, %v2034
    %v2723 = vpack.c.b16 %v2043, %v2035
    %v2724 = vpack.c.b16 %v2044, %v2036
    %v2725 = vpack.c.b16 %v2045, %v2037
    %v2726 = vpack.c.b16 %v2046, %v2038
    %v2727 = vpack.c.b16 %v2047, %v2039
    %v2728 = vpack.c.b16 %v2048, %v2040
    %v2729 = vpack.c.b16 %v2049, %v2041
    %v2730 = vpack.c.b16 %v2058, %v2050
    %v2731 = vpack.c.b16 %v2059, %v2051
    %v2732 = vpack.c.b16 %v2060, %v2052
    %v2733 = vpack.c.b16 %v2061, %v2053
    %v2734 = vpack.c.b16 %v2062, %v2054
    %v2735 = vpack.c.b16 %v2063, %v2055
    %v2736 = vpack.c.b16 %v2064, %v2056
    %v2737 = vpack.c.b16 %v2065, %v2057
    %v2738 = vpack.c.b16 %v2074, %v2066
    %v2739 = vpack.c.b16 %v2075, %v2067
    %v2740 = vpack.c.b16 %v2076, %v2068
    %v2741 = vpack.c.b16 %v2077, %v2069
    %v2742 = vpack.c.b16 %v2078, %v2070
    %v2743 = vpack.c.b16 %v2079, %v2071
    %v2744 = vpack.c.b16 %v2080, %v2072
    %v2745 = vpack.c.b16 %v2081, %v2073
    %v2746 = vpack.c.b16 %v2090, %v2082
    %v2747 = vpack.c.b16 %v2091, %v2083
    %v2748 = vpack.c.b16 %v2092, %v2084
    %v2749 = vpack.c.b16 %v2093, %v2085
    %v2750 = vpack.c.b16 %v2094, %v2086
    %v2751 = vpack.c.b16 %v2095, %v2087
    %v2752 = vpack.c.b16 %v2096, %v2088
    %v2753 = vpack.c.b16 %v2097, %v2089
    %v2754 = vpack.c.b16 %v2106, %v2098
    %v2755 = vpack.c.b16 %v2107, %v2099
    %v2756 = vpack.c.b16 %v2108, %v2100
    %v2757 = vpack.c.b16 %v2109, %v2101
    %v2758 = vpack.c.b16 %v2110, %v2102
    %v2759 = vpack.c.b16 %v2111, %v2103
    %v2760 = vpack.c.b16 %v2112, %v2104
    %v2761 = vpack.c.b16 %v2113, %v2105
    %v2762 = vpack.c.b16 %v2122, %v2114
    %v2763 = vpack.c.b16 %v2123, %v2115
    %v2764 = vpack.c.b16 %v2124, %v2116
    %v2765 = vpack.c.b16 %v2125, %v2117
    %v2766 = vpack.c.b16 %v2126, %v2118
    %v2767 = vpack.c.b16 %v2127, %v2119
    %v2768 = vpack.c.b16 %v2128, %v2120
    %v2769 = vpack.c.b16 %v2129, %v2121
    %v2770 = vpack.c.b16 %v2138, %v2130
    %v2771 = vpack.c.b16 %v2139, %v2131
    %v2772 = vpack.c.b16 %v2140, %v2132
    %v2773 = vpack.c.b16 %v2141, %v2133
    %v2774 = vpack.c.b16 %v2142, %v2134
    %v2775 = vpack.c.b16 %v2143, %v2135
    %v2776 = vpack.c.b16 %v2144, %v2136
    %v2777 = vpack.c.b16 %v2145, %v2137
    %v2778 = vpack.c.b16 %v2154, %v2146
    %v2779 = vpack.c.b16 %v2155, %v2147
    %v2780 = vpack.c.b16 %v2156, %v2148
    %v2781 = vpack.c.b16 %v2157, %v2149
    %v2782 = vpack.c.b16 %v2158, %v2150
    %v2783 = vpack.c.b16 %v2159, %v2151
    %v2784 = vpack.c.b16 %v2160, %v2152
    %v2785 = vpack.c.b16 %v2161, %v2153
    %v2786 = vpack.c.b16 %v2170, %v2162
    %v2787 = vpack.c.b16 %v2171, %v2163
    %v2788 = vpack.c.b16 %v2172, %v2164
    %v2789 = vpack.c.b16 %v2173, %v2165
    %v2790 = vpack.c.b16 %v2174, %v2166
    %v2791 = vpack.c.b16 %v2175, %v2167
    %v2792 = vpack.c.b16 %v2176, %v2168
    %v2793 = vpack.c.b16 %v2177, %v2169
    %v2794 = vpack.c.b16 %v2186, %v2178
    %v2795 = vpack.c.b16 %v2187, %v2179
    %v2796 = vpack.c.b16 %v2188, %v2180
    %v2797 = vpack.c.b16 %v2189, %v2181
    %v2798 = vpack.c.b16 %v2190, %v2182
    %v2799 = vpack.c.b16 %v2191, %v2183
    %v2800 = vpack.c.b16 %v2192, %v2184
    %v2801 = vpack.c.b16 %v2193, %v2185
    %v2802 = vpack.c.b16 %v2202, %v2194
    %v2803 = vpack.c.b16 %v2203, %v2195
    %v2804 = vpack.c.b16 %v2204, %v2196
    %v2805 = vpack.c.b16 %v2205, %v2197
    %v2806 = vpack.c.b16 %v2206, %v2198
    %v2807 = vpack.c.b16 %v2207, %v2199
    %v2808 = vpack.c.b16 %v2208, %v2200
    %v2809 = vpack.c.b16 %v2209, %v2201
    %v2810 = vpack.c.b16 %v2218, %v2210
    %v2811 = vpack.c.b16 %v2219, %v2211
    %v2812 = vpack.c.b16 %v2220, %v2212
    %v2813 = vpack.c.b16 %v2221, %v2213
    %v2814 = vpack.c.b16 %v2222, %v2214
    %v2815 = vpack.c.b16 %v2223, %v2215
    %v2816 = vpack.c.b16 %v2224, %v2216
    %v2817 = vpack.c.b16 %v2225, %v2217
    %v2818 = vpack.c.b16 %v2234, %v2226
    %v2819 = vpack.c.b16 %v2235, %v2227
    %v2820 = vpack.c.b16 %v2236, %v2228
    %v2821 = vpack.c.b16 %v2237, %v2229
    %v2822 = vpack.c.b16 %v2238, %v2230
    %v2823 = vpack.c.b16 %v2239, %v2231
    %v2824 = vpack.c.b16 %v2240, %v2232
    %v2825 = vpack.c.b16 %v2241, %v2233
    %v2826 = vpack.c.b16 %v2250, %v2242
    %v2827 = vpack.c.b16 %v2251, %v2243
    %v2828 = vpack.c.b16 %v2252, %v2244
    %v2829 = vpack.c.b16 %v2253, %v2245
    %v2830 = vpack.c.b16 %v2254, %v2246
    %v2831 = vpack.c.b16 %v2255, %v2247
    %v2832 = vpack.c.b16 %v2256, %v2248
    %v2833 = vpack.c.b16 %v2257, %v2249
    %v2834 = vpack.c.b16 %v2266, %v2258
    %v2835 = vpack.c.b16 %v2267, %v2259
    %v2836 = vpack.c.b16 %v2268, %v2260
    %v2837 = vpack.c.b16 %v2269, %v2261
    %v2838 = vpack.c.b16 %v2270, %v2262
    %v2839 = vpack.c.b16 %v2271, %v2263
    %v2840 = vpack.c.b16 %v2272, %v2264
    %v2841 = vpack.c.b16 %v2273, %v2265
    %v2842 = vpack.c.b16 %v2282, %v2274
    %v2843 = vpack.c.b16 %v2283, %v2275
    %v2844 = vpack.c.b16 %v2284, %v2276
    %v2845 = vpack.c.b16 %v2285, %v2277
    %v2846 = vpack.c.b16 %v2286, %v2278
    %v2847 = vpack.c.b16 %v2287, %v2279
    %v2848 = vpack.c.b16 %v2288, %v2280
    %v2849 = vpack.c.b16 %v2289, %v2281
    %v2850 = vpack.c.b16 %v2298, %v2290
    %v2851 = vpack.c.b16 %v2299, %v2291
    %v2852 = vpack.c.b16 %v2300, %v2292
    %v2853 = vpack.c.b16 %v2301, %v2293
    %v2854 = vpack.c.b16 %v2302, %v2294
    %v2855 = vpack.c.b16 %v2303, %v2295
    %v2856 = vpack.c.b16 %v2304, %v2296
    %v2857 = vpack.c.b16 %v2305, %v2297
    %v2858 = vpack.c.b16 %v2314, %v2306
    %v2859 = vpack.c.b16 %v2315, %v2307
    %v2860 = vpack.c.b16 %v2316, %v2308
    %v2861 = vpack.c.b16 %v2317, %v2309
    %v2862 = vpack.c.b16 %v2318, %v2310
    %v2863 = vpack.c.b16 %v2319, %v2311
    %v2864 = vpack.c.b16 %v2320, %v2312
    %v2865 = vpack.c.b16 %v2321, %v2313
    %v2866 = vpack.c.b16 %v2330, %v2322
    %v2867 = vpack.c.b16 %v2331, %v2323
    %v2868 = vpack.c.b16 %v2332, %v2324
    %v2869 = vpack.c.b16 %v2333, %v2325
    %v2870 = vpack.c.b16 %v2334, %v2326
    %v2871 = vpack.c.b16 %v2335, %v2327
    %v2872 = vpack.c.b16 %v2336, %v2328
    %v2873 = vpack.c.b16 %v2337, %v2329
    %v2874 = vpack.c.b16 %v2346, %v2338
    %v2875 = vpack.c.b16 %v2347, %v2339
    %v2876 = vpack.c.b16 %v2348, %v2340
    %v2877 = vpack.c.b16 %v2349, %v2341
    %v2878 = vpack.c.b16 %v2350, %v2342
    %v2879 = vpack.c.b16 %v2351, %v2343
    %v2880 = vpack.c.b16 %v2352, %v2344
    %v2881 = vpack.c.b16 %v2353, %v2345
    %v2882 = vpack.c.b16 %v2362, %v2354
    %v2883 = vpack.c.b16 %v2363, %v2355
    %v2884 = vpack.c.b16 %v2364, %v2356
    %v2885 = vpack.c.b16 %v2365, %v2357
    %v2886 = vpack.c.b16 %v2366, %v2358
    %v2887 = vpack.c.b16 %v2367, %v2359
    %v2888 = vpack.c.b16 %v2368, %v2360
    %v2889 = vpack.c.b16 %v2369, %v2361
    %v2890 = vpack.c.b16 %v2378, %v2370
    %v2891 = vpack.c.b16 %v2379, %v2371
    %v2892 = vpack.c.b16 %v2380, %v2372
    %v2893 = vpack.c.b16 %v2381, %v2373
    %v2894 = vpack.c.b16 %v2382, %v2374
    %v2895 = vpack.c.b16 %v2383, %v2375
    %v2896 = vpack.c.b16 %v2384, %v2376
    %v2897 = vpack.c.b16 %v2385, %v2377
    %3410 = vmatprep.subr.bf16.mxu0 %v2387
    %3411 = vmatpush1.bf16.msra.mxu0 %v2386
    %3412 = vmatprep.subr.bf16.mxu0 %v2395
    %3413 = vmatpush1.bf16.msra.mxu0 %v2394
    %3414 = vmatprep.subr.bf16.mxu0 %v2403
    %3415 = vmatpush1.bf16.msra.mxu0 %v2402
    %3416 = vmatprep.subr.bf16.mxu0 %v2411
    %3417 = vmatpush1.bf16.msra.mxu0 %v2410
    %3418 = vmatprep.subr.bf16.mxu0 %v2419
    %3419 = vmatpush1.bf16.msra.mxu0 %v2418
    %3420 = vmatprep.subr.bf16.mxu0 %v2427
    %3421 = vmatpush1.bf16.msra.mxu0 %v2426
    %3422 = vmatprep.subr.bf16.mxu0 %v2435
    %3423 = vmatpush1.bf16.msra.mxu0 %v2434
    %3424 = vmatprep.subr.bf16.mxu0 %v2443
    %3425 = vmatpush1.bf16.msra.mxu0 %v2442
    %3426 = vmatprep.subr.bf16.mxu0 %v2451
    %3427 = vmatpush1.bf16.msra.mxu0 %v2450
    %3428 = vmatprep.subr.bf16.mxu0 %v2459
    %3429 = vmatpush1.bf16.msra.mxu0 %v2458
    %3430 = vmatprep.subr.bf16.mxu0 %v2467
    %3431 = vmatpush1.bf16.msra.mxu0 %v2466
    %3432 = vmatprep.subr.bf16.mxu0 %v2475
    %3433 = vmatpush1.bf16.msra.mxu0 %v2474
    %3434 = vmatprep.subr.bf16.mxu0 %v2483
    %3435 = vmatpush1.bf16.msra.mxu0 %v2482
    %3436 = vmatprep.subr.bf16.mxu0 %v2491
    %3437 = vmatpush1.bf16.msra.mxu0 %v2490
    %3438 = vmatprep.subr.bf16.mxu0 %v2499
    %3439 = vmatpush1.bf16.msra.mxu0 %v2498
    %3440 = vmatprep.subr.bf16.mxu0 %v2507
    %3441 = vmatpush1.bf16.msra.mxu0 %v2506
    %3442 = vmatprep.mubr.bf16.mxu0 %v802
    %3443 = vmatmul.mubr.bf16.gmra.mrb[0].mxu0 %v801
    %v3444 = vpop.f32.mrb[0].mxu0
    %v3445 = vadd.f32 %v813, %v3444
    %v3446 = vpop.f32.mrb[0].mxu0
    %v3447 = vadd.f32 %v817, %v3446
    %v3448 = vpop.f32.mrb[0].mxu0
    %v3449 = vadd.f32 %v813, %v3448
    %v3450 = vpop.f32.mrb[0].mxu0
    %v3451 = vadd.f32 %v817, %v3450
    %3452 = vdwg.mxu0
    %3453 = vmatprep.subr.bf16.mxu0 %v2515
    %3454 = vmatpush1.bf16.msra.mxu0 %v2514
    %3455 = vmatprep.subr.bf16.mxu0 %v2523
    %3456 = vmatpush1.bf16.msra.mxu0 %v2522
    %3457 = vmatprep.subr.bf16.mxu0 %v2531
    %3458 = vmatpush1.bf16.msra.mxu0 %v2530
    %3459 = vmatprep.subr.bf16.mxu0 %v2539
    %3460 = vmatpush1.bf16.msra.mxu0 %v2538
    %3461 = vmatprep.subr.bf16.mxu0 %v2547
    %3462 = vmatpush1.bf16.msra.mxu0 %v2546
    %3463 = vmatprep.subr.bf16.mxu0 %v2555
    %3464 = vmatpush1.bf16.msra.mxu0 %v2554
    %3465 = vmatprep.subr.bf16.mxu0 %v2563
    %3466 = vmatpush1.bf16.msra.mxu0 %v2562
    %3467 = vmatprep.subr.bf16.mxu0 %v2571
    %3468 = vmatpush1.bf16.msra.mxu0 %v2570
    %3469 = vmatprep.subr.bf16.mxu0 %v2579
    %3470 = vmatpush1.bf16.msra.mxu0 %v2578
    %3471 = vmatprep.subr.bf16.mxu0 %v2587
    %3472 = vmatpush1.bf16.msra.mxu0 %v2586
    %3473 = vmatprep.subr.bf16.mxu0 %v2595
    %3474 = vmatpush1.bf16.msra.mxu0 %v2594
    %3475 = vmatprep.subr.bf16.mxu0 %v2603
    %3476 = vmatpush1.bf16.msra.mxu0 %v2602
    %3477 = vmatprep.subr.bf16.mxu0 %v2611
    %3478 = vmatpush1.bf16.msra.mxu0 %v2610
    %3479 = vmatprep.subr.bf16.mxu0 %v2619
    %3480 = vmatpush1.bf16.msra.mxu0 %v2618
    %3481 = vmatprep.subr.bf16.mxu0 %v2627
    %3482 = vmatpush1.bf16.msra.mxu0 %v2626
    %3483 = vmatprep.subr.bf16.mxu0 %v2635
    %3484 = vmatpush1.bf16.msra.mxu0 %v2634
    %3485 = vmatprep.mubr.bf16.mxu0 %v804
    %3486 = vmatmul.mubr.bf16.gmra.mrb[0].mxu0 %v803
    %v3487 = vpop.f32.mrb[0].mxu0
    %v3488 = vadd.f32 %v3445, %v3487
    %v3489 = vpop.f32.mrb[0].mxu0
    %v3490 = vadd.f32 %v3447, %v3489
    %v3491 = vpop.f32.mrb[0].mxu0
    %v3492 = vadd.f32 %v3449, %v3491
    %v3493 = vpop.f32.mrb[0].mxu0
    %v3494 = vadd.f32 %v3451, %v3493
    %3495 = vdwg.mxu0
    %3496 = vmatprep.subr.bf16.mxu0 %v2643
    %3497 = vmatpush1.bf16.msra.mxu0 %v2642
    %3498 = vmatprep.subr.bf16.mxu0 %v2651
    %3499 = vmatpush1.bf16.msra.mxu0 %v2650
    %3500 = vmatprep.subr.bf16.mxu0 %v2659
    %3501 = vmatpush1.bf16.msra.mxu0 %v2658
    %3502 = vmatprep.subr.bf16.mxu0 %v2667
    %3503 = vmatpush1.bf16.msra.mxu0 %v2666
    %3504 = vmatprep.subr.bf16.mxu0 %v2675
    %3505 = vmatpush1.bf16.msra.mxu0 %v2674
    %3506 = vmatprep.subr.bf16.mxu0 %v2683
    %3507 = vmatpush1.bf16.msra.mxu0 %v2682
    %3508 = vmatprep.subr.bf16.mxu0 %v2691
    %3509 = vmatpush1.bf16.msra.mxu0 %v2690
    %3510 = vmatprep.subr.bf16.mxu0 %v2699
    %3511 = vmatpush1.bf16.msra.mxu0 %v2698
    %3512 = vmatprep.subr.bf16.mxu0 %v2707
    %3513 = vmatpush1.bf16.msra.mxu0 %v2706
    %3514 = vmatprep.subr.bf16.mxu0 %v2715
    %3515 = vmatpush1.bf16.msra.mxu0 %v2714
    %3516 = vmatprep.subr.bf16.mxu0 %v2723
    %3517 = vmatpush1.bf16.msra.mxu0 %v2722
    %3518 = vmatprep.subr.bf16.mxu0 %v2731
    %3519 = vmatpush1.bf16.msra.mxu0 %v2730
    %3520 = vmatprep.subr.bf16.mxu0 %v2739
    %3521 = vmatpush1.bf16.msra.mxu0 %v2738
    %3522 = vmatprep.subr.bf16.mxu0 %v2747
    %3523 = vmatpush1.bf16.msra.mxu0 %v2746
    %3524 = vmatprep.subr.bf16.mxu0 %v2755
    %3525 = vmatpush1.bf16.msra.mxu0 %v2754
    %3526 = vmatprep.subr.bf16.mxu0 %v2763
    %3527 = vmatpush1.bf16.msra.mxu0 %v2762
    %3528 = vmatprep.mubr.bf16.mxu0 %v806
    %3529 = vmatmul.mubr.bf16.gmra.mrb[0].mxu0 %v805
    %v3530 = vpop.f32.mrb[0].mxu0
    %v3531 = vadd.f32 %v3488, %v3530
    %v3532 = vpop.f32.mrb[0].mxu0
    %v3533 = vadd.f32 %v3490, %v3532
    %v3534 = vpop.f32.mrb[0].mxu0
    %v3535 = vadd.f32 %v3492, %v3534
    %v3536 = vpop.f32.mrb[0].mxu0
    %v3537 = vadd.f32 %v3494, %v3536
    %3538 = vdwg.mxu0
    %3539 = vmatprep.subr.bf16.mxu0 %v2771
    %3540 = vmatpush1.bf16.msra.mxu0 %v2770
    %3541 = vmatprep.subr.bf16.mxu0 %v2779
    %3542 = vmatpush1.bf16.msra.mxu0 %v2778
    %3543 = vmatprep.subr.bf16.mxu0 %v2787
    %3544 = vmatpush1.bf16.msra.mxu0 %v2786
    %3545 = vmatprep.subr.bf16.mxu0 %v2795
    %3546 = vmatpush1.bf16.msra.mxu0 %v2794
    %3547 = vmatprep.subr.bf16.mxu0 %v2803
    %3548 = vmatpush1.bf16.msra.mxu0 %v2802
    %3549 = vmatprep.subr.bf16.mxu0 %v2811
    %3550 = vmatpush1.bf16.msra.mxu0 %v2810
    %3551 = vmatprep.subr.bf16.mxu0 %v2819
    %3552 = vmatpush1.bf16.msra.mxu0 %v2818
    %3553 = vmatprep.subr.bf16.mxu0 %v2827
    %3554 = vmatpush1.bf16.msra.mxu0 %v2826
    %3555 = vmatprep.subr.bf16.mxu0 %v2835
    %3556 = vmatpush1.bf16.msra.mxu0 %v2834
    %3557 = vmatprep.subr.bf16.mxu0 %v2843
    %3558 = vmatpush1.bf16.msra.mxu0 %v2842
    %3559 = vmatprep.subr.bf16.mxu0 %v2851
    %3560 = vmatpush1.bf16.msra.mxu0 %v2850
    %3561 = vmatprep.subr.bf16.mxu0 %v2859
    %3562 = vmatpush1.bf16.msra.mxu0 %v2858
    %3563 = vmatprep.subr.bf16.mxu0 %v2867
    %3564 = vmatpush1.bf16.msra.mxu0 %v2866
    %3565 = vmatprep.subr.bf16.mxu0 %v2875
    %3566 = vmatpush1.bf16.msra.mxu0 %v2874
    %3567 = vmatprep.subr.bf16.mxu0 %v2883
    %3568 = vmatpush1.bf16.msra.mxu0 %v2882
    %3569 = vmatprep.subr.bf16.mxu0 %v2891
    %3570 = vmatpush1.bf16.msra.mxu0 %v2890
    %3571 = vmatprep.mubr.bf16.mxu0 %v808
    %3572 = vmatmul.mubr.bf16.gmra.mrb[0].mxu0 %v807
    %v3573 = vpop.f32.mrb[0].mxu0
    %v3574 = vadd.f32 %v3531, %v3573
    %v3575 = vpop.f32.mrb[0].mxu0
    %v3576 = vadd.f32 %v3533, %v3575
    %v3577 = vpop.f32.mrb[0].mxu0
    %v3578 = vadd.f32 %v3535, %v3577
    %v3579 = vpop.f32.mrb[0].mxu0
    %v3580 = vadd.f32 %v3537, %v3579
    %3581 = vdwg.mxu0
    %3582 = vmatprep.subr.bf16.mxu0 %v2389
    %3583 = vmatpush1.bf16.msra.mxu0 %v2388
    %3584 = vmatprep.subr.bf16.mxu0 %v2397
    %3585 = vmatpush1.bf16.msra.mxu0 %v2396
    %3586 = vmatprep.subr.bf16.mxu0 %v2405
    %3587 = vmatpush1.bf16.msra.mxu0 %v2404
    %3588 = vmatprep.subr.bf16.mxu0 %v2413
    %3589 = vmatpush1.bf16.msra.mxu0 %v2412
    %3590 = vmatprep.subr.bf16.mxu0 %v2421
    %3591 = vmatpush1.bf16.msra.mxu0 %v2420
    %3592 = vmatprep.subr.bf16.mxu0 %v2429
    %3593 = vmatpush1.bf16.msra.mxu0 %v2428
    %3594 = vmatprep.subr.bf16.mxu0 %v2437
    %3595 = vmatpush1.bf16.msra.mxu0 %v2436
    %3596 = vmatprep.subr.bf16.mxu0 %v2445
    %3597 = vmatpush1.bf16.msra.mxu0 %v2444
    %3598 = vmatprep.subr.bf16.mxu0 %v2453
    %3599 = vmatpush1.bf16.msra.mxu0 %v2452
    %3600 = vmatprep.subr.bf16.mxu0 %v2461
    %3601 = vmatpush1.bf16.msra.mxu0 %v2460
    %3602 = vmatprep.subr.bf16.mxu0 %v2469
    %3603 = vmatpush1.bf16.msra.mxu0 %v2468
    %3604 = vmatprep.subr.bf16.mxu0 %v2477
    %3605 = vmatpush1.bf16.msra.mxu0 %v2476
    %3606 = vmatprep.subr.bf16.mxu0 %v2485
    %3607 = vmatpush1.bf16.msra.mxu0 %v2484
    %3608 = vmatprep.subr.bf16.mxu0 %v2493
    %3609 = vmatpush1.bf16.msra.mxu0 %v2492
    %3610 = vmatprep.subr.bf16.mxu0 %v2501
    %3611 = vmatpush1.bf16.msra.mxu0 %v2500
    %3612 = vmatprep.subr.bf16.mxu0 %v2509
    %3613 = vmatpush1.bf16.msra.mxu0 %v2508
    %3614 = vmatprep.mubr.bf16.mxu0 %v802
    %3615 = vmatmul.mubr.bf16.gmra.mrb[0].mxu0 %v801
    %v3616 = vpop.f32.mrb[0].mxu0
    %v3617 = vadd.f32 %v821, %v3616
    %v3618 = vpop.f32.mrb[0].mxu0
    %v3619 = vadd.f32 %v825, %v3618
    %v3620 = vpop.f32.mrb[0].mxu0
    %v3621 = vadd.f32 %v821, %v3620
    %v3622 = vpop.f32.mrb[0].mxu0
    %v3623 = vadd.f32 %v825, %v3622
    %3624 = vdwg.mxu0
    %3625 = vmatprep.subr.bf16.mxu0 %v2517
    %3626 = vmatpush1.bf16.msra.mxu0 %v2516
    %3627 = vmatprep.subr.bf16.mxu0 %v2525
    %3628 = vmatpush1.bf16.msra.mxu0 %v2524
    %3629 = vmatprep.subr.bf16.mxu0 %v2533
    %3630 = vmatpush1.bf16.msra.mxu0 %v2532
    %3631 = vmatprep.subr.bf16.mxu0 %v2541
    %3632 = vmatpush1.bf16.msra.mxu0 %v2540
    %3633 = vmatprep.subr.bf16.mxu0 %v2549
    %3634 = vmatpush1.bf16.msra.mxu0 %v2548
    %3635 = vmatprep.subr.bf16.mxu0 %v2557
    %3636 = vmatpush1.bf16.msra.mxu0 %v2556
    %3637 = vmatprep.subr.bf16.mxu0 %v2565
    %3638 = vmatpush1.bf16.msra.mxu0 %v2564
    %3639 = vmatprep.subr.bf16.mxu0 %v2573
    %3640 = vmatpush1.bf16.msra.mxu0 %v2572
    %3641 = vmatprep.subr.bf16.mxu0 %v2581
    %3642 = vmatpush1.bf16.msra.mxu0 %v2580
    %3643 = vmatprep.subr.bf16.mxu0 %v2589
    %3644 = vmatpush1.bf16.msra.mxu0 %v2588
    %3645 = vmatprep.subr.bf16.mxu0 %v2597
    %3646 = vmatpush1.bf16.msra.mxu0 %v2596
    %3647 = vmatprep.subr.bf16.mxu0 %v2605
    %3648 = vmatpush1.bf16.msra.mxu0 %v2604
    %3649 = vmatprep.subr.bf16.mxu0 %v2613
    %3650 = vmatpush1.bf16.msra.mxu0 %v2612
    %3651 = vmatprep.subr.bf16.mxu0 %v2621
    %3652 = vmatpush1.bf16.msra.mxu0 %v2620
    %3653 = vmatprep.subr.bf16.mxu0 %v2629
    %3654 = vmatpush1.bf16.msra.mxu0 %v2628
    %3655 = vmatprep.subr.bf16.mxu0 %v2637
    %3656 = vmatpush1.bf16.msra.mxu0 %v2636
    %3657 = vmatprep.mubr.bf16.mxu0 %v804
    %3658 = vmatmul.mubr.bf16.gmra.mrb[0].mxu0 %v803
    %v3659 = vpop.f32.mrb[0].mxu0
    %v3660 = vadd.f32 %v3617, %v3659
    %v3661 = vpop.f32.mrb[0].mxu0
    %v3662 = vadd.f32 %v3619, %v3661
    %v3663 = vpop.f32.mrb[0].mxu0
    %v3664 = vadd.f32 %v3621, %v3663
    %v3665 = vpop.f32.mrb[0].mxu0
    %v3666 = vadd.f32 %v3623, %v3665
    %3667 = vdwg.mxu0
    %3668 = vmatprep.subr.bf16.mxu0 %v2645
    %3669 = vmatpush1.bf16.msra.mxu0 %v2644
    %3670 = vmatprep.subr.bf16.mxu0 %v2653
    %3671 = vmatpush1.bf16.msra.mxu0 %v2652
    %3672 = vmatprep.subr.bf16.mxu0 %v2661
    %3673 = vmatpush1.bf16.msra.mxu0 %v2660
    %3674 = vmatprep.subr.bf16.mxu0 %v2669
    %3675 = vmatpush1.bf16.msra.mxu0 %v2668
    %3676 = vmatprep.subr.bf16.mxu0 %v2677
    %3677 = vmatpush1.bf16.msra.mxu0 %v2676
    %3678 = vmatprep.subr.bf16.mxu0 %v2685
    %3679 = vmatpush1.bf16.msra.mxu0 %v2684
    %3680 = vmatprep.subr.bf16.mxu0 %v2693
    %3681 = vmatpush1.bf16.msra.mxu0 %v2692
    %3682 = vmatprep.subr.bf16.mxu0 %v2701
    %3683 = vmatpush1.bf16.msra.mxu0 %v2700
    %3684 = vmatprep.subr.bf16.mxu0 %v2709
    %3685 = vmatpush1.bf16.msra.mxu0 %v2708
    %3686 = vmatprep.subr.bf16.mxu0 %v2717
    %3687 = vmatpush1.bf16.msra.mxu0 %v2716
    %3688 = vmatprep.subr.bf16.mxu0 %v2725
    %3689 = vmatpush1.bf16.msra.mxu0 %v2724
    %3690 = vmatprep.subr.bf16.mxu0 %v2733
    %3691 = vmatpush1.bf16.msra.mxu0 %v2732
    %3692 = vmatprep.subr.bf16.mxu0 %v2741
    %3693 = vmatpush1.bf16.msra.mxu0 %v2740
    %3694 = vmatprep.subr.bf16.mxu0 %v2749
    %3695 = vmatpush1.bf16.msra.mxu0 %v2748
    %3696 = vmatprep.subr.bf16.mxu0 %v2757
    %3697 = vmatpush1.bf16.msra.mxu0 %v2756
    %3698 = vmatprep.subr.bf16.mxu0 %v2765
    %3699 = vmatpush1.bf16.msra.mxu0 %v2764
    %3700 = vmatprep.mubr.bf16.mxu0 %v806
    %3701 = vmatmul.mubr.bf16.gmra.mrb[0].mxu0 %v805
    %v3702 = vpop.f32.mrb[0].mxu0
    %v3703 = vadd.f32 %v3660, %v3702
    %v3704 = vpop.f32.mrb[0].mxu0
    %v3705 = vadd.f32 %v3662, %v3704
    %v3706 = vpop.f32.mrb[0].mxu0
    %v3707 = vadd.f32 %v3664, %v3706
    %v3708 = vpop.f32.mrb[0].mxu0
    %v3709 = vadd.f32 %v3666, %v3708
    %3710 = vdwg.mxu0
    %3711 = vmatprep.subr.bf16.mxu0 %v2773
    %3712 = vmatpush1.bf16.msra.mxu0 %v2772
    %3713 = vmatprep.subr.bf16.mxu0 %v2781
    %3714 = vmatpush1.bf16.msra.mxu0 %v2780
    %3715 = vmatprep.subr.bf16.mxu0 %v2789
    %3716 = vmatpush1.bf16.msra.mxu0 %v2788
    %3717 = vmatprep.subr.bf16.mxu0 %v2797
    %3718 = vmatpush1.bf16.msra.mxu0 %v2796
    %3719 = vmatprep.subr.bf16.mxu0 %v2805
    %3720 = vmatpush1.bf16.msra.mxu0 %v2804
    %3721 = vmatprep.subr.bf16.mxu0 %v2813
    %3722 = vmatpush1.bf16.msra.mxu0 %v2812
    %3723 = vmatprep.subr.bf16.mxu0 %v2821
    %3724 = vmatpush1.bf16.msra.mxu0 %v2820
    %3725 = vmatprep.subr.bf16.mxu0 %v2829
    %3726 = vmatpush1.bf16.msra.mxu0 %v2828
    %3727 = vmatprep.subr.bf16.mxu0 %v2837
    %3728 = vmatpush1.bf16.msra.mxu0 %v2836
    %3729 = vmatprep.subr.bf16.mxu0 %v2845
    %3730 = vmatpush1.bf16.msra.mxu0 %v2844
    %3731 = vmatprep.subr.bf16.mxu0 %v2853
    %3732 = vmatpush1.bf16.msra.mxu0 %v2852
    %3733 = vmatprep.subr.bf16.mxu0 %v2861
    %3734 = vmatpush1.bf16.msra.mxu0 %v2860
    %3735 = vmatprep.subr.bf16.mxu0 %v2869
    %3736 = vmatpush1.bf16.msra.mxu0 %v2868
    %3737 = vmatprep.subr.bf16.mxu0 %v2877
    %3738 = vmatpush1.bf16.msra.mxu0 %v2876
    %3739 = vmatprep.subr.bf16.mxu0 %v2885
    %3740 = vmatpush1.bf16.msra.mxu0 %v2884
    %3741 = vmatprep.subr.bf16.mxu0 %v2893
    %3742 = vmatpush1.bf16.msra.mxu0 %v2892
    %3743 = vmatprep.mubr.bf16.mxu0 %v808
    %3744 = vmatmul.mubr.bf16.gmra.mrb[0].mxu0 %v807
    %v3745 = vpop.f32.mrb[0].mxu0
    %v3746 = vadd.f32 %v3703, %v3745
    %v3747 = vpop.f32.mrb[0].mxu0
    %v3748 = vadd.f32 %v3705, %v3747
    %v3749 = vpop.f32.mrb[0].mxu0
    %v3750 = vadd.f32 %v3707, %v3749
    %v3751 = vpop.f32.mrb[0].mxu0
    %v3752 = vadd.f32 %v3709, %v3751
    %3753 = vdwg.mxu0
    %3754 = vmatprep.subr.bf16.mxu0 %v2391
    %3755 = vmatpush1.bf16.msra.mxu0 %v2390
    %3756 = vmatprep.subr.bf16.mxu0 %v2399
    %3757 = vmatpush1.bf16.msra.mxu0 %v2398
    %3758 = vmatprep.subr.bf16.mxu0 %v2407
    %3759 = vmatpush1.bf16.msra.mxu0 %v2406
    %3760 = vmatprep.subr.bf16.mxu0 %v2415
    %3761 = vmatpush1.bf16.msra.mxu0 %v2414
    %3762 = vmatprep.subr.bf16.mxu0 %v2423
    %3763 = vmatpush1.bf16.msra.mxu0 %v2422
    %3764 = vmatprep.subr.bf16.mxu0 %v2431
    %3765 = vmatpush1.bf16.msra.mxu0 %v2430
    %3766 = vmatprep.subr.bf16.mxu0 %v2439
    %3767 = vmatpush1.bf16.msra.mxu0 %v2438
    %3768 = vmatprep.subr.bf16.mxu0 %v2447
    %3769 = vmatpush1.bf16.msra.mxu0 %v2446
    %3770 = vmatprep.subr.bf16.mxu0 %v2455
    %3771 = vmatpush1.bf16.msra.mxu0 %v2454
    %3772 = vmatprep.subr.bf16.mxu0 %v2463
    %3773 = vmatpush1.bf16.msra.mxu0 %v2462
    %3774 = vmatprep.subr.bf16.mxu0 %v2471
    %3775 = vmatpush1.bf16.msra.mxu0 %v2470
    %3776 = vmatprep.subr.bf16.mxu0 %v2479
    %3777 = vmatpush1.bf16.msra.mxu0 %v2478
    %3778 = vmatprep.subr.bf16.mxu0 %v2487
    %3779 = vmatpush1.bf16.msra.mxu0 %v2486
    %3780 = vmatprep.subr.bf16.mxu0 %v2495
    %3781 = vmatpush1.bf16.msra.mxu0 %v2494
    %3782 = vmatprep.subr.bf16.mxu0 %v2503
    %3783 = vmatpush1.bf16.msra.mxu0 %v2502
    %3784 = vmatprep.subr.bf16.mxu0 %v2511
    %3785 = vmatpush1.bf16.msra.mxu0 %v2510
    %3786 = vmatprep.mubr.bf16.mxu0 %v802
    %3787 = vmatmul.mubr.bf16.gmra.mrb[0].mxu0 %v801
    %v3788 = vpop.f32.mrb[0].mxu0
    %v3789 = vadd.f32 %v829, %v3788
    %v3790 = vpop.f32.mrb[0].mxu0
    %v3791 = vadd.f32 %v833, %v3790
    %v3792 = vpop.f32.mrb[0].mxu0
    %v3793 = vadd.f32 %v829, %v3792
    %v3794 = vpop.f32.mrb[0].mxu0
    %v3795 = vadd.f32 %v833, %v3794
    %3796 = vdwg.mxu0
    %3797 = vmatprep.subr.bf16.mxu0 %v2519
    %3798 = vmatpush1.bf16.msra.mxu0 %v2518
    %3799 = vmatprep.subr.bf16.mxu0 %v2527
    %3800 = vmatpush1.bf16.msra.mxu0 %v2526
    %3801 = vmatprep.subr.bf16.mxu0 %v2535
    %3802 = vmatpush1.bf16.msra.mxu0 %v2534
    %3803 = vmatprep.subr.bf16.mxu0 %v2543
    %3804 = vmatpush1.bf16.msra.mxu0 %v2542
    %3805 = vmatprep.subr.bf16.mxu0 %v2551
    %3806 = vmatpush1.bf16.msra.mxu0 %v2550
    %3807 = vmatprep.subr.bf16.mxu0 %v2559
    %3808 = vmatpush1.bf16.msra.mxu0 %v2558
    %3809 = vmatprep.subr.bf16.mxu0 %v2567
    %3810 = vmatpush1.bf16.msra.mxu0 %v2566
    %3811 = vmatprep.subr.bf16.mxu0 %v2575
    %3812 = vmatpush1.bf16.msra.mxu0 %v2574
    %3813 = vmatprep.subr.bf16.mxu0 %v2583
    %3814 = vmatpush1.bf16.msra.mxu0 %v2582
    %3815 = vmatprep.subr.bf16.mxu0 %v2591
    %3816 = vmatpush1.bf16.msra.mxu0 %v2590
    %3817 = vmatprep.subr.bf16.mxu0 %v2599
    %3818 = vmatpush1.bf16.msra.mxu0 %v2598
    %3819 = vmatprep.subr.bf16.mxu0 %v2607
    %3820 = vmatpush1.bf16.msra.mxu0 %v2606
    %3821 = vmatprep.subr.bf16.mxu0 %v2615
    %3822 = vmatpush1.bf16.msra.mxu0 %v2614
    %3823 = vmatprep.subr.bf16.mxu0 %v2623
    %3824 = vmatpush1.bf16.msra.mxu0 %v2622
    %3825 = vmatprep.subr.bf16.mxu0 %v2631
    %3826 = vmatpush1.bf16.msra.mxu0 %v2630
    %3827 = vmatprep.subr.bf16.mxu0 %v2639
    %3828 = vmatpush1.bf16.msra.mxu0 %v2638
    %3829 = vmatprep.mubr.bf16.mxu0 %v804
    %3830 = vmatmul.mubr.bf16.gmra.mrb[0].mxu0 %v803
    %v3831 = vpop.f32.mrb[0].mxu0
    %v3832 = vadd.f32 %v3789, %v3831
    %v3833 = vpop.f32.mrb[0].mxu0
    %v3834 = vadd.f32 %v3791, %v3833
    %v3835 = vpop.f32.mrb[0].mxu0
    %v3836 = vadd.f32 %v3793, %v3835
    %v3837 = vpop.f32.mrb[0].mxu0
    %v3838 = vadd.f32 %v3795, %v3837
    %3839 = vdwg.mxu0
    %3840 = vmatprep.subr.bf16.mxu0 %v2647
    %3841 = vmatpush1.bf16.msra.mxu0 %v2646
    %3842 = vmatprep.subr.bf16.mxu0 %v2655
    %3843 = vmatpush1.bf16.msra.mxu0 %v2654
    %3844 = vmatprep.subr.bf16.mxu0 %v2663
    %3845 = vmatpush1.bf16.msra.mxu0 %v2662
    %3846 = vmatprep.subr.bf16.mxu0 %v2671
    %3847 = vmatpush1.bf16.msra.mxu0 %v2670
    %3848 = vmatprep.subr.bf16.mxu0 %v2679
    %3849 = vmatpush1.bf16.msra.mxu0 %v2678
    %3850 = vmatprep.subr.bf16.mxu0 %v2687
    %3851 = vmatpush1.bf16.msra.mxu0 %v2686
    %3852 = vmatprep.subr.bf16.mxu0 %v2695
    %3853 = vmatpush1.bf16.msra.mxu0 %v2694
    %3854 = vmatprep.subr.bf16.mxu0 %v2703
    %3855 = vmatpush1.bf16.msra.mxu0 %v2702
    %3856 = vmatprep.subr.bf16.mxu0 %v2711
    %3857 = vmatpush1.bf16.msra.mxu0 %v2710
    %3858 = vmatprep.subr.bf16.mxu0 %v2719
    %3859 = vmatpush1.bf16.msra.mxu0 %v2718
    %3860 = vmatprep.subr.bf16.mxu0 %v2727
    %3861 = vmatpush1.bf16.msra.mxu0 %v2726
    %3862 = vmatprep.subr.bf16.mxu0 %v2735
    %3863 = vmatpush1.bf16.msra.mxu0 %v2734
    %3864 = vmatprep.subr.bf16.mxu0 %v2743
    %3865 = vmatpush1.bf16.msra.mxu0 %v2742
    %3866 = vmatprep.subr.bf16.mxu0 %v2751
    %3867 = vmatpush1.bf16.msra.mxu0 %v2750
    %3868 = vmatprep.subr.bf16.mxu0 %v2759
    %3869 = vmatpush1.bf16.msra.mxu0 %v2758
    %3870 = vmatprep.subr.bf16.mxu0 %v2767
    %3871 = vmatpush1.bf16.msra.mxu0 %v2766
    %3872 = vmatprep.mubr.bf16.mxu0 %v806
    %3873 = vmatmul.mubr.bf16.gmra.mrb[0].mxu0 %v805
    %v3874 = vpop.f32.mrb[0].mxu0
    %v3875 = vadd.f32 %v3832, %v3874
    %v3876 = vpop.f32.mrb[0].mxu0
    %v3877 = vadd.f32 %v3834, %v3876
    %v3878 = vpop.f32.mrb[0].mxu0
    %v3879 = vadd.f32 %v3836, %v3878
    %v3880 = vpop.f32.mrb[0].mxu0
    %v3881 = vadd.f32 %v3838, %v3880
    %3882 = vdwg.mxu0
    %3883 = vmatprep.subr.bf16.mxu0 %v2775
    %3884 = vmatpush1.bf16.msra.mxu0 %v2774
    %3885 = vmatprep.subr.bf16.mxu0 %v2783
    %3886 = vmatpush1.bf16.msra.mxu0 %v2782
    %3887 = vmatprep.subr.bf16.mxu0 %v2791
    %3888 = vmatpush1.bf16.msra.mxu0 %v2790
    %3889 = vmatprep.subr.bf16.mxu0 %v2799
    %3890 = vmatpush1.bf16.msra.mxu0 %v2798
    %3891 = vmatprep.subr.bf16.mxu0 %v2807
    %3892 = vmatpush1.bf16.msra.mxu0 %v2806
    %3893 = vmatprep.subr.bf16.mxu0 %v2815
    %3894 = vmatpush1.bf16.msra.mxu0 %v2814
    %3895 = vmatprep.subr.bf16.mxu0 %v2823
    %3896 = vmatpush1.bf16.msra.mxu0 %v2822
    %3897 = vmatprep.subr.bf16.mxu0 %v2831
    %3898 = vmatpush1.bf16.msra.mxu0 %v2830
    %3899 = vmatprep.subr.bf16.mxu0 %v2839
    %3900 = vmatpush1.bf16.msra.mxu0 %v2838
    %3901 = vmatprep.subr.bf16.mxu0 %v2847
    %3902 = vmatpush1.bf16.msra.mxu0 %v2846
    %3903 = vmatprep.subr.bf16.mxu0 %v2855
    %3904 = vmatpush1.bf16.msra.mxu0 %v2854
    %3905 = vmatprep.subr.bf16.mxu0 %v2863
    %3906 = vmatpush1.bf16.msra.mxu0 %v2862
    %3907 = vmatprep.subr.bf16.mxu0 %v2871
    %3908 = vmatpush1.bf16.msra.mxu0 %v2870
    %3909 = vmatprep.subr.bf16.mxu0 %v2879
    %3910 = vmatpush1.bf16.msra.mxu0 %v2878
    %3911 = vmatprep.subr.bf16.mxu0 %v2887
    %3912 = vmatpush1.bf16.msra.mxu0 %v2886
    %3913 = vmatprep.subr.bf16.mxu0 %v2895
    %3914 = vmatpush1.bf16.msra.mxu0 %v2894
    %3915 = vmatprep.mubr.bf16.mxu0 %v808
    %3916 = vmatmul.mubr.bf16.gmra.mrb[0].mxu0 %v807
    %v3917 = vpop.f32.mrb[0].mxu0
    %v3918 = vadd.f32 %v3875, %v3917
    %v3919 = vpop.f32.mrb[0].mxu0
    %v3920 = vadd.f32 %v3877, %v3919
    %v3921 = vpop.f32.mrb[0].mxu0
    %v3922 = vadd.f32 %v3879, %v3921
    %v3923 = vpop.f32.mrb[0].mxu0
    %v3924 = vadd.f32 %v3881, %v3923
    %3925 = vdwg.mxu0
    %3926 = vmatprep.subr.bf16.mxu0 %v2393
    %3927 = vmatpush1.bf16.msra.mxu0 %v2392
    %3928 = vmatprep.subr.bf16.mxu0 %v2401
    %3929 = vmatpush1.bf16.msra.mxu0 %v2400
    %3930 = vmatprep.subr.bf16.mxu0 %v2409
    %3931 = vmatpush1.bf16.msra.mxu0 %v2408
    %3932 = vmatprep.subr.bf16.mxu0 %v2417
    %3933 = vmatpush1.bf16.msra.mxu0 %v2416
    %3934 = vmatprep.subr.bf16.mxu0 %v2425
    %3935 = vmatpush1.bf16.msra.mxu0 %v2424
    %3936 = vmatprep.subr.bf16.mxu0 %v2433
    %3937 = vmatpush1.bf16.msra.mxu0 %v2432
    %3938 = vmatprep.subr.bf16.mxu0 %v2441
    %3939 = vmatpush1.bf16.msra.mxu0 %v2440
    %3940 = vmatprep.subr.bf16.mxu0 %v2449
    %3941 = vmatpush1.bf16.msra.mxu0 %v2448
    %3942 = vmatprep.subr.bf16.mxu0 %v2457
    %3943 = vmatpush1.bf16.msra.mxu0 %v2456
    %3944 = vmatprep.subr.bf16.mxu0 %v2465
    %3945 = vmatpush1.bf16.msra.mxu0 %v2464
    %3946 = vmatprep.subr.bf16.mxu0 %v2473
    %3947 = vmatpush1.bf16.msra.mxu0 %v2472
    %3948 = vmatprep.subr.bf16.mxu0 %v2481
    %3949 = vmatpush1.bf16.msra.mxu0 %v2480
    %3950 = vmatprep.subr.bf16.mxu0 %v2489
    %3951 = vmatpush1.bf16.msra.mxu0 %v2488
    %3952 = vmatprep.subr.bf16.mxu0 %v2497
    %3953 = vmatpush1.bf16.msra.mxu0 %v2496
    %3954 = vmatprep.subr.bf16.mxu0 %v2505
    %3955 = vmatpush1.bf16.msra.mxu0 %v2504
    %3956 = vmatprep.subr.bf16.mxu0 %v2513
    %3957 = vmatpush1.bf16.msra.mxu0 %v2512
    %3958 = vmatprep.mubr.bf16.mxu0 %v802
    %3959 = vmatmul.mubr.bf16.gmra.mrb[0].mxu0 %v801
    %v3960 = vpop.f32.mrb[0].mxu0
    %v3961 = vadd.f32 %v837, %v3960
    %v3962 = vpop.f32.mrb[0].mxu0
    %v3963 = vadd.f32 %v841, %v3962
    %v3964 = vpop.f32.mrb[0].mxu0
    %v3965 = vadd.f32 %v837, %v3964
    %v3966 = vpop.f32.mrb[0].mxu0
    %v3967 = vadd.f32 %v841, %v3966
    %3968 = vdwg.mxu0
    %3969 = vmatprep.subr.bf16.mxu0 %v2521
    %3970 = vmatpush1.bf16.msra.mxu0 %v2520
    %3971 = vmatprep.subr.bf16.mxu0 %v2529
    %3972 = vmatpush1.bf16.msra.mxu0 %v2528
    %3973 = vmatprep.subr.bf16.mxu0 %v2537
    %3974 = vmatpush1.bf16.msra.mxu0 %v2536
    %3975 = vmatprep.subr.bf16.mxu0 %v2545
    %3976 = vmatpush1.bf16.msra.mxu0 %v2544
    %3977 = vmatprep.subr.bf16.mxu0 %v2553
    %3978 = vmatpush1.bf16.msra.mxu0 %v2552
    %3979 = vmatprep.subr.bf16.mxu0 %v2561
    %3980 = vmatpush1.bf16.msra.mxu0 %v2560
    %3981 = vmatprep.subr.bf16.mxu0 %v2569
    %3982 = vmatpush1.bf16.msra.mxu0 %v2568
    %3983 = vmatprep.subr.bf16.mxu0 %v2577
    %3984 = vmatpush1.bf16.msra.mxu0 %v2576
    %3985 = vmatprep.subr.bf16.mxu0 %v2585
    %3986 = vmatpush1.bf16.msra.mxu0 %v2584
    %3987 = vmatprep.subr.bf16.mxu0 %v2593
    %3988 = vmatpush1.bf16.msra.mxu0 %v2592
    %3989 = vmatprep.subr.bf16.mxu0 %v2601
    %3990 = vmatpush1.bf16.msra.mxu0 %v2600
    %3991 = vmatprep.subr.bf16.mxu0 %v2609
    %3992 = vmatpush1.bf16.msra.mxu0 %v2608
    %3993 = vmatprep.subr.bf16.mxu0 %v2617
    %3994 = vmatpush1.bf16.msra.mxu0 %v2616
    %3995 = vmatprep.subr.bf16.mxu0 %v2625
    %3996 = vmatpush1.bf16.msra.mxu0 %v2624
    %3997 = vmatprep.subr.bf16.mxu0 %v2633
    %3998 = vmatpush1.bf16.msra.mxu0 %v2632
    %3999 = vmatprep.subr.bf16.mxu0 %v2641
    %4000 = vmatpush1.bf16.msra.mxu0 %v2640
    %4001 = vmatprep.mubr.bf16.mxu0 %v804
    %4002 = vmatmul.mubr.bf16.gmra.mrb[0].mxu0 %v803
    %v4003 = vpop.f32.mrb[0].mxu0
    %v4004 = vadd.f32 %v3961, %v4003
    %v4005 = vpop.f32.mrb[0].mxu0
    %v4006 = vadd.f32 %v3963, %v4005
    %v4007 = vpop.f32.mrb[0].mxu0
    %v4008 = vadd.f32 %v3965, %v4007
    %v4009 = vpop.f32.mrb[0].mxu0
    %v4010 = vadd.f32 %v3967, %v4009
    %4011 = vdwg.mxu0
    %4012 = vmatprep.subr.bf16.mxu0 %v2649
    %4013 = vmatpush1.bf16.msra.mxu0 %v2648
    %4014 = vmatprep.subr.bf16.mxu0 %v2657
    %4015 = vmatpush1.bf16.msra.mxu0 %v2656
    %4016 = vmatprep.subr.bf16.mxu0 %v2665
    %4017 = vmatpush1.bf16.msra.mxu0 %v2664
    %4018 = vmatprep.subr.bf16.mxu0 %v2673
    %4019 = vmatpush1.bf16.msra.mxu0 %v2672
    %4020 = vmatprep.subr.bf16.mxu0 %v2681
    %4021 = vmatpush1.bf16.msra.mxu0 %v2680
    %4022 = vmatprep.subr.bf16.mxu0 %v2689
    %4023 = vmatpush1.bf16.msra.mxu0 %v2688
    %4024 = vmatprep.subr.bf16.mxu0 %v2697
    %4025 = vmatpush1.bf16.msra.mxu0 %v2696
    %4026 = vmatprep.subr.bf16.mxu0 %v2705
    %4027 = vmatpush1.bf16.msra.mxu0 %v2704
    %4028 = vmatprep.subr.bf16.mxu0 %v2713
    %4029 = vmatpush1.bf16.msra.mxu0 %v2712
    %4030 = vmatprep.subr.bf16.mxu0 %v2721
    %4031 = vmatpush1.bf16.msra.mxu0 %v2720
    %4032 = vmatprep.subr.bf16.mxu0 %v2729
    %4033 = vmatpush1.bf16.msra.mxu0 %v2728
    %4034 = vmatprep.subr.bf16.mxu0 %v2737
    %4035 = vmatpush1.bf16.msra.mxu0 %v2736
    %4036 = vmatprep.subr.bf16.mxu0 %v2745
    %4037 = vmatpush1.bf16.msra.mxu0 %v2744
    %4038 = vmatprep.subr.bf16.mxu0 %v2753
    %4039 = vmatpush1.bf16.msra.mxu0 %v2752
    %4040 = vmatprep.subr.bf16.mxu0 %v2761
    %4041 = vmatpush1.bf16.msra.mxu0 %v2760
    %4042 = vmatprep.subr.bf16.mxu0 %v2769
    %4043 = vmatpush1.bf16.msra.mxu0 %v2768
    %4044 = vmatprep.mubr.bf16.mxu0 %v806
    %4045 = vmatmul.mubr.bf16.gmra.mrb[0].mxu0 %v805
    %v4046 = vpop.f32.mrb[0].mxu0
    %v4047 = vadd.f32 %v4004, %v4046
    %v4048 = vpop.f32.mrb[0].mxu0
    %v4049 = vadd.f32 %v4006, %v4048
    %v4050 = vpop.f32.mrb[0].mxu0
    %v4051 = vadd.f32 %v4008, %v4050
    %v4052 = vpop.f32.mrb[0].mxu0
    %v4053 = vadd.f32 %v4010, %v4052
    %4054 = vdwg.mxu0
    %4055 = vmatprep.subr.bf16.mxu0 %v2777
    %4056 = vmatpush1.bf16.msra.mxu0 %v2776
    %4057 = vmatprep.subr.bf16.mxu0 %v2785
    %4058 = vmatpush1.bf16.msra.mxu0 %v2784
    %4059 = vmatprep.subr.bf16.mxu0 %v2793
    %4060 = vmatpush1.bf16.msra.mxu0 %v2792
    %4061 = vmatprep.subr.bf16.mxu0 %v2801
    %4062 = vmatpush1.bf16.msra.mxu0 %v2800
    %4063 = vmatprep.subr.bf16.mxu0 %v2809
    %4064 = vmatpush1.bf16.msra.mxu0 %v2808
    %4065 = vmatprep.subr.bf16.mxu0 %v2817
    %4066 = vmatpush1.bf16.msra.mxu0 %v2816
    %4067 = vmatprep.subr.bf16.mxu0 %v2825
    %4068 = vmatpush1.bf16.msra.mxu0 %v2824
    %4069 = vmatprep.subr.bf16.mxu0 %v2833
    %4070 = vmatpush1.bf16.msra.mxu0 %v2832
    %4071 = vmatprep.subr.bf16.mxu0 %v2841
    %4072 = vmatpush1.bf16.msra.mxu0 %v2840
    %4073 = vmatprep.subr.bf16.mxu0 %v2849
    %4074 = vmatpush1.bf16.msra.mxu0 %v2848
    %4075 = vmatprep.subr.bf16.mxu0 %v2857
    %4076 = vmatpush1.bf16.msra.mxu0 %v2856
    %4077 = vmatprep.subr.bf16.mxu0 %v2865
    %4078 = vmatpush1.bf16.msra.mxu0 %v2864
    %4079 = vmatprep.subr.bf16.mxu0 %v2873
    %4080 = vmatpush1.bf16.msra.mxu0 %v2872
    %4081 = vmatprep.subr.bf16.mxu0 %v2881
    %4082 = vmatpush1.bf16.msra.mxu0 %v2880
    %4083 = vmatprep.subr.bf16.mxu0 %v2889
    %4084 = vmatpush1.bf16.msra.mxu0 %v2888
    %4085 = vmatprep.subr.bf16.mxu0 %v2897
    %4086 = vmatpush1.bf16.msra.mxu0 %v2896
    %4087 = vmatprep.mubr.bf16.mxu0 %v808
    %4088 = vmatmul.mubr.bf16.gmra.mrb[0].mxu0 %v807
    %v4089 = vpop.f32.mrb[0].mxu0
    %v4090 = vadd.f32 %v4047, %v4089
    %v4091 = vpop.f32.mrb[0].mxu0
    %v4092 = vadd.f32 %v4049, %v4091
    %v4093 = vpop.f32.mrb[0].mxu0
    %v4094 = vadd.f32 %v4051, %v4093
    %v4095 = vpop.f32.mrb[0].mxu0
    %v4096 = vadd.f32 %v4053, %v4095
    %4097 = vdwg.mxu0
    %v4098 = vmax.f32 %v3574, 0.0
    %v4099 = vmax.f32 %v3576, 0.0
    %v4100 = vmax.f32 %v3746, 0.0
    %v4101 = vmax.f32 %v3748, 0.0
    %v4102 = vmax.f32 %v3918, 0.0
    %v4103 = vmax.f32 %v3920, 0.0
    %v4104 = vmax.f32 %v4090, 0.0
    %v4105 = vmax.f32 %v4092, 0.0
    %v4106 = vmax.f32 %v3578, 0.0
    %v4107 = vmax.f32 %v3580, 0.0
    %v4108 = vmax.f32 %v3750, 0.0
    %v4109 = vmax.f32 %v3752, 0.0
    %v4110 = vmax.f32 %v3922, 0.0
    %v4111 = vmax.f32 %v3924, 0.0
    %v4112 = vmax.f32 %v4094, 0.0
    %v4113 = vmax.f32 %v4096, 0.0
    %v4114 = vld [vmem:[#allocation8] sm:$0xff]
    %v4115 = vld [vmem:[#allocation8 + $0x8] sm:$0xff]
    %v4116 = vld [vmem:[#allocation8 + $0x10] sm:$0xff]
    %v4117 = vld [vmem:[#allocation8 + $0x18] sm:$0xff]
    %v4118 = vld [vmem:[#allocation8 + $0x20] sm:$0xff]
    %v4119 = vld [vmem:[#allocation8 + $0x28] sm:$0xff]
    %v4120 = vld [vmem:[#allocation8 + $0x30] sm:$0xff]
    %v4121 = vld [vmem:[#allocation8 + $0x38] sm:$0xff]
    %v4122 = vld [vmem:[#allocation8 + $0x40] sm:$0xff]
    %v4123 = vld [vmem:[#allocation8 + $0x48] sm:$0xff]
    %v4124 = vld [vmem:[#allocation8 + $0x50] sm:$0xff]
    %v4125 = vld [vmem:[#allocation8 + $0x58] sm:$0xff]
    %v4126 = vld [vmem:[#allocation8 + $0x60] sm:$0xff]
    %v4127 = vld [vmem:[#allocation8 + $0x68] sm:$0xff]
    %v4128 = vld [vmem:[#allocation8 + $0x70] sm:$0xff]
    %v4129 = vld [vmem:[#allocation8 + $0x78] sm:$0xff]
    %v4130 = vld [vmem:[#allocation8 + $0x80] sm:$0xff]
    %v4131 = vld [vmem:[#allocation8 + $0x88] sm:$0xff]
    %v4132 = vld [vmem:[#allocation8 + $0x90] sm:$0xff]
    %v4133 = vld [vmem:[#allocation8 + $0x98] sm:$0xff]
    %v4134 = vld [vmem:[#allocation8 + $0xa0] sm:$0xff]
    %v4135 = vld [vmem:[#allocation8 + $0xa8] sm:$0xff]
    %v4136 = vld [vmem:[#allocation8 + $0xb0] sm:$0xff]
    %v4137 = vld [vmem:[#allocation8 + $0xb8] sm:$0xff]
    %v4138 = vld [vmem:[#allocation8 + $0xc0] sm:$0xff]
    %v4139 = vld [vmem:[#allocation8 + $0xc8] sm:$0xff]
    %v4140 = vld [vmem:[#allocation8 + $0xd0] sm:$0xff]
    %v4141 = vld [vmem:[#allocation8 + $0xd8] sm:$0xff]
    %v4142 = vld [vmem:[#allocation8 + $0xe0] sm:$0xff]
    %v4143 = vld [vmem:[#allocation8 + $0xe8] sm:$0xff]
    %v4144 = vld [vmem:[#allocation8 + $0xf0] sm:$0xff]
    %v4145 = vld [vmem:[#allocation8 + $0xf8] sm:$0xff]
    %v4146 = vld [vmem:[#allocation8 + $0x100] sm:$0xff]
    %v4147 = vld [vmem:[#allocation8 + $0x108] sm:$0xff]
    %v4148 = vld [vmem:[#allocation8 + $0x110] sm:$0xff]
    %v4149 = vld [vmem:[#allocation8 + $0x118] sm:$0xff]
    %v4150 = vld [vmem:[#allocation8 + $0x120] sm:$0xff]
    %v4151 = vld [vmem:[#allocation8 + $0x128] sm:$0xff]
    %v4152 = vld [vmem:[#allocation8 + $0x130] sm:$0xff]
    %v4153 = vld [vmem:[#allocation8 + $0x138] sm:$0xff]
    %v4154 = vld [vmem:[#allocation8 + $0x140] sm:$0xff]
    %v4155 = vld [vmem:[#allocation8 + $0x148] sm:$0xff]
    %v4156 = vld [vmem:[#allocation8 + $0x150] sm:$0xff]
    %v4157 = vld [vmem:[#allocation8 + $0x158] sm:$0xff]
    %v4158 = vld [vmem:[#allocation8 + $0x160] sm:$0xff]
    %v4159 = vld [vmem:[#allocation8 + $0x168] sm:$0xff]
    %v4160 = vld [vmem:[#allocation8 + $0x170] sm:$0xff]
    %v4161 = vld [vmem:[#allocation8 + $0x178] sm:$0xff]
    %v4162 = vld [vmem:[#allocation8 + $0x180] sm:$0xff]
    %v4163 = vld [vmem:[#allocation8 + $0x188] sm:$0xff]
    %v4164 = vld [vmem:[#allocation8 + $0x190] sm:$0xff]
    %v4165 = vld [vmem:[#allocation8 + $0x198] sm:$0xff]
    %v4166 = vld [vmem:[#allocation8 + $0x1a0] sm:$0xff]
    %v4167 = vld [vmem:[#allocation8 + $0x1a8] sm:$0xff]
    %v4168 = vld [vmem:[#allocation8 + $0x1b0] sm:$0xff]
    %v4169 = vld [vmem:[#allocation8 + $0x1b8] sm:$0xff]
    %v4170 = vld [vmem:[#allocation8 + $0x1c0] sm:$0xff]
    %v4171 = vld [vmem:[#allocation8 + $0x1c8] sm:$0xff]
    %v4172 = vld [vmem:[#allocation8 + $0x1d0] sm:$0xff]
    %v4173 = vld [vmem:[#allocation8 + $0x1d8] sm:$0xff]
    %v4174 = vld [vmem:[#allocation8 + $0x1e0] sm:$0xff]
    %v4175 = vld [vmem:[#allocation8 + $0x1e8] sm:$0xff]
    %v4176 = vld [vmem:[#allocation8 + $0x1f0] sm:$0xff]
    %v4177 = vld [vmem:[#allocation8 + $0x1f8] sm:$0xff]
    %v4178 = vld [vmem:[#allocation8 + $0x200] sm:$0xff]
    %v4179 = vld [vmem:[#allocation8 + $0x208] sm:$0xff]
    %v4180 = vld [vmem:[#allocation8 + $0x210] sm:$0xff]
    %v4181 = vld [vmem:[#allocation8 + $0x218] sm:$0xff]
    %v4182 = vld [vmem:[#allocation8 + $0x220] sm:$0xff]
    %v4183 = vld [vmem:[#allocation8 + $0x228] sm:$0xff]
    %v4184 = vld [vmem:[#allocation8 + $0x230] sm:$0xff]
    %v4185 = vld [vmem:[#allocation8 + $0x238] sm:$0xff]
    %v4186 = vld [vmem:[#allocation8 + $0x240] sm:$0xff]
    %v4187 = vld [vmem:[#allocation8 + $0x248] sm:$0xff]
    %v4188 = vld [vmem:[#allocation8 + $0x250] sm:$0xff]
    %v4189 = vld [vmem:[#allocation8 + $0x258] sm:$0xff]
    %v4190 = vld [vmem:[#allocation8 + $0x260] sm:$0xff]
    %v4191 = vld [vmem:[#allocation8 + $0x268] sm:$0xff]
    %v4192 = vld [vmem:[#allocation8 + $0x270] sm:$0xff]
    %v4193 = vld [vmem:[#allocation8 + $0x278] sm:$0xff]
    %v4194 = vld [vmem:[#allocation8 + $0x280] sm:$0xff]
    %v4195 = vld [vmem:[#allocation8 + $0x288] sm:$0xff]
    %v4196 = vld [vmem:[#allocation8 + $0x290] sm:$0xff]
    %v4197 = vld [vmem:[#allocation8 + $0x298] sm:$0xff]
    %v4198 = vld [vmem:[#allocation8 + $0x2a0] sm:$0xff]
    %v4199 = vld [vmem:[#allocation8 + $0x2a8] sm:$0xff]
    %v4200 = vld [vmem:[#allocation8 + $0x2b0] sm:$0xff]
    %v4201 = vld [vmem:[#allocation8 + $0x2b8] sm:$0xff]
    %v4202 = vld [vmem:[#allocation8 + $0x2c0] sm:$0xff]
    %v4203 = vld [vmem:[#allocation8 + $0x2c8] sm:$0xff]
    %v4204 = vld [vmem:[#allocation8 + $0x2d0] sm:$0xff]
    %v4205 = vld [vmem:[#allocation8 + $0x2d8] sm:$0xff]
    %v4206 = vld [vmem:[#allocation8 + $0x2e0] sm:$0xff]
    %v4207 = vld [vmem:[#allocation8 + $0x2e8] sm:$0xff]
    %v4208 = vld [vmem:[#allocation8 + $0x2f0] sm:$0xff]
    %v4209 = vld [vmem:[#allocation8 + $0x2f8] sm:$0xff]
    %v4210 = vld [vmem:[#allocation8 + $0x300] sm:$0xff]
    %v4211 = vld [vmem:[#allocation8 + $0x308] sm:$0xff]
    %v4212 = vld [vmem:[#allocation8 + $0x310] sm:$0xff]
    %v4213 = vld [vmem:[#allocation8 + $0x318] sm:$0xff]
    %v4214 = vld [vmem:[#allocation8 + $0x320] sm:$0xff]
    %v4215 = vld [vmem:[#allocation8 + $0x328] sm:$0xff]
    %v4216 = vld [vmem:[#allocation8 + $0x330] sm:$0xff]
    %v4217 = vld [vmem:[#allocation8 + $0x338] sm:$0xff]
    %v4218 = vld [vmem:[#allocation8 + $0x340] sm:$0xff]
    %v4219 = vld [vmem:[#allocation8 + $0x348] sm:$0xff]
    %v4220 = vld [vmem:[#allocation8 + $0x350] sm:$0xff]
    %v4221 = vld [vmem:[#allocation8 + $0x358] sm:$0xff]
    %v4222 = vld [vmem:[#allocation8 + $0x360] sm:$0xff]
    %v4223 = vld [vmem:[#allocation8 + $0x368] sm:$0xff]
    %v4224 = vld [vmem:[#allocation8 + $0x370] sm:$0xff]
    %v4225 = vld [vmem:[#allocation8 + $0x378] sm:$0xff]
    %v4226 = vld [vmem:[#allocation8 + $0x380] sm:$0xff]
    %v4227 = vld [vmem:[#allocation8 + $0x388] sm:$0xff]
    %v4228 = vld [vmem:[#allocation8 + $0x390] sm:$0xff]
    %v4229 = vld [vmem:[#allocation8 + $0x398] sm:$0xff]
    %v4230 = vld [vmem:[#allocation8 + $0x3a0] sm:$0xff]
    %v4231 = vld [vmem:[#allocation8 + $0x3a8] sm:$0xff]
    %v4232 = vld [vmem:[#allocation8 + $0x3b0] sm:$0xff]
    %v4233 = vld [vmem:[#allocation8 + $0x3b8] sm:$0xff]
    %v4234 = vld [vmem:[#allocation8 + $0x3c0] sm:$0xff]
    %v4235 = vld [vmem:[#allocation8 + $0x3c8] sm:$0xff]
    %v4236 = vld [vmem:[#allocation8 + $0x3d0] sm:$0xff]
    %v4237 = vld [vmem:[#allocation8 + $0x3d8] sm:$0xff]
    %v4238 = vld [vmem:[#allocation8 + $0x3e0] sm:$0xff]
    %v4239 = vld [vmem:[#allocation8 + $0x3e8] sm:$0xff]
    %v4240 = vld [vmem:[#allocation8 + $0x3f0] sm:$0xff]
    %v4241 = vld [vmem:[#allocation8 + $0x3f8] sm:$0xff]
    %v4242 = vld [vmem:[#allocation8 + $0x400] sm:$0xff]
    %v4243 = vld [vmem:[#allocation8 + $0x408] sm:$0xff]
    %v4244 = vld [vmem:[#allocation8 + $0x410] sm:$0xff]
    %v4245 = vld [vmem:[#allocation8 + $0x418] sm:$0xff]
    %v4246 = vld [vmem:[#allocation8 + $0x420] sm:$0xff]
    %v4247 = vld [vmem:[#allocation8 + $0x428] sm:$0xff]
    %v4248 = vld [vmem:[#allocation8 + $0x430] sm:$0xff]
    %v4249 = vld [vmem:[#allocation8 + $0x438] sm:$0xff]
    %v4250 = vld [vmem:[#allocation8 + $0x440] sm:$0xff]
    %v4251 = vld [vmem:[#allocation8 + $0x448] sm:$0xff]
    %v4252 = vld [vmem:[#allocation8 + $0x450] sm:$0xff]
    %v4253 = vld [vmem:[#allocation8 + $0x458] sm:$0xff]
    %v4254 = vld [vmem:[#allocation8 + $0x460] sm:$0xff]
    %v4255 = vld [vmem:[#allocation8 + $0x468] sm:$0xff]
    %v4256 = vld [vmem:[#allocation8 + $0x470] sm:$0xff]
    %v4257 = vld [vmem:[#allocation8 + $0x478] sm:$0xff]
    %v4258 = vld [vmem:[#allocation8 + $0x480] sm:$0xff]
    %v4259 = vld [vmem:[#allocation8 + $0x488] sm:$0xff]
    %v4260 = vld [vmem:[#allocation8 + $0x490] sm:$0xff]
    %v4261 = vld [vmem:[#allocation8 + $0x498] sm:$0xff]
    %v4262 = vld [vmem:[#allocation8 + $0x4a0] sm:$0xff]
    %v4263 = vld [vmem:[#allocation8 + $0x4a8] sm:$0xff]
    %v4264 = vld [vmem:[#allocation8 + $0x4b0] sm:$0xff]
    %v4265 = vld [vmem:[#allocation8 + $0x4b8] sm:$0xff]
    %v4266 = vld [vmem:[#allocation8 + $0x4c0] sm:$0xff]
    %v4267 = vld [vmem:[#allocation8 + $0x4c8] sm:$0xff]
    %v4268 = vld [vmem:[#allocation8 + $0x4d0] sm:$0xff]
    %v4269 = vld [vmem:[#allocation8 + $0x4d8] sm:$0xff]
    %v4270 = vld [vmem:[#allocation8 + $0x4e0] sm:$0xff]
    %v4271 = vld [vmem:[#allocation8 + $0x4e8] sm:$0xff]
    %v4272 = vld [vmem:[#allocation8 + $0x4f0] sm:$0xff]
    %v4273 = vld [vmem:[#allocation8 + $0x4f8] sm:$0xff]
    %v4274 = vld [vmem:[#allocation8 + $0x500] sm:$0xff]
    %v4275 = vld [vmem:[#allocation8 + $0x508] sm:$0xff]
    %v4276 = vld [vmem:[#allocation8 + $0x510] sm:$0xff]
    %v4277 = vld [vmem:[#allocation8 + $0x518] sm:$0xff]
    %v4278 = vld [vmem:[#allocation8 + $0x520] sm:$0xff]
    %v4279 = vld [vmem:[#allocation8 + $0x528] sm:$0xff]
    %v4280 = vld [vmem:[#allocation8 + $0x530] sm:$0xff]
    %v4281 = vld [vmem:[#allocation8 + $0x538] sm:$0xff]
    %v4282 = vld [vmem:[#allocation8 + $0x540] sm:$0xff]
    %v4283 = vld [vmem:[#allocation8 + $0x548] sm:$0xff]
    %v4284 = vld [vmem:[#allocation8 + $0x550] sm:$0xff]
    %v4285 = vld [vmem:[#allocation8 + $0x558] sm:$0xff]
    %v4286 = vld [vmem:[#allocation8 + $0x560] sm:$0xff]
    %v4287 = vld [vmem:[#allocation8 + $0x568] sm:$0xff]
    %v4288 = vld [vmem:[#allocation8 + $0x570] sm:$0xff]
    %v4289 = vld [vmem:[#allocation8 + $0x578] sm:$0xff]
    %v4290 = vld [vmem:[#allocation8 + $0x580] sm:$0xff]
    %v4291 = vld [vmem:[#allocation8 + $0x588] sm:$0xff]
    %v4292 = vld [vmem:[#allocation8 + $0x590] sm:$0xff]
    %v4293 = vld [vmem:[#allocation8 + $0x598] sm:$0xff]
    %v4294 = vld [vmem:[#allocation8 + $0x5a0] sm:$0xff]
    %v4295 = vld [vmem:[#allocation8 + $0x5a8] sm:$0xff]
    %v4296 = vld [vmem:[#allocation8 + $0x5b0] sm:$0xff]
    %v4297 = vld [vmem:[#allocation8 + $0x5b8] sm:$0xff]
    %v4298 = vld [vmem:[#allocation8 + $0x5c0] sm:$0xff]
    %v4299 = vld [vmem:[#allocation8 + $0x5c8] sm:$0xff]
    %v4300 = vld [vmem:[#allocation8 + $0x5d0] sm:$0xff]
    %v4301 = vld [vmem:[#allocation8 + $0x5d8] sm:$0xff]
    %v4302 = vld [vmem:[#allocation8 + $0x5e0] sm:$0xff]
    %v4303 = vld [vmem:[#allocation8 + $0x5e8] sm:$0xff]
    %v4304 = vld [vmem:[#allocation8 + $0x5f0] sm:$0xff]
    %v4305 = vld [vmem:[#allocation8 + $0x5f8] sm:$0xff]
    %v4306 = vld [vmem:[#allocation8 + $0x600] sm:$0xff]
    %v4307 = vld [vmem:[#allocation8 + $0x608] sm:$0xff]
    %v4308 = vld [vmem:[#allocation8 + $0x610] sm:$0xff]
    %v4309 = vld [vmem:[#allocation8 + $0x618] sm:$0xff]
    %v4310 = vld [vmem:[#allocation8 + $0x620] sm:$0xff]
    %v4311 = vld [vmem:[#allocation8 + $0x628] sm:$0xff]
    %v4312 = vld [vmem:[#allocation8 + $0x630] sm:$0xff]
    %v4313 = vld [vmem:[#allocation8 + $0x638] sm:$0xff]
    %v4314 = vld [vmem:[#allocation8 + $0x640] sm:$0xff]
    %v4315 = vld [vmem:[#allocation8 + $0x648] sm:$0xff]
    %v4316 = vld [vmem:[#allocation8 + $0x650] sm:$0xff]
    %v4317 = vld [vmem:[#allocation8 + $0x658] sm:$0xff]
    %v4318 = vld [vmem:[#allocation8 + $0x660] sm:$0xff]
    %v4319 = vld [vmem:[#allocation8 + $0x668] sm:$0xff]
    %v4320 = vld [vmem:[#allocation8 + $0x670] sm:$0xff]
    %v4321 = vld [vmem:[#allocation8 + $0x678] sm:$0xff]
    %v4322 = vld [vmem:[#allocation8 + $0x680] sm:$0xff]
    %v4323 = vld [vmem:[#allocation8 + $0x688] sm:$0xff]
    %v4324 = vld [vmem:[#allocation8 + $0x690] sm:$0xff]
    %v4325 = vld [vmem:[#allocation8 + $0x698] sm:$0xff]
    %v4326 = vld [vmem:[#allocation8 + $0x6a0] sm:$0xff]
    %v4327 = vld [vmem:[#allocation8 + $0x6a8] sm:$0xff]
    %v4328 = vld [vmem:[#allocation8 + $0x6b0] sm:$0xff]
    %v4329 = vld [vmem:[#allocation8 + $0x6b8] sm:$0xff]
    %v4330 = vld [vmem:[#allocation8 + $0x6c0] sm:$0xff]
    %v4331 = vld [vmem:[#allocation8 + $0x6c8] sm:$0xff]
    %v4332 = vld [vmem:[#allocation8 + $0x6d0] sm:$0xff]
    %v4333 = vld [vmem:[#allocation8 + $0x6d8] sm:$0xff]
    %v4334 = vld [vmem:[#allocation8 + $0x6e0] sm:$0xff]
    %v4335 = vld [vmem:[#allocation8 + $0x6e8] sm:$0xff]
    %v4336 = vld [vmem:[#allocation8 + $0x6f0] sm:$0xff]
    %v4337 = vld [vmem:[#allocation8 + $0x6f8] sm:$0xff]
    %v4338 = vld [vmem:[#allocation8 + $0x700] sm:$0xff]
    %v4339 = vld [vmem:[#allocation8 + $0x708] sm:$0xff]
    %v4340 = vld [vmem:[#allocation8 + $0x710] sm:$0xff]
    %v4341 = vld [vmem:[#allocation8 + $0x718] sm:$0xff]
    %v4342 = vld [vmem:[#allocation8 + $0x720] sm:$0xff]
    %v4343 = vld [vmem:[#allocation8 + $0x728] sm:$0xff]
    %v4344 = vld [vmem:[#allocation8 + $0x730] sm:$0xff]
    %v4345 = vld [vmem:[#allocation8 + $0x738] sm:$0xff]
    %v4346 = vld [vmem:[#allocation8 + $0x740] sm:$0xff]
    %v4347 = vld [vmem:[#allocation8 + $0x748] sm:$0xff]
    %v4348 = vld [vmem:[#allocation8 + $0x750] sm:$0xff]
    %v4349 = vld [vmem:[#allocation8 + $0x758] sm:$0xff]
    %v4350 = vld [vmem:[#allocation8 + $0x760] sm:$0xff]
    %v4351 = vld [vmem:[#allocation8 + $0x768] sm:$0xff]
    %v4352 = vld [vmem:[#allocation8 + $0x770] sm:$0xff]
    %v4353 = vld [vmem:[#allocation8 + $0x778] sm:$0xff]
    %v4354 = vld [vmem:[#allocation8 + $0x780] sm:$0xff]
    %v4355 = vld [vmem:[#allocation8 + $0x788] sm:$0xff]
    %v4356 = vld [vmem:[#allocation8 + $0x790] sm:$0xff]
    %v4357 = vld [vmem:[#allocation8 + $0x798] sm:$0xff]
    %v4358 = vld [vmem:[#allocation8 + $0x7a0] sm:$0xff]
    %v4359 = vld [vmem:[#allocation8 + $0x7a8] sm:$0xff]
    %v4360 = vld [vmem:[#allocation8 + $0x7b0] sm:$0xff]
    %v4361 = vld [vmem:[#allocation8 + $0x7b8] sm:$0xff]
    %v4362 = vld [vmem:[#allocation8 + $0x7c0] sm:$0xff]
    %v4363 = vld [vmem:[#allocation8 + $0x7c8] sm:$0xff]
    %v4364 = vld [vmem:[#allocation8 + $0x7d0] sm:$0xff]
    %v4365 = vld [vmem:[#allocation8 + $0x7d8] sm:$0xff]
    %v4366 = vld [vmem:[#allocation8 + $0x7e0] sm:$0xff]
    %v4367 = vld [vmem:[#allocation8 + $0x7e8] sm:$0xff]
    %v4368 = vld [vmem:[#allocation8 + $0x7f0] sm:$0xff]
    %v4369 = vld [vmem:[#allocation8 + $0x7f8] sm:$0xff]
    %v4370 = vld [vmem:[#allocation10] sm:$0xf]
    %v4371 = vpack.c.bf16 %v4106, %v4098
    %v4372 = vpack.c.bf16 %v4107, %v4099
    %v4373 = vpack.c.bf16 %v4108, %v4100
    %v4374 = vpack.c.bf16 %v4109, %v4101
    %v4375 = vpack.c.bf16 %v4110, %v4102
    %v4376 = vpack.c.bf16 %v4111, %v4103
    %v4377 = vpack.c.bf16 %v4112, %v4104
    %v4378 = vpack.c.bf16 %v4113, %v4105
    %v4380 = vlaneseq
    %v4381 = vshrl.u32 %v4380, 7
    %v4382 = vsub.s32 0, %v4381
    %v4383 = vrot.slane %v4370, %v4382
    %v4384 = vlaneseq
    %v4385 = vshrl.u32 %v4384, 7
    %v4386 = vsub.s32 1, %v4385
    %v4387 = vrot.slane %v4370, %v4386
    %v4388 = vlaneseq
    %v4389 = vshrl.u32 %v4388, 7
    %v4390 = vsub.s32 2, %v4389
    %v4391 = vrot.slane %v4370, %v4390
    %v4392 = vlaneseq
    %v4393 = vshrl.u32 %v4392, 7
    %v4394 = vsub.s32 3, %v4393
    %v4395 = vrot.slane %v4370, %v4394
    %v4656 = vunpack.c.l.b16 %v4114
    %v4657 = vunpack.c.h.b16 %v4114
    %v4658 = vunpack.c.l.b16 %v4115
    %v4659 = vunpack.c.h.b16 %v4115
    %v4660 = vunpack.c.l.b16 %v4116
    %v4661 = vunpack.c.h.b16 %v4116
    %v4662 = vunpack.c.l.b16 %v4117
    %v4663 = vunpack.c.h.b16 %v4117
    %v4664 = vunpack.c.l.b16 %v4118
    %v4665 = vunpack.c.h.b16 %v4118
    %v4666 = vunpack.c.l.b16 %v4119
    %v4667 = vunpack.c.h.b16 %v4119
    %v4668 = vunpack.c.l.b16 %v4120
    %v4669 = vunpack.c.h.b16 %v4120
    %v4670 = vunpack.c.l.b16 %v4121
    %v4671 = vunpack.c.h.b16 %v4121
    %v4672 = vunpack.c.l.b16 %v4122
    %v4673 = vunpack.c.h.b16 %v4122
    %v4674 = vunpack.c.l.b16 %v4123
    %v4675 = vunpack.c.h.b16 %v4123
    %v4676 = vunpack.c.l.b16 %v4124
    %v4677 = vunpack.c.h.b16 %v4124
    %v4678 = vunpack.c.l.b16 %v4125
    %v4679 = vunpack.c.h.b16 %v4125
    %v4680 = vunpack.c.l.b16 %v4126
    %v4681 = vunpack.c.h.b16 %v4126
    %v4682 = vunpack.c.l.b16 %v4127
    %v4683 = vunpack.c.h.b16 %v4127
    %v4684 = vunpack.c.l.b16 %v4128
    %v4685 = vunpack.c.h.b16 %v4128
    %v4686 = vunpack.c.l.b16 %v4129
    %v4687 = vunpack.c.h.b16 %v4129
    %v4688 = vunpack.c.l.b16 %v4130
    %v4689 = vunpack.c.h.b16 %v4130
    %v4690 = vunpack.c.l.b16 %v4131
    %v4691 = vunpack.c.h.b16 %v4131
    %v4692 = vunpack.c.l.b16 %v4132
    %v4693 = vunpack.c.h.b16 %v4132
    %v4694 = vunpack.c.l.b16 %v4133
    %v4695 = vunpack.c.h.b16 %v4133
    %v4696 = vunpack.c.l.b16 %v4134
    %v4697 = vunpack.c.h.b16 %v4134
    %v4698 = vunpack.c.l.b16 %v4135
    %v4699 = vunpack.c.h.b16 %v4135
    %v4700 = vunpack.c.l.b16 %v4136
    %v4701 = vunpack.c.h.b16 %v4136
    %v4702 = vunpack.c.l.b16 %v4137
    %v4703 = vunpack.c.h.b16 %v4137
    %v4704 = vunpack.c.l.b16 %v4138
    %v4705 = vunpack.c.h.b16 %v4138
    %v4706 = vunpack.c.l.b16 %v4139
    %v4707 = vunpack.c.h.b16 %v4139
    %v4708 = vunpack.c.l.b16 %v4140
    %v4709 = vunpack.c.h.b16 %v4140
    %v4710 = vunpack.c.l.b16 %v4141
    %v4711 = vunpack.c.h.b16 %v4141
    %v4712 = vunpack.c.l.b16 %v4142
    %v4713 = vunpack.c.h.b16 %v4142
    %v4714 = vunpack.c.l.b16 %v4143
    %v4715 = vunpack.c.h.b16 %v4143
    %v4716 = vunpack.c.l.b16 %v4144
    %v4717 = vunpack.c.h.b16 %v4144
    %v4718 = vunpack.c.l.b16 %v4145
    %v4719 = vunpack.c.h.b16 %v4145
    %v4720 = vunpack.c.l.b16 %v4146
    %v4721 = vunpack.c.h.b16 %v4146
    %v4722 = vunpack.c.l.b16 %v4147
    %v4723 = vunpack.c.h.b16 %v4147
    %v4724 = vunpack.c.l.b16 %v4148
    %v4725 = vunpack.c.h.b16 %v4148
    %v4726 = vunpack.c.l.b16 %v4149
    %v4727 = vunpack.c.h.b16 %v4149
    %v4728 = vunpack.c.l.b16 %v4150
    %v4729 = vunpack.c.h.b16 %v4150
    %v4730 = vunpack.c.l.b16 %v4151
    %v4731 = vunpack.c.h.b16 %v4151
    %v4732 = vunpack.c.l.b16 %v4152
    %v4733 = vunpack.c.h.b16 %v4152
    %v4734 = vunpack.c.l.b16 %v4153
    %v4735 = vunpack.c.h.b16 %v4153
    %v4736 = vunpack.c.l.b16 %v4154
    %v4737 = vunpack.c.h.b16 %v4154
    %v4738 = vunpack.c.l.b16 %v4155
    %v4739 = vunpack.c.h.b16 %v4155
    %v4740 = vunpack.c.l.b16 %v4156
    %v4741 = vunpack.c.h.b16 %v4156
    %v4742 = vunpack.c.l.b16 %v4157
    %v4743 = vunpack.c.h.b16 %v4157
    %v4744 = vunpack.c.l.b16 %v4158
    %v4745 = vunpack.c.h.b16 %v4158
    %v4746 = vunpack.c.l.b16 %v4159
    %v4747 = vunpack.c.h.b16 %v4159
    %v4748 = vunpack.c.l.b16 %v4160
    %v4749 = vunpack.c.h.b16 %v4160
    %v4750 = vunpack.c.l.b16 %v4161
    %v4751 = vunpack.c.h.b16 %v4161
    %v4752 = vunpack.c.l.b16 %v4162
    %v4753 = vunpack.c.h.b16 %v4162
    %v4754 = vunpack.c.l.b16 %v4163
    %v4755 = vunpack.c.h.b16 %v4163
    %v4756 = vunpack.c.l.b16 %v4164
    %v4757 = vunpack.c.h.b16 %v4164
    %v4758 = vunpack.c.l.b16 %v4165
    %v4759 = vunpack.c.h.b16 %v4165
    %v4760 = vunpack.c.l.b16 %v4166
    %v4761 = vunpack.c.h.b16 %v4166
    %v4762 = vunpack.c.l.b16 %v4167
    %v4763 = vunpack.c.h.b16 %v4167
    %v4764 = vunpack.c.l.b16 %v4168
    %v4765 = vunpack.c.h.b16 %v4168
    %v4766 = vunpack.c.l.b16 %v4169
    %v4767 = vunpack.c.h.b16 %v4169
    %v4768 = vunpack.c.l.b16 %v4170
    %v4769 = vunpack.c.h.b16 %v4170
    %v4770 = vunpack.c.l.b16 %v4171
    %v4771 = vunpack.c.h.b16 %v4171
    %v4772 = vunpack.c.l.b16 %v4172
    %v4773 = vunpack.c.h.b16 %v4172
    %v4774 = vunpack.c.l.b16 %v4173
    %v4775 = vunpack.c.h.b16 %v4173
    %v4776 = vunpack.c.l.b16 %v4174
    %v4777 = vunpack.c.h.b16 %v4174
    %v4778 = vunpack.c.l.b16 %v4175
    %v4779 = vunpack.c.h.b16 %v4175
    %v4780 = vunpack.c.l.b16 %v4176
    %v4781 = vunpack.c.h.b16 %v4176
    %v4782 = vunpack.c.l.b16 %v4177
    %v4783 = vunpack.c.h.b16 %v4177
    %v4784 = vunpack.c.l.b16 %v4178
    %v4785 = vunpack.c.h.b16 %v4178
    %v4786 = vunpack.c.l.b16 %v4179
    %v4787 = vunpack.c.h.b16 %v4179
    %v4788 = vunpack.c.l.b16 %v4180
    %v4789 = vunpack.c.h.b16 %v4180
    %v4790 = vunpack.c.l.b16 %v4181
    %v4791 = vunpack.c.h.b16 %v4181
    %v4792 = vunpack.c.l.b16 %v4182
    %v4793 = vunpack.c.h.b16 %v4182
    %v4794 = vunpack.c.l.b16 %v4183
    %v4795 = vunpack.c.h.b16 %v4183
    %v4796 = vunpack.c.l.b16 %v4184
    %v4797 = vunpack.c.h.b16 %v4184
    %v4798 = vunpack.c.l.b16 %v4185
    %v4799 = vunpack.c.h.b16 %v4185
    %v4800 = vunpack.c.l.b16 %v4186
    %v4801 = vunpack.c.h.b16 %v4186
    %v4802 = vunpack.c.l.b16 %v4187
    %v4803 = vunpack.c.h.b16 %v4187
    %v4804 = vunpack.c.l.b16 %v4188
    %v4805 = vunpack.c.h.b16 %v4188
    %v4806 = vunpack.c.l.b16 %v4189
    %v4807 = vunpack.c.h.b16 %v4189
    %v4808 = vunpack.c.l.b16 %v4190
    %v4809 = vunpack.c.h.b16 %v4190
    %v4810 = vunpack.c.l.b16 %v4191
    %v4811 = vunpack.c.h.b16 %v4191
    %v4812 = vunpack.c.l.b16 %v4192
    %v4813 = vunpack.c.h.b16 %v4192
    %v4814 = vunpack.c.l.b16 %v4193
    %v4815 = vunpack.c.h.b16 %v4193
    %v4816 = vunpack.c.l.b16 %v4194
    %v4817 = vunpack.c.h.b16 %v4194
    %v4818 = vunpack.c.l.b16 %v4195
    %v4819 = vunpack.c.h.b16 %v4195
    %v4820 = vunpack.c.l.b16 %v4196
    %v4821 = vunpack.c.h.b16 %v4196
    %v4822 = vunpack.c.l.b16 %v4197
    %v4823 = vunpack.c.h.b16 %v4197
    %v4824 = vunpack.c.l.b16 %v4198
    %v4825 = vunpack.c.h.b16 %v4198
    %v4826 = vunpack.c.l.b16 %v4199
    %v4827 = vunpack.c.h.b16 %v4199
    %v4828 = vunpack.c.l.b16 %v4200
    %v4829 = vunpack.c.h.b16 %v4200
    %v4830 = vunpack.c.l.b16 %v4201
    %v4831 = vunpack.c.h.b16 %v4201
    %v4832 = vunpack.c.l.b16 %v4202
    %v4833 = vunpack.c.h.b16 %v4202
    %v4834 = vunpack.c.l.b16 %v4203
    %v4835 = vunpack.c.h.b16 %v4203
    %v4836 = vunpack.c.l.b16 %v4204
    %v4837 = vunpack.c.h.b16 %v4204
    %v4838 = vunpack.c.l.b16 %v4205
    %v4839 = vunpack.c.h.b16 %v4205
    %v4840 = vunpack.c.l.b16 %v4206
    %v4841 = vunpack.c.h.b16 %v4206
    %v4842 = vunpack.c.l.b16 %v4207
    %v4843 = vunpack.c.h.b16 %v4207
    %v4844 = vunpack.c.l.b16 %v4208
    %v4845 = vunpack.c.h.b16 %v4208
    %v4846 = vunpack.c.l.b16 %v4209
    %v4847 = vunpack.c.h.b16 %v4209
    %v4848 = vunpack.c.l.b16 %v4210
    %v4849 = vunpack.c.h.b16 %v4210
    %v4850 = vunpack.c.l.b16 %v4211
    %v4851 = vunpack.c.h.b16 %v4211
    %v4852 = vunpack.c.l.b16 %v4212
    %v4853 = vunpack.c.h.b16 %v4212
    %v4854 = vunpack.c.l.b16 %v4213
    %v4855 = vunpack.c.h.b16 %v4213
    %v4856 = vunpack.c.l.b16 %v4214
    %v4857 = vunpack.c.h.b16 %v4214
    %v4858 = vunpack.c.l.b16 %v4215
    %v4859 = vunpack.c.h.b16 %v4215
    %v4860 = vunpack.c.l.b16 %v4216
    %v4861 = vunpack.c.h.b16 %v4216
    %v4862 = vunpack.c.l.b16 %v4217
    %v4863 = vunpack.c.h.b16 %v4217
    %v4864 = vunpack.c.l.b16 %v4218
    %v4865 = vunpack.c.h.b16 %v4218
    %v4866 = vunpack.c.l.b16 %v4219
    %v4867 = vunpack.c.h.b16 %v4219
    %v4868 = vunpack.c.l.b16 %v4220
    %v4869 = vunpack.c.h.b16 %v4220
    %v4870 = vunpack.c.l.b16 %v4221
    %v4871 = vunpack.c.h.b16 %v4221
    %v4872 = vunpack.c.l.b16 %v4222
    %v4873 = vunpack.c.h.b16 %v4222
    %v4874 = vunpack.c.l.b16 %v4223
    %v4875 = vunpack.c.h.b16 %v4223
    %v4876 = vunpack.c.l.b16 %v4224
    %v4877 = vunpack.c.h.b16 %v4224
    %v4878 = vunpack.c.l.b16 %v4225
    %v4879 = vunpack.c.h.b16 %v4225
    %v4880 = vunpack.c.l.b16 %v4226
    %v4881 = vunpack.c.h.b16 %v4226
    %v4882 = vunpack.c.l.b16 %v4227
    %v4883 = vunpack.c.h.b16 %v4227
    %v4884 = vunpack.c.l.b16 %v4228
    %v4885 = vunpack.c.h.b16 %v4228
    %v4886 = vunpack.c.l.b16 %v4229
    %v4887 = vunpack.c.h.b16 %v4229
    %v4888 = vunpack.c.l.b16 %v4230
    %v4889 = vunpack.c.h.b16 %v4230
    %v4890 = vunpack.c.l.b16 %v4231
    %v4891 = vunpack.c.h.b16 %v4231
    %v4892 = vunpack.c.l.b16 %v4232
    %v4893 = vunpack.c.h.b16 %v4232
    %v4894 = vunpack.c.l.b16 %v4233
    %v4895 = vunpack.c.h.b16 %v4233
    %v4896 = vunpack.c.l.b16 %v4234
    %v4897 = vunpack.c.h.b16 %v4234
    %v4898 = vunpack.c.l.b16 %v4235
    %v4899 = vunpack.c.h.b16 %v4235
    %v4900 = vunpack.c.l.b16 %v4236
    %v4901 = vunpack.c.h.b16 %v4236
    %v4902 = vunpack.c.l.b16 %v4237
    %v4903 = vunpack.c.h.b16 %v4237
    %v4904 = vunpack.c.l.b16 %v4238
    %v4905 = vunpack.c.h.b16 %v4238
    %v4906 = vunpack.c.l.b16 %v4239
    %v4907 = vunpack.c.h.b16 %v4239
    %v4908 = vunpack.c.l.b16 %v4240
    %v4909 = vunpack.c.h.b16 %v4240
    %v4910 = vunpack.c.l.b16 %v4241
    %v4911 = vunpack.c.h.b16 %v4241
    %v4912 = vunpack.c.l.b16 %v4242
    %v4913 = vunpack.c.h.b16 %v4242
    %v4914 = vunpack.c.l.b16 %v4243
    %v4915 = vunpack.c.h.b16 %v4243
    %v4916 = vunpack.c.l.b16 %v4244
    %v4917 = vunpack.c.h.b16 %v4244
    %v4918 = vunpack.c.l.b16 %v4245
    %v4919 = vunpack.c.h.b16 %v4245
    %v4920 = vunpack.c.l.b16 %v4246
    %v4921 = vunpack.c.h.b16 %v4246
    %v4922 = vunpack.c.l.b16 %v4247
    %v4923 = vunpack.c.h.b16 %v4247
    %v4924 = vunpack.c.l.b16 %v4248
    %v4925 = vunpack.c.h.b16 %v4248
    %v4926 = vunpack.c.l.b16 %v4249
    %v4927 = vunpack.c.h.b16 %v4249
    %v4928 = vunpack.c.l.b16 %v4250
    %v4929 = vunpack.c.h.b16 %v4250
    %v4930 = vunpack.c.l.b16 %v4251
    %v4931 = vunpack.c.h.b16 %v4251
    %v4932 = vunpack.c.l.b16 %v4252
    %v4933 = vunpack.c.h.b16 %v4252
    %v4934 = vunpack.c.l.b16 %v4253
    %v4935 = vunpack.c.h.b16 %v4253
    %v4936 = vunpack.c.l.b16 %v4254
    %v4937 = vunpack.c.h.b16 %v4254
    %v4938 = vunpack.c.l.b16 %v4255
    %v4939 = vunpack.c.h.b16 %v4255
    %v4940 = vunpack.c.l.b16 %v4256
    %v4941 = vunpack.c.h.b16 %v4256
    %v4942 = vunpack.c.l.b16 %v4257
    %v4943 = vunpack.c.h.b16 %v4257
    %v4944 = vunpack.c.l.b16 %v4258
    %v4945 = vunpack.c.h.b16 %v4258
    %v4946 = vunpack.c.l.b16 %v4259
    %v4947 = vunpack.c.h.b16 %v4259
    %v4948 = vunpack.c.l.b16 %v4260
    %v4949 = vunpack.c.h.b16 %v4260
    %v4950 = vunpack.c.l.b16 %v4261
    %v4951 = vunpack.c.h.b16 %v4261
    %v4952 = vunpack.c.l.b16 %v4262
    %v4953 = vunpack.c.h.b16 %v4262
    %v4954 = vunpack.c.l.b16 %v4263
    %v4955 = vunpack.c.h.b16 %v4263
    %v4956 = vunpack.c.l.b16 %v4264
    %v4957 = vunpack.c.h.b16 %v4264
    %v4958 = vunpack.c.l.b16 %v4265
    %v4959 = vunpack.c.h.b16 %v4265
    %v4960 = vunpack.c.l.b16 %v4266
    %v4961 = vunpack.c.h.b16 %v4266
    %v4962 = vunpack.c.l.b16 %v4267
    %v4963 = vunpack.c.h.b16 %v4267
    %v4964 = vunpack.c.l.b16 %v4268
    %v4965 = vunpack.c.h.b16 %v4268
    %v4966 = vunpack.c.l.b16 %v4269
    %v4967 = vunpack.c.h.b16 %v4269
    %v4968 = vunpack.c.l.b16 %v4270
    %v4969 = vunpack.c.h.b16 %v4270
    %v4970 = vunpack.c.l.b16 %v4271
    %v4971 = vunpack.c.h.b16 %v4271
    %v4972 = vunpack.c.l.b16 %v4272
    %v4973 = vunpack.c.h.b16 %v4272
    %v4974 = vunpack.c.l.b16 %v4273
    %v4975 = vunpack.c.h.b16 %v4273
    %v4976 = vunpack.c.l.b16 %v4274
    %v4977 = vunpack.c.h.b16 %v4274
    %v4978 = vunpack.c.l.b16 %v4275
    %v4979 = vunpack.c.h.b16 %v4275
    %v4980 = vunpack.c.l.b16 %v4276
    %v4981 = vunpack.c.h.b16 %v4276
    %v4982 = vunpack.c.l.b16 %v4277
    %v4983 = vunpack.c.h.b16 %v4277
    %v4984 = vunpack.c.l.b16 %v4278
    %v4985 = vunpack.c.h.b16 %v4278
    %v4986 = vunpack.c.l.b16 %v4279
    %v4987 = vunpack.c.h.b16 %v4279
    %v4988 = vunpack.c.l.b16 %v4280
    %v4989 = vunpack.c.h.b16 %v4280
    %v4990 = vunpack.c.l.b16 %v4281
    %v4991 = vunpack.c.h.b16 %v4281
    %v4992 = vunpack.c.l.b16 %v4282
    %v4993 = vunpack.c.h.b16 %v4282
    %v4994 = vunpack.c.l.b16 %v4283
    %v4995 = vunpack.c.h.b16 %v4283
    %v4996 = vunpack.c.l.b16 %v4284
    %v4997 = vunpack.c.h.b16 %v4284
    %v4998 = vunpack.c.l.b16 %v4285
    %v4999 = vunpack.c.h.b16 %v4285
    %v5000 = vunpack.c.l.b16 %v4286
    %v5001 = vunpack.c.h.b16 %v4286
    %v5002 = vunpack.c.l.b16 %v4287
    %v5003 = vunpack.c.h.b16 %v4287
    %v5004 = vunpack.c.l.b16 %v4288
    %v5005 = vunpack.c.h.b16 %v4288
    %v5006 = vunpack.c.l.b16 %v4289
    %v5007 = vunpack.c.h.b16 %v4289
    %v5008 = vunpack.c.l.b16 %v4290
    %v5009 = vunpack.c.h.b16 %v4290
    %v5010 = vunpack.c.l.b16 %v4291
    %v5011 = vunpack.c.h.b16 %v4291
    %v5012 = vunpack.c.l.b16 %v4292
    %v5013 = vunpack.c.h.b16 %v4292
    %v5014 = vunpack.c.l.b16 %v4293
    %v5015 = vunpack.c.h.b16 %v4293
    %v5016 = vunpack.c.l.b16 %v4294
    %v5017 = vunpack.c.h.b16 %v4294
    %v5018 = vunpack.c.l.b16 %v4295
    %v5019 = vunpack.c.h.b16 %v4295
    %v5020 = vunpack.c.l.b16 %v4296
    %v5021 = vunpack.c.h.b16 %v4296
    %v5022 = vunpack.c.l.b16 %v4297
    %v5023 = vunpack.c.h.b16 %v4297
    %v5024 = vunpack.c.l.b16 %v4298
    %v5025 = vunpack.c.h.b16 %v4298
    %v5026 = vunpack.c.l.b16 %v4299
    %v5027 = vunpack.c.h.b16 %v4299
    %v5028 = vunpack.c.l.b16 %v4300
    %v5029 = vunpack.c.h.b16 %v4300
    %v5030 = vunpack.c.l.b16 %v4301
    %v5031 = vunpack.c.h.b16 %v4301
    %v5032 = vunpack.c.l.b16 %v4302
    %v5033 = vunpack.c.h.b16 %v4302
    %v5034 = vunpack.c.l.b16 %v4303
    %v5035 = vunpack.c.h.b16 %v4303
    %v5036 = vunpack.c.l.b16 %v4304
    %v5037 = vunpack.c.h.b16 %v4304
    %v5038 = vunpack.c.l.b16 %v4305
    %v5039 = vunpack.c.h.b16 %v4305
    %v5040 = vunpack.c.l.b16 %v4306
    %v5041 = vunpack.c.h.b16 %v4306
    %v5042 = vunpack.c.l.b16 %v4307
    %v5043 = vunpack.c.h.b16 %v4307
    %v5044 = vunpack.c.l.b16 %v4308
    %v5045 = vunpack.c.h.b16 %v4308
    %v5046 = vunpack.c.l.b16 %v4309
    %v5047 = vunpack.c.h.b16 %v4309
    %v5048 = vunpack.c.l.b16 %v4310
    %v5049 = vunpack.c.h.b16 %v4310
    %v5050 = vunpack.c.l.b16 %v4311
    %v5051 = vunpack.c.h.b16 %v4311
    %v5052 = vunpack.c.l.b16 %v4312
    %v5053 = vunpack.c.h.b16 %v4312
    %v5054 = vunpack.c.l.b16 %v4313
    %v5055 = vunpack.c.h.b16 %v4313
    %v5056 = vunpack.c.l.b16 %v4314
    %v5057 = vunpack.c.h.b16 %v4314
    %v5058 = vunpack.c.l.b16 %v4315
    %v5059 = vunpack.c.h.b16 %v4315
    %v5060 = vunpack.c.l.b16 %v4316
    %v5061 = vunpack.c.h.b16 %v4316
    %v5062 = vunpack.c.l.b16 %v4317
    %v5063 = vunpack.c.h.b16 %v4317
    %v5064 = vunpack.c.l.b16 %v4318
    %v5065 = vunpack.c.h.b16 %v4318
    %v5066 = vunpack.c.l.b16 %v4319
    %v5067 = vunpack.c.h.b16 %v4319
    %v5068 = vunpack.c.l.b16 %v4320
    %v5069 = vunpack.c.h.b16 %v4320
    %v5070 = vunpack.c.l.b16 %v4321
    %v5071 = vunpack.c.h.b16 %v4321
    %v5072 = vunpack.c.l.b16 %v4322
    %v5073 = vunpack.c.h.b16 %v4322
    %v5074 = vunpack.c.l.b16 %v4323
    %v5075 = vunpack.c.h.b16 %v4323
    %v5076 = vunpack.c.l.b16 %v4324
    %v5077 = vunpack.c.h.b16 %v4324
    %v5078 = vunpack.c.l.b16 %v4325
    %v5079 = vunpack.c.h.b16 %v4325
    %v5080 = vunpack.c.l.b16 %v4326
    %v5081 = vunpack.c.h.b16 %v4326
    %v5082 = vunpack.c.l.b16 %v4327
    %v5083 = vunpack.c.h.b16 %v4327
    %v5084 = vunpack.c.l.b16 %v4328
    %v5085 = vunpack.c.h.b16 %v4328
    %v5086 = vunpack.c.l.b16 %v4329
    %v5087 = vunpack.c.h.b16 %v4329
    %v5088 = vunpack.c.l.b16 %v4330
    %v5089 = vunpack.c.h.b16 %v4330
    %v5090 = vunpack.c.l.b16 %v4331
    %v5091 = vunpack.c.h.b16 %v4331
    %v5092 = vunpack.c.l.b16 %v4332
    %v5093 = vunpack.c.h.b16 %v4332
    %v5094 = vunpack.c.l.b16 %v4333
    %v5095 = vunpack.c.h.b16 %v4333
    %v5096 = vunpack.c.l.b16 %v4334
    %v5097 = vunpack.c.h.b16 %v4334
    %v5098 = vunpack.c.l.b16 %v4335
    %v5099 = vunpack.c.h.b16 %v4335
    %v5100 = vunpack.c.l.b16 %v4336
    %v5101 = vunpack.c.h.b16 %v4336
    %v5102 = vunpack.c.l.b16 %v4337
    %v5103 = vunpack.c.h.b16 %v4337
    %v5104 = vunpack.c.l.b16 %v4338
    %v5105 = vunpack.c.h.b16 %v4338
    %v5106 = vunpack.c.l.b16 %v4339
    %v5107 = vunpack.c.h.b16 %v4339
    %v5108 = vunpack.c.l.b16 %v4340
    %v5109 = vunpack.c.h.b16 %v4340
    %v5110 = vunpack.c.l.b16 %v4341
    %v5111 = vunpack.c.h.b16 %v4341
    %v5112 = vunpack.c.l.b16 %v4342
    %v5113 = vunpack.c.h.b16 %v4342
    %v5114 = vunpack.c.l.b16 %v4343
    %v5115 = vunpack.c.h.b16 %v4343
    %v5116 = vunpack.c.l.b16 %v4344
    %v5117 = vunpack.c.h.b16 %v4344
    %v5118 = vunpack.c.l.b16 %v4345
    %v5119 = vunpack.c.h.b16 %v4345
    %v5120 = vunpack.c.l.b16 %v4346
    %v5121 = vunpack.c.h.b16 %v4346
    %v5122 = vunpack.c.l.b16 %v4347
    %v5123 = vunpack.c.h.b16 %v4347
    %v5124 = vunpack.c.l.b16 %v4348
    %v5125 = vunpack.c.h.b16 %v4348
    %v5126 = vunpack.c.l.b16 %v4349
    %v5127 = vunpack.c.h.b16 %v4349
    %v5128 = vunpack.c.l.b16 %v4350
    %v5129 = vunpack.c.h.b16 %v4350
    %v5130 = vunpack.c.l.b16 %v4351
    %v5131 = vunpack.c.h.b16 %v4351
    %v5132 = vunpack.c.l.b16 %v4352
    %v5133 = vunpack.c.h.b16 %v4352
    %v5134 = vunpack.c.l.b16 %v4353
    %v5135 = vunpack.c.h.b16 %v4353
    %v5136 = vunpack.c.l.b16 %v4354
    %v5137 = vunpack.c.h.b16 %v4354
    %v5138 = vunpack.c.l.b16 %v4355
    %v5139 = vunpack.c.h.b16 %v4355
    %v5140 = vunpack.c.l.b16 %v4356
    %v5141 = vunpack.c.h.b16 %v4356
    %v5142 = vunpack.c.l.b16 %v4357
    %v5143 = vunpack.c.h.b16 %v4357
    %v5144 = vunpack.c.l.b16 %v4358
    %v5145 = vunpack.c.h.b16 %v4358
    %v5146 = vunpack.c.l.b16 %v4359
    %v5147 = vunpack.c.h.b16 %v4359
    %v5148 = vunpack.c.l.b16 %v4360
    %v5149 = vunpack.c.h.b16 %v4360
    %v5150 = vunpack.c.l.b16 %v4361
    %v5151 = vunpack.c.h.b16 %v4361
    %v5152 = vunpack.c.l.b16 %v4362
    %v5153 = vunpack.c.h.b16 %v4362
    %v5154 = vunpack.c.l.b16 %v4363
    %v5155 = vunpack.c.h.b16 %v4363
    %v5156 = vunpack.c.l.b16 %v4364
    %v5157 = vunpack.c.h.b16 %v4364
    %v5158 = vunpack.c.l.b16 %v4365
    %v5159 = vunpack.c.h.b16 %v4365
    %v5160 = vunpack.c.l.b16 %v4366
    %v5161 = vunpack.c.h.b16 %v4366
    %v5162 = vunpack.c.l.b16 %v4367
    %v5163 = vunpack.c.h.b16 %v4367
    %v5164 = vunpack.c.l.b16 %v4368
    %v5165 = vunpack.c.h.b16 %v4368
    %v5166 = vunpack.c.l.b16 %v4369
    %v5167 = vunpack.c.h.b16 %v4369
    %v5168 = vpack.c.b16 %v4660, %v4656
    %v5169 = vpack.c.b16 %v4661, %v4657
    %v5170 = vpack.c.b16 %v4662, %v4658
    %v5171 = vpack.c.b16 %v4663, %v4659
    %v5172 = vpack.c.b16 %v4668, %v4664
    %v5173 = vpack.c.b16 %v4669, %v4665
    %v5174 = vpack.c.b16 %v4670, %v4666
    %v5175 = vpack.c.b16 %v4671, %v4667
    %v5176 = vpack.c.b16 %v4676, %v4672
    %v5177 = vpack.c.b16 %v4677, %v4673
    %v5178 = vpack.c.b16 %v4678, %v4674
    %v5179 = vpack.c.b16 %v4679, %v4675
    %v5180 = vpack.c.b16 %v4684, %v4680
    %v5181 = vpack.c.b16 %v4685, %v4681
    %v5182 = vpack.c.b16 %v4686, %v4682
    %v5183 = vpack.c.b16 %v4687, %v4683
    %v5184 = vpack.c.b16 %v4692, %v4688
    %v5185 = vpack.c.b16 %v4693, %v4689
    %v5186 = vpack.c.b16 %v4694, %v4690
    %v5187 = vpack.c.b16 %v4695, %v4691
    %v5188 = vpack.c.b16 %v4700, %v4696
    %v5189 = vpack.c.b16 %v4701, %v4697
    %v5190 = vpack.c.b16 %v4702, %v4698
    %v5191 = vpack.c.b16 %v4703, %v4699
    %v5192 = vpack.c.b16 %v4708, %v4704
    %v5193 = vpack.c.b16 %v4709, %v4705
    %v5194 = vpack.c.b16 %v4710, %v4706
    %v5195 = vpack.c.b16 %v4711, %v4707
    %v5196 = vpack.c.b16 %v4716, %v4712
    %v5197 = vpack.c.b16 %v4717, %v4713
    %v5198 = vpack.c.b16 %v4718, %v4714
    %v5199 = vpack.c.b16 %v4719, %v4715
    %v5200 = vpack.c.b16 %v4724, %v4720
    %v5201 = vpack.c.b16 %v4725, %v4721
    %v5202 = vpack.c.b16 %v4726, %v4722
    %v5203 = vpack.c.b16 %v4727, %v4723
    %v5204 = vpack.c.b16 %v4732, %v4728
    %v5205 = vpack.c.b16 %v4733, %v4729
    %v5206 = vpack.c.b16 %v4734, %v4730
    %v5207 = vpack.c.b16 %v4735, %v4731
    %v5208 = vpack.c.b16 %v4740, %v4736
    %v5209 = vpack.c.b16 %v4741, %v4737
    %v5210 = vpack.c.b16 %v4742, %v4738
    %v5211 = vpack.c.b16 %v4743, %v4739
    %v5212 = vpack.c.b16 %v4748, %v4744
    %v5213 = vpack.c.b16 %v4749, %v4745
    %v5214 = vpack.c.b16 %v4750, %v4746
    %v5215 = vpack.c.b16 %v4751, %v4747
    %v5216 = vpack.c.b16 %v4756, %v4752
    %v5217 = vpack.c.b16 %v4757, %v4753
    %v5218 = vpack.c.b16 %v4758, %v4754
    %v5219 = vpack.c.b16 %v4759, %v4755
    %v5220 = vpack.c.b16 %v4764, %v4760
    %v5221 = vpack.c.b16 %v4765, %v4761
    %v5222 = vpack.c.b16 %v4766, %v4762
    %v5223 = vpack.c.b16 %v4767, %v4763
    %v5224 = vpack.c.b16 %v4772, %v4768
    %v5225 = vpack.c.b16 %v4773, %v4769
    %v5226 = vpack.c.b16 %v4774, %v4770
    %v5227 = vpack.c.b16 %v4775, %v4771
    %v5228 = vpack.c.b16 %v4780, %v4776
    %v5229 = vpack.c.b16 %v4781, %v4777
    %v5230 = vpack.c.b16 %v4782, %v4778
    %v5231 = vpack.c.b16 %v4783, %v4779
    %v5232 = vpack.c.b16 %v4788, %v4784
    %v5233 = vpack.c.b16 %v4789, %v4785
    %v5234 = vpack.c.b16 %v4790, %v4786
    %v5235 = vpack.c.b16 %v4791, %v4787
    %v5236 = vpack.c.b16 %v4796, %v4792
    %v5237 = vpack.c.b16 %v4797, %v4793
    %v5238 = vpack.c.b16 %v4798, %v4794
    %v5239 = vpack.c.b16 %v4799, %v4795
    %v5240 = vpack.c.b16 %v4804, %v4800
    %v5241 = vpack.c.b16 %v4805, %v4801
    %v5242 = vpack.c.b16 %v4806, %v4802
    %v5243 = vpack.c.b16 %v4807, %v4803
    %v5244 = vpack.c.b16 %v4812, %v4808
    %v5245 = vpack.c.b16 %v4813, %v4809
    %v5246 = vpack.c.b16 %v4814, %v4810
    %v5247 = vpack.c.b16 %v4815, %v4811
    %v5248 = vpack.c.b16 %v4820, %v4816
    %v5249 = vpack.c.b16 %v4821, %v4817
    %v5250 = vpack.c.b16 %v4822, %v4818
    %v5251 = vpack.c.b16 %v4823, %v4819
    %v5252 = vpack.c.b16 %v4828, %v4824
    %v5253 = vpack.c.b16 %v4829, %v4825
    %v5254 = vpack.c.b16 %v4830, %v4826
    %v5255 = vpack.c.b16 %v4831, %v4827
    %v5256 = vpack.c.b16 %v4836, %v4832
    %v5257 = vpack.c.b16 %v4837, %v4833
    %v5258 = vpack.c.b16 %v4838, %v4834
    %v5259 = vpack.c.b16 %v4839, %v4835
    %v5260 = vpack.c.b16 %v4844, %v4840
    %v5261 = vpack.c.b16 %v4845, %v4841
    %v5262 = vpack.c.b16 %v4846, %v4842
    %v5263 = vpack.c.b16 %v4847, %v4843
    %v5264 = vpack.c.b16 %v4852, %v4848
    %v5265 = vpack.c.b16 %v4853, %v4849
    %v5266 = vpack.c.b16 %v4854, %v4850
    %v5267 = vpack.c.b16 %v4855, %v4851
    %v5268 = vpack.c.b16 %v4860, %v4856
    %v5269 = vpack.c.b16 %v4861, %v4857
    %v5270 = vpack.c.b16 %v4862, %v4858
    %v5271 = vpack.c.b16 %v4863, %v4859
    %v5272 = vpack.c.b16 %v4868, %v4864
    %v5273 = vpack.c.b16 %v4869, %v4865
    %v5274 = vpack.c.b16 %v4870, %v4866
    %v5275 = vpack.c.b16 %v4871, %v4867
    %v5276 = vpack.c.b16 %v4876, %v4872
    %v5277 = vpack.c.b16 %v4877, %v4873
    %v5278 = vpack.c.b16 %v4878, %v4874
    %v5279 = vpack.c.b16 %v4879, %v4875
    %v5280 = vpack.c.b16 %v4884, %v4880
    %v5281 = vpack.c.b16 %v4885, %v4881
    %v5282 = vpack.c.b16 %v4886, %v4882
    %v5283 = vpack.c.b16 %v4887, %v4883
    %v5284 = vpack.c.b16 %v4892, %v4888
    %v5285 = vpack.c.b16 %v4893, %v4889
    %v5286 = vpack.c.b16 %v4894, %v4890
    %v5287 = vpack.c.b16 %v4895, %v4891
    %v5288 = vpack.c.b16 %v4900, %v4896
    %v5289 = vpack.c.b16 %v4901, %v4897
    %v5290 = vpack.c.b16 %v4902, %v4898
    %v5291 = vpack.c.b16 %v4903, %v4899
    %v5292 = vpack.c.b16 %v4908, %v4904
    %v5293 = vpack.c.b16 %v4909, %v4905
    %v5294 = vpack.c.b16 %v4910, %v4906
    %v5295 = vpack.c.b16 %v4911, %v4907
    %v5296 = vpack.c.b16 %v4916, %v4912
    %v5297 = vpack.c.b16 %v4917, %v4913
    %v5298 = vpack.c.b16 %v4918, %v4914
    %v5299 = vpack.c.b16 %v4919, %v4915
    %v5300 = vpack.c.b16 %v4924, %v4920
    %v5301 = vpack.c.b16 %v4925, %v4921
    %v5302 = vpack.c.b16 %v4926, %v4922
    %v5303 = vpack.c.b16 %v4927, %v4923
    %v5304 = vpack.c.b16 %v4932, %v4928
    %v5305 = vpack.c.b16 %v4933, %v4929
    %v5306 = vpack.c.b16 %v4934, %v4930
    %v5307 = vpack.c.b16 %v4935, %v4931
    %v5308 = vpack.c.b16 %v4940, %v4936
    %v5309 = vpack.c.b16 %v4941, %v4937
    %v5310 = vpack.c.b16 %v4942, %v4938
    %v5311 = vpack.c.b16 %v4943, %v4939
    %v5312 = vpack.c.b16 %v4948, %v4944
    %v5313 = vpack.c.b16 %v4949, %v4945
    %v5314 = vpack.c.b16 %v4950, %v4946
    %v5315 = vpack.c.b16 %v4951, %v4947
    %v5316 = vpack.c.b16 %v4956, %v4952
    %v5317 = vpack.c.b16 %v4957, %v4953
    %v5318 = vpack.c.b16 %v4958, %v4954
    %v5319 = vpack.c.b16 %v4959, %v4955
    %v5320 = vpack.c.b16 %v4964, %v4960
    %v5321 = vpack.c.b16 %v4965, %v4961
    %v5322 = vpack.c.b16 %v4966, %v4962
    %v5323 = vpack.c.b16 %v4967, %v4963
    %v5324 = vpack.c.b16 %v4972, %v4968
    %v5325 = vpack.c.b16 %v4973, %v4969
    %v5326 = vpack.c.b16 %v4974, %v4970
    %v5327 = vpack.c.b16 %v4975, %v4971
    %v5328 = vpack.c.b16 %v4980, %v4976
    %v5329 = vpack.c.b16 %v4981, %v4977
    %v5330 = vpack.c.b16 %v4982, %v4978
    %v5331 = vpack.c.b16 %v4983, %v4979
    %v5332 = vpack.c.b16 %v4988, %v4984
    %v5333 = vpack.c.b16 %v4989, %v4985
    %v5334 = vpack.c.b16 %v4990, %v4986
    %v5335 = vpack.c.b16 %v4991, %v4987
    %v5336 = vpack.c.b16 %v4996, %v4992
    %v5337 = vpack.c.b16 %v4997, %v4993
    %v5338 = vpack.c.b16 %v4998, %v4994
    %v5339 = vpack.c.b16 %v4999, %v4995
    %v5340 = vpack.c.b16 %v5004, %v5000
    %v5341 = vpack.c.b16 %v5005, %v5001
    %v5342 = vpack.c.b16 %v5006, %v5002
    %v5343 = vpack.c.b16 %v5007, %v5003
    %v5344 = vpack.c.b16 %v5012, %v5008
    %v5345 = vpack.c.b16 %v5013, %v5009
    %v5346 = vpack.c.b16 %v5014, %v5010
    %v5347 = vpack.c.b16 %v5015, %v5011
    %v5348 = vpack.c.b16 %v5020, %v5016
    %v5349 = vpack.c.b16 %v5021, %v5017
    %v5350 = vpack.c.b16 %v5022, %v5018
    %v5351 = vpack.c.b16 %v5023, %v5019
    %v5352 = vpack.c.b16 %v5028, %v5024
    %v5353 = vpack.c.b16 %v5029, %v5025
    %v5354 = vpack.c.b16 %v5030, %v5026
    %v5355 = vpack.c.b16 %v5031, %v5027
    %v5356 = vpack.c.b16 %v5036, %v5032
    %v5357 = vpack.c.b16 %v5037, %v5033
    %v5358 = vpack.c.b16 %v5038, %v5034
    %v5359 = vpack.c.b16 %v5039, %v5035
    %v5360 = vpack.c.b16 %v5044, %v5040
    %v5361 = vpack.c.b16 %v5045, %v5041
    %v5362 = vpack.c.b16 %v5046, %v5042
    %v5363 = vpack.c.b16 %v5047, %v5043
    %v5364 = vpack.c.b16 %v5052, %v5048
    %v5365 = vpack.c.b16 %v5053, %v5049
    %v5366 = vpack.c.b16 %v5054, %v5050
    %v5367 = vpack.c.b16 %v5055, %v5051
    %v5368 = vpack.c.b16 %v5060, %v5056
    %v5369 = vpack.c.b16 %v5061, %v5057
    %v5370 = vpack.c.b16 %v5062, %v5058
    %v5371 = vpack.c.b16 %v5063, %v5059
    %v5372 = vpack.c.b16 %v5068, %v5064
    %v5373 = vpack.c.b16 %v5069, %v5065
    %v5374 = vpack.c.b16 %v5070, %v5066
    %v5375 = vpack.c.b16 %v5071, %v5067
    %v5376 = vpack.c.b16 %v5076, %v5072
    %v5377 = vpack.c.b16 %v5077, %v5073
    %v5378 = vpack.c.b16 %v5078, %v5074
    %v5379 = vpack.c.b16 %v5079, %v5075
    %v5380 = vpack.c.b16 %v5084, %v5080
    %v5381 = vpack.c.b16 %v5085, %v5081
    %v5382 = vpack.c.b16 %v5086, %v5082
    %v5383 = vpack.c.b16 %v5087, %v5083
    %v5384 = vpack.c.b16 %v5092, %v5088
    %v5385 = vpack.c.b16 %v5093, %v5089
    %v5386 = vpack.c.b16 %v5094, %v5090
    %v5387 = vpack.c.b16 %v5095, %v5091
    %v5388 = vpack.c.b16 %v5100, %v5096
    %v5389 = vpack.c.b16 %v5101, %v5097
    %v5390 = vpack.c.b16 %v5102, %v5098
    %v5391 = vpack.c.b16 %v5103, %v5099
    %v5392 = vpack.c.b16 %v5108, %v5104
    %v5393 = vpack.c.b16 %v5109, %v5105
    %v5394 = vpack.c.b16 %v5110, %v5106
    %v5395 = vpack.c.b16 %v5111, %v5107
    %v5396 = vpack.c.b16 %v5116, %v5112
    %v5397 = vpack.c.b16 %v5117, %v5113
    %v5398 = vpack.c.b16 %v5118, %v5114
    %v5399 = vpack.c.b16 %v5119, %v5115
    %v5400 = vpack.c.b16 %v5124, %v5120
    %v5401 = vpack.c.b16 %v5125, %v5121
    %v5402 = vpack.c.b16 %v5126, %v5122
    %v5403 = vpack.c.b16 %v5127, %v5123
    %v5404 = vpack.c.b16 %v5132, %v5128
    %v5405 = vpack.c.b16 %v5133, %v5129
    %v5406 = vpack.c.b16 %v5134, %v5130
    %v5407 = vpack.c.b16 %v5135, %v5131
    %v5408 = vpack.c.b16 %v5140, %v5136
    %v5409 = vpack.c.b16 %v5141, %v5137
    %v5410 = vpack.c.b16 %v5142, %v5138
    %v5411 = vpack.c.b16 %v5143, %v5139
    %v5412 = vpack.c.b16 %v5148, %v5144
    %v5413 = vpack.c.b16 %v5149, %v5145
    %v5414 = vpack.c.b16 %v5150, %v5146
    %v5415 = vpack.c.b16 %v5151, %v5147
    %v5416 = vpack.c.b16 %v5156, %v5152
    %v5417 = vpack.c.b16 %v5157, %v5153
    %v5418 = vpack.c.b16 %v5158, %v5154
    %v5419 = vpack.c.b16 %v5159, %v5155
    %v5420 = vpack.c.b16 %v5164, %v5160
    %v5421 = vpack.c.b16 %v5165, %v5161
    %v5422 = vpack.c.b16 %v5166, %v5162
    %v5423 = vpack.c.b16 %v5167, %v5163
    %5680 = vmatprep.subr.bf16.mxu0 %v5169
    %5681 = vmatpush1.bf16.msra.mxu0 %v5168
    %5682 = vmatprep.subr.bf16.mxu0 %v5173
    %5683 = vmatpush1.bf16.msra.mxu0 %v5172
    %5684 = vmatprep.subr.bf16.mxu0 %v5177
    %5685 = vmatpush1.bf16.msra.mxu0 %v5176
    %5686 = vmatprep.subr.bf16.mxu0 %v5181
    %5687 = vmatpush1.bf16.msra.mxu0 %v5180
    %5688 = vmatprep.subr.bf16.mxu0 %v5185
    %5689 = vmatpush1.bf16.msra.mxu0 %v5184
    %5690 = vmatprep.subr.bf16.mxu0 %v5189
    %5691 = vmatpush1.bf16.msra.mxu0 %v5188
    %5692 = vmatprep.subr.bf16.mxu0 %v5193
    %5693 = vmatpush1.bf16.msra.mxu0 %v5192
    %5694 = vmatprep.subr.bf16.mxu0 %v5197
    %5695 = vmatpush1.bf16.msra.mxu0 %v5196
    %5696 = vmatprep.subr.bf16.mxu0 %v5201
    %5697 = vmatpush1.bf16.msra.mxu0 %v5200
    %5698 = vmatprep.subr.bf16.mxu0 %v5205
    %5699 = vmatpush1.bf16.msra.mxu0 %v5204
    %5700 = vmatprep.subr.bf16.mxu0 %v5209
    %5701 = vmatpush1.bf16.msra.mxu0 %v5208
    %5702 = vmatprep.subr.bf16.mxu0 %v5213
    %5703 = vmatpush1.bf16.msra.mxu0 %v5212
    %5704 = vmatprep.subr.bf16.mxu0 %v5217
    %5705 = vmatpush1.bf16.msra.mxu0 %v5216
    %5706 = vmatprep.subr.bf16.mxu0 %v5221
    %5707 = vmatpush1.bf16.msra.mxu0 %v5220
    %5708 = vmatprep.subr.bf16.mxu0 %v5225
    %5709 = vmatpush1.bf16.msra.mxu0 %v5224
    %5710 = vmatprep.subr.bf16.mxu0 %v5229
    %5711 = vmatpush1.bf16.msra.mxu0 %v5228
    %5712 = vmatprep.mubr.bf16.mxu0 %v4372
    %5713 = vmatmul.mubr.bf16.gmra.mrb[0].mxu0 %v4371
    %v5714 = vpop.f32.mrb[0].mxu0
    %v5715 = vadd.f32 %v4383, %v5714
    %v5716 = vpop.f32.mrb[0].mxu0
    %v5717 = vadd.f32 %v4387, %v5716
    %v5718 = vpop.f32.mrb[0].mxu0
    %v5719 = vadd.f32 %v4383, %v5718
    %v5720 = vpop.f32.mrb[0].mxu0
    %v5721 = vadd.f32 %v4387, %v5720
    %5722 = vdwg.mxu0
    %5723 = vmatprep.subr.bf16.mxu0 %v5233
    %5724 = vmatpush1.bf16.msra.mxu0 %v5232
    %5725 = vmatprep.subr.bf16.mxu0 %v5237
    %5726 = vmatpush1.bf16.msra.mxu0 %v5236
    %5727 = vmatprep.subr.bf16.mxu0 %v5241
    %5728 = vmatpush1.bf16.msra.mxu0 %v5240
    %5729 = vmatprep.subr.bf16.mxu0 %v5245
    %5730 = vmatpush1.bf16.msra.mxu0 %v5244
    %5731 = vmatprep.subr.bf16.mxu0 %v5249
    %5732 = vmatpush1.bf16.msra.mxu0 %v5248
    %5733 = vmatprep.subr.bf16.mxu0 %v5253
    %5734 = vmatpush1.bf16.msra.mxu0 %v5252
    %5735 = vmatprep.subr.bf16.mxu0 %v5257
    %5736 = vmatpush1.bf16.msra.mxu0 %v5256
    %5737 = vmatprep.subr.bf16.mxu0 %v5261
    %5738 = vmatpush1.bf16.msra.mxu0 %v5260
    %5739 = vmatprep.subr.bf16.mxu0 %v5265
    %5740 = vmatpush1.bf16.msra.mxu0 %v5264
    %5741 = vmatprep.subr.bf16.mxu0 %v5269
    %5742 = vmatpush1.bf16.msra.mxu0 %v5268
    %5743 = vmatprep.subr.bf16.mxu0 %v5273
    %5744 = vmatpush1.bf16.msra.mxu0 %v5272
    %5745 = vmatprep.subr.bf16.mxu0 %v5277
    %5746 = vmatpush1.bf16.msra.mxu0 %v5276
    %5747 = vmatprep.subr.bf16.mxu0 %v5281
    %5748 = vmatpush1.bf16.msra.mxu0 %v5280
    %5749 = vmatprep.subr.bf16.mxu0 %v5285
    %5750 = vmatpush1.bf16.msra.mxu0 %v5284
    %5751 = vmatprep.subr.bf16.mxu0 %v5289
    %5752 = vmatpush1.bf16.msra.mxu0 %v5288
    %5753 = vmatprep.subr.bf16.mxu0 %v5293
    %5754 = vmatpush1.bf16.msra.mxu0 %v5292
    %5755 = vmatprep.mubr.bf16.mxu0 %v4374
    %5756 = vmatmul.mubr.bf16.gmra.mrb[0].mxu0 %v4373
    %v5757 = vpop.f32.mrb[0].mxu0
    %v5758 = vadd.f32 %v5715, %v5757
    %v5759 = vpop.f32.mrb[0].mxu0
    %v5760 = vadd.f32 %v5717, %v5759
    %v5761 = vpop.f32.mrb[0].mxu0
    %v5762 = vadd.f32 %v5719, %v5761
    %v5763 = vpop.f32.mrb[0].mxu0
    %v5764 = vadd.f32 %v5721, %v5763
    %5765 = vdwg.mxu0
    %5766 = vmatprep.subr.bf16.mxu0 %v5297
    %5767 = vmatpush1.bf16.msra.mxu0 %v5296
    %5768 = vmatprep.subr.bf16.mxu0 %v5301
    %5769 = vmatpush1.bf16.msra.mxu0 %v5300
    %5770 = vmatprep.subr.bf16.mxu0 %v5305
    %5771 = vmatpush1.bf16.msra.mxu0 %v5304
    %5772 = vmatprep.subr.bf16.mxu0 %v5309
    %5773 = vmatpush1.bf16.msra.mxu0 %v5308
    %5774 = vmatprep.subr.bf16.mxu0 %v5313
    %5775 = vmatpush1.bf16.msra.mxu0 %v5312
    %5776 = vmatprep.subr.bf16.mxu0 %v5317
    %5777 = vmatpush1.bf16.msra.mxu0 %v5316
    %5778 = vmatprep.subr.bf16.mxu0 %v5321
    %5779 = vmatpush1.bf16.msra.mxu0 %v5320
    %5780 = vmatprep.subr.bf16.mxu0 %v5325
    %5781 = vmatpush1.bf16.msra.mxu0 %v5324
    %5782 = vmatprep.subr.bf16.mxu0 %v5329
    %5783 = vmatpush1.bf16.msra.mxu0 %v5328
    %5784 = vmatprep.subr.bf16.mxu0 %v5333
    %5785 = vmatpush1.bf16.msra.mxu0 %v5332
    %5786 = vmatprep.subr.bf16.mxu0 %v5337
    %5787 = vmatpush1.bf16.msra.mxu0 %v5336
    %5788 = vmatprep.subr.bf16.mxu0 %v5341
    %5789 = vmatpush1.bf16.msra.mxu0 %v5340
    %5790 = vmatprep.subr.bf16.mxu0 %v5345
    %5791 = vmatpush1.bf16.msra.mxu0 %v5344
    %5792 = vmatprep.subr.bf16.mxu0 %v5349
    %5793 = vmatpush1.bf16.msra.mxu0 %v5348
    %5794 = vmatprep.subr.bf16.mxu0 %v5353
    %5795 = vmatpush1.bf16.msra.mxu0 %v5352
    %5796 = vmatprep.subr.bf16.mxu0 %v5357
    %5797 = vmatpush1.bf16.msra.mxu0 %v5356
    %5798 = vmatprep.mubr.bf16.mxu0 %v4376
    %5799 = vmatmul.mubr.bf16.gmra.mrb[0].mxu0 %v4375
    %v5800 = vpop.f32.mrb[0].mxu0
    %v5801 = vadd.f32 %v5758, %v5800
    %v5802 = vpop.f32.mrb[0].mxu0
    %v5803 = vadd.f32 %v5760, %v5802
    %v5804 = vpop.f32.mrb[0].mxu0
    %v5805 = vadd.f32 %v5762, %v5804
    %v5806 = vpop.f32.mrb[0].mxu0
    %v5807 = vadd.f32 %v5764, %v5806
    %5808 = vdwg.mxu0
    %5809 = vmatprep.subr.bf16.mxu0 %v5361
    %5810 = vmatpush1.bf16.msra.mxu0 %v5360
    %5811 = vmatprep.subr.bf16.mxu0 %v5365
    %5812 = vmatpush1.bf16.msra.mxu0 %v5364
    %5813 = vmatprep.subr.bf16.mxu0 %v5369
    %5814 = vmatpush1.bf16.msra.mxu0 %v5368
    %5815 = vmatprep.subr.bf16.mxu0 %v5373
    %5816 = vmatpush1.bf16.msra.mxu0 %v5372
    %5817 = vmatprep.subr.bf16.mxu0 %v5377
    %5818 = vmatpush1.bf16.msra.mxu0 %v5376
    %5819 = vmatprep.subr.bf16.mxu0 %v5381
    %5820 = vmatpush1.bf16.msra.mxu0 %v5380
    %5821 = vmatprep.subr.bf16.mxu0 %v5385
    %5822 = vmatpush1.bf16.msra.mxu0 %v5384
    %5823 = vmatprep.subr.bf16.mxu0 %v5389
    %5824 = vmatpush1.bf16.msra.mxu0 %v5388
    %5825 = vmatprep.subr.bf16.mxu0 %v5393
    %5826 = vmatpush1.bf16.msra.mxu0 %v5392
    %5827 = vmatprep.subr.bf16.mxu0 %v5397
    %5828 = vmatpush1.bf16.msra.mxu0 %v5396
    %5829 = vmatprep.subr.bf16.mxu0 %v5401
    %5830 = vmatpush1.bf16.msra.mxu0 %v5400
    %5831 = vmatprep.subr.bf16.mxu0 %v5405
    %5832 = vmatpush1.bf16.msra.mxu0 %v5404
    %5833 = vmatprep.subr.bf16.mxu0 %v5409
    %5834 = vmatpush1.bf16.msra.mxu0 %v5408
    %5835 = vmatprep.subr.bf16.mxu0 %v5413
    %5836 = vmatpush1.bf16.msra.mxu0 %v5412
    %5837 = vmatprep.subr.bf16.mxu0 %v5417
    %5838 = vmatpush1.bf16.msra.mxu0 %v5416
    %5839 = vmatprep.subr.bf16.mxu0 %v5421
    %5840 = vmatpush1.bf16.msra.mxu0 %v5420
    %5841 = vmatprep.mubr.bf16.mxu0 %v4378
    %5842 = vmatmul.mubr.bf16.gmra.mrb[0].mxu0 %v4377
    %v5843 = vpop.f32.mrb[0].mxu0
    %v5844 = vadd.f32 %v5801, %v5843
    %v5845 = vpop.f32.mrb[0].mxu0
    %v5846 = vadd.f32 %v5803, %v5845
    %v5847 = vpop.f32.mrb[0].mxu0
    %v5848 = vadd.f32 %v5805, %v5847
    %v5849 = vpop.f32.mrb[0].mxu0
    %v5850 = vadd.f32 %v5807, %v5849
    %5851 = vdwg.mxu0
    %5852 = vmatprep.subr.bf16.mxu0 %v5171
    %5853 = vmatpush1.bf16.msra.mxu0 %v5170
    %5854 = vmatprep.subr.bf16.mxu0 %v5175
    %5855 = vmatpush1.bf16.msra.mxu0 %v5174
    %5856 = vmatprep.subr.bf16.mxu0 %v5179
    %5857 = vmatpush1.bf16.msra.mxu0 %v5178
    %5858 = vmatprep.subr.bf16.mxu0 %v5183
    %5859 = vmatpush1.bf16.msra.mxu0 %v5182
    %5860 = vmatprep.subr.bf16.mxu0 %v5187
    %5861 = vmatpush1.bf16.msra.mxu0 %v5186
    %5862 = vmatprep.subr.bf16.mxu0 %v5191
    %5863 = vmatpush1.bf16.msra.mxu0 %v5190
    %5864 = vmatprep.subr.bf16.mxu0 %v5195
    %5865 = vmatpush1.bf16.msra.mxu0 %v5194
    %5866 = vmatprep.subr.bf16.mxu0 %v5199
    %5867 = vmatpush1.bf16.msra.mxu0 %v5198
    %5868 = vmatprep.subr.bf16.mxu0 %v5203
    %5869 = vmatpush1.bf16.msra.mxu0 %v5202
    %5870 = vmatprep.subr.bf16.mxu0 %v5207
    %5871 = vmatpush1.bf16.msra.mxu0 %v5206
    %5872 = vmatprep.subr.bf16.mxu0 %v5211
    %5873 = vmatpush1.bf16.msra.mxu0 %v5210
    %5874 = vmatprep.subr.bf16.mxu0 %v5215
    %5875 = vmatpush1.bf16.msra.mxu0 %v5214
    %5876 = vmatprep.subr.bf16.mxu0 %v5219
    %5877 = vmatpush1.bf16.msra.mxu0 %v5218
    %5878 = vmatprep.subr.bf16.mxu0 %v5223
    %5879 = vmatpush1.bf16.msra.mxu0 %v5222
    %5880 = vmatprep.subr.bf16.mxu0 %v5227
    %5881 = vmatpush1.bf16.msra.mxu0 %v5226
    %5882 = vmatprep.subr.bf16.mxu0 %v5231
    %5883 = vmatpush1.bf16.msra.mxu0 %v5230
    %5884 = vmatprep.mubr.bf16.mxu0 %v4372
    %5885 = vmatmul.mubr.bf16.gmra.mrb[0].mxu0 %v4371
    %v5886 = vpop.f32.mrb[0].mxu0
    %v5887 = vadd.f32 %v4391, %v5886
    %v5888 = vpop.f32.mrb[0].mxu0
    %v5889 = vadd.f32 %v4395, %v5888
    %v5890 = vpop.f32.mrb[0].mxu0
    %v5891 = vadd.f32 %v4391, %v5890
    %v5892 = vpop.f32.mrb[0].mxu0
    %v5893 = vadd.f32 %v4395, %v5892
    %5894 = vdwg.mxu0
    %5895 = vmatprep.subr.bf16.mxu0 %v5235
    %5896 = vmatpush1.bf16.msra.mxu0 %v5234
    %5897 = vmatprep.subr.bf16.mxu0 %v5239
    %5898 = vmatpush1.bf16.msra.mxu0 %v5238
    %5899 = vmatprep.subr.bf16.mxu0 %v5243
    %5900 = vmatpush1.bf16.msra.mxu0 %v5242
    %5901 = vmatprep.subr.bf16.mxu0 %v5247
    %5902 = vmatpush1.bf16.msra.mxu0 %v5246
    %5903 = vmatprep.subr.bf16.mxu0 %v5251
    %5904 = vmatpush1.bf16.msra.mxu0 %v5250
    %5905 = vmatprep.subr.bf16.mxu0 %v5255
    %5906 = vmatpush1.bf16.msra.mxu0 %v5254
    %5907 = vmatprep.subr.bf16.mxu0 %v5259
    %5908 = vmatpush1.bf16.msra.mxu0 %v5258
    %5909 = vmatprep.subr.bf16.mxu0 %v5263
    %5910 = vmatpush1.bf16.msra.mxu0 %v5262
    %5911 = vmatprep.subr.bf16.mxu0 %v5267
    %5912 = vmatpush1.bf16.msra.mxu0 %v5266
    %5913 = vmatprep.subr.bf16.mxu0 %v5271
    %5914 = vmatpush1.bf16.msra.mxu0 %v5270
    %5915 = vmatprep.subr.bf16.mxu0 %v5275
    %5916 = vmatpush1.bf16.msra.mxu0 %v5274
    %5917 = vmatprep.subr.bf16.mxu0 %v5279
    %5918 = vmatpush1.bf16.msra.mxu0 %v5278
    %5919 = vmatprep.subr.bf16.mxu0 %v5283
    %5920 = vmatpush1.bf16.msra.mxu0 %v5282
    %5921 = vmatprep.subr.bf16.mxu0 %v5287
    %5922 = vmatpush1.bf16.msra.mxu0 %v5286
    %5923 = vmatprep.subr.bf16.mxu0 %v5291
    %5924 = vmatpush1.bf16.msra.mxu0 %v5290
    %5925 = vmatprep.subr.bf16.mxu0 %v5295
    %5926 = vmatpush1.bf16.msra.mxu0 %v5294
    %5927 = vmatprep.mubr.bf16.mxu0 %v4374
    %5928 = vmatmul.mubr.bf16.gmra.mrb[0].mxu0 %v4373
    %v5929 = vpop.f32.mrb[0].mxu0
    %v5930 = vadd.f32 %v5887, %v5929
    %v5931 = vpop.f32.mrb[0].mxu0
    %v5932 = vadd.f32 %v5889, %v5931
    %v5933 = vpop.f32.mrb[0].mxu0
    %v5934 = vadd.f32 %v5891, %v5933
    %v5935 = vpop.f32.mrb[0].mxu0
    %v5936 = vadd.f32 %v5893, %v5935
    %5937 = vdwg.mxu0
    %5938 = vmatprep.subr.bf16.mxu0 %v5299
    %5939 = vmatpush1.bf16.msra.mxu0 %v5298
    %5940 = vmatprep.subr.bf16.mxu0 %v5303
    %5941 = vmatpush1.bf16.msra.mxu0 %v5302
    %5942 = vmatprep.subr.bf16.mxu0 %v5307
    %5943 = vmatpush1.bf16.msra.mxu0 %v5306
    %5944 = vmatprep.subr.bf16.mxu0 %v5311
    %5945 = vmatpush1.bf16.msra.mxu0 %v5310
    %5946 = vmatprep.subr.bf16.mxu0 %v5315
    %5947 = vmatpush1.bf16.msra.mxu0 %v5314
    %5948 = vmatprep.subr.bf16.mxu0 %v5319
    %5949 = vmatpush1.bf16.msra.mxu0 %v5318
    %5950 = vmatprep.subr.bf16.mxu0 %v5323
    %5951 = vmatpush1.bf16.msra.mxu0 %v5322
    %5952 = vmatprep.subr.bf16.mxu0 %v5327
    %5953 = vmatpush1.bf16.msra.mxu0 %v5326
    %5954 = vmatprep.subr.bf16.mxu0 %v5331
    %5955 = vmatpush1.bf16.msra.mxu0 %v5330
    %5956 = vmatprep.subr.bf16.mxu0 %v5335
    %5957 = vmatpush1.bf16.msra.mxu0 %v5334
    %5958 = vmatprep.subr.bf16.mxu0 %v5339
    %5959 = vmatpush1.bf16.msra.mxu0 %v5338
    %5960 = vmatprep.subr.bf16.mxu0 %v5343
    %5961 = vmatpush1.bf16.msra.mxu0 %v5342
    %5962 = vmatprep.subr.bf16.mxu0 %v5347
    %5963 = vmatpush1.bf16.msra.mxu0 %v5346
    %5964 = vmatprep.subr.bf16.mxu0 %v5351
    %5965 = vmatpush1.bf16.msra.mxu0 %v5350
    %5966 = vmatprep.subr.bf16.mxu0 %v5355
    %5967 = vmatpush1.bf16.msra.mxu0 %v5354
    %5968 = vmatprep.subr.bf16.mxu0 %v5359
    %5969 = vmatpush1.bf16.msra.mxu0 %v5358
    %5970 = vmatprep.mubr.bf16.mxu0 %v4376
    %5971 = vmatmul.mubr.bf16.gmra.mrb[0].mxu0 %v4375
    %v5972 = vpop.f32.mrb[0].mxu0
    %v5973 = vadd.f32 %v5930, %v5972
    %v5974 = vpop.f32.mrb[0].mxu0
    %v5975 = vadd.f32 %v5932, %v5974
    %v5976 = vpop.f32.mrb[0].mxu0
    %v5977 = vadd.f32 %v5934, %v5976
    %v5978 = vpop.f32.mrb[0].mxu0
    %v5979 = vadd.f32 %v5936, %v5978
    %5980 = vdwg.mxu0
    %5981 = vmatprep.subr.bf16.mxu0 %v5363
    %5982 = vmatpush1.bf16.msra.mxu0 %v5362
    %5983 = vmatprep.subr.bf16.mxu0 %v5367
    %5984 = vmatpush1.bf16.msra.mxu0 %v5366
    %5985 = vmatprep.subr.bf16.mxu0 %v5371
    %5986 = vmatpush1.bf16.msra.mxu0 %v5370
    %5987 = vmatprep.subr.bf16.mxu0 %v5375
    %5988 = vmatpush1.bf16.msra.mxu0 %v5374
    %5989 = vmatprep.subr.bf16.mxu0 %v5379
    %5990 = vmatpush1.bf16.msra.mxu0 %v5378
    %5991 = vmatprep.subr.bf16.mxu0 %v5383
    %5992 = vmatpush1.bf16.msra.mxu0 %v5382
    %5993 = vmatprep.subr.bf16.mxu0 %v5387
    %5994 = vmatpush1.bf16.msra.mxu0 %v5386
    %5995 = vmatprep.subr.bf16.mxu0 %v5391
    %5996 = vmatpush1.bf16.msra.mxu0 %v5390
    %5997 = vmatprep.subr.bf16.mxu0 %v5395
    %5998 = vmatpush1.bf16.msra.mxu0 %v5394
    %5999 = vmatprep.subr.bf16.mxu0 %v5399
    %6000 = vmatpush1.bf16.msra.mxu0 %v5398
    %6001 = vmatprep.subr.bf16.mxu0 %v5403
    %6002 = vmatpush1.bf16.msra.mxu0 %v5402
    %6003 = vmatprep.subr.bf16.mxu0 %v5407
    %6004 = vmatpush1.bf16.msra.mxu0 %v5406
    %6005 = vmatprep.subr.bf16.mxu0 %v5411
    %6006 = vmatpush1.bf16.msra.mxu0 %v5410
    %6007 = vmatprep.subr.bf16.mxu0 %v5415
    %6008 = vmatpush1.bf16.msra.mxu0 %v5414
    %6009 = vmatprep.subr.bf16.mxu0 %v5419
    %6010 = vmatpush1.bf16.msra.mxu0 %v5418
    %6011 = vmatprep.subr.bf16.mxu0 %v5423
    %6012 = vmatpush1.bf16.msra.mxu0 %v5422
    %6013 = vmatprep.mubr.bf16.mxu0 %v4378
    %6014 = vmatmul.mubr.bf16.gmra.mrb[0].mxu0 %v4377
    %v6015 = vpop.f32.mrb[0].mxu0
    %v6016 = vadd.f32 %v5973, %v6015
    %v6017 = vpop.f32.mrb[0].mxu0
    %v6018 = vadd.f32 %v5975, %v6017
    %v6019 = vpop.f32.mrb[0].mxu0
    %v6020 = vadd.f32 %v5977, %v6019
    %v6021 = vpop.f32.mrb[0].mxu0
    %v6022 = vadd.f32 %v5979, %v6021
    %6023 = vdwg.mxu0
    %v6024 = vmax.f32 %v5844, 0.0
    %v6025 = vmax.f32 %v5846, 0.0
    %v6026 = vmax.f32 %v6016, 0.0
    %v6027 = vmax.f32 %v6018, 0.0
    %v6028 = vmax.f32 %v5848, 0.0
    %v6029 = vmax.f32 %v5850, 0.0
    %v6030 = vmax.f32 %v6020, 0.0
    %v6031 = vmax.f32 %v6022, 0.0
    %v6032 = vld [vmem:[#allocation11] sm:$0xff]
    %v6033 = vld [vmem:[#allocation11 + $0x8] sm:$0xff]
    %v6034 = vld [vmem:[#allocation11 + $0x10] sm:$0xff]
    %v6035 = vld [vmem:[#allocation11 + $0x18] sm:$0xff]
    %v6036 = vld [vmem:[#allocation11 + $0x20] sm:$0xff]
    %v6037 = vld [vmem:[#allocation11 + $0x28] sm:$0xff]
    %v6038 = vld [vmem:[#allocation11 + $0x30] sm:$0xff]
    %v6039 = vld [vmem:[#allocation11 + $0x38] sm:$0xff]
    %v6040 = vld [vmem:[#allocation11 + $0x40] sm:$0xff]
    %v6041 = vld [vmem:[#allocation11 + $0x48] sm:$0xff]
    %v6042 = vld [vmem:[#allocation11 + $0x50] sm:$0xff]
    %v6043 = vld [vmem:[#allocation11 + $0x58] sm:$0xff]
    %v6044 = vld [vmem:[#allocation11 + $0x60] sm:$0xff]
    %v6045 = vld [vmem:[#allocation11 + $0x68] sm:$0xff]
    %v6046 = vld [vmem:[#allocation11 + $0x70] sm:$0xff]
    %v6047 = vld [vmem:[#allocation11 + $0x78] sm:$0xff]
    %v6048 = vld [vmem:[#allocation11 + $0x80] sm:$0xff]
    %v6049 = vld [vmem:[#allocation11 + $0x88] sm:$0xff]
    %v6050 = vld [vmem:[#allocation11 + $0x90] sm:$0xff]
    %v6051 = vld [vmem:[#allocation11 + $0x98] sm:$0xff]
    %v6052 = vld [vmem:[#allocation11 + $0xa0] sm:$0xff]
    %v6053 = vld [vmem:[#allocation11 + $0xa8] sm:$0xff]
    %v6054 = vld [vmem:[#allocation11 + $0xb0] sm:$0xff]
    %v6055 = vld [vmem:[#allocation11 + $0xb8] sm:$0xff]
    %v6056 = vld [vmem:[#allocation11 + $0xc0] sm:$0xff]
    %v6057 = vld [vmem:[#allocation11 + $0xc8] sm:$0xff]
    %v6058 = vld [vmem:[#allocation11 + $0xd0] sm:$0xff]
    %v6059 = vld [vmem:[#allocation11 + $0xd8] sm:$0xff]
    %v6060 = vld [vmem:[#allocation11 + $0xe0] sm:$0xff]
    %v6061 = vld [vmem:[#allocation11 + $0xe8] sm:$0xff]
    %v6062 = vld [vmem:[#allocation11 + $0xf0] sm:$0xff]
    %v6063 = vld [vmem:[#allocation11 + $0xf8] sm:$0xff]
    %v6064 = vld [vmem:[#allocation11 + $0x100] sm:$0xff]
    %v6065 = vld [vmem:[#allocation11 + $0x108] sm:$0xff]
    %v6066 = vld [vmem:[#allocation11 + $0x110] sm:$0xff]
    %v6067 = vld [vmem:[#allocation11 + $0x118] sm:$0xff]
    %v6068 = vld [vmem:[#allocation11 + $0x120] sm:$0xff]
    %v6069 = vld [vmem:[#allocation11 + $0x128] sm:$0xff]
    %v6070 = vld [vmem:[#allocation11 + $0x130] sm:$0xff]
    %v6071 = vld [vmem:[#allocation11 + $0x138] sm:$0xff]
    %v6072 = vld [vmem:[#allocation11 + $0x140] sm:$0xff]
    %v6073 = vld [vmem:[#allocation11 + $0x148] sm:$0xff]
    %v6074 = vld [vmem:[#allocation11 + $0x150] sm:$0xff]
    %v6075 = vld [vmem:[#allocation11 + $0x158] sm:$0xff]
    %v6076 = vld [vmem:[#allocation11 + $0x160] sm:$0xff]
    %v6077 = vld [vmem:[#allocation11 + $0x168] sm:$0xff]
    %v6078 = vld [vmem:[#allocation11 + $0x170] sm:$0xff]
    %v6079 = vld [vmem:[#allocation11 + $0x178] sm:$0xff]
    %v6080 = vld [vmem:[#allocation11 + $0x180] sm:$0xff]
    %v6081 = vld [vmem:[#allocation11 + $0x188] sm:$0xff]
    %v6082 = vld [vmem:[#allocation11 + $0x190] sm:$0xff]
    %v6083 = vld [vmem:[#allocation11 + $0x198] sm:$0xff]
    %v6084 = vld [vmem:[#allocation11 + $0x1a0] sm:$0xff]
    %v6085 = vld [vmem:[#allocation11 + $0x1a8] sm:$0xff]
    %v6086 = vld [vmem:[#allocation11 + $0x1b0] sm:$0xff]
    %v6087 = vld [vmem:[#allocation11 + $0x1b8] sm:$0xff]
    %v6088 = vld [vmem:[#allocation11 + $0x1c0] sm:$0xff]
    %v6089 = vld [vmem:[#allocation11 + $0x1c8] sm:$0xff]
    %v6090 = vld [vmem:[#allocation11 + $0x1d0] sm:$0xff]
    %v6091 = vld [vmem:[#allocation11 + $0x1d8] sm:$0xff]
    %v6092 = vld [vmem:[#allocation11 + $0x1e0] sm:$0xff]
    %v6093 = vld [vmem:[#allocation11 + $0x1e8] sm:$0xff]
    %v6094 = vld [vmem:[#allocation11 + $0x1f0] sm:$0xff]
    %v6095 = vld [vmem:[#allocation11 + $0x1f8] sm:$0xff]
    %v6096 = vld [vmem:[#allocation13] sm:$0x3]
    %v6097 = vpack.c.bf16 %v6028, %v6024
    %v6098 = vpack.c.bf16 %v6029, %v6025
    %v6099 = vpack.c.bf16 %v6030, %v6026
    %v6100 = vpack.c.bf16 %v6031, %v6027
    %v6102 = vlaneseq
    %v6103 = vshrl.u32 %v6102, 7
    %v6104 = vsub.s32 0, %v6103
    %v6105 = vrot.slane %v6096, %v6104
    %v6106 = vlaneseq
    %v6107 = vshrl.u32 %v6106, 7
    %v6108 = vsub.s32 1, %v6107
    %v6109 = vrot.slane %v6096, %v6108
    %v6176 = vunpack.c.l.b16 %v6032
    %v6177 = vunpack.c.h.b16 %v6032
    %v6178 = vunpack.c.l.b16 %v6033
    %v6179 = vunpack.c.h.b16 %v6033
    %v6180 = vunpack.c.l.b16 %v6034
    %v6181 = vunpack.c.h.b16 %v6034
    %v6182 = vunpack.c.l.b16 %v6035
    %v6183 = vunpack.c.h.b16 %v6035
    %v6184 = vunpack.c.l.b16 %v6036
    %v6185 = vunpack.c.h.b16 %v6036
    %v6186 = vunpack.c.l.b16 %v6037
    %v6187 = vunpack.c.h.b16 %v6037
    %v6188 = vunpack.c.l.b16 %v6038
    %v6189 = vunpack.c.h.b16 %v6038
    %v6190 = vunpack.c.l.b16 %v6039
    %v6191 = vunpack.c.h.b16 %v6039
    %v6192 = vunpack.c.l.b16 %v6040
    %v6193 = vunpack.c.h.b16 %v6040
    %v6194 = vunpack.c.l.b16 %v6041
    %v6195 = vunpack.c.h.b16 %v6041
    %v6196 = vunpack.c.l.b16 %v6042
    %v6197 = vunpack.c.h.b16 %v6042
    %v6198 = vunpack.c.l.b16 %v6043
    %v6199 = vunpack.c.h.b16 %v6043
    %v6200 = vunpack.c.l.b16 %v6044
    %v6201 = vunpack.c.h.b16 %v6044
    %v6202 = vunpack.c.l.b16 %v6045
    %v6203 = vunpack.c.h.b16 %v6045
    %v6204 = vunpack.c.l.b16 %v6046
    %v6205 = vunpack.c.h.b16 %v6046
    %v6206 = vunpack.c.l.b16 %v6047
    %v6207 = vunpack.c.h.b16 %v6047
    %v6208 = vunpack.c.l.b16 %v6048
    %v6209 = vunpack.c.h.b16 %v6048
    %v6210 = vunpack.c.l.b16 %v6049
    %v6211 = vunpack.c.h.b16 %v6049
    %v6212 = vunpack.c.l.b16 %v6050
    %v6213 = vunpack.c.h.b16 %v6050
    %v6214 = vunpack.c.l.b16 %v6051
    %v6215 = vunpack.c.h.b16 %v6051
    %v6216 = vunpack.c.l.b16 %v6052
    %v6217 = vunpack.c.h.b16 %v6052
    %v6218 = vunpack.c.l.b16 %v6053
    %v6219 = vunpack.c.h.b16 %v6053
    %v6220 = vunpack.c.l.b16 %v6054
    %v6221 = vunpack.c.h.b16 %v6054
    %v6222 = vunpack.c.l.b16 %v6055
    %v6223 = vunpack.c.h.b16 %v6055
    %v6224 = vunpack.c.l.b16 %v6056
    %v6225 = vunpack.c.h.b16 %v6056
    %v6226 = vunpack.c.l.b16 %v6057
    %v6227 = vunpack.c.h.b16 %v6057
    %v6228 = vunpack.c.l.b16 %v6058
    %v6229 = vunpack.c.h.b16 %v6058
    %v6230 = vunpack.c.l.b16 %v6059
    %v6231 = vunpack.c.h.b16 %v6059
    %v6232 = vunpack.c.l.b16 %v6060
    %v6233 = vunpack.c.h.b16 %v6060
    %v6234 = vunpack.c.l.b16 %v6061
    %v6235 = vunpack.c.h.b16 %v6061
    %v6236 = vunpack.c.l.b16 %v6062
    %v6237 = vunpack.c.h.b16 %v6062
    %v6238 = vunpack.c.l.b16 %v6063
    %v6239 = vunpack.c.h.b16 %v6063
    %v6240 = vunpack.c.l.b16 %v6064
    %v6241 = vunpack.c.h.b16 %v6064
    %v6242 = vunpack.c.l.b16 %v6065
    %v6243 = vunpack.c.h.b16 %v6065
    %v6244 = vunpack.c.l.b16 %v6066
    %v6245 = vunpack.c.h.b16 %v6066
    %v6246 = vunpack.c.l.b16 %v6067
    %v6247 = vunpack.c.h.b16 %v6067
    %v6248 = vunpack.c.l.b16 %v6068
    %v6249 = vunpack.c.h.b16 %v6068
    %v6250 = vunpack.c.l.b16 %v6069
    %v6251 = vunpack.c.h.b16 %v6069
    %v6252 = vunpack.c.l.b16 %v6070
    %v6253 = vunpack.c.h.b16 %v6070
    %v6254 = vunpack.c.l.b16 %v6071
    %v6255 = vunpack.c.h.b16 %v6071
    %v6256 = vunpack.c.l.b16 %v6072
    %v6257 = vunpack.c.h.b16 %v6072
    %v6258 = vunpack.c.l.b16 %v6073
    %v6259 = vunpack.c.h.b16 %v6073
    %v6260 = vunpack.c.l.b16 %v6074
    %v6261 = vunpack.c.h.b16 %v6074
    %v6262 = vunpack.c.l.b16 %v6075
    %v6263 = vunpack.c.h.b16 %v6075
    %v6264 = vunpack.c.l.b16 %v6076
    %v6265 = vunpack.c.h.b16 %v6076
    %v6266 = vunpack.c.l.b16 %v6077
    %v6267 = vunpack.c.h.b16 %v6077
    %v6268 = vunpack.c.l.b16 %v6078
    %v6269 = vunpack.c.h.b16 %v6078
    %v6270 = vunpack.c.l.b16 %v6079
    %v6271 = vunpack.c.h.b16 %v6079
    %v6272 = vunpack.c.l.b16 %v6080
    %v6273 = vunpack.c.h.b16 %v6080
    %v6274 = vunpack.c.l.b16 %v6081
    %v6275 = vunpack.c.h.b16 %v6081
    %v6276 = vunpack.c.l.b16 %v6082
    %v6277 = vunpack.c.h.b16 %v6082
    %v6278 = vunpack.c.l.b16 %v6083
    %v6279 = vunpack.c.h.b16 %v6083
    %v6280 = vunpack.c.l.b16 %v6084
    %v6281 = vunpack.c.h.b16 %v6084
    %v6282 = vunpack.c.l.b16 %v6085
    %v6283 = vunpack.c.h.b16 %v6085
    %v6284 = vunpack.c.l.b16 %v6086
    %v6285 = vunpack.c.h.b16 %v6086
    %v6286 = vunpack.c.l.b16 %v6087
    %v6287 = vunpack.c.h.b16 %v6087
    %v6288 = vunpack.c.l.b16 %v6088
    %v6289 = vunpack.c.h.b16 %v6088
    %v6290 = vunpack.c.l.b16 %v6089
    %v6291 = vunpack.c.h.b16 %v6089
    %v6292 = vunpack.c.l.b16 %v6090
    %v6293 = vunpack.c.h.b16 %v6090
    %v6294 = vunpack.c.l.b16 %v6091
    %v6295 = vunpack.c.h.b16 %v6091
    %v6296 = vunpack.c.l.b16 %v6092
    %v6297 = vunpack.c.h.b16 %v6092
    %v6298 = vunpack.c.l.b16 %v6093
    %v6299 = vunpack.c.h.b16 %v6093
    %v6300 = vunpack.c.l.b16 %v6094
    %v6301 = vunpack.c.h.b16 %v6094
    %v6302 = vunpack.c.l.b16 %v6095
    %v6303 = vunpack.c.h.b16 %v6095
    %v6304 = vpack.c.b16 %v6178, %v6176
    %v6305 = vpack.c.b16 %v6179, %v6177
    %v6306 = vpack.c.b16 %v6182, %v6180
    %v6307 = vpack.c.b16 %v6183, %v6181
    %v6308 = vpack.c.b16 %v6186, %v6184
    %v6309 = vpack.c.b16 %v6187, %v6185
    %v6310 = vpack.c.b16 %v6190, %v6188
    %v6311 = vpack.c.b16 %v6191, %v6189
    %v6312 = vpack.c.b16 %v6194, %v6192
    %v6313 = vpack.c.b16 %v6195, %v6193
    %v6314 = vpack.c.b16 %v6198, %v6196
    %v6315 = vpack.c.b16 %v6199, %v6197
    %v6316 = vpack.c.b16 %v6202, %v6200
    %v6317 = vpack.c.b16 %v6203, %v6201
    %v6318 = vpack.c.b16 %v6206, %v6204
    %v6319 = vpack.c.b16 %v6207, %v6205
    %v6320 = vpack.c.b16 %v6210, %v6208
    %v6321 = vpack.c.b16 %v6211, %v6209
    %v6322 = vpack.c.b16 %v6214, %v6212
    %v6323 = vpack.c.b16 %v6215, %v6213
    %v6324 = vpack.c.b16 %v6218, %v6216
    %v6325 = vpack.c.b16 %v6219, %v6217
    %v6326 = vpack.c.b16 %v6222, %v6220
    %v6327 = vpack.c.b16 %v6223, %v6221
    %v6328 = vpack.c.b16 %v6226, %v6224
    %v6329 = vpack.c.b16 %v6227, %v6225
    %v6330 = vpack.c.b16 %v6230, %v6228
    %v6331 = vpack.c.b16 %v6231, %v6229
    %v6332 = vpack.c.b16 %v6234, %v6232
    %v6333 = vpack.c.b16 %v6235, %v6233
    %v6334 = vpack.c.b16 %v6238, %v6236
    %v6335 = vpack.c.b16 %v6239, %v6237
    %v6336 = vpack.c.b16 %v6242, %v6240
    %v6337 = vpack.c.b16 %v6243, %v6241
    %v6338 = vpack.c.b16 %v6246, %v6244
    %v6339 = vpack.c.b16 %v6247, %v6245
    %v6340 = vpack.c.b16 %v6250, %v6248
    %v6341 = vpack.c.b16 %v6251, %v6249
    %v6342 = vpack.c.b16 %v6254, %v6252
    %v6343 = vpack.c.b16 %v6255, %v6253
    %v6344 = vpack.c.b16 %v6258, %v6256
    %v6345 = vpack.c.b16 %v6259, %v6257
    %v6346 = vpack.c.b16 %v6262, %v6260
    %v6347 = vpack.c.b16 %v6263, %v6261
    %v6348 = vpack.c.b16 %v6266, %v6264
    %v6349 = vpack.c.b16 %v6267, %v6265
    %v6350 = vpack.c.b16 %v6270, %v6268
    %v6351 = vpack.c.b16 %v6271, %v6269
    %v6352 = vpack.c.b16 %v6274, %v6272
    %v6353 = vpack.c.b16 %v6275, %v6273
    %v6354 = vpack.c.b16 %v6278, %v6276
    %v6355 = vpack.c.b16 %v6279, %v6277
    %v6356 = vpack.c.b16 %v6282, %v6280
    %v6357 = vpack.c.b16 %v6283, %v6281
    %v6358 = vpack.c.b16 %v6286, %v6284
    %v6359 = vpack.c.b16 %v6287, %v6285
    %v6360 = vpack.c.b16 %v6290, %v6288
    %v6361 = vpack.c.b16 %v6291, %v6289
    %v6362 = vpack.c.b16 %v6294, %v6292
    %v6363 = vpack.c.b16 %v6295, %v6293
    %v6364 = vpack.c.b16 %v6298, %v6296
    %v6365 = vpack.c.b16 %v6299, %v6297
    %v6366 = vpack.c.b16 %v6302, %v6300
    %v6367 = vpack.c.b16 %v6303, %v6301
    %6432 = vmatprep.subr.bf16.mxu0 %v6305
    %6433 = vmatpush1.bf16.msra.mxu0 %v6304
    %6434 = vmatprep.subr.bf16.mxu0 %v6307
    %6435 = vmatpush1.bf16.msra.mxu0 %v6306
    %6436 = vmatprep.subr.bf16.mxu0 %v6309
    %6437 = vmatpush1.bf16.msra.mxu0 %v6308
    %6438 = vmatprep.subr.bf16.mxu0 %v6311
    %6439 = vmatpush1.bf16.msra.mxu0 %v6310
    %6440 = vmatprep.subr.bf16.mxu0 %v6313
    %6441 = vmatpush1.bf16.msra.mxu0 %v6312
    %6442 = vmatprep.subr.bf16.mxu0 %v6315
    %6443 = vmatpush1.bf16.msra.mxu0 %v6314
    %6444 = vmatprep.subr.bf16.mxu0 %v6317
    %6445 = vmatpush1.bf16.msra.mxu0 %v6316
    %6446 = vmatprep.subr.bf16.mxu0 %v6319
    %6447 = vmatpush1.bf16.msra.mxu0 %v6318
    %6448 = vmatprep.subr.bf16.mxu0 %v6321
    %6449 = vmatpush1.bf16.msra.mxu0 %v6320
    %6450 = vmatprep.subr.bf16.mxu0 %v6323
    %6451 = vmatpush1.bf16.msra.mxu0 %v6322
    %6452 = vmatprep.subr.bf16.mxu0 %v6325
    %6453 = vmatpush1.bf16.msra.mxu0 %v6324
    %6454 = vmatprep.subr.bf16.mxu0 %v6327
    %6455 = vmatpush1.bf16.msra.mxu0 %v6326
    %6456 = vmatprep.subr.bf16.mxu0 %v6329
    %6457 = vmatpush1.bf16.msra.mxu0 %v6328
    %6458 = vmatprep.subr.bf16.mxu0 %v6331
    %6459 = vmatpush1.bf16.msra.mxu0 %v6330
    %6460 = vmatprep.subr.bf16.mxu0 %v6333
    %6461 = vmatpush1.bf16.msra.mxu0 %v6332
    %6462 = vmatprep.subr.bf16.mxu0 %v6335
    %6463 = vmatpush1.bf16.msra.mxu0 %v6334
    %6464 = vmatprep.mubr.bf16.mxu0 %v6098
    %6465 = vmatmul.mubr.bf16.gmra.mrb[0].mxu0 %v6097
    %v6466 = vpop.f32.mrb[0].mxu0
    %v6467 = vadd.f32 %v6105, %v6466
    %v6468 = vpop.f32.mrb[0].mxu0
    %v6469 = vadd.f32 %v6109, %v6468
    %v6470 = vpop.f32.mrb[0].mxu0
    %v6471 = vadd.f32 %v6105, %v6470
    %v6472 = vpop.f32.mrb[0].mxu0
    %v6473 = vadd.f32 %v6109, %v6472
    %6474 = vdwg.mxu0
    %6475 = vmatprep.subr.bf16.mxu0 %v6337
    %6476 = vmatpush1.bf16.msra.mxu0 %v6336
    %6477 = vmatprep.subr.bf16.mxu0 %v6339
    %6478 = vmatpush1.bf16.msra.mxu0 %v6338
    %6479 = vmatprep.subr.bf16.mxu0 %v6341
    %6480 = vmatpush1.bf16.msra.mxu0 %v6340
    %6481 = vmatprep.subr.bf16.mxu0 %v6343
    %6482 = vmatpush1.bf16.msra.mxu0 %v6342
    %6483 = vmatprep.subr.bf16.mxu0 %v6345
    %6484 = vmatpush1.bf16.msra.mxu0 %v6344
    %6485 = vmatprep.subr.bf16.mxu0 %v6347
    %6486 = vmatpush1.bf16.msra.mxu0 %v6346
    %6487 = vmatprep.subr.bf16.mxu0 %v6349
    %6488 = vmatpush1.bf16.msra.mxu0 %v6348
    %6489 = vmatprep.subr.bf16.mxu0 %v6351
    %6490 = vmatpush1.bf16.msra.mxu0 %v6350
    %6491 = vmatprep.subr.bf16.mxu0 %v6353
    %6492 = vmatpush1.bf16.msra.mxu0 %v6352
    %6493 = vmatprep.subr.bf16.mxu0 %v6355
    %6494 = vmatpush1.bf16.msra.mxu0 %v6354
    %6495 = vmatprep.subr.bf16.mxu0 %v6357
    %6496 = vmatpush1.bf16.msra.mxu0 %v6356
    %6497 = vmatprep.subr.bf16.mxu0 %v6359
    %6498 = vmatpush1.bf16.msra.mxu0 %v6358
    %6499 = vmatprep.subr.bf16.mxu0 %v6361
    %6500 = vmatpush1.bf16.msra.mxu0 %v6360
    %6501 = vmatprep.subr.bf16.mxu0 %v6363
    %6502 = vmatpush1.bf16.msra.mxu0 %v6362
    %6503 = vmatprep.subr.bf16.mxu0 %v6365
    %6504 = vmatpush1.bf16.msra.mxu0 %v6364
    %6505 = vmatprep.subr.bf16.mxu0 %v6367
    %6506 = vmatpush1.bf16.msra.mxu0 %v6366
    %6507 = vmatprep.mubr.bf16.mxu0 %v6100
    %6508 = vmatmul.mubr.bf16.gmra.mrb[0].mxu0 %v6099
    %v6509 = vpop.f32.mrb[0].mxu0
    %v6510 = vadd.f32 %v6467, %v6509
    %v6511 = vpop.f32.mrb[0].mxu0
    %v6512 = vadd.f32 %v6469, %v6511
    %v6513 = vpop.f32.mrb[0].mxu0
    %v6514 = vadd.f32 %v6471, %v6513
    %v6515 = vpop.f32.mrb[0].mxu0
    %v6516 = vadd.f32 %v6473, %v6515
    %6517 = vdwg.mxu0
    %v6518 = vmax.f32 %v6510, 0.0
    %v6519 = vmax.f32 %v6512, 0.0
    %v6520 = vmax.f32 %v6514, 0.0
    %v6521 = vmax.f32 %v6516, 0.0
    %v6522 = vld [vmem:[#allocation14] sm:$0xf]
    %v6523 = vld [vmem:[#allocation14 + $0x4] sm:$0xf]
    %v6524 = vld [vmem:[#allocation14 + $0x8] sm:$0xf]
    %v6525 = vld [vmem:[#allocation14 + $0xc] sm:$0xf]
    %v6526 = vld [vmem:[#allocation14 + $0x10] sm:$0xf]
    %v6527 = vld [vmem:[#allocation14 + $0x14] sm:$0xf]
    %v6528 = vld [vmem:[#allocation14 + $0x18] sm:$0xf]
    %v6529 = vld [vmem:[#allocation14 + $0x1c] sm:$0xf]
    %v6530 = vld [vmem:[#allocation14 + $0x20] sm:$0xf]
    %v6531 = vld [vmem:[#allocation14 + $0x24] sm:$0xf]
    %v6532 = vld [vmem:[#allocation14 + $0x28] sm:$0xf]
    %v6533 = vld [vmem:[#allocation14 + $0x2c] sm:$0xf]
    %v6534 = vld [vmem:[#allocation14 + $0x30] sm:$0xf]
    %v6535 = vld [vmem:[#allocation14 + $0x34] sm:$0xf]
    %v6536 = vld [vmem:[#allocation14 + $0x38] sm:$0xf]
    %v6537 = vld [vmem:[#allocation14 + $0x3c] sm:$0xf]
    %v6538 = vld [vmem:[#allocation14 + $0x40] sm:$0xf]
    %v6539 = vld [vmem:[#allocation14 + $0x44] sm:$0xf]
    %v6540 = vld [vmem:[#allocation14 + $0x48] sm:$0xf]
    %v6541 = vld [vmem:[#allocation14 + $0x4c] sm:$0xf]
    %v6542 = vld [vmem:[#allocation14 + $0x50] sm:$0xf]
    %v6543 = vld [vmem:[#allocation14 + $0x54] sm:$0xf]
    %v6544 = vld [vmem:[#allocation14 + $0x58] sm:$0xf]
    %v6545 = vld [vmem:[#allocation14 + $0x5c] sm:$0xf]
    %v6546 = vld [vmem:[#allocation14 + $0x60] sm:$0xf]
    %v6547 = vld [vmem:[#allocation14 + $0x64] sm:$0xf]
    %v6548 = vld [vmem:[#allocation14 + $0x68] sm:$0xf]
    %v6549 = vld [vmem:[#allocation14 + $0x6c] sm:$0xf]
    %v6550 = vld [vmem:[#allocation14 + $0x70] sm:$0xf]
    %v6551 = vld [vmem:[#allocation14 + $0x74] sm:$0xf]
    %v6552 = vld [vmem:[#allocation14 + $0x78] sm:$0xf]
    %v6553 = vld [vmem:[#allocation14 + $0x7c] sm:$0xf]
    %v6554 = vld [vmem:[#allocation16] sm:$0x1]
    %v6555 = vpack.c.bf16 %v6520, %v6518
    %v6556 = vpack.c.bf16 %v6521, %v6519
    %v6558 = vlaneseq
    %v6559 = vshrl.u32 %v6558, 7
    %v6560 = vsub.s32 0, %v6559
    %v6561 = vrot.slane %v6554, %v6560
    %v6595 = vunpack.c.l.b16 %v6522
    %v6596 = vunpack.c.l.b16 %v6523
    %v6597 = vunpack.c.l.b16 %v6524
    %v6598 = vunpack.c.l.b16 %v6525
    %v6599 = vunpack.c.l.b16 %v6526
    %v6600 = vunpack.c.l.b16 %v6527
    %v6601 = vunpack.c.l.b16 %v6528
    %v6602 = vunpack.c.l.b16 %v6529
    %v6603 = vunpack.c.l.b16 %v6530
    %v6604 = vunpack.c.l.b16 %v6531
    %v6605 = vunpack.c.l.b16 %v6532
    %v6606 = vunpack.c.l.b16 %v6533
    %v6607 = vunpack.c.l.b16 %v6534
    %v6608 = vunpack.c.l.b16 %v6535
    %v6609 = vunpack.c.l.b16 %v6536
    %v6610 = vunpack.c.l.b16 %v6537
    %v6611 = vunpack.c.l.b16 %v6538
    %v6612 = vunpack.c.l.b16 %v6539
    %v6613 = vunpack.c.l.b16 %v6540
    %v6614 = vunpack.c.l.b16 %v6541
    %v6615 = vunpack.c.l.b16 %v6542
    %v6616 = vunpack.c.l.b16 %v6543
    %v6617 = vunpack.c.l.b16 %v6544
    %v6618 = vunpack.c.l.b16 %v6545
    %v6619 = vunpack.c.l.b16 %v6546
    %v6620 = vunpack.c.l.b16 %v6547
    %v6621 = vunpack.c.l.b16 %v6548
    %v6622 = vunpack.c.l.b16 %v6549
    %v6623 = vunpack.c.l.b16 %v6550
    %v6624 = vunpack.c.l.b16 %v6551
    %v6625 = vunpack.c.l.b16 %v6552
    %v6626 = vunpack.c.l.b16 %v6553
    %v6627 = vpack.c.b16 %v6596, %v6595
    %v6628 = vpack.c.b16 %v6598, %v6597
    %v6629 = vpack.c.b16 %v6600, %v6599
    %v6630 = vpack.c.b16 %v6602, %v6601
    %v6631 = vpack.c.b16 %v6604, %v6603
    %v6632 = vpack.c.b16 %v6606, %v6605
    %v6633 = vpack.c.b16 %v6608, %v6607
    %v6634 = vpack.c.b16 %v6610, %v6609
    %v6635 = vpack.c.b16 %v6612, %v6611
    %v6636 = vpack.c.b16 %v6614, %v6613
    %v6637 = vpack.c.b16 %v6616, %v6615
    %v6638 = vpack.c.b16 %v6618, %v6617
    %v6639 = vpack.c.b16 %v6620, %v6619
    %v6640 = vpack.c.b16 %v6622, %v6621
    %v6641 = vpack.c.b16 %v6624, %v6623
    %v6642 = vpack.c.b16 %v6626, %v6625
    %6659 = vmatprep.subr.bf16.mxu0 0
    %6660 = vmatpush1.bf16.msra.mxu0 %v6627
    %6661 = vmatprep.subr.bf16.mxu0 0
    %6662 = vmatpush1.bf16.msra.mxu0 %v6628
    %6663 = vmatprep.subr.bf16.mxu0 0
    %6664 = vmatpush1.bf16.msra.mxu0 %v6629
    %6665 = vmatprep.subr.bf16.mxu0 0
    %6666 = vmatpush1.bf16.msra.mxu0 %v6630
    %6667 = vmatprep.subr.bf16.mxu0 0
    %6668 = vmatpush1.bf16.msra.mxu0 %v6631
    %6669 = vmatprep.subr.bf16.mxu0 0
    %6670 = vmatpush1.bf16.msra.mxu0 %v6632
    %6671 = vmatprep.subr.bf16.mxu0 0
    %6672 = vmatpush1.bf16.msra.mxu0 %v6633
    %6673 = vmatprep.subr.bf16.mxu0 0
    %6674 = vmatpush1.bf16.msra.mxu0 %v6634
    %6675 = vmatprep.subr.bf16.mxu0 0
    %6676 = vmatpush1.bf16.msra.mxu0 %v6635
    %6677 = vmatprep.subr.bf16.mxu0 0
    %6678 = vmatpush1.bf16.msra.mxu0 %v6636
    %6679 = vmatprep.subr.bf16.mxu0 0
    %6680 = vmatpush1.bf16.msra.mxu0 %v6637
    %6681 = vmatprep.subr.bf16.mxu0 0
    %6682 = vmatpush1.bf16.msra.mxu0 %v6638
    %6683 = vmatprep.subr.bf16.mxu0 0
    %6684 = vmatpush1.bf16.msra.mxu0 %v6639
    %6685 = vmatprep.subr.bf16.mxu0 0
    %6686 = vmatpush1.bf16.msra.mxu0 %v6640
    %6687 = vmatprep.subr.bf16.mxu0 0
    %6688 = vmatpush1.bf16.msra.mxu0 %v6641
    %6689 = vmatprep.subr.bf16.mxu0 0
    %6690 = vmatpush1.bf16.msra.mxu0 %v6642
    %6691 = vmatprep.mubr.bf16.mxu0 %v6556
    %6692 = vmatmul.mubr.bf16.gmra.mrb[0].mxu0 %v6555
    %v6693 = vpop.f32.mrb[0].mxu0
    %v6694 = vadd.f32 %v6561, %v6693
    %v6695 = vpop.f32.mrb[0].mxu0
    %v6696 = vpop.f32.mrb[0].mxu0
    %v6697 = vadd.f32 %v6561, %v6696
    %v6698 = vpop.f32.mrb[0].mxu0
    %6699 = vdwg.mxu0
    %v6700 = vld [vmem:[#allocation17] sm:$0xff]
    %v6701 = vld [vmem:[#allocation17 + $0x8] sm:$0xff]
    %v6702 = vld [vmem:[#allocation17 + $0x10] sm:$0xff]
    %v6703 = vld [vmem:[#allocation17 + $0x18] sm:$0xff]
    %v6704 = vld [vmem:[#allocation17 + $0x20] sm:$0xff]
    %v6705 = vld [vmem:[#allocation17 + $0x28] sm:$0xff]
    %v6706 = vld [vmem:[#allocation17 + $0x30] sm:$0xff]
    %v6707 = vld [vmem:[#allocation17 + $0x38] sm:$0xff]
    %v6708 = vld [vmem:[#allocation17 + $0x40] sm:$0xff]
    %v6709 = vld [vmem:[#allocation17 + $0x48] sm:$0xff]
    %v6710 = vld [vmem:[#allocation17 + $0x50] sm:$0xff]
    %v6711 = vld [vmem:[#allocation17 + $0x58] sm:$0xff]
    %v6712 = vld [vmem:[#allocation17 + $0x60] sm:$0xff]
    %v6713 = vld [vmem:[#allocation17 + $0x68] sm:$0xff]
    %v6714 = vld [vmem:[#allocation17 + $0x70] sm:$0xff]
    %v6715 = vld [vmem:[#allocation17 + $0x78] sm:$0xff]
    %v6716 = vld [vmem:[#allocation19] sm:$0x3]
    %v6717 = vpack.c.bf16 %v6697, %v6694
    %v6719 = vlaneseq
    %v6720 = vshrl.u32 %v6719, 7
    %v6721 = vsub.s32 0, %v6720
    %v6722 = vrot.slane %v6716, %v6721
    %v6723 = vlaneseq
    %v6724 = vshrl.u32 %v6723, 7
    %v6725 = vsub.s32 1, %v6724
    %v6726 = vrot.slane %v6716, %v6725
    %v6745 = vunpack.c.l.b16 %v6700
    %v6746 = vunpack.c.h.b16 %v6700
    %v6747 = vunpack.c.l.b16 %v6701
    %v6748 = vunpack.c.h.b16 %v6701
    %v6749 = vunpack.c.l.b16 %v6702
    %v6750 = vunpack.c.h.b16 %v6702
    %v6751 = vunpack.c.l.b16 %v6703
    %v6752 = vunpack.c.h.b16 %v6703
    %v6753 = vunpack.c.l.b16 %v6704
    %v6754 = vunpack.c.h.b16 %v6704
    %v6755 = vunpack.c.l.b16 %v6705
    %v6756 = vunpack.c.h.b16 %v6705
    %v6757 = vunpack.c.l.b16 %v6706
    %v6758 = vunpack.c.h.b16 %v6706
    %v6759 = vunpack.c.l.b16 %v6707
    %v6760 = vunpack.c.h.b16 %v6707
    %v6761 = vunpack.c.l.b16 %v6708
    %v6762 = vunpack.c.h.b16 %v6708
    %v6763 = vunpack.c.l.b16 %v6709
    %v6764 = vunpack.c.h.b16 %v6709
    %v6765 = vunpack.c.l.b16 %v6710
    %v6766 = vunpack.c.h.b16 %v6710
    %v6767 = vunpack.c.l.b16 %v6711
    %v6768 = vunpack.c.h.b16 %v6711
    %v6769 = vunpack.c.l.b16 %v6712
    %v6770 = vunpack.c.h.b16 %v6712
    %v6771 = vunpack.c.l.b16 %v6713
    %v6772 = vunpack.c.h.b16 %v6713
    %v6773 = vunpack.c.l.b16 %v6714
    %v6774 = vunpack.c.h.b16 %v6714
    %v6775 = vunpack.c.l.b16 %v6715
    %v6776 = vunpack.c.h.b16 %v6715
    %v6777 = vpack.c.b16 %v6747, %v6745
    %v6778 = vpack.c.b16 %v6748, %v6746
    %v6779 = vpack.c.b16 %v6751, %v6749
    %v6780 = vpack.c.b16 %v6752, %v6750
    %v6781 = vpack.c.b16 %v6755, %v6753
    %v6782 = vpack.c.b16 %v6756, %v6754
    %v6783 = vpack.c.b16 %v6759, %v6757
    %v6784 = vpack.c.b16 %v6760, %v6758
    %v6785 = vpack.c.b16 %v6763, %v6761
    %v6786 = vpack.c.b16 %v6764, %v6762
    %v6787 = vpack.c.b16 %v6767, %v6765
    %v6788 = vpack.c.b16 %v6768, %v6766
    %v6789 = vpack.c.b16 %v6771, %v6769
    %v6790 = vpack.c.b16 %v6772, %v6770
    %v6791 = vpack.c.b16 %v6775, %v6773
    %v6792 = vpack.c.b16 %v6776, %v6774
    %6809 = vmatprep.subr.bf16.mxu0 %v6778
    %6810 = vmatpush1.bf16.msra.mxu0 %v6777
    %6811 = vmatprep.subr.bf16.mxu0 %v6780
    %6812 = vmatpush1.bf16.msra.mxu0 %v6779
    %6813 = vmatprep.subr.bf16.mxu0 %v6782
    %6814 = vmatpush1.bf16.msra.mxu0 %v6781
    %6815 = vmatprep.subr.bf16.mxu0 %v6784
    %6816 = vmatpush1.bf16.msra.mxu0 %v6783
    %6817 = vmatprep.subr.bf16.mxu0 %v6786
    %6818 = vmatpush1.bf16.msra.mxu0 %v6785
    %6819 = vmatprep.subr.bf16.mxu0 %v6788
    %6820 = vmatpush1.bf16.msra.mxu0 %v6787
    %6821 = vmatprep.subr.bf16.mxu0 %v6790
    %6822 = vmatpush1.bf16.msra.mxu0 %v6789
    %6823 = vmatprep.subr.bf16.mxu0 %v6792
    %6824 = vmatpush1.bf16.msra.mxu0 %v6791
    %6825 = vmatprep.subr.bf16.mxu0 0
    %6826 = vmatpush1.bf16.msra.mxu0 0
    %6827 = vmatprep.subr.bf16.mxu0 0
    %6828 = vmatpush1.bf16.msra.mxu0 0
    %6829 = vmatprep.subr.bf16.mxu0 0
    %6830 = vmatpush1.bf16.msra.mxu0 0
    %6831 = vmatprep.subr.bf16.mxu0 0
    %6832 = vmatpush1.bf16.msra.mxu0 0
    %6833 = vmatprep.subr.bf16.mxu0 0
    %6834 = vmatpush1.bf16.msra.mxu0 0
    %6835 = vmatprep.subr.bf16.mxu0 0
    %6836 = vmatpush1.bf16.msra.mxu0 0
    %6837 = vmatprep.subr.bf16.mxu0 0
    %6838 = vmatpush1.bf16.msra.mxu0 0
    %6839 = vmatprep.subr.bf16.mxu0 0
    %6840 = vmatpush1.bf16.msra.mxu0 0
    %6841 = vmatprep.mubr.bf16.mxu0 0
    %6842 = vmatmul.mubr.bf16.gmra.mrb[0].mxu0 %v6717
    %v6843 = vpop.f32.mrb[0].mxu0
    %v6844 = vadd.f32 %v6722, %v6843
    %v6845 = vpop.f32.mrb[0].mxu0
    %v6846 = vadd.f32 %v6726, %v6845
    %v6847 = vpop.f32.mrb[0].mxu0
    %v6848 = vadd.f32 %v6722, %v6847
    %v6849 = vpop.f32.mrb[0].mxu0
    %v6850 = vadd.f32 %v6726, %v6849
    %6851 = vdwg.mxu0
    %v6852 = vmax.f32 %v6844, 0.0
    %v6853 = vmax.f32 %v6846, 0.0
    %v6854 = vmax.f32 %v6848, 0.0
    %v6855 = vmax.f32 %v6850, 0.0
    %v6856 = vld [vmem:[#allocation20] sm:$0xff]
    %v6857 = vld [vmem:[#allocation20 + $0x8] sm:$0xff]
    %v6858 = vld [vmem:[#allocation20 + $0x10] sm:$0xff]
    %v6859 = vld [vmem:[#allocation20 + $0x18] sm:$0xff]
    %v6860 = vld [vmem:[#allocation20 + $0x20] sm:$0xff]
    %v6861 = vld [vmem:[#allocation20 + $0x28] sm:$0xff]
    %v6862 = vld [vmem:[#allocation20 + $0x30] sm:$0xff]
    %v6863 = vld [vmem:[#allocation20 + $0x38] sm:$0xff]
    %v6864 = vld [vmem:[#allocation20 + $0x40] sm:$0xff]
    %v6865 = vld [vmem:[#allocation20 + $0x48] sm:$0xff]
    %v6866 = vld [vmem:[#allocation20 + $0x50] sm:$0xff]
    %v6867 = vld [vmem:[#allocation20 + $0x58] sm:$0xff]
    %v6868 = vld [vmem:[#allocation20 + $0x60] sm:$0xff]
    %v6869 = vld [vmem:[#allocation20 + $0x68] sm:$0xff]
    %v6870 = vld [vmem:[#allocation20 + $0x70] sm:$0xff]
    %v6871 = vld [vmem:[#allocation20 + $0x78] sm:$0xff]
    %v6872 = vld [vmem:[#allocation20 + $0x80] sm:$0xff]
    %v6873 = vld [vmem:[#allocation20 + $0x88] sm:$0xff]
    %v6874 = vld [vmem:[#allocation20 + $0x90] sm:$0xff]
    %v6875 = vld [vmem:[#allocation20 + $0x98] sm:$0xff]
    %v6876 = vld [vmem:[#allocation20 + $0xa0] sm:$0xff]
    %v6877 = vld [vmem:[#allocation20 + $0xa8] sm:$0xff]
    %v6878 = vld [vmem:[#allocation20 + $0xb0] sm:$0xff]
    %v6879 = vld [vmem:[#allocation20 + $0xb8] sm:$0xff]
    %v6880 = vld [vmem:[#allocation20 + $0xc0] sm:$0xff]
    %v6881 = vld [vmem:[#allocation20 + $0xc8] sm:$0xff]
    %v6882 = vld [vmem:[#allocation20 + $0xd0] sm:$0xff]
    %v6883 = vld [vmem:[#allocation20 + $0xd8] sm:$0xff]
    %v6884 = vld [vmem:[#allocation20 + $0xe0] sm:$0xff]
    %v6885 = vld [vmem:[#allocation20 + $0xe8] sm:$0xff]
    %v6886 = vld [vmem:[#allocation20 + $0xf0] sm:$0xff]
    %v6887 = vld [vmem:[#allocation20 + $0xf8] sm:$0xff]
    %v6888 = vld [vmem:[#allocation20 + $0x100] sm:$0xff]
    %v6889 = vld [vmem:[#allocation20 + $0x108] sm:$0xff]
    %v6890 = vld [vmem:[#allocation20 + $0x110] sm:$0xff]
    %v6891 = vld [vmem:[#allocation20 + $0x118] sm:$0xff]
    %v6892 = vld [vmem:[#allocation20 + $0x120] sm:$0xff]
    %v6893 = vld [vmem:[#allocation20 + $0x128] sm:$0xff]
    %v6894 = vld [vmem:[#allocation20 + $0x130] sm:$0xff]
    %v6895 = vld [vmem:[#allocation20 + $0x138] sm:$0xff]
    %v6896 = vld [vmem:[#allocation20 + $0x140] sm:$0xff]
    %v6897 = vld [vmem:[#allocation20 + $0x148] sm:$0xff]
    %v6898 = vld [vmem:[#allocation20 + $0x150] sm:$0xff]
    %v6899 = vld [vmem:[#allocation20 + $0x158] sm:$0xff]
    %v6900 = vld [vmem:[#allocation20 + $0x160] sm:$0xff]
    %v6901 = vld [vmem:[#allocation20 + $0x168] sm:$0xff]
    %v6902 = vld [vmem:[#allocation20 + $0x170] sm:$0xff]
    %v6903 = vld [vmem:[#allocation20 + $0x178] sm:$0xff]
    %v6904 = vld [vmem:[#allocation20 + $0x180] sm:$0xff]
    %v6905 = vld [vmem:[#allocation20 + $0x188] sm:$0xff]
    %v6906 = vld [vmem:[#allocation20 + $0x190] sm:$0xff]
    %v6907 = vld [vmem:[#allocation20 + $0x198] sm:$0xff]
    %v6908 = vld [vmem:[#allocation20 + $0x1a0] sm:$0xff]
    %v6909 = vld [vmem:[#allocation20 + $0x1a8] sm:$0xff]
    %v6910 = vld [vmem:[#allocation20 + $0x1b0] sm:$0xff]
    %v6911 = vld [vmem:[#allocation20 + $0x1b8] sm:$0xff]
    %v6912 = vld [vmem:[#allocation20 + $0x1c0] sm:$0xff]
    %v6913 = vld [vmem:[#allocation20 + $0x1c8] sm:$0xff]
    %v6914 = vld [vmem:[#allocation20 + $0x1d0] sm:$0xff]
    %v6915 = vld [vmem:[#allocation20 + $0x1d8] sm:$0xff]
    %v6916 = vld [vmem:[#allocation20 + $0x1e0] sm:$0xff]
    %v6917 = vld [vmem:[#allocation20 + $0x1e8] sm:$0xff]
    %v6918 = vld [vmem:[#allocation20 + $0x1f0] sm:$0xff]
    %v6919 = vld [vmem:[#allocation20 + $0x1f8] sm:$0xff]
    %v6920 = vld [vmem:[#allocation22] sm:$0xf]
    %v6921 = vpack.c.bf16 %v6854, %v6852
    %v6922 = vpack.c.bf16 %v6855, %v6853
    %v6924 = vlaneseq
    %v6925 = vshrl.u32 %v6924, 7
    %v6926 = vsub.s32 0, %v6925
    %v6927 = vrot.slane %v6920, %v6926
    %v6928 = vlaneseq
    %v6929 = vshrl.u32 %v6928, 7
    %v6930 = vsub.s32 1, %v6929
    %v6931 = vrot.slane %v6920, %v6930
    %v6932 = vlaneseq
    %v6933 = vshrl.u32 %v6932, 7
    %v6934 = vsub.s32 2, %v6933
    %v6935 = vrot.slane %v6920, %v6934
    %v6936 = vlaneseq
    %v6937 = vshrl.u32 %v6936, 7
    %v6938 = vsub.s32 3, %v6937
    %v6939 = vrot.slane %v6920, %v6938
    %v7008 = vunpack.c.l.b16 %v6856
    %v7009 = vunpack.c.h.b16 %v6856
    %v7010 = vunpack.c.l.b16 %v6857
    %v7011 = vunpack.c.h.b16 %v6857
    %v7012 = vunpack.c.l.b16 %v6858
    %v7013 = vunpack.c.h.b16 %v6858
    %v7014 = vunpack.c.l.b16 %v6859
    %v7015 = vunpack.c.h.b16 %v6859
    %v7016 = vunpack.c.l.b16 %v6860
    %v7017 = vunpack.c.h.b16 %v6860
    %v7018 = vunpack.c.l.b16 %v6861
    %v7019 = vunpack.c.h.b16 %v6861
    %v7020 = vunpack.c.l.b16 %v6862
    %v7021 = vunpack.c.h.b16 %v6862
    %v7022 = vunpack.c.l.b16 %v6863
    %v7023 = vunpack.c.h.b16 %v6863
    %v7024 = vunpack.c.l.b16 %v6864
    %v7025 = vunpack.c.h.b16 %v6864
    %v7026 = vunpack.c.l.b16 %v6865
    %v7027 = vunpack.c.h.b16 %v6865
    %v7028 = vunpack.c.l.b16 %v6866
    %v7029 = vunpack.c.h.b16 %v6866
    %v7030 = vunpack.c.l.b16 %v6867
    %v7031 = vunpack.c.h.b16 %v6867
    %v7032 = vunpack.c.l.b16 %v6868
    %v7033 = vunpack.c.h.b16 %v6868
    %v7034 = vunpack.c.l.b16 %v6869
    %v7035 = vunpack.c.h.b16 %v6869
    %v7036 = vunpack.c.l.b16 %v6870
    %v7037 = vunpack.c.h.b16 %v6870
    %v7038 = vunpack.c.l.b16 %v6871
    %v7039 = vunpack.c.h.b16 %v6871
    %v7040 = vunpack.c.l.b16 %v6872
    %v7041 = vunpack.c.h.b16 %v6872
    %v7042 = vunpack.c.l.b16 %v6873
    %v7043 = vunpack.c.h.b16 %v6873
    %v7044 = vunpack.c.l.b16 %v6874
    %v7045 = vunpack.c.h.b16 %v6874
    %v7046 = vunpack.c.l.b16 %v6875
    %v7047 = vunpack.c.h.b16 %v6875
    %v7048 = vunpack.c.l.b16 %v6876
    %v7049 = vunpack.c.h.b16 %v6876
    %v7050 = vunpack.c.l.b16 %v6877
    %v7051 = vunpack.c.h.b16 %v6877
    %v7052 = vunpack.c.l.b16 %v6878
    %v7053 = vunpack.c.h.b16 %v6878
    %v7054 = vunpack.c.l.b16 %v6879
    %v7055 = vunpack.c.h.b16 %v6879
    %v7056 = vunpack.c.l.b16 %v6880
    %v7057 = vunpack.c.h.b16 %v6880
    %v7058 = vunpack.c.l.b16 %v6881
    %v7059 = vunpack.c.h.b16 %v6881
    %v7060 = vunpack.c.l.b16 %v6882
    %v7061 = vunpack.c.h.b16 %v6882
    %v7062 = vunpack.c.l.b16 %v6883
    %v7063 = vunpack.c.h.b16 %v6883
    %v7064 = vunpack.c.l.b16 %v6884
    %v7065 = vunpack.c.h.b16 %v6884
    %v7066 = vunpack.c.l.b16 %v6885
    %v7067 = vunpack.c.h.b16 %v6885
    %v7068 = vunpack.c.l.b16 %v6886
    %v7069 = vunpack.c.h.b16 %v6886
    %v7070 = vunpack.c.l.b16 %v6887
    %v7071 = vunpack.c.h.b16 %v6887
    %v7072 = vunpack.c.l.b16 %v6888
    %v7073 = vunpack.c.h.b16 %v6888
    %v7074 = vunpack.c.l.b16 %v6889
    %v7075 = vunpack.c.h.b16 %v6889
    %v7076 = vunpack.c.l.b16 %v6890
    %v7077 = vunpack.c.h.b16 %v6890
    %v7078 = vunpack.c.l.b16 %v6891
    %v7079 = vunpack.c.h.b16 %v6891
    %v7080 = vunpack.c.l.b16 %v6892
    %v7081 = vunpack.c.h.b16 %v6892
    %v7082 = vunpack.c.l.b16 %v6893
    %v7083 = vunpack.c.h.b16 %v6893
    %v7084 = vunpack.c.l.b16 %v6894
    %v7085 = vunpack.c.h.b16 %v6894
    %v7086 = vunpack.c.l.b16 %v6895
    %v7087 = vunpack.c.h.b16 %v6895
    %v7088 = vunpack.c.l.b16 %v6896
    %v7089 = vunpack.c.h.b16 %v6896
    %v7090 = vunpack.c.l.b16 %v6897
    %v7091 = vunpack.c.h.b16 %v6897
    %v7092 = vunpack.c.l.b16 %v6898
    %v7093 = vunpack.c.h.b16 %v6898
    %v7094 = vunpack.c.l.b16 %v6899
    %v7095 = vunpack.c.h.b16 %v6899
    %v7096 = vunpack.c.l.b16 %v6900
    %v7097 = vunpack.c.h.b16 %v6900
    %v7098 = vunpack.c.l.b16 %v6901
    %v7099 = vunpack.c.h.b16 %v6901
    %v7100 = vunpack.c.l.b16 %v6902
    %v7101 = vunpack.c.h.b16 %v6902
    %v7102 = vunpack.c.l.b16 %v6903
    %v7103 = vunpack.c.h.b16 %v6903
    %v7104 = vunpack.c.l.b16 %v6904
    %v7105 = vunpack.c.h.b16 %v6904
    %v7106 = vunpack.c.l.b16 %v6905
    %v7107 = vunpack.c.h.b16 %v6905
    %v7108 = vunpack.c.l.b16 %v6906
    %v7109 = vunpack.c.h.b16 %v6906
    %v7110 = vunpack.c.l.b16 %v6907
    %v7111 = vunpack.c.h.b16 %v6907
    %v7112 = vunpack.c.l.b16 %v6908
    %v7113 = vunpack.c.h.b16 %v6908
    %v7114 = vunpack.c.l.b16 %v6909
    %v7115 = vunpack.c.h.b16 %v6909
    %v7116 = vunpack.c.l.b16 %v6910
    %v7117 = vunpack.c.h.b16 %v6910
    %v7118 = vunpack.c.l.b16 %v6911
    %v7119 = vunpack.c.h.b16 %v6911
    %v7120 = vunpack.c.l.b16 %v6912
    %v7121 = vunpack.c.h.b16 %v6912
    %v7122 = vunpack.c.l.b16 %v6913
    %v7123 = vunpack.c.h.b16 %v6913
    %v7124 = vunpack.c.l.b16 %v6914
    %v7125 = vunpack.c.h.b16 %v6914
    %v7126 = vunpack.c.l.b16 %v6915
    %v7127 = vunpack.c.h.b16 %v6915
    %v7128 = vunpack.c.l.b16 %v6916
    %v7129 = vunpack.c.h.b16 %v6916
    %v7130 = vunpack.c.l.b16 %v6917
    %v7131 = vunpack.c.h.b16 %v6917
    %v7132 = vunpack.c.l.b16 %v6918
    %v7133 = vunpack.c.h.b16 %v6918
    %v7134 = vunpack.c.l.b16 %v6919
    %v7135 = vunpack.c.h.b16 %v6919
    %v7136 = vpack.c.b16 %v7012, %v7008
    %v7137 = vpack.c.b16 %v7013, %v7009
    %v7138 = vpack.c.b16 %v7014, %v7010
    %v7139 = vpack.c.b16 %v7015, %v7011
    %v7140 = vpack.c.b16 %v7020, %v7016
    %v7141 = vpack.c.b16 %v7021, %v7017
    %v7142 = vpack.c.b16 %v7022, %v7018
    %v7143 = vpack.c.b16 %v7023, %v7019
    %v7144 = vpack.c.b16 %v7028, %v7024
    %v7145 = vpack.c.b16 %v7029, %v7025
    %v7146 = vpack.c.b16 %v7030, %v7026
    %v7147 = vpack.c.b16 %v7031, %v7027
    %v7148 = vpack.c.b16 %v7036, %v7032
    %v7149 = vpack.c.b16 %v7037, %v7033
    %v7150 = vpack.c.b16 %v7038, %v7034
    %v7151 = vpack.c.b16 %v7039, %v7035
    %v7152 = vpack.c.b16 %v7044, %v7040
    %v7153 = vpack.c.b16 %v7045, %v7041
    %v7154 = vpack.c.b16 %v7046, %v7042
    %v7155 = vpack.c.b16 %v7047, %v7043
    %v7156 = vpack.c.b16 %v7052, %v7048
    %v7157 = vpack.c.b16 %v7053, %v7049
    %v7158 = vpack.c.b16 %v7054, %v7050
    %v7159 = vpack.c.b16 %v7055, %v7051
    %v7160 = vpack.c.b16 %v7060, %v7056
    %v7161 = vpack.c.b16 %v7061, %v7057
    %v7162 = vpack.c.b16 %v7062, %v7058
    %v7163 = vpack.c.b16 %v7063, %v7059
    %v7164 = vpack.c.b16 %v7068, %v7064
    %v7165 = vpack.c.b16 %v7069, %v7065
    %v7166 = vpack.c.b16 %v7070, %v7066
    %v7167 = vpack.c.b16 %v7071, %v7067
    %v7168 = vpack.c.b16 %v7076, %v7072
    %v7169 = vpack.c.b16 %v7077, %v7073
    %v7170 = vpack.c.b16 %v7078, %v7074
    %v7171 = vpack.c.b16 %v7079, %v7075
    %v7172 = vpack.c.b16 %v7084, %v7080
    %v7173 = vpack.c.b16 %v7085, %v7081
    %v7174 = vpack.c.b16 %v7086, %v7082
    %v7175 = vpack.c.b16 %v7087, %v7083
    %v7176 = vpack.c.b16 %v7092, %v7088
    %v7177 = vpack.c.b16 %v7093, %v7089
    %v7178 = vpack.c.b16 %v7094, %v7090
    %v7179 = vpack.c.b16 %v7095, %v7091
    %v7180 = vpack.c.b16 %v7100, %v7096
    %v7181 = vpack.c.b16 %v7101, %v7097
    %v7182 = vpack.c.b16 %v7102, %v7098
    %v7183 = vpack.c.b16 %v7103, %v7099
    %v7184 = vpack.c.b16 %v7108, %v7104
    %v7185 = vpack.c.b16 %v7109, %v7105
    %v7186 = vpack.c.b16 %v7110, %v7106
    %v7187 = vpack.c.b16 %v7111, %v7107
    %v7188 = vpack.c.b16 %v7116, %v7112
    %v7189 = vpack.c.b16 %v7117, %v7113
    %v7190 = vpack.c.b16 %v7118, %v7114
    %v7191 = vpack.c.b16 %v7119, %v7115
    %v7192 = vpack.c.b16 %v7124, %v7120
    %v7193 = vpack.c.b16 %v7125, %v7121
    %v7194 = vpack.c.b16 %v7126, %v7122
    %v7195 = vpack.c.b16 %v7127, %v7123
    %v7196 = vpack.c.b16 %v7132, %v7128
    %v7197 = vpack.c.b16 %v7133, %v7129
    %v7198 = vpack.c.b16 %v7134, %v7130
    %v7199 = vpack.c.b16 %v7135, %v7131
    %7264 = vmatprep.subr.bf16.mxu0 %v7137
    %7265 = vmatpush1.bf16.msra.mxu0 %v7136
    %7266 = vmatprep.subr.bf16.mxu0 %v7141
    %7267 = vmatpush1.bf16.msra.mxu0 %v7140
    %7268 = vmatprep.subr.bf16.mxu0 %v7145
    %7269 = vmatpush1.bf16.msra.mxu0 %v7144
    %7270 = vmatprep.subr.bf16.mxu0 %v7149
    %7271 = vmatpush1.bf16.msra.mxu0 %v7148
    %7272 = vmatprep.subr.bf16.mxu0 %v7153
    %7273 = vmatpush1.bf16.msra.mxu0 %v7152
    %7274 = vmatprep.subr.bf16.mxu0 %v7157
    %7275 = vmatpush1.bf16.msra.mxu0 %v7156
    %7276 = vmatprep.subr.bf16.mxu0 %v7161
    %7277 = vmatpush1.bf16.msra.mxu0 %v7160
    %7278 = vmatprep.subr.bf16.mxu0 %v7165
    %7279 = vmatpush1.bf16.msra.mxu0 %v7164
    %7280 = vmatprep.subr.bf16.mxu0 %v7169
    %7281 = vmatpush1.bf16.msra.mxu0 %v7168
    %7282 = vmatprep.subr.bf16.mxu0 %v7173
    %7283 = vmatpush1.bf16.msra.mxu0 %v7172
    %7284 = vmatprep.subr.bf16.mxu0 %v7177
    %7285 = vmatpush1.bf16.msra.mxu0 %v7176
    %7286 = vmatprep.subr.bf16.mxu0 %v7181
    %7287 = vmatpush1.bf16.msra.mxu0 %v7180
    %7288 = vmatprep.subr.bf16.mxu0 %v7185
    %7289 = vmatpush1.bf16.msra.mxu0 %v7184
    %7290 = vmatprep.subr.bf16.mxu0 %v7189
    %7291 = vmatpush1.bf16.msra.mxu0 %v7188
    %7292 = vmatprep.subr.bf16.mxu0 %v7193
    %7293 = vmatpush1.bf16.msra.mxu0 %v7192
    %7294 = vmatprep.subr.bf16.mxu0 %v7197
    %7295 = vmatpush1.bf16.msra.mxu0 %v7196
    %7296 = vmatprep.mubr.bf16.mxu0 %v6922
    %7297 = vmatmul.mubr.bf16.gmra.mrb[0].mxu0 %v6921
    %v7298 = vpop.f32.mrb[0].mxu0
    %v7299 = vadd.f32 %v6927, %v7298
    %v7300 = vpop.f32.mrb[0].mxu0
    %v7301 = vadd.f32 %v6931, %v7300
    %v7302 = vpop.f32.mrb[0].mxu0
    %v7303 = vadd.f32 %v6927, %v7302
    %v7304 = vpop.f32.mrb[0].mxu0
    %v7305 = vadd.f32 %v6931, %v7304
    %7306 = vdwg.mxu0
    %7307 = vmatprep.subr.bf16.mxu0 %v7139
    %7308 = vmatpush1.bf16.msra.mxu0 %v7138
    %7309 = vmatprep.subr.bf16.mxu0 %v7143
    %7310 = vmatpush1.bf16.msra.mxu0 %v7142
    %7311 = vmatprep.subr.bf16.mxu0 %v7147
    %7312 = vmatpush1.bf16.msra.mxu0 %v7146
    %7313 = vmatprep.subr.bf16.mxu0 %v7151
    %7314 = vmatpush1.bf16.msra.mxu0 %v7150
    %7315 = vmatprep.subr.bf16.mxu0 %v7155
    %7316 = vmatpush1.bf16.msra.mxu0 %v7154
    %7317 = vmatprep.subr.bf16.mxu0 %v7159
    %7318 = vmatpush1.bf16.msra.mxu0 %v7158
    %7319 = vmatprep.subr.bf16.mxu0 %v7163
    %7320 = vmatpush1.bf16.msra.mxu0 %v7162
    %7321 = vmatprep.subr.bf16.mxu0 %v7167
    %7322 = vmatpush1.bf16.msra.mxu0 %v7166
    %7323 = vmatprep.subr.bf16.mxu0 %v7171
    %7324 = vmatpush1.bf16.msra.mxu0 %v7170
    %7325 = vmatprep.subr.bf16.mxu0 %v7175
    %7326 = vmatpush1.bf16.msra.mxu0 %v7174
    %7327 = vmatprep.subr.bf16.mxu0 %v7179
    %7328 = vmatpush1.bf16.msra.mxu0 %v7178
    %7329 = vmatprep.subr.bf16.mxu0 %v7183
    %7330 = vmatpush1.bf16.msra.mxu0 %v7182
    %7331 = vmatprep.subr.bf16.mxu0 %v7187
    %7332 = vmatpush1.bf16.msra.mxu0 %v7186
    %7333 = vmatprep.subr.bf16.mxu0 %v7191
    %7334 = vmatpush1.bf16.msra.mxu0 %v7190
    %7335 = vmatprep.subr.bf16.mxu0 %v7195
    %7336 = vmatpush1.bf16.msra.mxu0 %v7194
    %7337 = vmatprep.subr.bf16.mxu0 %v7199
    %7338 = vmatpush1.bf16.msra.mxu0 %v7198
    %7339 = vmatprep.mubr.bf16.mxu0 %v6922
    %7340 = vmatmul.mubr.bf16.gmra.mrb[0].mxu0 %v6921
    %v7341 = vpop.f32.mrb[0].mxu0
    %v7342 = vadd.f32 %v6935, %v7341
    %v7343 = vpop.f32.mrb[0].mxu0
    %v7344 = vadd.f32 %v6939, %v7343
    %v7345 = vpop.f32.mrb[0].mxu0
    %v7346 = vadd.f32 %v6935, %v7345
    %v7347 = vpop.f32.mrb[0].mxu0
    %v7348 = vadd.f32 %v6939, %v7347
    %7349 = vdwg.mxu0
    %v7350 = vmax.f32 %v7299, 0.0
    %v7351 = vmax.f32 %v7301, 0.0
    %v7352 = vmax.f32 %v7342, 0.0
    %v7353 = vmax.f32 %v7344, 0.0
    %v7354 = vmax.f32 %v7303, 0.0
    %v7355 = vmax.f32 %v7305, 0.0
    %v7356 = vmax.f32 %v7346, 0.0
    %v7357 = vmax.f32 %v7348, 0.0
    %v7358 = vld [vmem:[#allocation23] sm:$0xff]
    %v7359 = vld [vmem:[#allocation23 + $0x8] sm:$0xff]
    %v7360 = vld [vmem:[#allocation23 + $0x10] sm:$0xff]
    %v7361 = vld [vmem:[#allocation23 + $0x18] sm:$0xff]
    %v7362 = vld [vmem:[#allocation23 + $0x20] sm:$0xff]
    %v7363 = vld [vmem:[#allocation23 + $0x28] sm:$0xff]
    %v7364 = vld [vmem:[#allocation23 + $0x30] sm:$0xff]
    %v7365 = vld [vmem:[#allocation23 + $0x38] sm:$0xff]
    %v7366 = vld [vmem:[#allocation23 + $0x40] sm:$0xff]
    %v7367 = vld [vmem:[#allocation23 + $0x48] sm:$0xff]
    %v7368 = vld [vmem:[#allocation23 + $0x50] sm:$0xff]
    %v7369 = vld [vmem:[#allocation23 + $0x58] sm:$0xff]
    %v7370 = vld [vmem:[#allocation23 + $0x60] sm:$0xff]
    %v7371 = vld [vmem:[#allocation23 + $0x68] sm:$0xff]
    %v7372 = vld [vmem:[#allocation23 + $0x70] sm:$0xff]
    %v7373 = vld [vmem:[#allocation23 + $0x78] sm:$0xff]
    %v7374 = vld [vmem:[#allocation23 + $0x80] sm:$0xff]
    %v7375 = vld [vmem:[#allocation23 + $0x88] sm:$0xff]
    %v7376 = vld [vmem:[#allocation23 + $0x90] sm:$0xff]
    %v7377 = vld [vmem:[#allocation23 + $0x98] sm:$0xff]
    %v7378 = vld [vmem:[#allocation23 + $0xa0] sm:$0xff]
    %v7379 = vld [vmem:[#allocation23 + $0xa8] sm:$0xff]
    %v7380 = vld [vmem:[#allocation23 + $0xb0] sm:$0xff]
    %v7381 = vld [vmem:[#allocation23 + $0xb8] sm:$0xff]
    %v7382 = vld [vmem:[#allocation23 + $0xc0] sm:$0xff]
    %v7383 = vld [vmem:[#allocation23 + $0xc8] sm:$0xff]
    %v7384 = vld [vmem:[#allocation23 + $0xd0] sm:$0xff]
    %v7385 = vld [vmem:[#allocation23 + $0xd8] sm:$0xff]
    %v7386 = vld [vmem:[#allocation23 + $0xe0] sm:$0xff]
    %v7387 = vld [vmem:[#allocation23 + $0xe8] sm:$0xff]
    %v7388 = vld [vmem:[#allocation23 + $0xf0] sm:$0xff]
    %v7389 = vld [vmem:[#allocation23 + $0xf8] sm:$0xff]
    %v7390 = vld [vmem:[#allocation23 + $0x100] sm:$0xff]
    %v7391 = vld [vmem:[#allocation23 + $0x108] sm:$0xff]
    %v7392 = vld [vmem:[#allocation23 + $0x110] sm:$0xff]
    %v7393 = vld [vmem:[#allocation23 + $0x118] sm:$0xff]
    %v7394 = vld [vmem:[#allocation23 + $0x120] sm:$0xff]
    %v7395 = vld [vmem:[#allocation23 + $0x128] sm:$0xff]
    %v7396 = vld [vmem:[#allocation23 + $0x130] sm:$0xff]
    %v7397 = vld [vmem:[#allocation23 + $0x138] sm:$0xff]
    %v7398 = vld [vmem:[#allocation23 + $0x140] sm:$0xff]
    %v7399 = vld [vmem:[#allocation23 + $0x148] sm:$0xff]
    %v7400 = vld [vmem:[#allocation23 + $0x150] sm:$0xff]
    %v7401 = vld [vmem:[#allocation23 + $0x158] sm:$0xff]
    %v7402 = vld [vmem:[#allocation23 + $0x160] sm:$0xff]
    %v7403 = vld [vmem:[#allocation23 + $0x168] sm:$0xff]
    %v7404 = vld [vmem:[#allocation23 + $0x170] sm:$0xff]
    %v7405 = vld [vmem:[#allocation23 + $0x178] sm:$0xff]
    %v7406 = vld [vmem:[#allocation23 + $0x180] sm:$0xff]
    %v7407 = vld [vmem:[#allocation23 + $0x188] sm:$0xff]
    %v7408 = vld [vmem:[#allocation23 + $0x190] sm:$0xff]
    %v7409 = vld [vmem:[#allocation23 + $0x198] sm:$0xff]
    %v7410 = vld [vmem:[#allocation23 + $0x1a0] sm:$0xff]
    %v7411 = vld [vmem:[#allocation23 + $0x1a8] sm:$0xff]
    %v7412 = vld [vmem:[#allocation23 + $0x1b0] sm:$0xff]
    %v7413 = vld [vmem:[#allocation23 + $0x1b8] sm:$0xff]
    %v7414 = vld [vmem:[#allocation23 + $0x1c0] sm:$0xff]
    %v7415 = vld [vmem:[#allocation23 + $0x1c8] sm:$0xff]
    %v7416 = vld [vmem:[#allocation23 + $0x1d0] sm:$0xff]
    %v7417 = vld [vmem:[#allocation23 + $0x1d8] sm:$0xff]
    %v7418 = vld [vmem:[#allocation23 + $0x1e0] sm:$0xff]
    %v7419 = vld [vmem:[#allocation23 + $0x1e8] sm:$0xff]
    %v7420 = vld [vmem:[#allocation23 + $0x1f0] sm:$0xff]
    %v7421 = vld [vmem:[#allocation23 + $0x1f8] sm:$0xff]
    %v7422 = vld [vmem:[#allocation23 + $0x200] sm:$0xff]
    %v7423 = vld [vmem:[#allocation23 + $0x208] sm:$0xff]
    %v7424 = vld [vmem:[#allocation23 + $0x210] sm:$0xff]
    %v7425 = vld [vmem:[#allocation23 + $0x218] sm:$0xff]
    %v7426 = vld [vmem:[#allocation23 + $0x220] sm:$0xff]
    %v7427 = vld [vmem:[#allocation23 + $0x228] sm:$0xff]
    %v7428 = vld [vmem:[#allocation23 + $0x230] sm:$0xff]
    %v7429 = vld [vmem:[#allocation23 + $0x238] sm:$0xff]
    %v7430 = vld [vmem:[#allocation23 + $0x240] sm:$0xff]
    %v7431 = vld [vmem:[#allocation23 + $0x248] sm:$0xff]
    %v7432 = vld [vmem:[#allocation23 + $0x250] sm:$0xff]
    %v7433 = vld [vmem:[#allocation23 + $0x258] sm:$0xff]
    %v7434 = vld [vmem:[#allocation23 + $0x260] sm:$0xff]
    %v7435 = vld [vmem:[#allocation23 + $0x268] sm:$0xff]
    %v7436 = vld [vmem:[#allocation23 + $0x270] sm:$0xff]
    %v7437 = vld [vmem:[#allocation23 + $0x278] sm:$0xff]
    %v7438 = vld [vmem:[#allocation23 + $0x280] sm:$0xff]
    %v7439 = vld [vmem:[#allocation23 + $0x288] sm:$0xff]
    %v7440 = vld [vmem:[#allocation23 + $0x290] sm:$0xff]
    %v7441 = vld [vmem:[#allocation23 + $0x298] sm:$0xff]
    %v7442 = vld [vmem:[#allocation23 + $0x2a0] sm:$0xff]
    %v7443 = vld [vmem:[#allocation23 + $0x2a8] sm:$0xff]
    %v7444 = vld [vmem:[#allocation23 + $0x2b0] sm:$0xff]
    %v7445 = vld [vmem:[#allocation23 + $0x2b8] sm:$0xff]
    %v7446 = vld [vmem:[#allocation23 + $0x2c0] sm:$0xff]
    %v7447 = vld [vmem:[#allocation23 + $0x2c8] sm:$0xff]
    %v7448 = vld [vmem:[#allocation23 + $0x2d0] sm:$0xff]
    %v7449 = vld [vmem:[#allocation23 + $0x2d8] sm:$0xff]
    %v7450 = vld [vmem:[#allocation23 + $0x2e0] sm:$0xff]
    %v7451 = vld [vmem:[#allocation23 + $0x2e8] sm:$0xff]
    %v7452 = vld [vmem:[#allocation23 + $0x2f0] sm:$0xff]
    %v7453 = vld [vmem:[#allocation23 + $0x2f8] sm:$0xff]
    %v7454 = vld [vmem:[#allocation23 + $0x300] sm:$0xff]
    %v7455 = vld [vmem:[#allocation23 + $0x308] sm:$0xff]
    %v7456 = vld [vmem:[#allocation23 + $0x310] sm:$0xff]
    %v7457 = vld [vmem:[#allocation23 + $0x318] sm:$0xff]
    %v7458 = vld [vmem:[#allocation23 + $0x320] sm:$0xff]
    %v7459 = vld [vmem:[#allocation23 + $0x328] sm:$0xff]
    %v7460 = vld [vmem:[#allocation23 + $0x330] sm:$0xff]
    %v7461 = vld [vmem:[#allocation23 + $0x338] sm:$0xff]
    %v7462 = vld [vmem:[#allocation23 + $0x340] sm:$0xff]
    %v7463 = vld [vmem:[#allocation23 + $0x348] sm:$0xff]
    %v7464 = vld [vmem:[#allocation23 + $0x350] sm:$0xff]
    %v7465 = vld [vmem:[#allocation23 + $0x358] sm:$0xff]
    %v7466 = vld [vmem:[#allocation23 + $0x360] sm:$0xff]
    %v7467 = vld [vmem:[#allocation23 + $0x368] sm:$0xff]
    %v7468 = vld [vmem:[#allocation23 + $0x370] sm:$0xff]
    %v7469 = vld [vmem:[#allocation23 + $0x378] sm:$0xff]
    %v7470 = vld [vmem:[#allocation23 + $0x380] sm:$0xff]
    %v7471 = vld [vmem:[#allocation23 + $0x388] sm:$0xff]
    %v7472 = vld [vmem:[#allocation23 + $0x390] sm:$0xff]
    %v7473 = vld [vmem:[#allocation23 + $0x398] sm:$0xff]
    %v7474 = vld [vmem:[#allocation23 + $0x3a0] sm:$0xff]
    %v7475 = vld [vmem:[#allocation23 + $0x3a8] sm:$0xff]
    %v7476 = vld [vmem:[#allocation23 + $0x3b0] sm:$0xff]
    %v7477 = vld [vmem:[#allocation23 + $0x3b8] sm:$0xff]
    %v7478 = vld [vmem:[#allocation23 + $0x3c0] sm:$0xff]
    %v7479 = vld [vmem:[#allocation23 + $0x3c8] sm:$0xff]
    %v7480 = vld [vmem:[#allocation23 + $0x3d0] sm:$0xff]
    %v7481 = vld [vmem:[#allocation23 + $0x3d8] sm:$0xff]
    %v7482 = vld [vmem:[#allocation23 + $0x3e0] sm:$0xff]
    %v7483 = vld [vmem:[#allocation23 + $0x3e8] sm:$0xff]
    %v7484 = vld [vmem:[#allocation23 + $0x3f0] sm:$0xff]
    %v7485 = vld [vmem:[#allocation23 + $0x3f8] sm:$0xff]
    %v7486 = vld [vmem:[#allocation23 + $0x400] sm:$0xff]
    %v7487 = vld [vmem:[#allocation23 + $0x408] sm:$0xff]
    %v7488 = vld [vmem:[#allocation23 + $0x410] sm:$0xff]
    %v7489 = vld [vmem:[#allocation23 + $0x418] sm:$0xff]
    %v7490 = vld [vmem:[#allocation23 + $0x420] sm:$0xff]
    %v7491 = vld [vmem:[#allocation23 + $0x428] sm:$0xff]
    %v7492 = vld [vmem:[#allocation23 + $0x430] sm:$0xff]
    %v7493 = vld [vmem:[#allocation23 + $0x438] sm:$0xff]
    %v7494 = vld [vmem:[#allocation23 + $0x440] sm:$0xff]
    %v7495 = vld [vmem:[#allocation23 + $0x448] sm:$0xff]
    %v7496 = vld [vmem:[#allocation23 + $0x450] sm:$0xff]
    %v7497 = vld [vmem:[#allocation23 + $0x458] sm:$0xff]
    %v7498 = vld [vmem:[#allocation23 + $0x460] sm:$0xff]
    %v7499 = vld [vmem:[#allocation23 + $0x468] sm:$0xff]
    %v7500 = vld [vmem:[#allocation23 + $0x470] sm:$0xff]
    %v7501 = vld [vmem:[#allocation23 + $0x478] sm:$0xff]
    %v7502 = vld [vmem:[#allocation23 + $0x480] sm:$0xff]
    %v7503 = vld [vmem:[#allocation23 + $0x488] sm:$0xff]
    %v7504 = vld [vmem:[#allocation23 + $0x490] sm:$0xff]
    %v7505 = vld [vmem:[#allocation23 + $0x498] sm:$0xff]
    %v7506 = vld [vmem:[#allocation23 + $0x4a0] sm:$0xff]
    %v7507 = vld [vmem:[#allocation23 + $0x4a8] sm:$0xff]
    %v7508 = vld [vmem:[#allocation23 + $0x4b0] sm:$0xff]
    %v7509 = vld [vmem:[#allocation23 + $0x4b8] sm:$0xff]
    %v7510 = vld [vmem:[#allocation23 + $0x4c0] sm:$0xff]
    %v7511 = vld [vmem:[#allocation23 + $0x4c8] sm:$0xff]
    %v7512 = vld [vmem:[#allocation23 + $0x4d0] sm:$0xff]
    %v7513 = vld [vmem:[#allocation23 + $0x4d8] sm:$0xff]
    %v7514 = vld [vmem:[#allocation23 + $0x4e0] sm:$0xff]
    %v7515 = vld [vmem:[#allocation23 + $0x4e8] sm:$0xff]
    %v7516 = vld [vmem:[#allocation23 + $0x4f0] sm:$0xff]
    %v7517 = vld [vmem:[#allocation23 + $0x4f8] sm:$0xff]
    %v7518 = vld [vmem:[#allocation23 + $0x500] sm:$0xff]
    %v7519 = vld [vmem:[#allocation23 + $0x508] sm:$0xff]
    %v7520 = vld [vmem:[#allocation23 + $0x510] sm:$0xff]
    %v7521 = vld [vmem:[#allocation23 + $0x518] sm:$0xff]
    %v7522 = vld [vmem:[#allocation23 + $0x520] sm:$0xff]
    %v7523 = vld [vmem:[#allocation23 + $0x528] sm:$0xff]
    %v7524 = vld [vmem:[#allocation23 + $0x530] sm:$0xff]
    %v7525 = vld [vmem:[#allocation23 + $0x538] sm:$0xff]
    %v7526 = vld [vmem:[#allocation23 + $0x540] sm:$0xff]
    %v7527 = vld [vmem:[#allocation23 + $0x548] sm:$0xff]
    %v7528 = vld [vmem:[#allocation23 + $0x550] sm:$0xff]
    %v7529 = vld [vmem:[#allocation23 + $0x558] sm:$0xff]
    %v7530 = vld [vmem:[#allocation23 + $0x560] sm:$0xff]
    %v7531 = vld [vmem:[#allocation23 + $0x568] sm:$0xff]
    %v7532 = vld [vmem:[#allocation23 + $0x570] sm:$0xff]
    %v7533 = vld [vmem:[#allocation23 + $0x578] sm:$0xff]
    %v7534 = vld [vmem:[#allocation23 + $0x580] sm:$0xff]
    %v7535 = vld [vmem:[#allocation23 + $0x588] sm:$0xff]
    %v7536 = vld [vmem:[#allocation23 + $0x590] sm:$0xff]
    %v7537 = vld [vmem:[#allocation23 + $0x598] sm:$0xff]
    %v7538 = vld [vmem:[#allocation23 + $0x5a0] sm:$0xff]
    %v7539 = vld [vmem:[#allocation23 + $0x5a8] sm:$0xff]
    %v7540 = vld [vmem:[#allocation23 + $0x5b0] sm:$0xff]
    %v7541 = vld [vmem:[#allocation23 + $0x5b8] sm:$0xff]
    %v7542 = vld [vmem:[#allocation23 + $0x5c0] sm:$0xff]
    %v7543 = vld [vmem:[#allocation23 + $0x5c8] sm:$0xff]
    %v7544 = vld [vmem:[#allocation23 + $0x5d0] sm:$0xff]
    %v7545 = vld [vmem:[#allocation23 + $0x5d8] sm:$0xff]
    %v7546 = vld [vmem:[#allocation23 + $0x5e0] sm:$0xff]
    %v7547 = vld [vmem:[#allocation23 + $0x5e8] sm:$0xff]
    %v7548 = vld [vmem:[#allocation23 + $0x5f0] sm:$0xff]
    %v7549 = vld [vmem:[#allocation23 + $0x5f8] sm:$0xff]
    %v7550 = vld [vmem:[#allocation23 + $0x600] sm:$0xff]
    %v7551 = vld [vmem:[#allocation23 + $0x608] sm:$0xff]
    %v7552 = vld [vmem:[#allocation23 + $0x610] sm:$0xff]
    %v7553 = vld [vmem:[#allocation23 + $0x618] sm:$0xff]
    %v7554 = vld [vmem:[#allocation23 + $0x620] sm:$0xff]
    %v7555 = vld [vmem:[#allocation23 + $0x628] sm:$0xff]
    %v7556 = vld [vmem:[#allocation23 + $0x630] sm:$0xff]
    %v7557 = vld [vmem:[#allocation23 + $0x638] sm:$0xff]
    %v7558 = vld [vmem:[#allocation23 + $0x640] sm:$0xff]
    %v7559 = vld [vmem:[#allocation23 + $0x648] sm:$0xff]
    %v7560 = vld [vmem:[#allocation23 + $0x650] sm:$0xff]
    %v7561 = vld [vmem:[#allocation23 + $0x658] sm:$0xff]
    %v7562 = vld [vmem:[#allocation23 + $0x660] sm:$0xff]
    %v7563 = vld [vmem:[#allocation23 + $0x668] sm:$0xff]
    %v7564 = vld [vmem:[#allocation23 + $0x670] sm:$0xff]
    %v7565 = vld [vmem:[#allocation23 + $0x678] sm:$0xff]
    %v7566 = vld [vmem:[#allocation23 + $0x680] sm:$0xff]
    %v7567 = vld [vmem:[#allocation23 + $0x688] sm:$0xff]
    %v7568 = vld [vmem:[#allocation23 + $0x690] sm:$0xff]
    %v7569 = vld [vmem:[#allocation23 + $0x698] sm:$0xff]
    %v7570 = vld [vmem:[#allocation23 + $0x6a0] sm:$0xff]
    %v7571 = vld [vmem:[#allocation23 + $0x6a8] sm:$0xff]
    %v7572 = vld [vmem:[#allocation23 + $0x6b0] sm:$0xff]
    %v7573 = vld [vmem:[#allocation23 + $0x6b8] sm:$0xff]
    %v7574 = vld [vmem:[#allocation23 + $0x6c0] sm:$0xff]
    %v7575 = vld [vmem:[#allocation23 + $0x6c8] sm:$0xff]
    %v7576 = vld [vmem:[#allocation23 + $0x6d0] sm:$0xff]
    %v7577 = vld [vmem:[#allocation23 + $0x6d8] sm:$0xff]
    %v7578 = vld [vmem:[#allocation23 + $0x6e0] sm:$0xff]
    %v7579 = vld [vmem:[#allocation23 + $0x6e8] sm:$0xff]
    %v7580 = vld [vmem:[#allocation23 + $0x6f0] sm:$0xff]
    %v7581 = vld [vmem:[#allocation23 + $0x6f8] sm:$0xff]
    %v7582 = vld [vmem:[#allocation23 + $0x700] sm:$0xff]
    %v7583 = vld [vmem:[#allocation23 + $0x708] sm:$0xff]
    %v7584 = vld [vmem:[#allocation23 + $0x710] sm:$0xff]
    %v7585 = vld [vmem:[#allocation23 + $0x718] sm:$0xff]
    %v7586 = vld [vmem:[#allocation23 + $0x720] sm:$0xff]
    %v7587 = vld [vmem:[#allocation23 + $0x728] sm:$0xff]
    %v7588 = vld [vmem:[#allocation23 + $0x730] sm:$0xff]
    %v7589 = vld [vmem:[#allocation23 + $0x738] sm:$0xff]
    %v7590 = vld [vmem:[#allocation23 + $0x740] sm:$0xff]
    %v7591 = vld [vmem:[#allocation23 + $0x748] sm:$0xff]
    %v7592 = vld [vmem:[#allocation23 + $0x750] sm:$0xff]
    %v7593 = vld [vmem:[#allocation23 + $0x758] sm:$0xff]
    %v7594 = vld [vmem:[#allocation23 + $0x760] sm:$0xff]
    %v7595 = vld [vmem:[#allocation23 + $0x768] sm:$0xff]
    %v7596 = vld [vmem:[#allocation23 + $0x770] sm:$0xff]
    %v7597 = vld [vmem:[#allocation23 + $0x778] sm:$0xff]
    %v7598 = vld [vmem:[#allocation23 + $0x780] sm:$0xff]
    %v7599 = vld [vmem:[#allocation23 + $0x788] sm:$0xff]
    %v7600 = vld [vmem:[#allocation23 + $0x790] sm:$0xff]
    %v7601 = vld [vmem:[#allocation23 + $0x798] sm:$0xff]
    %v7602 = vld [vmem:[#allocation23 + $0x7a0] sm:$0xff]
    %v7603 = vld [vmem:[#allocation23 + $0x7a8] sm:$0xff]
    %v7604 = vld [vmem:[#allocation23 + $0x7b0] sm:$0xff]
    %v7605 = vld [vmem:[#allocation23 + $0x7b8] sm:$0xff]
    %v7606 = vld [vmem:[#allocation23 + $0x7c0] sm:$0xff]
    %v7607 = vld [vmem:[#allocation23 + $0x7c8] sm:$0xff]
    %v7608 = vld [vmem:[#allocation23 + $0x7d0] sm:$0xff]
    %v7609 = vld [vmem:[#allocation23 + $0x7d8] sm:$0xff]
    %v7610 = vld [vmem:[#allocation23 + $0x7e0] sm:$0xff]
    %v7611 = vld [vmem:[#allocation23 + $0x7e8] sm:$0xff]
    %v7612 = vld [vmem:[#allocation23 + $0x7f0] sm:$0xff]
    %v7613 = vld [vmem:[#allocation23 + $0x7f8] sm:$0xff]
    %v7614 = vld [vmem:[#allocation25] sm:$0xff]
    %v7615 = vpack.c.bf16 %v7354, %v7350
    %v7616 = vpack.c.bf16 %v7355, %v7351
    %v7617 = vpack.c.bf16 %v7356, %v7352
    %v7618 = vpack.c.bf16 %v7357, %v7353
    %v7620 = vlaneseq
    %v7621 = vshrl.u32 %v7620, 7
    %v7622 = vsub.s32 0, %v7621
    %v7623 = vrot.slane %v7614, %v7622
    %v7624 = vlaneseq
    %v7625 = vshrl.u32 %v7624, 7
    %v7626 = vsub.s32 1, %v7625
    %v7627 = vrot.slane %v7614, %v7626
    %v7628 = vlaneseq
    %v7629 = vshrl.u32 %v7628, 7
    %v7630 = vsub.s32 2, %v7629
    %v7631 = vrot.slane %v7614, %v7630
    %v7632 = vlaneseq
    %v7633 = vshrl.u32 %v7632, 7
    %v7634 = vsub.s32 3, %v7633
    %v7635 = vrot.slane %v7614, %v7634
    %v7636 = vlaneseq
    %v7637 = vshrl.u32 %v7636, 7
    %v7638 = vsub.s32 4, %v7637
    %v7639 = vrot.slane %v7614, %v7638
    %v7640 = vlaneseq
    %v7641 = vshrl.u32 %v7640, 7
    %v7642 = vsub.s32 5, %v7641
    %v7643 = vrot.slane %v7614, %v7642
    %v7644 = vlaneseq
    %v7645 = vshrl.u32 %v7644, 7
    %v7646 = vsub.s32 6, %v7645
    %v7647 = vrot.slane %v7614, %v7646
    %v7648 = vlaneseq
    %v7649 = vshrl.u32 %v7648, 7
    %v7650 = vsub.s32 7, %v7649
    %v7651 = vrot.slane %v7614, %v7650
    %v7916 = vunpack.c.l.b16 %v7358
    %v7917 = vunpack.c.h.b16 %v7358
    %v7918 = vunpack.c.l.b16 %v7359
    %v7919 = vunpack.c.h.b16 %v7359
    %v7920 = vunpack.c.l.b16 %v7360
    %v7921 = vunpack.c.h.b16 %v7360
    %v7922 = vunpack.c.l.b16 %v7361
    %v7923 = vunpack.c.h.b16 %v7361
    %v7924 = vunpack.c.l.b16 %v7362
    %v7925 = vunpack.c.h.b16 %v7362
    %v7926 = vunpack.c.l.b16 %v7363
    %v7927 = vunpack.c.h.b16 %v7363
    %v7928 = vunpack.c.l.b16 %v7364
    %v7929 = vunpack.c.h.b16 %v7364
    %v7930 = vunpack.c.l.b16 %v7365
    %v7931 = vunpack.c.h.b16 %v7365
    %v7932 = vunpack.c.l.b16 %v7366
    %v7933 = vunpack.c.h.b16 %v7366
    %v7934 = vunpack.c.l.b16 %v7367
    %v7935 = vunpack.c.h.b16 %v7367
    %v7936 = vunpack.c.l.b16 %v7368
    %v7937 = vunpack.c.h.b16 %v7368
    %v7938 = vunpack.c.l.b16 %v7369
    %v7939 = vunpack.c.h.b16 %v7369
    %v7940 = vunpack.c.l.b16 %v7370
    %v7941 = vunpack.c.h.b16 %v7370
    %v7942 = vunpack.c.l.b16 %v7371
    %v7943 = vunpack.c.h.b16 %v7371
    %v7944 = vunpack.c.l.b16 %v7372
    %v7945 = vunpack.c.h.b16 %v7372
    %v7946 = vunpack.c.l.b16 %v7373
    %v7947 = vunpack.c.h.b16 %v7373
    %v7948 = vunpack.c.l.b16 %v7374
    %v7949 = vunpack.c.h.b16 %v7374
    %v7950 = vunpack.c.l.b16 %v7375
    %v7951 = vunpack.c.h.b16 %v7375
    %v7952 = vunpack.c.l.b16 %v7376
    %v7953 = vunpack.c.h.b16 %v7376
    %v7954 = vunpack.c.l.b16 %v7377
    %v7955 = vunpack.c.h.b16 %v7377
    %v7956 = vunpack.c.l.b16 %v7378
    %v7957 = vunpack.c.h.b16 %v7378
    %v7958 = vunpack.c.l.b16 %v7379
    %v7959 = vunpack.c.h.b16 %v7379
    %v7960 = vunpack.c.l.b16 %v7380
    %v7961 = vunpack.c.h.b16 %v7380
    %v7962 = vunpack.c.l.b16 %v7381
    %v7963 = vunpack.c.h.b16 %v7381
    %v7964 = vunpack.c.l.b16 %v7382
    %v7965 = vunpack.c.h.b16 %v7382
    %v7966 = vunpack.c.l.b16 %v7383
    %v7967 = vunpack.c.h.b16 %v7383
    %v7968 = vunpack.c.l.b16 %v7384
    %v7969 = vunpack.c.h.b16 %v7384
    %v7970 = vunpack.c.l.b16 %v7385
    %v7971 = vunpack.c.h.b16 %v7385
    %v7972 = vunpack.c.l.b16 %v7386
    %v7973 = vunpack.c.h.b16 %v7386
    %v7974 = vunpack.c.l.b16 %v7387
    %v7975 = vunpack.c.h.b16 %v7387
    %v7976 = vunpack.c.l.b16 %v7388
    %v7977 = vunpack.c.h.b16 %v7388
    %v7978 = vunpack.c.l.b16 %v7389
    %v7979 = vunpack.c.h.b16 %v7389
    %v7980 = vunpack.c.l.b16 %v7390
    %v7981 = vunpack.c.h.b16 %v7390
    %v7982 = vunpack.c.l.b16 %v7391
    %v7983 = vunpack.c.h.b16 %v7391
    %v7984 = vunpack.c.l.b16 %v7392
    %v7985 = vunpack.c.h.b16 %v7392
    %v7986 = vunpack.c.l.b16 %v7393
    %v7987 = vunpack.c.h.b16 %v7393
    %v7988 = vunpack.c.l.b16 %v7394
    %v7989 = vunpack.c.h.b16 %v7394
    %v7990 = vunpack.c.l.b16 %v7395
    %v7991 = vunpack.c.h.b16 %v7395
    %v7992 = vunpack.c.l.b16 %v7396
    %v7993 = vunpack.c.h.b16 %v7396
    %v7994 = vunpack.c.l.b16 %v7397
    %v7995 = vunpack.c.h.b16 %v7397
    %v7996 = vunpack.c.l.b16 %v7398
    %v7997 = vunpack.c.h.b16 %v7398
    %v7998 = vunpack.c.l.b16 %v7399
    %v7999 = vunpack.c.h.b16 %v7399
    %v8000 = vunpack.c.l.b16 %v7400
    %v8001 = vunpack.c.h.b16 %v7400
    %v8002 = vunpack.c.l.b16 %v7401
    %v8003 = vunpack.c.h.b16 %v7401
    %v8004 = vunpack.c.l.b16 %v7402
    %v8005 = vunpack.c.h.b16 %v7402
    %v8006 = vunpack.c.l.b16 %v7403
    %v8007 = vunpack.c.h.b16 %v7403
    %v8008 = vunpack.c.l.b16 %v7404
    %v8009 = vunpack.c.h.b16 %v7404
    %v8010 = vunpack.c.l.b16 %v7405
    %v8011 = vunpack.c.h.b16 %v7405
    %v8012 = vunpack.c.l.b16 %v7406
    %v8013 = vunpack.c.h.b16 %v7406
    %v8014 = vunpack.c.l.b16 %v7407
    %v8015 = vunpack.c.h.b16 %v7407
    %v8016 = vunpack.c.l.b16 %v7408
    %v8017 = vunpack.c.h.b16 %v7408
    %v8018 = vunpack.c.l.b16 %v7409
    %v8019 = vunpack.c.h.b16 %v7409
    %v8020 = vunpack.c.l.b16 %v7410
    %v8021 = vunpack.c.h.b16 %v7410
    %v8022 = vunpack.c.l.b16 %v7411
    %v8023 = vunpack.c.h.b16 %v7411
    %v8024 = vunpack.c.l.b16 %v7412
    %v8025 = vunpack.c.h.b16 %v7412
    %v8026 = vunpack.c.l.b16 %v7413
    %v8027 = vunpack.c.h.b16 %v7413
    %v8028 = vunpack.c.l.b16 %v7414
    %v8029 = vunpack.c.h.b16 %v7414
    %v8030 = vunpack.c.l.b16 %v7415
    %v8031 = vunpack.c.h.b16 %v7415
    %v8032 = vunpack.c.l.b16 %v7416
    %v8033 = vunpack.c.h.b16 %v7416
    %v8034 = vunpack.c.l.b16 %v7417
    %v8035 = vunpack.c.h.b16 %v7417
    %v8036 = vunpack.c.l.b16 %v7418
    %v8037 = vunpack.c.h.b16 %v7418
    %v8038 = vunpack.c.l.b16 %v7419
    %v8039 = vunpack.c.h.b16 %v7419
    %v8040 = vunpack.c.l.b16 %v7420
    %v8041 = vunpack.c.h.b16 %v7420
    %v8042 = vunpack.c.l.b16 %v7421
    %v8043 = vunpack.c.h.b16 %v7421
    %v8044 = vunpack.c.l.b16 %v7422
    %v8045 = vunpack.c.h.b16 %v7422
    %v8046 = vunpack.c.l.b16 %v7423
    %v8047 = vunpack.c.h.b16 %v7423
    %v8048 = vunpack.c.l.b16 %v7424
    %v8049 = vunpack.c.h.b16 %v7424
    %v8050 = vunpack.c.l.b16 %v7425
    %v8051 = vunpack.c.h.b16 %v7425
    %v8052 = vunpack.c.l.b16 %v7426
    %v8053 = vunpack.c.h.b16 %v7426
    %v8054 = vunpack.c.l.b16 %v7427
    %v8055 = vunpack.c.h.b16 %v7427
    %v8056 = vunpack.c.l.b16 %v7428
    %v8057 = vunpack.c.h.b16 %v7428
    %v8058 = vunpack.c.l.b16 %v7429
    %v8059 = vunpack.c.h.b16 %v7429
    %v8060 = vunpack.c.l.b16 %v7430
    %v8061 = vunpack.c.h.b16 %v7430
    %v8062 = vunpack.c.l.b16 %v7431
    %v8063 = vunpack.c.h.b16 %v7431
    %v8064 = vunpack.c.l.b16 %v7432
    %v8065 = vunpack.c.h.b16 %v7432
    %v8066 = vunpack.c.l.b16 %v7433
    %v8067 = vunpack.c.h.b16 %v7433
    %v8068 = vunpack.c.l.b16 %v7434
    %v8069 = vunpack.c.h.b16 %v7434
    %v8070 = vunpack.c.l.b16 %v7435
    %v8071 = vunpack.c.h.b16 %v7435
    %v8072 = vunpack.c.l.b16 %v7436
    %v8073 = vunpack.c.h.b16 %v7436
    %v8074 = vunpack.c.l.b16 %v7437
    %v8075 = vunpack.c.h.b16 %v7437
    %v8076 = vunpack.c.l.b16 %v7438
    %v8077 = vunpack.c.h.b16 %v7438
    %v8078 = vunpack.c.l.b16 %v7439
    %v8079 = vunpack.c.h.b16 %v7439
    %v8080 = vunpack.c.l.b16 %v7440
    %v8081 = vunpack.c.h.b16 %v7440
    %v8082 = vunpack.c.l.b16 %v7441
    %v8083 = vunpack.c.h.b16 %v7441
    %v8084 = vunpack.c.l.b16 %v7442
    %v8085 = vunpack.c.h.b16 %v7442
    %v8086 = vunpack.c.l.b16 %v7443
    %v8087 = vunpack.c.h.b16 %v7443
    %v8088 = vunpack.c.l.b16 %v7444
    %v8089 = vunpack.c.h.b16 %v7444
    %v8090 = vunpack.c.l.b16 %v7445
    %v8091 = vunpack.c.h.b16 %v7445
    %v8092 = vunpack.c.l.b16 %v7446
    %v8093 = vunpack.c.h.b16 %v7446
    %v8094 = vunpack.c.l.b16 %v7447
    %v8095 = vunpack.c.h.b16 %v7447
    %v8096 = vunpack.c.l.b16 %v7448
    %v8097 = vunpack.c.h.b16 %v7448
    %v8098 = vunpack.c.l.b16 %v7449
    %v8099 = vunpack.c.h.b16 %v7449
    %v8100 = vunpack.c.l.b16 %v7450
    %v8101 = vunpack.c.h.b16 %v7450
    %v8102 = vunpack.c.l.b16 %v7451
    %v8103 = vunpack.c.h.b16 %v7451
    %v8104 = vunpack.c.l.b16 %v7452
    %v8105 = vunpack.c.h.b16 %v7452
    %v8106 = vunpack.c.l.b16 %v7453
    %v8107 = vunpack.c.h.b16 %v7453
    %v8108 = vunpack.c.l.b16 %v7454
    %v8109 = vunpack.c.h.b16 %v7454
    %v8110 = vunpack.c.l.b16 %v7455
    %v8111 = vunpack.c.h.b16 %v7455
    %v8112 = vunpack.c.l.b16 %v7456
    %v8113 = vunpack.c.h.b16 %v7456
    %v8114 = vunpack.c.l.b16 %v7457
    %v8115 = vunpack.c.h.b16 %v7457
    %v8116 = vunpack.c.l.b16 %v7458
    %v8117 = vunpack.c.h.b16 %v7458
    %v8118 = vunpack.c.l.b16 %v7459
    %v8119 = vunpack.c.h.b16 %v7459
    %v8120 = vunpack.c.l.b16 %v7460
    %v8121 = vunpack.c.h.b16 %v7460
    %v8122 = vunpack.c.l.b16 %v7461
    %v8123 = vunpack.c.h.b16 %v7461
    %v8124 = vunpack.c.l.b16 %v7462
    %v8125 = vunpack.c.h.b16 %v7462
    %v8126 = vunpack.c.l.b16 %v7463
    %v8127 = vunpack.c.h.b16 %v7463
    %v8128 = vunpack.c.l.b16 %v7464
    %v8129 = vunpack.c.h.b16 %v7464
    %v8130 = vunpack.c.l.b16 %v7465
    %v8131 = vunpack.c.h.b16 %v7465
    %v8132 = vunpack.c.l.b16 %v7466
    %v8133 = vunpack.c.h.b16 %v7466
    %v8134 = vunpack.c.l.b16 %v7467
    %v8135 = vunpack.c.h.b16 %v7467
    %v8136 = vunpack.c.l.b16 %v7468
    %v8137 = vunpack.c.h.b16 %v7468
    %v8138 = vunpack.c.l.b16 %v7469
    %v8139 = vunpack.c.h.b16 %v7469
    %v8140 = vunpack.c.l.b16 %v7470
    %v8141 = vunpack.c.h.b16 %v7470
    %v8142 = vunpack.c.l.b16 %v7471
    %v8143 = vunpack.c.h.b16 %v7471
    %v8144 = vunpack.c.l.b16 %v7472
    %v8145 = vunpack.c.h.b16 %v7472
    %v8146 = vunpack.c.l.b16 %v7473
    %v8147 = vunpack.c.h.b16 %v7473
    %v8148 = vunpack.c.l.b16 %v7474
    %v8149 = vunpack.c.h.b16 %v7474
    %v8150 = vunpack.c.l.b16 %v7475
    %v8151 = vunpack.c.h.b16 %v7475
    %v8152 = vunpack.c.l.b16 %v7476
    %v8153 = vunpack.c.h.b16 %v7476
    %v8154 = vunpack.c.l.b16 %v7477
    %v8155 = vunpack.c.h.b16 %v7477
    %v8156 = vunpack.c.l.b16 %v7478
    %v8157 = vunpack.c.h.b16 %v7478
    %v8158 = vunpack.c.l.b16 %v7479
    %v8159 = vunpack.c.h.b16 %v7479
    %v8160 = vunpack.c.l.b16 %v7480
    %v8161 = vunpack.c.h.b16 %v7480
    %v8162 = vunpack.c.l.b16 %v7481
    %v8163 = vunpack.c.h.b16 %v7481
    %v8164 = vunpack.c.l.b16 %v7482
    %v8165 = vunpack.c.h.b16 %v7482
    %v8166 = vunpack.c.l.b16 %v7483
    %v8167 = vunpack.c.h.b16 %v7483
    %v8168 = vunpack.c.l.b16 %v7484
    %v8169 = vunpack.c.h.b16 %v7484
    %v8170 = vunpack.c.l.b16 %v7485
    %v8171 = vunpack.c.h.b16 %v7485
    %v8172 = vunpack.c.l.b16 %v7486
    %v8173 = vunpack.c.h.b16 %v7486
    %v8174 = vunpack.c.l.b16 %v7487
    %v8175 = vunpack.c.h.b16 %v7487
    %v8176 = vunpack.c.l.b16 %v7488
    %v8177 = vunpack.c.h.b16 %v7488
    %v8178 = vunpack.c.l.b16 %v7489
    %v8179 = vunpack.c.h.b16 %v7489
    %v8180 = vunpack.c.l.b16 %v7490
    %v8181 = vunpack.c.h.b16 %v7490
    %v8182 = vunpack.c.l.b16 %v7491
    %v8183 = vunpack.c.h.b16 %v7491
    %v8184 = vunpack.c.l.b16 %v7492
    %v8185 = vunpack.c.h.b16 %v7492
    %v8186 = vunpack.c.l.b16 %v7493
    %v8187 = vunpack.c.h.b16 %v7493
    %v8188 = vunpack.c.l.b16 %v7494
    %v8189 = vunpack.c.h.b16 %v7494
    %v8190 = vunpack.c.l.b16 %v7495
    %v8191 = vunpack.c.h.b16 %v7495
    %v8192 = vunpack.c.l.b16 %v7496
    %v8193 = vunpack.c.h.b16 %v7496
    %v8194 = vunpack.c.l.b16 %v7497
    %v8195 = vunpack.c.h.b16 %v7497
    %v8196 = vunpack.c.l.b16 %v7498
    %v8197 = vunpack.c.h.b16 %v7498
    %v8198 = vunpack.c.l.b16 %v7499
    %v8199 = vunpack.c.h.b16 %v7499
    %v8200 = vunpack.c.l.b16 %v7500
    %v8201 = vunpack.c.h.b16 %v7500
    %v8202 = vunpack.c.l.b16 %v7501
    %v8203 = vunpack.c.h.b16 %v7501
    %v8204 = vunpack.c.l.b16 %v7502
    %v8205 = vunpack.c.h.b16 %v7502
    %v8206 = vunpack.c.l.b16 %v7503
    %v8207 = vunpack.c.h.b16 %v7503
    %v8208 = vunpack.c.l.b16 %v7504
    %v8209 = vunpack.c.h.b16 %v7504
    %v8210 = vunpack.c.l.b16 %v7505
    %v8211 = vunpack.c.h.b16 %v7505
    %v8212 = vunpack.c.l.b16 %v7506
    %v8213 = vunpack.c.h.b16 %v7506
    %v8214 = vunpack.c.l.b16 %v7507
    %v8215 = vunpack.c.h.b16 %v7507
    %v8216 = vunpack.c.l.b16 %v7508
    %v8217 = vunpack.c.h.b16 %v7508
    %v8218 = vunpack.c.l.b16 %v7509
    %v8219 = vunpack.c.h.b16 %v7509
    %v8220 = vunpack.c.l.b16 %v7510
    %v8221 = vunpack.c.h.b16 %v7510
    %v8222 = vunpack.c.l.b16 %v7511
    %v8223 = vunpack.c.h.b16 %v7511
    %v8224 = vunpack.c.l.b16 %v7512
    %v8225 = vunpack.c.h.b16 %v7512
    %v8226 = vunpack.c.l.b16 %v7513
    %v8227 = vunpack.c.h.b16 %v7513
    %v8228 = vunpack.c.l.b16 %v7514
    %v8229 = vunpack.c.h.b16 %v7514
    %v8230 = vunpack.c.l.b16 %v7515
    %v8231 = vunpack.c.h.b16 %v7515
    %v8232 = vunpack.c.l.b16 %v7516
    %v8233 = vunpack.c.h.b16 %v7516
    %v8234 = vunpack.c.l.b16 %v7517
    %v8235 = vunpack.c.h.b16 %v7517
    %v8236 = vunpack.c.l.b16 %v7518
    %v8237 = vunpack.c.h.b16 %v7518
    %v8238 = vunpack.c.l.b16 %v7519
    %v8239 = vunpack.c.h.b16 %v7519
    %v8240 = vunpack.c.l.b16 %v7520
    %v8241 = vunpack.c.h.b16 %v7520
    %v8242 = vunpack.c.l.b16 %v7521
    %v8243 = vunpack.c.h.b16 %v7521
    %v8244 = vunpack.c.l.b16 %v7522
    %v8245 = vunpack.c.h.b16 %v7522
    %v8246 = vunpack.c.l.b16 %v7523
    %v8247 = vunpack.c.h.b16 %v7523
    %v8248 = vunpack.c.l.b16 %v7524
    %v8249 = vunpack.c.h.b16 %v7524
    %v8250 = vunpack.c.l.b16 %v7525
    %v8251 = vunpack.c.h.b16 %v7525
    %v8252 = vunpack.c.l.b16 %v7526
    %v8253 = vunpack.c.h.b16 %v7526
    %v8254 = vunpack.c.l.b16 %v7527
    %v8255 = vunpack.c.h.b16 %v7527
    %v8256 = vunpack.c.l.b16 %v7528
    %v8257 = vunpack.c.h.b16 %v7528
    %v8258 = vunpack.c.l.b16 %v7529
    %v8259 = vunpack.c.h.b16 %v7529
    %v8260 = vunpack.c.l.b16 %v7530
    %v8261 = vunpack.c.h.b16 %v7530
    %v8262 = vunpack.c.l.b16 %v7531
    %v8263 = vunpack.c.h.b16 %v7531
    %v8264 = vunpack.c.l.b16 %v7532
    %v8265 = vunpack.c.h.b16 %v7532
    %v8266 = vunpack.c.l.b16 %v7533
    %v8267 = vunpack.c.h.b16 %v7533
    %v8268 = vunpack.c.l.b16 %v7534
    %v8269 = vunpack.c.h.b16 %v7534
    %v8270 = vunpack.c.l.b16 %v7535
    %v8271 = vunpack.c.h.b16 %v7535
    %v8272 = vunpack.c.l.b16 %v7536
    %v8273 = vunpack.c.h.b16 %v7536
    %v8274 = vunpack.c.l.b16 %v7537
    %v8275 = vunpack.c.h.b16 %v7537
    %v8276 = vunpack.c.l.b16 %v7538
    %v8277 = vunpack.c.h.b16 %v7538
    %v8278 = vunpack.c.l.b16 %v7539
    %v8279 = vunpack.c.h.b16 %v7539
    %v8280 = vunpack.c.l.b16 %v7540
    %v8281 = vunpack.c.h.b16 %v7540
    %v8282 = vunpack.c.l.b16 %v7541
    %v8283 = vunpack.c.h.b16 %v7541
    %v8284 = vunpack.c.l.b16 %v7542
    %v8285 = vunpack.c.h.b16 %v7542
    %v8286 = vunpack.c.l.b16 %v7543
    %v8287 = vunpack.c.h.b16 %v7543
    %v8288 = vunpack.c.l.b16 %v7544
    %v8289 = vunpack.c.h.b16 %v7544
    %v8290 = vunpack.c.l.b16 %v7545
    %v8291 = vunpack.c.h.b16 %v7545
    %v8292 = vunpack.c.l.b16 %v7546
    %v8293 = vunpack.c.h.b16 %v7546
    %v8294 = vunpack.c.l.b16 %v7547
    %v8295 = vunpack.c.h.b16 %v7547
    %v8296 = vunpack.c.l.b16 %v7548
    %v8297 = vunpack.c.h.b16 %v7548
    %v8298 = vunpack.c.l.b16 %v7549
    %v8299 = vunpack.c.h.b16 %v7549
    %v8300 = vunpack.c.l.b16 %v7550
    %v8301 = vunpack.c.h.b16 %v7550
    %v8302 = vunpack.c.l.b16 %v7551
    %v8303 = vunpack.c.h.b16 %v7551
    %v8304 = vunpack.c.l.b16 %v7552
    %v8305 = vunpack.c.h.b16 %v7552
    %v8306 = vunpack.c.l.b16 %v7553
    %v8307 = vunpack.c.h.b16 %v7553
    %v8308 = vunpack.c.l.b16 %v7554
    %v8309 = vunpack.c.h.b16 %v7554
    %v8310 = vunpack.c.l.b16 %v7555
    %v8311 = vunpack.c.h.b16 %v7555
    %v8312 = vunpack.c.l.b16 %v7556
    %v8313 = vunpack.c.h.b16 %v7556
    %v8314 = vunpack.c.l.b16 %v7557
    %v8315 = vunpack.c.h.b16 %v7557
    %v8316 = vunpack.c.l.b16 %v7558
    %v8317 = vunpack.c.h.b16 %v7558
    %v8318 = vunpack.c.l.b16 %v7559
    %v8319 = vunpack.c.h.b16 %v7559
    %v8320 = vunpack.c.l.b16 %v7560
    %v8321 = vunpack.c.h.b16 %v7560
    %v8322 = vunpack.c.l.b16 %v7561
    %v8323 = vunpack.c.h.b16 %v7561
    %v8324 = vunpack.c.l.b16 %v7562
    %v8325 = vunpack.c.h.b16 %v7562
    %v8326 = vunpack.c.l.b16 %v7563
    %v8327 = vunpack.c.h.b16 %v7563
    %v8328 = vunpack.c.l.b16 %v7564
    %v8329 = vunpack.c.h.b16 %v7564
    %v8330 = vunpack.c.l.b16 %v7565
    %v8331 = vunpack.c.h.b16 %v7565
    %v8332 = vunpack.c.l.b16 %v7566
    %v8333 = vunpack.c.h.b16 %v7566
    %v8334 = vunpack.c.l.b16 %v7567
    %v8335 = vunpack.c.h.b16 %v7567
    %v8336 = vunpack.c.l.b16 %v7568
    %v8337 = vunpack.c.h.b16 %v7568
    %v8338 = vunpack.c.l.b16 %v7569
    %v8339 = vunpack.c.h.b16 %v7569
    %v8340 = vunpack.c.l.b16 %v7570
    %v8341 = vunpack.c.h.b16 %v7570
    %v8342 = vunpack.c.l.b16 %v7571
    %v8343 = vunpack.c.h.b16 %v7571
    %v8344 = vunpack.c.l.b16 %v7572
    %v8345 = vunpack.c.h.b16 %v7572
    %v8346 = vunpack.c.l.b16 %v7573
    %v8347 = vunpack.c.h.b16 %v7573
    %v8348 = vunpack.c.l.b16 %v7574
    %v8349 = vunpack.c.h.b16 %v7574
    %v8350 = vunpack.c.l.b16 %v7575
    %v8351 = vunpack.c.h.b16 %v7575
    %v8352 = vunpack.c.l.b16 %v7576
    %v8353 = vunpack.c.h.b16 %v7576
    %v8354 = vunpack.c.l.b16 %v7577
    %v8355 = vunpack.c.h.b16 %v7577
    %v8356 = vunpack.c.l.b16 %v7578
    %v8357 = vunpack.c.h.b16 %v7578
    %v8358 = vunpack.c.l.b16 %v7579
    %v8359 = vunpack.c.h.b16 %v7579
    %v8360 = vunpack.c.l.b16 %v7580
    %v8361 = vunpack.c.h.b16 %v7580
    %v8362 = vunpack.c.l.b16 %v7581
    %v8363 = vunpack.c.h.b16 %v7581
    %v8364 = vunpack.c.l.b16 %v7582
    %v8365 = vunpack.c.h.b16 %v7582
    %v8366 = vunpack.c.l.b16 %v7583
    %v8367 = vunpack.c.h.b16 %v7583
    %v8368 = vunpack.c.l.b16 %v7584
    %v8369 = vunpack.c.h.b16 %v7584
    %v8370 = vunpack.c.l.b16 %v7585
    %v8371 = vunpack.c.h.b16 %v7585
    %v8372 = vunpack.c.l.b16 %v7586
    %v8373 = vunpack.c.h.b16 %v7586
    %v8374 = vunpack.c.l.b16 %v7587
    %v8375 = vunpack.c.h.b16 %v7587
    %v8376 = vunpack.c.l.b16 %v7588
    %v8377 = vunpack.c.h.b16 %v7588
    %v8378 = vunpack.c.l.b16 %v7589
    %v8379 = vunpack.c.h.b16 %v7589
    %v8380 = vunpack.c.l.b16 %v7590
    %v8381 = vunpack.c.h.b16 %v7590
    %v8382 = vunpack.c.l.b16 %v7591
    %v8383 = vunpack.c.h.b16 %v7591
    %v8384 = vunpack.c.l.b16 %v7592
    %v8385 = vunpack.c.h.b16 %v7592
    %v8386 = vunpack.c.l.b16 %v7593
    %v8387 = vunpack.c.h.b16 %v7593
    %v8388 = vunpack.c.l.b16 %v7594
    %v8389 = vunpack.c.h.b16 %v7594
    %v8390 = vunpack.c.l.b16 %v7595
    %v8391 = vunpack.c.h.b16 %v7595
    %v8392 = vunpack.c.l.b16 %v7596
    %v8393 = vunpack.c.h.b16 %v7596
    %v8394 = vunpack.c.l.b16 %v7597
    %v8395 = vunpack.c.h.b16 %v7597
    %v8396 = vunpack.c.l.b16 %v7598
    %v8397 = vunpack.c.h.b16 %v7598
    %v8398 = vunpack.c.l.b16 %v7599
    %v8399 = vunpack.c.h.b16 %v7599
    %v8400 = vunpack.c.l.b16 %v7600
    %v8401 = vunpack.c.h.b16 %v7600
    %v8402 = vunpack.c.l.b16 %v7601
    %v8403 = vunpack.c.h.b16 %v7601
    %v8404 = vunpack.c.l.b16 %v7602
    %v8405 = vunpack.c.h.b16 %v7602
    %v8406 = vunpack.c.l.b16 %v7603
    %v8407 = vunpack.c.h.b16 %v7603
    %v8408 = vunpack.c.l.b16 %v7604
    %v8409 = vunpack.c.h.b16 %v7604
    %v8410 = vunpack.c.l.b16 %v7605
    %v8411 = vunpack.c.h.b16 %v7605
    %v8412 = vunpack.c.l.b16 %v7606
    %v8413 = vunpack.c.h.b16 %v7606
    %v8414 = vunpack.c.l.b16 %v7607
    %v8415 = vunpack.c.h.b16 %v7607
    %v8416 = vunpack.c.l.b16 %v7608
    %v8417 = vunpack.c.h.b16 %v7608
    %v8418 = vunpack.c.l.b16 %v7609
    %v8419 = vunpack.c.h.b16 %v7609
    %v8420 = vunpack.c.l.b16 %v7610
    %v8421 = vunpack.c.h.b16 %v7610
    %v8422 = vunpack.c.l.b16 %v7611
    %v8423 = vunpack.c.h.b16 %v7611
    %v8424 = vunpack.c.l.b16 %v7612
    %v8425 = vunpack.c.h.b16 %v7612
    %v8426 = vunpack.c.l.b16 %v7613
    %v8427 = vunpack.c.h.b16 %v7613
    %v8428 = vpack.c.b16 %v7924, %v7916
    %v8429 = vpack.c.b16 %v7925, %v7917
    %v8430 = vpack.c.b16 %v7926, %v7918
    %v8431 = vpack.c.b16 %v7927, %v7919
    %v8432 = vpack.c.b16 %v7928, %v7920
    %v8433 = vpack.c.b16 %v7929, %v7921
    %v8434 = vpack.c.b16 %v7930, %v7922
    %v8435 = vpack.c.b16 %v7931, %v7923
    %v8436 = vpack.c.b16 %v7940, %v7932
    %v8437 = vpack.c.b16 %v7941, %v7933
    %v8438 = vpack.c.b16 %v7942, %v7934
    %v8439 = vpack.c.b16 %v7943, %v7935
    %v8440 = vpack.c.b16 %v7944, %v7936
    %v8441 = vpack.c.b16 %v7945, %v7937
    %v8442 = vpack.c.b16 %v7946, %v7938
    %v8443 = vpack.c.b16 %v7947, %v7939
    %v8444 = vpack.c.b16 %v7956, %v7948
    %v8445 = vpack.c.b16 %v7957, %v7949
    %v8446 = vpack.c.b16 %v7958, %v7950
    %v8447 = vpack.c.b16 %v7959, %v7951
    %v8448 = vpack.c.b16 %v7960, %v7952
    %v8449 = vpack.c.b16 %v7961, %v7953
    %v8450 = vpack.c.b16 %v7962, %v7954
    %v8451 = vpack.c.b16 %v7963, %v7955
    %v8452 = vpack.c.b16 %v7972, %v7964
    %v8453 = vpack.c.b16 %v7973, %v7965
    %v8454 = vpack.c.b16 %v7974, %v7966
    %v8455 = vpack.c.b16 %v7975, %v7967
    %v8456 = vpack.c.b16 %v7976, %v7968
    %v8457 = vpack.c.b16 %v7977, %v7969
    %v8458 = vpack.c.b16 %v7978, %v7970
    %v8459 = vpack.c.b16 %v7979, %v7971
    %v8460 = vpack.c.b16 %v7988, %v7980
    %v8461 = vpack.c.b16 %v7989, %v7981
    %v8462 = vpack.c.b16 %v7990, %v7982
    %v8463 = vpack.c.b16 %v7991, %v7983
    %v8464 = vpack.c.b16 %v7992, %v7984
    %v8465 = vpack.c.b16 %v7993, %v7985
    %v8466 = vpack.c.b16 %v7994, %v7986
    %v8467 = vpack.c.b16 %v7995, %v7987
    %v8468 = vpack.c.b16 %v8004, %v7996
    %v8469 = vpack.c.b16 %v8005, %v7997
    %v8470 = vpack.c.b16 %v8006, %v7998
    %v8471 = vpack.c.b16 %v8007, %v7999
    %v8472 = vpack.c.b16 %v8008, %v8000
    %v8473 = vpack.c.b16 %v8009, %v8001
    %v8474 = vpack.c.b16 %v8010, %v8002
    %v8475 = vpack.c.b16 %v8011, %v8003
    %v8476 = vpack.c.b16 %v8020, %v8012
    %v8477 = vpack.c.b16 %v8021, %v8013
    %v8478 = vpack.c.b16 %v8022, %v8014
    %v8479 = vpack.c.b16 %v8023, %v8015
    %v8480 = vpack.c.b16 %v8024, %v8016
    %v8481 = vpack.c.b16 %v8025, %v8017
    %v8482 = vpack.c.b16 %v8026, %v8018
    %v8483 = vpack.c.b16 %v8027, %v8019
    %v8484 = vpack.c.b16 %v8036, %v8028
    %v8485 = vpack.c.b16 %v8037, %v8029
    %v8486 = vpack.c.b16 %v8038, %v8030
    %v8487 = vpack.c.b16 %v8039, %v8031
    %v8488 = vpack.c.b16 %v8040, %v8032
    %v8489 = vpack.c.b16 %v8041, %v8033
    %v8490 = vpack.c.b16 %v8042, %v8034
    %v8491 = vpack.c.b16 %v8043, %v8035
    %v8492 = vpack.c.b16 %v8052, %v8044
    %v8493 = vpack.c.b16 %v8053, %v8045
    %v8494 = vpack.c.b16 %v8054, %v8046
    %v8495 = vpack.c.b16 %v8055, %v8047
    %v8496 = vpack.c.b16 %v8056, %v8048
    %v8497 = vpack.c.b16 %v8057, %v8049
    %v8498 = vpack.c.b16 %v8058, %v8050
    %v8499 = vpack.c.b16 %v8059, %v8051
    %v8500 = vpack.c.b16 %v8068, %v8060
    %v8501 = vpack.c.b16 %v8069, %v8061
    %v8502 = vpack.c.b16 %v8070, %v8062
    %v8503 = vpack.c.b16 %v8071, %v8063
    %v8504 = vpack.c.b16 %v8072, %v8064
    %v8505 = vpack.c.b16 %v8073, %v8065
    %v8506 = vpack.c.b16 %v8074, %v8066
    %v8507 = vpack.c.b16 %v8075, %v8067
    %v8508 = vpack.c.b16 %v8084, %v8076
    %v8509 = vpack.c.b16 %v8085, %v8077
    %v8510 = vpack.c.b16 %v8086, %v8078
    %v8511 = vpack.c.b16 %v8087, %v8079
    %v8512 = vpack.c.b16 %v8088, %v8080
    %v8513 = vpack.c.b16 %v8089, %v8081
    %v8514 = vpack.c.b16 %v8090, %v8082
    %v8515 = vpack.c.b16 %v8091, %v8083
    %v8516 = vpack.c.b16 %v8100, %v8092
    %v8517 = vpack.c.b16 %v8101, %v8093
    %v8518 = vpack.c.b16 %v8102, %v8094
    %v8519 = vpack.c.b16 %v8103, %v8095
    %v8520 = vpack.c.b16 %v8104, %v8096
    %v8521 = vpack.c.b16 %v8105, %v8097
    %v8522 = vpack.c.b16 %v8106, %v8098
    %v8523 = vpack.c.b16 %v8107, %v8099
    %v8524 = vpack.c.b16 %v8116, %v8108
    %v8525 = vpack.c.b16 %v8117, %v8109
    %v8526 = vpack.c.b16 %v8118, %v8110
    %v8527 = vpack.c.b16 %v8119, %v8111
    %v8528 = vpack.c.b16 %v8120, %v8112
    %v8529 = vpack.c.b16 %v8121, %v8113
    %v8530 = vpack.c.b16 %v8122, %v8114
    %v8531 = vpack.c.b16 %v8123, %v8115
    %v8532 = vpack.c.b16 %v8132, %v8124
    %v8533 = vpack.c.b16 %v8133, %v8125
    %v8534 = vpack.c.b16 %v8134, %v8126
    %v8535 = vpack.c.b16 %v8135, %v8127
    %v8536 = vpack.c.b16 %v8136, %v8128
    %v8537 = vpack.c.b16 %v8137, %v8129
    %v8538 = vpack.c.b16 %v8138, %v8130
    %v8539 = vpack.c.b16 %v8139, %v8131
    %v8540 = vpack.c.b16 %v8148, %v8140
    %v8541 = vpack.c.b16 %v8149, %v8141
    %v8542 = vpack.c.b16 %v8150, %v8142
    %v8543 = vpack.c.b16 %v8151, %v8143
    %v8544 = vpack.c.b16 %v8152, %v8144
    %v8545 = vpack.c.b16 %v8153, %v8145
    %v8546 = vpack.c.b16 %v8154, %v8146
    %v8547 = vpack.c.b16 %v8155, %v8147
    %v8548 = vpack.c.b16 %v8164, %v8156
    %v8549 = vpack.c.b16 %v8165, %v8157
    %v8550 = vpack.c.b16 %v8166, %v8158
    %v8551 = vpack.c.b16 %v8167, %v8159
    %v8552 = vpack.c.b16 %v8168, %v8160
    %v8553 = vpack.c.b16 %v8169, %v8161
    %v8554 = vpack.c.b16 %v8170, %v8162
    %v8555 = vpack.c.b16 %v8171, %v8163
    %v8556 = vpack.c.b16 %v8180, %v8172
    %v8557 = vpack.c.b16 %v8181, %v8173
    %v8558 = vpack.c.b16 %v8182, %v8174
    %v8559 = vpack.c.b16 %v8183, %v8175
    %v8560 = vpack.c.b16 %v8184, %v8176
    %v8561 = vpack.c.b16 %v8185, %v8177
    %v8562 = vpack.c.b16 %v8186, %v8178
    %v8563 = vpack.c.b16 %v8187, %v8179
    %v8564 = vpack.c.b16 %v8196, %v8188
    %v8565 = vpack.c.b16 %v8197, %v8189
    %v8566 = vpack.c.b16 %v8198, %v8190
    %v8567 = vpack.c.b16 %v8199, %v8191
    %v8568 = vpack.c.b16 %v8200, %v8192
    %v8569 = vpack.c.b16 %v8201, %v8193
    %v8570 = vpack.c.b16 %v8202, %v8194
    %v8571 = vpack.c.b16 %v8203, %v8195
    %v8572 = vpack.c.b16 %v8212, %v8204
    %v8573 = vpack.c.b16 %v8213, %v8205
    %v8574 = vpack.c.b16 %v8214, %v8206
    %v8575 = vpack.c.b16 %v8215, %v8207
    %v8576 = vpack.c.b16 %v8216, %v8208
    %v8577 = vpack.c.b16 %v8217, %v8209
    %v8578 = vpack.c.b16 %v8218, %v8210
    %v8579 = vpack.c.b16 %v8219, %v8211
    %v8580 = vpack.c.b16 %v8228, %v8220
    %v8581 = vpack.c.b16 %v8229, %v8221
    %v8582 = vpack.c.b16 %v8230, %v8222
    %v8583 = vpack.c.b16 %v8231, %v8223
    %v8584 = vpack.c.b16 %v8232, %v8224
    %v8585 = vpack.c.b16 %v8233, %v8225
    %v8586 = vpack.c.b16 %v8234, %v8226
    %v8587 = vpack.c.b16 %v8235, %v8227
    %v8588 = vpack.c.b16 %v8244, %v8236
    %v8589 = vpack.c.b16 %v8245, %v8237
    %v8590 = vpack.c.b16 %v8246, %v8238
    %v8591 = vpack.c.b16 %v8247, %v8239
    %v8592 = vpack.c.b16 %v8248, %v8240
    %v8593 = vpack.c.b16 %v8249, %v8241
    %v8594 = vpack.c.b16 %v8250, %v8242
    %v8595 = vpack.c.b16 %v8251, %v8243
    %v8596 = vpack.c.b16 %v8260, %v8252
    %v8597 = vpack.c.b16 %v8261, %v8253
    %v8598 = vpack.c.b16 %v8262, %v8254
    %v8599 = vpack.c.b16 %v8263, %v8255
    %v8600 = vpack.c.b16 %v8264, %v8256
    %v8601 = vpack.c.b16 %v8265, %v8257
    %v8602 = vpack.c.b16 %v8266, %v8258
    %v8603 = vpack.c.b16 %v8267, %v8259
    %v8604 = vpack.c.b16 %v8276, %v8268
    %v8605 = vpack.c.b16 %v8277, %v8269
    %v8606 = vpack.c.b16 %v8278, %v8270
    %v8607 = vpack.c.b16 %v8279, %v8271
    %v8608 = vpack.c.b16 %v8280, %v8272
    %v8609 = vpack.c.b16 %v8281, %v8273
    %v8610 = vpack.c.b16 %v8282, %v8274
    %v8611 = vpack.c.b16 %v8283, %v8275
    %v8612 = vpack.c.b16 %v8292, %v8284
    %v8613 = vpack.c.b16 %v8293, %v8285
    %v8614 = vpack.c.b16 %v8294, %v8286
    %v8615 = vpack.c.b16 %v8295, %v8287
    %v8616 = vpack.c.b16 %v8296, %v8288
    %v8617 = vpack.c.b16 %v8297, %v8289
    %v8618 = vpack.c.b16 %v8298, %v8290
    %v8619 = vpack.c.b16 %v8299, %v8291
    %v8620 = vpack.c.b16 %v8308, %v8300
    %v8621 = vpack.c.b16 %v8309, %v8301
    %v8622 = vpack.c.b16 %v8310, %v8302
    %v8623 = vpack.c.b16 %v8311, %v8303
    %v8624 = vpack.c.b16 %v8312, %v8304
    %v8625 = vpack.c.b16 %v8313, %v8305
    %v8626 = vpack.c.b16 %v8314, %v8306
    %v8627 = vpack.c.b16 %v8315, %v8307
    %v8628 = vpack.c.b16 %v8324, %v8316
    %v8629 = vpack.c.b16 %v8325, %v8317
    %v8630 = vpack.c.b16 %v8326, %v8318
    %v8631 = vpack.c.b16 %v8327, %v8319
    %v8632 = vpack.c.b16 %v8328, %v8320
    %v8633 = vpack.c.b16 %v8329, %v8321
    %v8634 = vpack.c.b16 %v8330, %v8322
    %v8635 = vpack.c.b16 %v8331, %v8323
    %v8636 = vpack.c.b16 %v8340, %v8332
    %v8637 = vpack.c.b16 %v8341, %v8333
    %v8638 = vpack.c.b16 %v8342, %v8334
    %v8639 = vpack.c.b16 %v8343, %v8335
    %v8640 = vpack.c.b16 %v8344, %v8336
    %v8641 = vpack.c.b16 %v8345, %v8337
    %v8642 = vpack.c.b16 %v8346, %v8338
    %v8643 = vpack.c.b16 %v8347, %v8339
    %v8644 = vpack.c.b16 %v8356, %v8348
    %v8645 = vpack.c.b16 %v8357, %v8349
    %v8646 = vpack.c.b16 %v8358, %v8350
    %v8647 = vpack.c.b16 %v8359, %v8351
    %v8648 = vpack.c.b16 %v8360, %v8352
    %v8649 = vpack.c.b16 %v8361, %v8353
    %v8650 = vpack.c.b16 %v8362, %v8354
    %v8651 = vpack.c.b16 %v8363, %v8355
    %v8652 = vpack.c.b16 %v8372, %v8364
    %v8653 = vpack.c.b16 %v8373, %v8365
    %v8654 = vpack.c.b16 %v8374, %v8366
    %v8655 = vpack.c.b16 %v8375, %v8367
    %v8656 = vpack.c.b16 %v8376, %v8368
    %v8657 = vpack.c.b16 %v8377, %v8369
    %v8658 = vpack.c.b16 %v8378, %v8370
    %v8659 = vpack.c.b16 %v8379, %v8371
    %v8660 = vpack.c.b16 %v8388, %v8380
    %v8661 = vpack.c.b16 %v8389, %v8381
    %v8662 = vpack.c.b16 %v8390, %v8382
    %v8663 = vpack.c.b16 %v8391, %v8383
    %v8664 = vpack.c.b16 %v8392, %v8384
    %v8665 = vpack.c.b16 %v8393, %v8385
    %v8666 = vpack.c.b16 %v8394, %v8386
    %v8667 = vpack.c.b16 %v8395, %v8387
    %v8668 = vpack.c.b16 %v8404, %v8396
    %v8669 = vpack.c.b16 %v8405, %v8397
    %v8670 = vpack.c.b16 %v8406, %v8398
    %v8671 = vpack.c.b16 %v8407, %v8399
    %v8672 = vpack.c.b16 %v8408, %v8400
    %v8673 = vpack.c.b16 %v8409, %v8401
    %v8674 = vpack.c.b16 %v8410, %v8402
    %v8675 = vpack.c.b16 %v8411, %v8403
    %v8676 = vpack.c.b16 %v8420, %v8412
    %v8677 = vpack.c.b16 %v8421, %v8413
    %v8678 = vpack.c.b16 %v8422, %v8414
    %v8679 = vpack.c.b16 %v8423, %v8415
    %v8680 = vpack.c.b16 %v8424, %v8416
    %v8681 = vpack.c.b16 %v8425, %v8417
    %v8682 = vpack.c.b16 %v8426, %v8418
    %v8683 = vpack.c.b16 %v8427, %v8419
    %8940 = vmatprep.subr.bf16.mxu0 %v8429
    %8941 = vmatpush1.bf16.msra.mxu0 %v8428
    %8942 = vmatprep.subr.bf16.mxu0 %v8437
    %8943 = vmatpush1.bf16.msra.mxu0 %v8436
    %8944 = vmatprep.subr.bf16.mxu0 %v8445
    %8945 = vmatpush1.bf16.msra.mxu0 %v8444
    %8946 = vmatprep.subr.bf16.mxu0 %v8453
    %8947 = vmatpush1.bf16.msra.mxu0 %v8452
    %8948 = vmatprep.subr.bf16.mxu0 %v8461
    %8949 = vmatpush1.bf16.msra.mxu0 %v8460
    %8950 = vmatprep.subr.bf16.mxu0 %v8469
    %8951 = vmatpush1.bf16.msra.mxu0 %v8468
    %8952 = vmatprep.subr.bf16.mxu0 %v8477
    %8953 = vmatpush1.bf16.msra.mxu0 %v8476
    %8954 = vmatprep.subr.bf16.mxu0 %v8485
    %8955 = vmatpush1.bf16.msra.mxu0 %v8484
    %8956 = vmatprep.subr.bf16.mxu0 %v8493
    %8957 = vmatpush1.bf16.msra.mxu0 %v8492
    %8958 = vmatprep.subr.bf16.mxu0 %v8501
    %8959 = vmatpush1.bf16.msra.mxu0 %v8500
    %8960 = vmatprep.subr.bf16.mxu0 %v8509
    %8961 = vmatpush1.bf16.msra.mxu0 %v8508
    %8962 = vmatprep.subr.bf16.mxu0 %v8517
    %8963 = vmatpush1.bf16.msra.mxu0 %v8516
    %8964 = vmatprep.subr.bf16.mxu0 %v8525
    %8965 = vmatpush1.bf16.msra.mxu0 %v8524
    %8966 = vmatprep.subr.bf16.mxu0 %v8533
    %8967 = vmatpush1.bf16.msra.mxu0 %v8532
    %8968 = vmatprep.subr.bf16.mxu0 %v8541
    %8969 = vmatpush1.bf16.msra.mxu0 %v8540
    %8970 = vmatprep.subr.bf16.mxu0 %v8549
    %8971 = vmatpush1.bf16.msra.mxu0 %v8548
    %8972 = vmatprep.mubr.bf16.mxu0 %v7616
    %8973 = vmatmul.mubr.bf16.gmra.mrb[0].mxu0 %v7615
    %v8974 = vpop.f32.mrb[0].mxu0
    %v8975 = vadd.f32 %v7623, %v8974
    %v8976 = vpop.f32.mrb[0].mxu0
    %v8977 = vadd.f32 %v7627, %v8976
    %v8978 = vpop.f32.mrb[0].mxu0
    %v8979 = vadd.f32 %v7623, %v8978
    %v8980 = vpop.f32.mrb[0].mxu0
    %v8981 = vadd.f32 %v7627, %v8980
    %8982 = vdwg.mxu0
    %8983 = vmatprep.subr.bf16.mxu0 %v8557
    %8984 = vmatpush1.bf16.msra.mxu0 %v8556
    %8985 = vmatprep.subr.bf16.mxu0 %v8565
    %8986 = vmatpush1.bf16.msra.mxu0 %v8564
    %8987 = vmatprep.subr.bf16.mxu0 %v8573
    %8988 = vmatpush1.bf16.msra.mxu0 %v8572
    %8989 = vmatprep.subr.bf16.mxu0 %v8581
    %8990 = vmatpush1.bf16.msra.mxu0 %v8580
    %8991 = vmatprep.subr.bf16.mxu0 %v8589
    %8992 = vmatpush1.bf16.msra.mxu0 %v8588
    %8993 = vmatprep.subr.bf16.mxu0 %v8597
    %8994 = vmatpush1.bf16.msra.mxu0 %v8596
    %8995 = vmatprep.subr.bf16.mxu0 %v8605
    %8996 = vmatpush1.bf16.msra.mxu0 %v8604
    %8997 = vmatprep.subr.bf16.mxu0 %v8613
    %8998 = vmatpush1.bf16.msra.mxu0 %v8612
    %8999 = vmatprep.subr.bf16.mxu0 %v8621
    %9000 = vmatpush1.bf16.msra.mxu0 %v8620
    %9001 = vmatprep.subr.bf16.mxu0 %v8629
    %9002 = vmatpush1.bf16.msra.mxu0 %v8628
    %9003 = vmatprep.subr.bf16.mxu0 %v8637
    %9004 = vmatpush1.bf16.msra.mxu0 %v8636
    %9005 = vmatprep.subr.bf16.mxu0 %v8645
    %9006 = vmatpush1.bf16.msra.mxu0 %v8644
    %9007 = vmatprep.subr.bf16.mxu0 %v8653
    %9008 = vmatpush1.bf16.msra.mxu0 %v8652
    %9009 = vmatprep.subr.bf16.mxu0 %v8661
    %9010 = vmatpush1.bf16.msra.mxu0 %v8660
    %9011 = vmatprep.subr.bf16.mxu0 %v8669
    %9012 = vmatpush1.bf16.msra.mxu0 %v8668
    %9013 = vmatprep.subr.bf16.mxu0 %v8677
    %9014 = vmatpush1.bf16.msra.mxu0 %v8676
    %9015 = vmatprep.mubr.bf16.mxu0 %v7618
    %9016 = vmatmul.mubr.bf16.gmra.mrb[0].mxu0 %v7617
    %v9017 = vpop.f32.mrb[0].mxu0
    %v9018 = vadd.f32 %v8975, %v9017
    %v9019 = vpop.f32.mrb[0].mxu0
    %v9020 = vadd.f32 %v8977, %v9019
    %v9021 = vpop.f32.mrb[0].mxu0
    %v9022 = vadd.f32 %v8979, %v9021
    %v9023 = vpop.f32.mrb[0].mxu0
    %v9024 = vadd.f32 %v8981, %v9023
    %9025 = vdwg.mxu0
    %9026 = vmatprep.subr.bf16.mxu0 %v8431
    %9027 = vmatpush1.bf16.msra.mxu0 %v8430
    %9028 = vmatprep.subr.bf16.mxu0 %v8439
    %9029 = vmatpush1.bf16.msra.mxu0 %v8438
    %9030 = vmatprep.subr.bf16.mxu0 %v8447
    %9031 = vmatpush1.bf16.msra.mxu0 %v8446
    %9032 = vmatprep.subr.bf16.mxu0 %v8455
    %9033 = vmatpush1.bf16.msra.mxu0 %v8454
    %9034 = vmatprep.subr.bf16.mxu0 %v8463
    %9035 = vmatpush1.bf16.msra.mxu0 %v8462
    %9036 = vmatprep.subr.bf16.mxu0 %v8471
    %9037 = vmatpush1.bf16.msra.mxu0 %v8470
    %9038 = vmatprep.subr.bf16.mxu0 %v8479
    %9039 = vmatpush1.bf16.msra.mxu0 %v8478
    %9040 = vmatprep.subr.bf16.mxu0 %v8487
    %9041 = vmatpush1.bf16.msra.mxu0 %v8486
    %9042 = vmatprep.subr.bf16.mxu0 %v8495
    %9043 = vmatpush1.bf16.msra.mxu0 %v8494
    %9044 = vmatprep.subr.bf16.mxu0 %v8503
    %9045 = vmatpush1.bf16.msra.mxu0 %v8502
    %9046 = vmatprep.subr.bf16.mxu0 %v8511
    %9047 = vmatpush1.bf16.msra.mxu0 %v8510
    %9048 = vmatprep.subr.bf16.mxu0 %v8519
    %9049 = vmatpush1.bf16.msra.mxu0 %v8518
    %9050 = vmatprep.subr.bf16.mxu0 %v8527
    %9051 = vmatpush1.bf16.msra.mxu0 %v8526
    %9052 = vmatprep.subr.bf16.mxu0 %v8535
    %9053 = vmatpush1.bf16.msra.mxu0 %v8534
    %9054 = vmatprep.subr.bf16.mxu0 %v8543
    %9055 = vmatpush1.bf16.msra.mxu0 %v8542
    %9056 = vmatprep.subr.bf16.mxu0 %v8551
    %9057 = vmatpush1.bf16.msra.mxu0 %v8550
    %9058 = vmatprep.mubr.bf16.mxu0 %v7616
    %9059 = vmatmul.mubr.bf16.gmra.mrb[0].mxu0 %v7615
    %v9060 = vpop.f32.mrb[0].mxu0
    %v9061 = vadd.f32 %v7631, %v9060
    %v9062 = vpop.f32.mrb[0].mxu0
    %v9063 = vadd.f32 %v7635, %v9062
    %v9064 = vpop.f32.mrb[0].mxu0
    %v9065 = vadd.f32 %v7631, %v9064
    %v9066 = vpop.f32.mrb[0].mxu0
    %v9067 = vadd.f32 %v7635, %v9066
    %9068 = vdwg.mxu0
    %9069 = vmatprep.subr.bf16.mxu0 %v8559
    %9070 = vmatpush1.bf16.msra.mxu0 %v8558
    %9071 = vmatprep.subr.bf16.mxu0 %v8567
    %9072 = vmatpush1.bf16.msra.mxu0 %v8566
    %9073 = vmatprep.subr.bf16.mxu0 %v8575
    %9074 = vmatpush1.bf16.msra.mxu0 %v8574
    %9075 = vmatprep.subr.bf16.mxu0 %v8583
    %9076 = vmatpush1.bf16.msra.mxu0 %v8582
    %9077 = vmatprep.subr.bf16.mxu0 %v8591
    %9078 = vmatpush1.bf16.msra.mxu0 %v8590
    %9079 = vmatprep.subr.bf16.mxu0 %v8599
    %9080 = vmatpush1.bf16.msra.mxu0 %v8598
    %9081 = vmatprep.subr.bf16.mxu0 %v8607
    %9082 = vmatpush1.bf16.msra.mxu0 %v8606
    %9083 = vmatprep.subr.bf16.mxu0 %v8615
    %9084 = vmatpush1.bf16.msra.mxu0 %v8614
    %9085 = vmatprep.subr.bf16.mxu0 %v8623
    %9086 = vmatpush1.bf16.msra.mxu0 %v8622
    %9087 = vmatprep.subr.bf16.mxu0 %v8631
    %9088 = vmatpush1.bf16.msra.mxu0 %v8630
    %9089 = vmatprep.subr.bf16.mxu0 %v8639
    %9090 = vmatpush1.bf16.msra.mxu0 %v8638
    %9091 = vmatprep.subr.bf16.mxu0 %v8647
    %9092 = vmatpush1.bf16.msra.mxu0 %v8646
    %9093 = vmatprep.subr.bf16.mxu0 %v8655
    %9094 = vmatpush1.bf16.msra.mxu0 %v8654
    %9095 = vmatprep.subr.bf16.mxu0 %v8663
    %9096 = vmatpush1.bf16.msra.mxu0 %v8662
    %9097 = vmatprep.subr.bf16.mxu0 %v8671
    %9098 = vmatpush1.bf16.msra.mxu0 %v8670
    %9099 = vmatprep.subr.bf16.mxu0 %v8679
    %9100 = vmatpush1.bf16.msra.mxu0 %v8678
    %9101 = vmatprep.mubr.bf16.mxu0 %v7618
    %9102 = vmatmul.mubr.bf16.gmra.mrb[0].mxu0 %v7617
    %v9103 = vpop.f32.mrb[0].mxu0
    %v9104 = vadd.f32 %v9061, %v9103
    %v9105 = vpop.f32.mrb[0].mxu0
    %v9106 = vadd.f32 %v9063, %v9105
    %v9107 = vpop.f32.mrb[0].mxu0
    %v9108 = vadd.f32 %v9065, %v9107
    %v9109 = vpop.f32.mrb[0].mxu0
    %v9110 = vadd.f32 %v9067, %v9109
    %9111 = vdwg.mxu0
    %9112 = vmatprep.subr.bf16.mxu0 %v8433
    %9113 = vmatpush1.bf16.msra.mxu0 %v8432
    %9114 = vmatprep.subr.bf16.mxu0 %v8441
    %9115 = vmatpush1.bf16.msra.mxu0 %v8440
    %9116 = vmatprep.subr.bf16.mxu0 %v8449
    %9117 = vmatpush1.bf16.msra.mxu0 %v8448
    %9118 = vmatprep.subr.bf16.mxu0 %v8457
    %9119 = vmatpush1.bf16.msra.mxu0 %v8456
    %9120 = vmatprep.subr.bf16.mxu0 %v8465
    %9121 = vmatpush1.bf16.msra.mxu0 %v8464
    %9122 = vmatprep.subr.bf16.mxu0 %v8473
    %9123 = vmatpush1.bf16.msra.mxu0 %v8472
    %9124 = vmatprep.subr.bf16.mxu0 %v8481
    %9125 = vmatpush1.bf16.msra.mxu0 %v8480
    %9126 = vmatprep.subr.bf16.mxu0 %v8489
    %9127 = vmatpush1.bf16.msra.mxu0 %v8488
    %9128 = vmatprep.subr.bf16.mxu0 %v8497
    %9129 = vmatpush1.bf16.msra.mxu0 %v8496
    %9130 = vmatprep.subr.bf16.mxu0 %v8505
    %9131 = vmatpush1.bf16.msra.mxu0 %v8504
    %9132 = vmatprep.subr.bf16.mxu0 %v8513
    %9133 = vmatpush1.bf16.msra.mxu0 %v8512
    %9134 = vmatprep.subr.bf16.mxu0 %v8521
    %9135 = vmatpush1.bf16.msra.mxu0 %v8520
    %9136 = vmatprep.subr.bf16.mxu0 %v8529
    %9137 = vmatpush1.bf16.msra.mxu0 %v8528
    %9138 = vmatprep.subr.bf16.mxu0 %v8537
    %9139 = vmatpush1.bf16.msra.mxu0 %v8536
    %9140 = vmatprep.subr.bf16.mxu0 %v8545
    %9141 = vmatpush1.bf16.msra.mxu0 %v8544
    %9142 = vmatprep.subr.bf16.mxu0 %v8553
    %9143 = vmatpush1.bf16.msra.mxu0 %v8552
    %9144 = vmatprep.mubr.bf16.mxu0 %v7616
    %9145 = vmatmul.mubr.bf16.gmra.mrb[0].mxu0 %v7615
    %v9146 = vpop.f32.mrb[0].mxu0
    %v9147 = vadd.f32 %v7639, %v9146
    %v9148 = vpop.f32.mrb[0].mxu0
    %v9149 = vadd.f32 %v7643, %v9148
    %v9150 = vpop.f32.mrb[0].mxu0
    %v9151 = vadd.f32 %v7639, %v9150
    %v9152 = vpop.f32.mrb[0].mxu0
    %v9153 = vadd.f32 %v7643, %v9152
    %9154 = vdwg.mxu0
    %9155 = vmatprep.subr.bf16.mxu0 %v8561
    %9156 = vmatpush1.bf16.msra.mxu0 %v8560
    %9157 = vmatprep.subr.bf16.mxu0 %v8569
    %9158 = vmatpush1.bf16.msra.mxu0 %v8568
    %9159 = vmatprep.subr.bf16.mxu0 %v8577
    %9160 = vmatpush1.bf16.msra.mxu0 %v8576
    %9161 = vmatprep.subr.bf16.mxu0 %v8585
    %9162 = vmatpush1.bf16.msra.mxu0 %v8584
    %9163 = vmatprep.subr.bf16.mxu0 %v8593
    %9164 = vmatpush1.bf16.msra.mxu0 %v8592
    %9165 = vmatprep.subr.bf16.mxu0 %v8601
    %9166 = vmatpush1.bf16.msra.mxu0 %v8600
    %9167 = vmatprep.subr.bf16.mxu0 %v8609
    %9168 = vmatpush1.bf16.msra.mxu0 %v8608
    %9169 = vmatprep.subr.bf16.mxu0 %v8617
    %9170 = vmatpush1.bf16.msra.mxu0 %v8616
    %9171 = vmatprep.subr.bf16.mxu0 %v8625
    %9172 = vmatpush1.bf16.msra.mxu0 %v8624
    %9173 = vmatprep.subr.bf16.mxu0 %v8633
    %9174 = vmatpush1.bf16.msra.mxu0 %v8632
    %9175 = vmatprep.subr.bf16.mxu0 %v8641
    %9176 = vmatpush1.bf16.msra.mxu0 %v8640
    %9177 = vmatprep.subr.bf16.mxu0 %v8649
    %9178 = vmatpush1.bf16.msra.mxu0 %v8648
    %9179 = vmatprep.subr.bf16.mxu0 %v8657
    %9180 = vmatpush1.bf16.msra.mxu0 %v8656
    %9181 = vmatprep.subr.bf16.mxu0 %v8665
    %9182 = vmatpush1.bf16.msra.mxu0 %v8664
    %9183 = vmatprep.subr.bf16.mxu0 %v8673
    %9184 = vmatpush1.bf16.msra.mxu0 %v8672
    %9185 = vmatprep.subr.bf16.mxu0 %v8681
    %9186 = vmatpush1.bf16.msra.mxu0 %v8680
    %9187 = vmatprep.mubr.bf16.mxu0 %v7618
    %9188 = vmatmul.mubr.bf16.gmra.mrb[0].mxu0 %v7617
    %v9189 = vpop.f32.mrb[0].mxu0
    %v9190 = vadd.f32 %v9147, %v9189
    %v9191 = vpop.f32.mrb[0].mxu0
    %v9192 = vadd.f32 %v9149, %v9191
    %v9193 = vpop.f32.mrb[0].mxu0
    %v9194 = vadd.f32 %v9151, %v9193
    %v9195 = vpop.f32.mrb[0].mxu0
    %v9196 = vadd.f32 %v9153, %v9195
    %9197 = vdwg.mxu0
    %9198 = vmatprep.subr.bf16.mxu0 %v8435
    %9199 = vmatpush1.bf16.msra.mxu0 %v8434
    %9200 = vmatprep.subr.bf16.mxu0 %v8443
    %9201 = vmatpush1.bf16.msra.mxu0 %v8442
    %9202 = vmatprep.subr.bf16.mxu0 %v8451
    %9203 = vmatpush1.bf16.msra.mxu0 %v8450
    %9204 = vmatprep.subr.bf16.mxu0 %v8459
    %9205 = vmatpush1.bf16.msra.mxu0 %v8458
    %9206 = vmatprep.subr.bf16.mxu0 %v8467
    %9207 = vmatpush1.bf16.msra.mxu0 %v8466
    %9208 = vmatprep.subr.bf16.mxu0 %v8475
    %9209 = vmatpush1.bf16.msra.mxu0 %v8474
    %9210 = vmatprep.subr.bf16.mxu0 %v8483
    %9211 = vmatpush1.bf16.msra.mxu0 %v8482
    %9212 = vmatprep.subr.bf16.mxu0 %v8491
    %9213 = vmatpush1.bf16.msra.mxu0 %v8490
    %9214 = vmatprep.subr.bf16.mxu0 %v8499
    %9215 = vmatpush1.bf16.msra.mxu0 %v8498
    %9216 = vmatprep.subr.bf16.mxu0 %v8507
    %9217 = vmatpush1.bf16.msra.mxu0 %v8506
    %9218 = vmatprep.subr.bf16.mxu0 %v8515
    %9219 = vmatpush1.bf16.msra.mxu0 %v8514
    %9220 = vmatprep.subr.bf16.mxu0 %v8523
    %9221 = vmatpush1.bf16.msra.mxu0 %v8522
    %9222 = vmatprep.subr.bf16.mxu0 %v8531
    %9223 = vmatpush1.bf16.msra.mxu0 %v8530
    %9224 = vmatprep.subr.bf16.mxu0 %v8539
    %9225 = vmatpush1.bf16.msra.mxu0 %v8538
    %9226 = vmatprep.subr.bf16.mxu0 %v8547
    %9227 = vmatpush1.bf16.msra.mxu0 %v8546
    %9228 = vmatprep.subr.bf16.mxu0 %v8555
    %9229 = vmatpush1.bf16.msra.mxu0 %v8554
    %9230 = vmatprep.mubr.bf16.mxu0 %v7616
    %9231 = vmatmul.mubr.bf16.gmra.mrb[0].mxu0 %v7615
    %v9232 = vpop.f32.mrb[0].mxu0
    %v9233 = vadd.f32 %v7647, %v9232
    %v9234 = vpop.f32.mrb[0].mxu0
    %v9235 = vadd.f32 %v7651, %v9234
    %v9236 = vpop.f32.mrb[0].mxu0
    %v9237 = vadd.f32 %v7647, %v9236
    %v9238 = vpop.f32.mrb[0].mxu0
    %v9239 = vadd.f32 %v7651, %v9238
    %9240 = vdwg.mxu0
    %9241 = vmatprep.subr.bf16.mxu0 %v8563
    %9242 = vmatpush1.bf16.msra.mxu0 %v8562
    %9243 = vmatprep.subr.bf16.mxu0 %v8571
    %9244 = vmatpush1.bf16.msra.mxu0 %v8570
    %9245 = vmatprep.subr.bf16.mxu0 %v8579
    %9246 = vmatpush1.bf16.msra.mxu0 %v8578
    %9247 = vmatprep.subr.bf16.mxu0 %v8587
    %9248 = vmatpush1.bf16.msra.mxu0 %v8586
    %9249 = vmatprep.subr.bf16.mxu0 %v8595
    %9250 = vmatpush1.bf16.msra.mxu0 %v8594
    %9251 = vmatprep.subr.bf16.mxu0 %v8603
    %9252 = vmatpush1.bf16.msra.mxu0 %v8602
    %9253 = vmatprep.subr.bf16.mxu0 %v8611
    %9254 = vmatpush1.bf16.msra.mxu0 %v8610
    %9255 = vmatprep.subr.bf16.mxu0 %v8619
    %9256 = vmatpush1.bf16.msra.mxu0 %v8618
    %9257 = vmatprep.subr.bf16.mxu0 %v8627
    %9258 = vmatpush1.bf16.msra.mxu0 %v8626
    %9259 = vmatprep.subr.bf16.mxu0 %v8635
    %9260 = vmatpush1.bf16.msra.mxu0 %v8634
    %9261 = vmatprep.subr.bf16.mxu0 %v8643
    %9262 = vmatpush1.bf16.msra.mxu0 %v8642
    %9263 = vmatprep.subr.bf16.mxu0 %v8651
    %9264 = vmatpush1.bf16.msra.mxu0 %v8650
    %9265 = vmatprep.subr.bf16.mxu0 %v8659
    %9266 = vmatpush1.bf16.msra.mxu0 %v8658
    %9267 = vmatprep.subr.bf16.mxu0 %v8667
    %9268 = vmatpush1.bf16.msra.mxu0 %v8666
    %9269 = vmatprep.subr.bf16.mxu0 %v8675
    %9270 = vmatpush1.bf16.msra.mxu0 %v8674
    %9271 = vmatprep.subr.bf16.mxu0 %v8683
    %9272 = vmatpush1.bf16.msra.mxu0 %v8682
    %9273 = vmatprep.mubr.bf16.mxu0 %v7618
    %9274 = vmatmul.mubr.bf16.gmra.mrb[0].mxu0 %v7617
    %v9275 = vpop.f32.mrb[0].mxu0
    %v9276 = vadd.f32 %v9233, %v9275
    %v9277 = vpop.f32.mrb[0].mxu0
    %v9278 = vadd.f32 %v9235, %v9277
    %v9279 = vpop.f32.mrb[0].mxu0
    %v9280 = vadd.f32 %v9237, %v9279
    %v9281 = vpop.f32.mrb[0].mxu0
    %v9282 = vadd.f32 %v9239, %v9281
    %9283 = vdwg.mxu0
    %v9284 = vmax.f32 %v9018, 0.0
    %v9285 = vmax.f32 %v9020, 0.0
    %v9286 = vmax.f32 %v9104, 0.0
    %v9287 = vmax.f32 %v9106, 0.0
    %v9288 = vmax.f32 %v9190, 0.0
    %v9289 = vmax.f32 %v9192, 0.0
    %v9290 = vmax.f32 %v9276, 0.0
    %v9291 = vmax.f32 %v9278, 0.0
    %v9292 = vmax.f32 %v9022, 0.0
    %v9293 = vmax.f32 %v9024, 0.0
    %v9294 = vmax.f32 %v9108, 0.0
    %v9295 = vmax.f32 %v9110, 0.0
    %v9296 = vmax.f32 %v9194, 0.0
    %v9297 = vmax.f32 %v9196, 0.0
    %v9298 = vmax.f32 %v9280, 0.0
    %v9299 = vmax.f32 %v9282, 0.0
    %v9300 = vld [vmem:[#allocation26] sm:$0xff]
    %v9301 = vld [vmem:[#allocation26 + $0x8] sm:$0xff]
    %v9302 = vld [vmem:[#allocation26 + $0x10] sm:$0xff]
    %v9303 = vld [vmem:[#allocation26 + $0x18] sm:$0xff]
    %v9304 = vld [vmem:[#allocation26 + $0x20] sm:$0xff]
    %v9305 = vld [vmem:[#allocation26 + $0x28] sm:$0xff]
    %v9306 = vld [vmem:[#allocation26 + $0x30] sm:$0xff]
    %v9307 = vld [vmem:[#allocation26 + $0x38] sm:$0xff]
    %v9308 = vld [vmem:[#allocation26 + $0x40] sm:$0xff]
    %v9309 = vld [vmem:[#allocation26 + $0x48] sm:$0xff]
    %v9310 = vld [vmem:[#allocation26 + $0x50] sm:$0xff]
    %v9311 = vld [vmem:[#allocation26 + $0x58] sm:$0xff]
    %v9312 = vld [vmem:[#allocation26 + $0x60] sm:$0xff]
    %v9313 = vld [vmem:[#allocation26 + $0x68] sm:$0xff]
    %v9314 = vld [vmem:[#allocation26 + $0x70] sm:$0xff]
    %v9315 = vld [vmem:[#allocation26 + $0x78] sm:$0xff]
    %v9316 = vld [vmem:[#allocation26 + $0x80] sm:$0xff]
    %v9317 = vld [vmem:[#allocation26 + $0x88] sm:$0xff]
    %v9318 = vld [vmem:[#allocation26 + $0x90] sm:$0xff]
    %v9319 = vld [vmem:[#allocation26 + $0x98] sm:$0xff]
    %v9320 = vld [vmem:[#allocation26 + $0xa0] sm:$0xff]
    %v9321 = vld [vmem:[#allocation26 + $0xa8] sm:$0xff]
    %v9322 = vld [vmem:[#allocation26 + $0xb0] sm:$0xff]
    %v9323 = vld [vmem:[#allocation26 + $0xb8] sm:$0xff]
    %v9324 = vld [vmem:[#allocation26 + $0xc0] sm:$0xff]
    %v9325 = vld [vmem:[#allocation26 + $0xc8] sm:$0xff]
    %v9326 = vld [vmem:[#allocation26 + $0xd0] sm:$0xff]
    %v9327 = vld [vmem:[#allocation26 + $0xd8] sm:$0xff]
    %v9328 = vld [vmem:[#allocation26 + $0xe0] sm:$0xff]
    %v9329 = vld [vmem:[#allocation26 + $0xe8] sm:$0xff]
    %v9330 = vld [vmem:[#allocation26 + $0xf0] sm:$0xff]
    %v9331 = vld [vmem:[#allocation26 + $0xf8] sm:$0xff]
    %v9332 = vld [vmem:[#allocation26 + $0x100] sm:$0xff]
    %v9333 = vld [vmem:[#allocation26 + $0x108] sm:$0xff]
    %v9334 = vld [vmem:[#allocation26 + $0x110] sm:$0xff]
    %v9335 = vld [vmem:[#allocation26 + $0x118] sm:$0xff]
    %v9336 = vld [vmem:[#allocation26 + $0x120] sm:$0xff]
    %v9337 = vld [vmem:[#allocation26 + $0x128] sm:$0xff]
    %v9338 = vld [vmem:[#allocation26 + $0x130] sm:$0xff]
    %v9339 = vld [vmem:[#allocation26 + $0x138] sm:$0xff]
    %v9340 = vld [vmem:[#allocation26 + $0x140] sm:$0xff]
    %v9341 = vld [vmem:[#allocation26 + $0x148] sm:$0xff]
    %v9342 = vld [vmem:[#allocation26 + $0x150] sm:$0xff]
    %v9343 = vld [vmem:[#allocation26 + $0x158] sm:$0xff]
    %v9344 = vld [vmem:[#allocation26 + $0x160] sm:$0xff]
    %v9345 = vld [vmem:[#allocation26 + $0x168] sm:$0xff]
    %v9346 = vld [vmem:[#allocation26 + $0x170] sm:$0xff]
    %v9347 = vld [vmem:[#allocation26 + $0x178] sm:$0xff]
    %v9348 = vld [vmem:[#allocation26 + $0x180] sm:$0xff]
    %v9349 = vld [vmem:[#allocation26 + $0x188] sm:$0xff]
    %v9350 = vld [vmem:[#allocation26 + $0x190] sm:$0xff]
    %v9351 = vld [vmem:[#allocation26 + $0x198] sm:$0xff]
    %v9352 = vld [vmem:[#allocation26 + $0x1a0] sm:$0xff]
    %v9353 = vld [vmem:[#allocation26 + $0x1a8] sm:$0xff]
    %v9354 = vld [vmem:[#allocation26 + $0x1b0] sm:$0xff]
    %v9355 = vld [vmem:[#allocation26 + $0x1b8] sm:$0xff]
    %v9356 = vld [vmem:[#allocation26 + $0x1c0] sm:$0xff]
    %v9357 = vld [vmem:[#allocation26 + $0x1c8] sm:$0xff]
    %v9358 = vld [vmem:[#allocation26 + $0x1d0] sm:$0xff]
    %v9359 = vld [vmem:[#allocation26 + $0x1d8] sm:$0xff]
    %v9360 = vld [vmem:[#allocation26 + $0x1e0] sm:$0xff]
    %v9361 = vld [vmem:[#allocation26 + $0x1e8] sm:$0xff]
    %v9362 = vld [vmem:[#allocation26 + $0x1f0] sm:$0xff]
    %v9363 = vld [vmem:[#allocation26 + $0x1f8] sm:$0xff]
    %v9364 = vld [vmem:[#allocation26 + $0x200] sm:$0xff]
    %v9365 = vld [vmem:[#allocation26 + $0x208] sm:$0xff]
    %v9366 = vld [vmem:[#allocation26 + $0x210] sm:$0xff]
    %v9367 = vld [vmem:[#allocation26 + $0x218] sm:$0xff]
    %v9368 = vld [vmem:[#allocation26 + $0x220] sm:$0xff]
    %v9369 = vld [vmem:[#allocation26 + $0x228] sm:$0xff]
    %v9370 = vld [vmem:[#allocation26 + $0x230] sm:$0xff]
    %v9371 = vld [vmem:[#allocation26 + $0x238] sm:$0xff]
    %v9372 = vld [vmem:[#allocation26 + $0x240] sm:$0xff]
    %v9373 = vld [vmem:[#allocation26 + $0x248] sm:$0xff]
    %v9374 = vld [vmem:[#allocation26 + $0x250] sm:$0xff]
    %v9375 = vld [vmem:[#allocation26 + $0x258] sm:$0xff]
    %v9376 = vld [vmem:[#allocation26 + $0x260] sm:$0xff]
    %v9377 = vld [vmem:[#allocation26 + $0x268] sm:$0xff]
    %v9378 = vld [vmem:[#allocation26 + $0x270] sm:$0xff]
    %v9379 = vld [vmem:[#allocation26 + $0x278] sm:$0xff]
    %v9380 = vld [vmem:[#allocation26 + $0x280] sm:$0xff]
    %v9381 = vld [vmem:[#allocation26 + $0x288] sm:$0xff]
    %v9382 = vld [vmem:[#allocation26 + $0x290] sm:$0xff]
    %v9383 = vld [vmem:[#allocation26 + $0x298] sm:$0xff]
    %v9384 = vld [vmem:[#allocation26 + $0x2a0] sm:$0xff]
    %v9385 = vld [vmem:[#allocation26 + $0x2a8] sm:$0xff]
    %v9386 = vld [vmem:[#allocation26 + $0x2b0] sm:$0xff]
    %v9387 = vld [vmem:[#allocation26 + $0x2b8] sm:$0xff]
    %v9388 = vld [vmem:[#allocation26 + $0x2c0] sm:$0xff]
    %v9389 = vld [vmem:[#allocation26 + $0x2c8] sm:$0xff]
    %v9390 = vld [vmem:[#allocation26 + $0x2d0] sm:$0xff]
    %v9391 = vld [vmem:[#allocation26 + $0x2d8] sm:$0xff]
    %v9392 = vld [vmem:[#allocation26 + $0x2e0] sm:$0xff]
    %v9393 = vld [vmem:[#allocation26 + $0x2e8] sm:$0xff]
    %v9394 = vld [vmem:[#allocation26 + $0x2f0] sm:$0xff]
    %v9395 = vld [vmem:[#allocation26 + $0x2f8] sm:$0xff]
    %v9396 = vld [vmem:[#allocation26 + $0x300] sm:$0xff]
    %v9397 = vld [vmem:[#allocation26 + $0x308] sm:$0xff]
    %v9398 = vld [vmem:[#allocation26 + $0x310] sm:$0xff]
    %v9399 = vld [vmem:[#allocation26 + $0x318] sm:$0xff]
    %v9400 = vld [vmem:[#allocation26 + $0x320] sm:$0xff]
    %v9401 = vld [vmem:[#allocation26 + $0x328] sm:$0xff]
    %v9402 = vld [vmem:[#allocation26 + $0x330] sm:$0xff]
    %v9403 = vld [vmem:[#allocation26 + $0x338] sm:$0xff]
    %v9404 = vld [vmem:[#allocation26 + $0x340] sm:$0xff]
    %v9405 = vld [vmem:[#allocation26 + $0x348] sm:$0xff]
    %v9406 = vld [vmem:[#allocation26 + $0x350] sm:$0xff]
    %v9407 = vld [vmem:[#allocation26 + $0x358] sm:$0xff]
    %v9408 = vld [vmem:[#allocation26 + $0x360] sm:$0xff]
    %v9409 = vld [vmem:[#allocation26 + $0x368] sm:$0xff]
    %v9410 = vld [vmem:[#allocation26 + $0x370] sm:$0xff]
    %v9411 = vld [vmem:[#allocation26 + $0x378] sm:$0xff]
    %v9412 = vld [vmem:[#allocation26 + $0x380] sm:$0xff]
    %v9413 = vld [vmem:[#allocation26 + $0x388] sm:$0xff]
    %v9414 = vld [vmem:[#allocation26 + $0x390] sm:$0xff]
    %v9415 = vld [vmem:[#allocation26 + $0x398] sm:$0xff]
    %v9416 = vld [vmem:[#allocation26 + $0x3a0] sm:$0xff]
    %v9417 = vld [vmem:[#allocation26 + $0x3a8] sm:$0xff]
    %v9418 = vld [vmem:[#allocation26 + $0x3b0] sm:$0xff]
    %v9419 = vld [vmem:[#allocation26 + $0x3b8] sm:$0xff]
    %v9420 = vld [vmem:[#allocation26 + $0x3c0] sm:$0xff]
    %v9421 = vld [vmem:[#allocation26 + $0x3c8] sm:$0xff]
    %v9422 = vld [vmem:[#allocation26 + $0x3d0] sm:$0xff]
    %v9423 = vld [vmem:[#allocation26 + $0x3d8] sm:$0xff]
    %v9424 = vld [vmem:[#allocation26 + $0x3e0] sm:$0xff]
    %v9425 = vld [vmem:[#allocation26 + $0x3e8] sm:$0xff]
    %v9426 = vld [vmem:[#allocation26 + $0x3f0] sm:$0xff]
    %v9427 = vld [vmem:[#allocation26 + $0x3f8] sm:$0xff]
    %v9428 = vld [vmem:[#allocation26 + $0x400] sm:$0xff]
    %v9429 = vld [vmem:[#allocation26 + $0x408] sm:$0xff]
    %v9430 = vld [vmem:[#allocation26 + $0x410] sm:$0xff]
    %v9431 = vld [vmem:[#allocation26 + $0x418] sm:$0xff]
    %v9432 = vld [vmem:[#allocation26 + $0x420] sm:$0xff]
    %v9433 = vld [vmem:[#allocation26 + $0x428] sm:$0xff]
    %v9434 = vld [vmem:[#allocation26 + $0x430] sm:$0xff]
    %v9435 = vld [vmem:[#allocation26 + $0x438] sm:$0xff]
    %v9436 = vld [vmem:[#allocation26 + $0x440] sm:$0xff]
    %v9437 = vld [vmem:[#allocation26 + $0x448] sm:$0xff]
    %v9438 = vld [vmem:[#allocation26 + $0x450] sm:$0xff]
    %v9439 = vld [vmem:[#allocation26 + $0x458] sm:$0xff]
    %v9440 = vld [vmem:[#allocation26 + $0x460] sm:$0xff]
    %v9441 = vld [vmem:[#allocation26 + $0x468] sm:$0xff]
    %v9442 = vld [vmem:[#allocation26 + $0x470] sm:$0xff]
    %v9443 = vld [vmem:[#allocation26 + $0x478] sm:$0xff]
    %v9444 = vld [vmem:[#allocation26 + $0x480] sm:$0xff]
    %v9445 = vld [vmem:[#allocation26 + $0x488] sm:$0xff]
    %v9446 = vld [vmem:[#allocation26 + $0x490] sm:$0xff]
    %v9447 = vld [vmem:[#allocation26 + $0x498] sm:$0xff]
    %v9448 = vld [vmem:[#allocation26 + $0x4a0] sm:$0xff]
    %v9449 = vld [vmem:[#allocation26 + $0x4a8] sm:$0xff]
    %v9450 = vld [vmem:[#allocation26 + $0x4b0] sm:$0xff]
    %v9451 = vld [vmem:[#allocation26 + $0x4b8] sm:$0xff]
    %v9452 = vld [vmem:[#allocation26 + $0x4c0] sm:$0xff]
    %v9453 = vld [vmem:[#allocation26 + $0x4c8] sm:$0xff]
    %v9454 = vld [vmem:[#allocation26 + $0x4d0] sm:$0xff]
    %v9455 = vld [vmem:[#allocation26 + $0x4d8] sm:$0xff]
    %v9456 = vld [vmem:[#allocation26 + $0x4e0] sm:$0xff]
    %v9457 = vld [vmem:[#allocation26 + $0x4e8] sm:$0xff]
    %v9458 = vld [vmem:[#allocation26 + $0x4f0] sm:$0xff]
    %v9459 = vld [vmem:[#allocation26 + $0x4f8] sm:$0xff]
    %v9460 = vld [vmem:[#allocation26 + $0x500] sm:$0xff]
    %v9461 = vld [vmem:[#allocation26 + $0x508] sm:$0xff]
    %v9462 = vld [vmem:[#allocation26 + $0x510] sm:$0xff]
    %v9463 = vld [vmem:[#allocation26 + $0x518] sm:$0xff]
    %v9464 = vld [vmem:[#allocation26 + $0x520] sm:$0xff]
    %v9465 = vld [vmem:[#allocation26 + $0x528] sm:$0xff]
    %v9466 = vld [vmem:[#allocation26 + $0x530] sm:$0xff]
    %v9467 = vld [vmem:[#allocation26 + $0x538] sm:$0xff]
    %v9468 = vld [vmem:[#allocation26 + $0x540] sm:$0xff]
    %v9469 = vld [vmem:[#allocation26 + $0x548] sm:$0xff]
    %v9470 = vld [vmem:[#allocation26 + $0x550] sm:$0xff]
    %v9471 = vld [vmem:[#allocation26 + $0x558] sm:$0xff]
    %v9472 = vld [vmem:[#allocation26 + $0x560] sm:$0xff]
    %v9473 = vld [vmem:[#allocation26 + $0x568] sm:$0xff]
    %v9474 = vld [vmem:[#allocation26 + $0x570] sm:$0xff]
    %v9475 = vld [vmem:[#allocation26 + $0x578] sm:$0xff]
    %v9476 = vld [vmem:[#allocation26 + $0x580] sm:$0xff]
    %v9477 = vld [vmem:[#allocation26 + $0x588] sm:$0xff]
    %v9478 = vld [vmem:[#allocation26 + $0x590] sm:$0xff]
    %v9479 = vld [vmem:[#allocation26 + $0x598] sm:$0xff]
    %v9480 = vld [vmem:[#allocation26 + $0x5a0] sm:$0xff]
    %v9481 = vld [vmem:[#allocation26 + $0x5a8] sm:$0xff]
    %v9482 = vld [vmem:[#allocation26 + $0x5b0] sm:$0xff]
    %v9483 = vld [vmem:[#allocation26 + $0x5b8] sm:$0xff]
    %v9484 = vld [vmem:[#allocation26 + $0x5c0] sm:$0xff]
    %v9485 = vld [vmem:[#allocation26 + $0x5c8] sm:$0xff]
    %v9486 = vld [vmem:[#allocation26 + $0x5d0] sm:$0xff]
    %v9487 = vld [vmem:[#allocation26 + $0x5d8] sm:$0xff]
    %v9488 = vld [vmem:[#allocation26 + $0x5e0] sm:$0xff]
    %v9489 = vld [vmem:[#allocation26 + $0x5e8] sm:$0xff]
    %v9490 = vld [vmem:[#allocation26 + $0x5f0] sm:$0xff]
    %v9491 = vld [vmem:[#allocation26 + $0x5f8] sm:$0xff]
    %v9492 = vld [vmem:[#allocation26 + $0x600] sm:$0xff]
    %v9493 = vld [vmem:[#allocation26 + $0x608] sm:$0xff]
    %v9494 = vld [vmem:[#allocation26 + $0x610] sm:$0xff]
    %v9495 = vld [vmem:[#allocation26 + $0x618] sm:$0xff]
    %v9496 = vld [vmem:[#allocation26 + $0x620] sm:$0xff]
    %v9497 = vld [vmem:[#allocation26 + $0x628] sm:$0xff]
    %v9498 = vld [vmem:[#allocation26 + $0x630] sm:$0xff]
    %v9499 = vld [vmem:[#allocation26 + $0x638] sm:$0xff]
    %v9500 = vld [vmem:[#allocation26 + $0x640] sm:$0xff]
    %v9501 = vld [vmem:[#allocation26 + $0x648] sm:$0xff]
    %v9502 = vld [vmem:[#allocation26 + $0x650] sm:$0xff]
    %v9503 = vld [vmem:[#allocation26 + $0x658] sm:$0xff]
    %v9504 = vld [vmem:[#allocation26 + $0x660] sm:$0xff]
    %v9505 = vld [vmem:[#allocation26 + $0x668] sm:$0xff]
    %v9506 = vld [vmem:[#allocation26 + $0x670] sm:$0xff]
    %v9507 = vld [vmem:[#allocation26 + $0x678] sm:$0xff]
    %v9508 = vld [vmem:[#allocation26 + $0x680] sm:$0xff]
    %v9509 = vld [vmem:[#allocation26 + $0x688] sm:$0xff]
    %v9510 = vld [vmem:[#allocation26 + $0x690] sm:$0xff]
    %v9511 = vld [vmem:[#allocation26 + $0x698] sm:$0xff]
    %v9512 = vld [vmem:[#allocation26 + $0x6a0] sm:$0xff]
    %v9513 = vld [vmem:[#allocation26 + $0x6a8] sm:$0xff]
    %v9514 = vld [vmem:[#allocation26 + $0x6b0] sm:$0xff]
    %v9515 = vld [vmem:[#allocation26 + $0x6b8] sm:$0xff]
    %v9516 = vld [vmem:[#allocation26 + $0x6c0] sm:$0xff]
    %v9517 = vld [vmem:[#allocation26 + $0x6c8] sm:$0xff]
    %v9518 = vld [vmem:[#allocation26 + $0x6d0] sm:$0xff]
    %v9519 = vld [vmem:[#allocation26 + $0x6d8] sm:$0xff]
    %v9520 = vld [vmem:[#allocation26 + $0x6e0] sm:$0xff]
    %v9521 = vld [vmem:[#allocation26 + $0x6e8] sm:$0xff]
    %v9522 = vld [vmem:[#allocation26 + $0x6f0] sm:$0xff]
    %v9523 = vld [vmem:[#allocation26 + $0x6f8] sm:$0xff]
    %v9524 = vld [vmem:[#allocation26 + $0x700] sm:$0xff]
    %v9525 = vld [vmem:[#allocation26 + $0x708] sm:$0xff]
    %v9526 = vld [vmem:[#allocation26 + $0x710] sm:$0xff]
    %v9527 = vld [vmem:[#allocation26 + $0x718] sm:$0xff]
    %v9528 = vld [vmem:[#allocation26 + $0x720] sm:$0xff]
    %v9529 = vld [vmem:[#allocation26 + $0x728] sm:$0xff]
    %v9530 = vld [vmem:[#allocation26 + $0x730] sm:$0xff]
    %v9531 = vld [vmem:[#allocation26 + $0x738] sm:$0xff]
    %v9532 = vld [vmem:[#allocation26 + $0x740] sm:$0xff]
    %v9533 = vld [vmem:[#allocation26 + $0x748] sm:$0xff]
    %v9534 = vld [vmem:[#allocation26 + $0x750] sm:$0xff]
    %v9535 = vld [vmem:[#allocation26 + $0x758] sm:$0xff]
    %v9536 = vld [vmem:[#allocation26 + $0x760] sm:$0xff]
    %v9537 = vld [vmem:[#allocation26 + $0x768] sm:$0xff]
    %v9538 = vld [vmem:[#allocation26 + $0x770] sm:$0xff]
    %v9539 = vld [vmem:[#allocation26 + $0x778] sm:$0xff]
    %v9540 = vld [vmem:[#allocation26 + $0x780] sm:$0xff]
    %v9541 = vld [vmem:[#allocation26 + $0x788] sm:$0xff]
    %v9542 = vld [vmem:[#allocation26 + $0x790] sm:$0xff]
    %v9543 = vld [vmem:[#allocation26 + $0x798] sm:$0xff]
    %v9544 = vld [vmem:[#allocation26 + $0x7a0] sm:$0xff]
    %v9545 = vld [vmem:[#allocation26 + $0x7a8] sm:$0xff]
    %v9546 = vld [vmem:[#allocation26 + $0x7b0] sm:$0xff]
    %v9547 = vld [vmem:[#allocation26 + $0x7b8] sm:$0xff]
    %v9548 = vld [vmem:[#allocation26 + $0x7c0] sm:$0xff]
    %v9549 = vld [vmem:[#allocation26 + $0x7c8] sm:$0xff]
    %v9550 = vld [vmem:[#allocation26 + $0x7d0] sm:$0xff]
    %v9551 = vld [vmem:[#allocation26 + $0x7d8] sm:$0xff]
    %v9552 = vld [vmem:[#allocation26 + $0x7e0] sm:$0xff]
    %v9553 = vld [vmem:[#allocation26 + $0x7e8] sm:$0xff]
    %v9554 = vld [vmem:[#allocation26 + $0x7f0] sm:$0xff]
    %v9555 = vld [vmem:[#allocation26 + $0x7f8] sm:$0xff]
    %v9556 = vld [vmem:[#allocation26 + $0x800] sm:$0xff]
    %v9557 = vld [vmem:[#allocation26 + $0x808] sm:$0xff]
    %v9558 = vld [vmem:[#allocation26 + $0x810] sm:$0xff]
    %v9559 = vld [vmem:[#allocation26 + $0x818] sm:$0xff]
    %v9560 = vld [vmem:[#allocation26 + $0x820] sm:$0xff]
    %v9561 = vld [vmem:[#allocation26 + $0x828] sm:$0xff]
    %v9562 = vld [vmem:[#allocation26 + $0x830] sm:$0xff]
    %v9563 = vld [vmem:[#allocation26 + $0x838] sm:$0xff]
    %v9564 = vld [vmem:[#allocation26 + $0x840] sm:$0xff]
    %v9565 = vld [vmem:[#allocation26 + $0x848] sm:$0xff]
    %v9566 = vld [vmem:[#allocation26 + $0x850] sm:$0xff]
    %v9567 = vld [vmem:[#allocation26 + $0x858] sm:$0xff]
    %v9568 = vld [vmem:[#allocation26 + $0x860] sm:$0xff]
    %v9569 = vld [vmem:[#allocation26 + $0x868] sm:$0xff]
    %v9570 = vld [vmem:[#allocation26 + $0x870] sm:$0xff]
    %v9571 = vld [vmem:[#allocation26 + $0x878] sm:$0xff]
    %v9572 = vld [vmem:[#allocation26 + $0x880] sm:$0xff]
    %v9573 = vld [vmem:[#allocation26 + $0x888] sm:$0xff]
    %v9574 = vld [vmem:[#allocation26 + $0x890] sm:$0xff]
    %v9575 = vld [vmem:[#allocation26 + $0x898] sm:$0xff]
    %v9576 = vld [vmem:[#allocation26 + $0x8a0] sm:$0xff]
    %v9577 = vld [vmem:[#allocation26 + $0x8a8] sm:$0xff]
    %v9578 = vld [vmem:[#allocation26 + $0x8b0] sm:$0xff]
    %v9579 = vld [vmem:[#allocation26 + $0x8b8] sm:$0xff]
    %v9580 = vld [vmem:[#allocation26 + $0x8c0] sm:$0xff]
    %v9581 = vld [vmem:[#allocation26 + $0x8c8] sm:$0xff]
    %v9582 = vld [vmem:[#allocation26 + $0x8d0] sm:$0xff]
    %v9583 = vld [vmem:[#allocation26 + $0x8d8] sm:$0xff]
    %v9584 = vld [vmem:[#allocation26 + $0x8e0] sm:$0xff]
    %v9585 = vld [vmem:[#allocation26 + $0x8e8] sm:$0xff]
    %v9586 = vld [vmem:[#allocation26 + $0x8f0] sm:$0xff]
    %v9587 = vld [vmem:[#allocation26 + $0x8f8] sm:$0xff]
    %v9588 = vld [vmem:[#allocation26 + $0x900] sm:$0xff]
    %v9589 = vld [vmem:[#allocation26 + $0x908] sm:$0xff]
    %v9590 = vld [vmem:[#allocation26 + $0x910] sm:$0xff]
    %v9591 = vld [vmem:[#allocation26 + $0x918] sm:$0xff]
    %v9592 = vld [vmem:[#allocation26 + $0x920] sm:$0xff]
    %v9593 = vld [vmem:[#allocation26 + $0x928] sm:$0xff]
    %v9594 = vld [vmem:[#allocation26 + $0x930] sm:$0xff]
    %v9595 = vld [vmem:[#allocation26 + $0x938] sm:$0xff]
    %v9596 = vld [vmem:[#allocation26 + $0x940] sm:$0xff]
    %v9597 = vld [vmem:[#allocation26 + $0x948] sm:$0xff]
    %v9598 = vld [vmem:[#allocation26 + $0x950] sm:$0xff]
    %v9599 = vld [vmem:[#allocation26 + $0x958] sm:$0xff]
    %v9600 = vld [vmem:[#allocation26 + $0x960] sm:$0xff]
    %v9601 = vld [vmem:[#allocation26 + $0x968] sm:$0xff]
    %v9602 = vld [vmem:[#allocation26 + $0x970] sm:$0xff]
    %v9603 = vld [vmem:[#allocation26 + $0x978] sm:$0xff]
    %v9604 = vld [vmem:[#allocation26 + $0x980] sm:$0xff]
    %v9605 = vld [vmem:[#allocation26 + $0x988] sm:$0xff]
    %v9606 = vld [vmem:[#allocation26 + $0x990] sm:$0xff]
    %v9607 = vld [vmem:[#allocation26 + $0x998] sm:$0xff]
    %v9608 = vld [vmem:[#allocation26 + $0x9a0] sm:$0xff]
    %v9609 = vld [vmem:[#allocation26 + $0x9a8] sm:$0xff]
    %v9610 = vld [vmem:[#allocation26 + $0x9b0] sm:$0xff]
    %v9611 = vld [vmem:[#allocation26 + $0x9b8] sm:$0xff]
    %v9612 = vld [vmem:[#allocation26 + $0x9c0] sm:$0xff]
    %v9613 = vld [vmem:[#allocation26 + $0x9c8] sm:$0xff]
    %v9614 = vld [vmem:[#allocation26 + $0x9d0] sm:$0xff]
    %v9615 = vld [vmem:[#allocation26 + $0x9d8] sm:$0xff]
    %v9616 = vld [vmem:[#allocation26 + $0x9e0] sm:$0xff]
    %v9617 = vld [vmem:[#allocation26 + $0x9e8] sm:$0xff]
    %v9618 = vld [vmem:[#allocation26 + $0x9f0] sm:$0xff]
    %v9619 = vld [vmem:[#allocation26 + $0x9f8] sm:$0xff]
    %v9620 = vld [vmem:[#allocation26 + $0xa00] sm:$0xff]
    %v9621 = vld [vmem:[#allocation26 + $0xa08] sm:$0xff]
    %v9622 = vld [vmem:[#allocation26 + $0xa10] sm:$0xff]
    %v9623 = vld [vmem:[#allocation26 + $0xa18] sm:$0xff]
    %v9624 = vld [vmem:[#allocation26 + $0xa20] sm:$0xff]
    %v9625 = vld [vmem:[#allocation26 + $0xa28] sm:$0xff]
    %v9626 = vld [vmem:[#allocation26 + $0xa30] sm:$0xff]
    %v9627 = vld [vmem:[#allocation26 + $0xa38] sm:$0xff]
    %v9628 = vld [vmem:[#allocation26 + $0xa40] sm:$0xff]
    %v9629 = vld [vmem:[#allocation26 + $0xa48] sm:$0xff]
    %v9630 = vld [vmem:[#allocation26 + $0xa50] sm:$0xff]
    %v9631 = vld [vmem:[#allocation26 + $0xa58] sm:$0xff]
    %v9632 = vld [vmem:[#allocation26 + $0xa60] sm:$0xff]
    %v9633 = vld [vmem:[#allocation26 + $0xa68] sm:$0xff]
    %v9634 = vld [vmem:[#allocation26 + $0xa70] sm:$0xff]
    %v9635 = vld [vmem:[#allocation26 + $0xa78] sm:$0xff]
    %v9636 = vld [vmem:[#allocation26 + $0xa80] sm:$0xff]
    %v9637 = vld [vmem:[#allocation26 + $0xa88] sm:$0xff]
    %v9638 = vld [vmem:[#allocation26 + $0xa90] sm:$0xff]
    %v9639 = vld [vmem:[#allocation26 + $0xa98] sm:$0xff]
    %v9640 = vld [vmem:[#allocation26 + $0xaa0] sm:$0xff]
    %v9641 = vld [vmem:[#allocation26 + $0xaa8] sm:$0xff]
    %v9642 = vld [vmem:[#allocation26 + $0xab0] sm:$0xff]
    %v9643 = vld [vmem:[#allocation26 + $0xab8] sm:$0xff]
    %v9644 = vld [vmem:[#allocation26 + $0xac0] sm:$0xff]
    %v9645 = vld [vmem:[#allocation26 + $0xac8] sm:$0xff]
    %v9646 = vld [vmem:[#allocation26 + $0xad0] sm:$0xff]
    %v9647 = vld [vmem:[#allocation26 + $0xad8] sm:$0xff]
    %v9648 = vld [vmem:[#allocation26 + $0xae0] sm:$0xff]
    %v9649 = vld [vmem:[#allocation26 + $0xae8] sm:$0xff]
    %v9650 = vld [vmem:[#allocation26 + $0xaf0] sm:$0xff]
    %v9651 = vld [vmem:[#allocation26 + $0xaf8] sm:$0xff]
    %v9652 = vld [vmem:[#allocation26 + $0xb00] sm:$0xff]
    %v9653 = vld [vmem:[#allocation26 + $0xb08] sm:$0xff]
    %v9654 = vld [vmem:[#allocation26 + $0xb10] sm:$0xff]
    %v9655 = vld [vmem:[#allocation26 + $0xb18] sm:$0xff]
    %v9656 = vld [vmem:[#allocation26 + $0xb20] sm:$0xff]
    %v9657 = vld [vmem:[#allocation26 + $0xb28] sm:$0xff]
    %v9658 = vld [vmem:[#allocation26 + $0xb30] sm:$0xff]
    %v9659 = vld [vmem:[#allocation26 + $0xb38] sm:$0xff]
    %v9660 = vld [vmem:[#allocation26 + $0xb40] sm:$0xff]
    %v9661 = vld [vmem:[#allocation26 + $0xb48] sm:$0xff]
    %v9662 = vld [vmem:[#allocation26 + $0xb50] sm:$0xff]
    %v9663 = vld [vmem:[#allocation26 + $0xb58] sm:$0xff]
    %v9664 = vld [vmem:[#allocation26 + $0xb60] sm:$0xff]
    %v9665 = vld [vmem:[#allocation26 + $0xb68] sm:$0xff]
    %v9666 = vld [vmem:[#allocation26 + $0xb70] sm:$0xff]
    %v9667 = vld [vmem:[#allocation26 + $0xb78] sm:$0xff]
    %v9668 = vld [vmem:[#allocation26 + $0xb80] sm:$0xff]
    %v9669 = vld [vmem:[#allocation26 + $0xb88] sm:$0xff]
    %v9670 = vld [vmem:[#allocation26 + $0xb90] sm:$0xff]
    %v9671 = vld [vmem:[#allocation26 + $0xb98] sm:$0xff]
    %v9672 = vld [vmem:[#allocation26 + $0xba0] sm:$0xff]
    %v9673 = vld [vmem:[#allocation26 + $0xba8] sm:$0xff]
    %v9674 = vld [vmem:[#allocation26 + $0xbb0] sm:$0xff]
    %v9675 = vld [vmem:[#allocation26 + $0xbb8] sm:$0xff]
    %v9676 = vld [vmem:[#allocation26 + $0xbc0] sm:$0xff]
    %v9677 = vld [vmem:[#allocation26 + $0xbc8] sm:$0xff]
    %v9678 = vld [vmem:[#allocation26 + $0xbd0] sm:$0xff]
    %v9679 = vld [vmem:[#allocation26 + $0xbd8] sm:$0xff]
    %v9680 = vld [vmem:[#allocation26 + $0xbe0] sm:$0xff]
    %v9681 = vld [vmem:[#allocation26 + $0xbe8] sm:$0xff]
    %v9682 = vld [vmem:[#allocation26 + $0xbf0] sm:$0xff]
    %v9683 = vld [vmem:[#allocation26 + $0xbf8] sm:$0xff]
    %v9684 = vld [vmem:[#allocation26 + $0xc00] sm:$0xff]
    %v9685 = vld [vmem:[#allocation26 + $0xc08] sm:$0xff]
    %v9686 = vld [vmem:[#allocation26 + $0xc10] sm:$0xff]
    %v9687 = vld [vmem:[#allocation26 + $0xc18] sm:$0xff]
    %v9688 = vld [vmem:[#allocation26 + $0xc20] sm:$0xff]
    %v9689 = vld [vmem:[#allocation26 + $0xc28] sm:$0xff]
    %v9690 = vld [vmem:[#allocation26 + $0xc30] sm:$0xff]
    %v9691 = vld [vmem:[#allocation26 + $0xc38] sm:$0xff]
    %v9692 = vld [vmem:[#allocation26 + $0xc40] sm:$0xff]
    %v9693 = vld [vmem:[#allocation26 + $0xc48] sm:$0xff]
    %v9694 = vld [vmem:[#allocation26 + $0xc50] sm:$0xff]
    %v9695 = vld [vmem:[#allocation26 + $0xc58] sm:$0xff]
    %v9696 = vld [vmem:[#allocation26 + $0xc60] sm:$0xff]
    %v9697 = vld [vmem:[#allocation26 + $0xc68] sm:$0xff]
    %v9698 = vld [vmem:[#allocation26 + $0xc70] sm:$0xff]
    %v9699 = vld [vmem:[#allocation26 + $0xc78] sm:$0xff]
    %v9700 = vld [vmem:[#allocation26 + $0xc80] sm:$0xff]
    %v9701 = vld [vmem:[#allocation26 + $0xc88] sm:$0xff]
    %v9702 = vld [vmem:[#allocation26 + $0xc90] sm:$0xff]
    %v9703 = vld [vmem:[#allocation26 + $0xc98] sm:$0xff]
    %v9704 = vld [vmem:[#allocation26 + $0xca0] sm:$0xff]
    %v9705 = vld [vmem:[#allocation26 + $0xca8] sm:$0xff]
    %v9706 = vld [vmem:[#allocation26 + $0xcb0] sm:$0xff]
    %v9707 = vld [vmem:[#allocation26 + $0xcb8] sm:$0xff]
    %v9708 = vld [vmem:[#allocation26 + $0xcc0] sm:$0xff]
    %v9709 = vld [vmem:[#allocation26 + $0xcc8] sm:$0xff]
    %v9710 = vld [vmem:[#allocation26 + $0xcd0] sm:$0xff]
    %v9711 = vld [vmem:[#allocation26 + $0xcd8] sm:$0xff]
    %v9712 = vld [vmem:[#allocation26 + $0xce0] sm:$0xff]
    %v9713 = vld [vmem:[#allocation26 + $0xce8] sm:$0xff]
    %v9714 = vld [vmem:[#allocation26 + $0xcf0] sm:$0xff]
    %v9715 = vld [vmem:[#allocation26 + $0xcf8] sm:$0xff]
    %v9716 = vld [vmem:[#allocation26 + $0xd00] sm:$0xff]
    %v9717 = vld [vmem:[#allocation26 + $0xd08] sm:$0xff]
    %v9718 = vld [vmem:[#allocation26 + $0xd10] sm:$0xff]
    %v9719 = vld [vmem:[#allocation26 + $0xd18] sm:$0xff]
    %v9720 = vld [vmem:[#allocation26 + $0xd20] sm:$0xff]
    %v9721 = vld [vmem:[#allocation26 + $0xd28] sm:$0xff]
    %v9722 = vld [vmem:[#allocation26 + $0xd30] sm:$0xff]
    %v9723 = vld [vmem:[#allocation26 + $0xd38] sm:$0xff]
    %v9724 = vld [vmem:[#allocation26 + $0xd40] sm:$0xff]
    %v9725 = vld [vmem:[#allocation26 + $0xd48] sm:$0xff]
    %v9726 = vld [vmem:[#allocation26 + $0xd50] sm:$0xff]
    %v9727 = vld [vmem:[#allocation26 + $0xd58] sm:$0xff]
    %v9728 = vld [vmem:[#allocation26 + $0xd60] sm:$0xff]
    %v9729 = vld [vmem:[#allocation26 + $0xd68] sm:$0xff]
    %v9730 = vld [vmem:[#allocation26 + $0xd70] sm:$0xff]
    %v9731 = vld [vmem:[#allocation26 + $0xd78] sm:$0xff]
    %v9732 = vld [vmem:[#allocation26 + $0xd80] sm:$0xff]
    %v9733 = vld [vmem:[#allocation26 + $0xd88] sm:$0xff]
    %v9734 = vld [vmem:[#allocation26 + $0xd90] sm:$0xff]
    %v9735 = vld [vmem:[#allocation26 + $0xd98] sm:$0xff]
    %v9736 = vld [vmem:[#allocation26 + $0xda0] sm:$0xff]
    %v9737 = vld [vmem:[#allocation26 + $0xda8] sm:$0xff]
    %v9738 = vld [vmem:[#allocation26 + $0xdb0] sm:$0xff]
    %v9739 = vld [vmem:[#allocation26 + $0xdb8] sm:$0xff]
    %v9740 = vld [vmem:[#allocation26 + $0xdc0] sm:$0xff]
    %v9741 = vld [vmem:[#allocation26 + $0xdc8] sm:$0xff]
    %v9742 = vld [vmem:[#allocation26 + $0xdd0] sm:$0xff]
    %v9743 = vld [vmem:[#allocation26 + $0xdd8] sm:$0xff]
    %v9744 = vld [vmem:[#allocation26 + $0xde0] sm:$0xff]
    %v9745 = vld [vmem:[#allocation26 + $0xde8] sm:$0xff]
    %v9746 = vld [vmem:[#allocation26 + $0xdf0] sm:$0xff]
    %v9747 = vld [vmem:[#allocation26 + $0xdf8] sm:$0xff]
    %v9748 = vld [vmem:[#allocation26 + $0xe00] sm:$0xff]
    %v9749 = vld [vmem:[#allocation26 + $0xe08] sm:$0xff]
    %v9750 = vld [vmem:[#allocation26 + $0xe10] sm:$0xff]
    %v9751 = vld [vmem:[#allocation26 + $0xe18] sm:$0xff]
    %v9752 = vld [vmem:[#allocation26 + $0xe20] sm:$0xff]
    %v9753 = vld [vmem:[#allocation26 + $0xe28] sm:$0xff]
    %v9754 = vld [vmem:[#allocation26 + $0xe30] sm:$0xff]
    %v9755 = vld [vmem:[#allocation26 + $0xe38] sm:$0xff]
    %v9756 = vld [vmem:[#allocation26 + $0xe40] sm:$0xff]
    %v9757 = vld [vmem:[#allocation26 + $0xe48] sm:$0xff]
    %v9758 = vld [vmem:[#allocation26 + $0xe50] sm:$0xff]
    %v9759 = vld [vmem:[#allocation26 + $0xe58] sm:$0xff]
    %v9760 = vld [vmem:[#allocation26 + $0xe60] sm:$0xff]
    %v9761 = vld [vmem:[#allocation26 + $0xe68] sm:$0xff]
    %v9762 = vld [vmem:[#allocation26 + $0xe70] sm:$0xff]
    %v9763 = vld [vmem:[#allocation26 + $0xe78] sm:$0xff]
    %v9764 = vld [vmem:[#allocation26 + $0xe80] sm:$0xff]
    %v9765 = vld [vmem:[#allocation26 + $0xe88] sm:$0xff]
    %v9766 = vld [vmem:[#allocation26 + $0xe90] sm:$0xff]
    %v9767 = vld [vmem:[#allocation26 + $0xe98] sm:$0xff]
    %v9768 = vld [vmem:[#allocation26 + $0xea0] sm:$0xff]
    %v9769 = vld [vmem:[#allocation26 + $0xea8] sm:$0xff]
    %v9770 = vld [vmem:[#allocation26 + $0xeb0] sm:$0xff]
    %v9771 = vld [vmem:[#allocation26 + $0xeb8] sm:$0xff]
    %v9772 = vld [vmem:[#allocation26 + $0xec0] sm:$0xff]
    %v9773 = vld [vmem:[#allocation26 + $0xec8] sm:$0xff]
    %v9774 = vld [vmem:[#allocation26 + $0xed0] sm:$0xff]
    %v9775 = vld [vmem:[#allocation26 + $0xed8] sm:$0xff]
    %v9776 = vld [vmem:[#allocation26 + $0xee0] sm:$0xff]
    %v9777 = vld [vmem:[#allocation26 + $0xee8] sm:$0xff]
    %v9778 = vld [vmem:[#allocation26 + $0xef0] sm:$0xff]
    %v9779 = vld [vmem:[#allocation26 + $0xef8] sm:$0xff]
    %v9780 = vld [vmem:[#allocation26 + $0xf00] sm:$0xff]
    %v9781 = vld [vmem:[#allocation26 + $0xf08] sm:$0xff]
    %v9782 = vld [vmem:[#allocation26 + $0xf10] sm:$0xff]
    %v9783 = vld [vmem:[#allocation26 + $0xf18] sm:$0xff]
    %v9784 = vld [vmem:[#allocation26 + $0xf20] sm:$0xff]
    %v9785 = vld [vmem:[#allocation26 + $0xf28] sm:$0xff]
    %v9786 = vld [vmem:[#allocation26 + $0xf30] sm:$0xff]
    %v9787 = vld [vmem:[#allocation26 + $0xf38] sm:$0xff]
    %v9788 = vld [vmem:[#allocation26 + $0xf40] sm:$0xff]
    %v9789 = vld [vmem:[#allocation26 + $0xf48] sm:$0xff]
    %v9790 = vld [vmem:[#allocation26 + $0xf50] sm:$0xff]
    %v9791 = vld [vmem:[#allocation26 + $0xf58] sm:$0xff]
    %v9792 = vld [vmem:[#allocation26 + $0xf60] sm:$0xff]
    %v9793 = vld [vmem:[#allocation26 + $0xf68] sm:$0xff]
    %v9794 = vld [vmem:[#allocation26 + $0xf70] sm:$0xff]
    %v9795 = vld [vmem:[#allocation26 + $0xf78] sm:$0xff]
    %v9796 = vld [vmem:[#allocation26 + $0xf80] sm:$0xff]
    %v9797 = vld [vmem:[#allocation26 + $0xf88] sm:$0xff]
    %v9798 = vld [vmem:[#allocation26 + $0xf90] sm:$0xff]
    %v9799 = vld [vmem:[#allocation26 + $0xf98] sm:$0xff]
    %v9800 = vld [vmem:[#allocation26 + $0xfa0] sm:$0xff]
    %v9801 = vld [vmem:[#allocation26 + $0xfa8] sm:$0xff]
    %v9802 = vld [vmem:[#allocation26 + $0xfb0] sm:$0xff]
    %v9803 = vld [vmem:[#allocation26 + $0xfb8] sm:$0xff]
    %v9804 = vld [vmem:[#allocation26 + $0xfc0] sm:$0xff]
    %v9805 = vld [vmem:[#allocation26 + $0xfc8] sm:$0xff]
    %v9806 = vld [vmem:[#allocation26 + $0xfd0] sm:$0xff]
    %v9807 = vld [vmem:[#allocation26 + $0xfd8] sm:$0xff]
    %v9808 = vld [vmem:[#allocation26 + $0xfe0] sm:$0xff]
    %v9809 = vld [vmem:[#allocation26 + $0xfe8] sm:$0xff]
    %v9810 = vld [vmem:[#allocation26 + $0xff0] sm:$0xff]
    %v9811 = vld [vmem:[#allocation26 + $0xff8] sm:$0xff]
    %v9812 = vld [vmem:[#allocation28] sm:$0xff]
    %v9813 = vpack.c.bf16 %v9292, %v9284
    %v9814 = vpack.c.bf16 %v9293, %v9285
    %v9815 = vpack.c.bf16 %v9294, %v9286
    %v9816 = vpack.c.bf16 %v9295, %v9287
    %v9817 = vpack.c.bf16 %v9296, %v9288
    %v9818 = vpack.c.bf16 %v9297, %v9289
    %v9819 = vpack.c.bf16 %v9298, %v9290
    %v9820 = vpack.c.bf16 %v9299, %v9291
    %v9822 = vlaneseq
    %v9823 = vshrl.u32 %v9822, 7
    %v9824 = vsub.s32 0, %v9823
    %v9825 = vrot.slane %v9812, %v9824
    %v9826 = vlaneseq
    %v9827 = vshrl.u32 %v9826, 7
    %v9828 = vsub.s32 1, %v9827
    %v9829 = vrot.slane %v9812, %v9828
    %v9830 = vlaneseq
    %v9831 = vshrl.u32 %v9830, 7
    %v9832 = vsub.s32 2, %v9831
    %v9833 = vrot.slane %v9812, %v9832
    %v9834 = vlaneseq
    %v9835 = vshrl.u32 %v9834, 7
    %v9836 = vsub.s32 3, %v9835
    %v9837 = vrot.slane %v9812, %v9836
    %v9838 = vlaneseq
    %v9839 = vshrl.u32 %v9838, 7
    %v9840 = vsub.s32 4, %v9839
    %v9841 = vrot.slane %v9812, %v9840
    %v9842 = vlaneseq
    %v9843 = vshrl.u32 %v9842, 7
    %v9844 = vsub.s32 5, %v9843
    %v9845 = vrot.slane %v9812, %v9844
    %v9846 = vlaneseq
    %v9847 = vshrl.u32 %v9846, 7
    %v9848 = vsub.s32 6, %v9847
    %v9849 = vrot.slane %v9812, %v9848
    %v9850 = vlaneseq
    %v9851 = vshrl.u32 %v9850, 7
    %v9852 = vsub.s32 7, %v9851
    %v9853 = vrot.slane %v9812, %v9852
    %v10374 = vunpack.c.l.b16 %v9300
    %v10375 = vunpack.c.h.b16 %v9300
    %v10376 = vunpack.c.l.b16 %v9301
    %v10377 = vunpack.c.h.b16 %v9301
    %v10378 = vunpack.c.l.b16 %v9302
    %v10379 = vunpack.c.h.b16 %v9302
    %v10380 = vunpack.c.l.b16 %v9303
    %v10381 = vunpack.c.h.b16 %v9303
    %v10382 = vunpack.c.l.b16 %v9304
    %v10383 = vunpack.c.h.b16 %v9304
    %v10384 = vunpack.c.l.b16 %v9305
    %v10385 = vunpack.c.h.b16 %v9305
    %v10386 = vunpack.c.l.b16 %v9306
    %v10387 = vunpack.c.h.b16 %v9306
    %v10388 = vunpack.c.l.b16 %v9307
    %v10389 = vunpack.c.h.b16 %v9307
    %v10390 = vunpack.c.l.b16 %v9308
    %v10391 = vunpack.c.h.b16 %v9308
    %v10392 = vunpack.c.l.b16 %v9309
    %v10393 = vunpack.c.h.b16 %v9309
    %v10394 = vunpack.c.l.b16 %v9310
    %v10395 = vunpack.c.h.b16 %v9310
    %v10396 = vunpack.c.l.b16 %v9311
    %v10397 = vunpack.c.h.b16 %v9311
    %v10398 = vunpack.c.l.b16 %v9312
    %v10399 = vunpack.c.h.b16 %v9312
    %v10400 = vunpack.c.l.b16 %v9313
    %v10401 = vunpack.c.h.b16 %v9313
    %v10402 = vunpack.c.l.b16 %v9314
    %v10403 = vunpack.c.h.b16 %v9314
    %v10404 = vunpack.c.l.b16 %v9315
    %v10405 = vunpack.c.h.b16 %v9315
    %v10406 = vunpack.c.l.b16 %v9316
    %v10407 = vunpack.c.h.b16 %v9316
    %v10408 = vunpack.c.l.b16 %v9317
    %v10409 = vunpack.c.h.b16 %v9317
    %v10410 = vunpack.c.l.b16 %v9318
    %v10411 = vunpack.c.h.b16 %v9318
    %v10412 = vunpack.c.l.b16 %v9319
    %v10413 = vunpack.c.h.b16 %v9319
    %v10414 = vunpack.c.l.b16 %v9320
    %v10415 = vunpack.c.h.b16 %v9320
    %v10416 = vunpack.c.l.b16 %v9321
    %v10417 = vunpack.c.h.b16 %v9321
    %v10418 = vunpack.c.l.b16 %v9322
    %v10419 = vunpack.c.h.b16 %v9322
    %v10420 = vunpack.c.l.b16 %v9323
    %v10421 = vunpack.c.h.b16 %v9323
    %v10422 = vunpack.c.l.b16 %v9324
    %v10423 = vunpack.c.h.b16 %v9324
    %v10424 = vunpack.c.l.b16 %v9325
    %v10425 = vunpack.c.h.b16 %v9325
    %v10426 = vunpack.c.l.b16 %v9326
    %v10427 = vunpack.c.h.b16 %v9326
    %v10428 = vunpack.c.l.b16 %v9327
    %v10429 = vunpack.c.h.b16 %v9327
    %v10430 = vunpack.c.l.b16 %v9328
    %v10431 = vunpack.c.h.b16 %v9328
    %v10432 = vunpack.c.l.b16 %v9329
    %v10433 = vunpack.c.h.b16 %v9329
    %v10434 = vunpack.c.l.b16 %v9330
    %v10435 = vunpack.c.h.b16 %v9330
    %v10436 = vunpack.c.l.b16 %v9331
    %v10437 = vunpack.c.h.b16 %v9331
    %v10438 = vunpack.c.l.b16 %v9332
    %v10439 = vunpack.c.h.b16 %v9332
    %v10440 = vunpack.c.l.b16 %v9333
    %v10441 = vunpack.c.h.b16 %v9333
    %v10442 = vunpack.c.l.b16 %v9334
    %v10443 = vunpack.c.h.b16 %v9334
    %v10444 = vunpack.c.l.b16 %v9335
    %v10445 = vunpack.c.h.b16 %v9335
    %v10446 = vunpack.c.l.b16 %v9336
    %v10447 = vunpack.c.h.b16 %v9336
    %v10448 = vunpack.c.l.b16 %v9337
    %v10449 = vunpack.c.h.b16 %v9337
    %v10450 = vunpack.c.l.b16 %v9338
    %v10451 = vunpack.c.h.b16 %v9338
    %v10452 = vunpack.c.l.b16 %v9339
    %v10453 = vunpack.c.h.b16 %v9339
    %v10454 = vunpack.c.l.b16 %v9340
    %v10455 = vunpack.c.h.b16 %v9340
    %v10456 = vunpack.c.l.b16 %v9341
    %v10457 = vunpack.c.h.b16 %v9341
    %v10458 = vunpack.c.l.b16 %v9342
    %v10459 = vunpack.c.h.b16 %v9342
    %v10460 = vunpack.c.l.b16 %v9343
    %v10461 = vunpack.c.h.b16 %v9343
    %v10462 = vunpack.c.l.b16 %v9344
    %v10463 = vunpack.c.h.b16 %v9344
    %v10464 = vunpack.c.l.b16 %v9345
    %v10465 = vunpack.c.h.b16 %v9345
    %v10466 = vunpack.c.l.b16 %v9346
    %v10467 = vunpack.c.h.b16 %v9346
    %v10468 = vunpack.c.l.b16 %v9347
    %v10469 = vunpack.c.h.b16 %v9347
    %v10470 = vunpack.c.l.b16 %v9348
    %v10471 = vunpack.c.h.b16 %v9348
    %v10472 = vunpack.c.l.b16 %v9349
    %v10473 = vunpack.c.h.b16 %v9349
    %v10474 = vunpack.c.l.b16 %v9350
    %v10475 = vunpack.c.h.b16 %v9350
    %v10476 = vunpack.c.l.b16 %v9351
    %v10477 = vunpack.c.h.b16 %v9351
    %v10478 = vunpack.c.l.b16 %v9352
    %v10479 = vunpack.c.h.b16 %v9352
    %v10480 = vunpack.c.l.b16 %v9353
    %v10481 = vunpack.c.h.b16 %v9353
    %v10482 = vunpack.c.l.b16 %v9354
    %v10483 = vunpack.c.h.b16 %v9354
    %v10484 = vunpack.c.l.b16 %v9355
    %v10485 = vunpack.c.h.b16 %v9355
    %v10486 = vunpack.c.l.b16 %v9356
    %v10487 = vunpack.c.h.b16 %v9356
    %v10488 = vunpack.c.l.b16 %v9357
    %v10489 = vunpack.c.h.b16 %v9357
    %v10490 = vunpack.c.l.b16 %v9358
    %v10491 = vunpack.c.h.b16 %v9358
    %v10492 = vunpack.c.l.b16 %v9359
    %v10493 = vunpack.c.h.b16 %v9359
    %v10494 = vunpack.c.l.b16 %v9360
    %v10495 = vunpack.c.h.b16 %v9360
    %v10496 = vunpack.c.l.b16 %v9361
    %v10497 = vunpack.c.h.b16 %v9361
    %v10498 = vunpack.c.l.b16 %v9362
    %v10499 = vunpack.c.h.b16 %v9362
    %v10500 = vunpack.c.l.b16 %v9363
    %v10501 = vunpack.c.h.b16 %v9363
    %v10502 = vunpack.c.l.b16 %v9364
    %v10503 = vunpack.c.h.b16 %v9364
    %v10504 = vunpack.c.l.b16 %v9365
    %v10505 = vunpack.c.h.b16 %v9365
    %v10506 = vunpack.c.l.b16 %v9366
    %v10507 = vunpack.c.h.b16 %v9366
    %v10508 = vunpack.c.l.b16 %v9367
    %v10509 = vunpack.c.h.b16 %v9367
    %v10510 = vunpack.c.l.b16 %v9368
    %v10511 = vunpack.c.h.b16 %v9368
    %v10512 = vunpack.c.l.b16 %v9369
    %v10513 = vunpack.c.h.b16 %v9369
    %v10514 = vunpack.c.l.b16 %v9370
    %v10515 = vunpack.c.h.b16 %v9370
    %v10516 = vunpack.c.l.b16 %v9371
    %v10517 = vunpack.c.h.b16 %v9371
    %v10518 = vunpack.c.l.b16 %v9372
    %v10519 = vunpack.c.h.b16 %v9372
    %v10520 = vunpack.c.l.b16 %v9373
    %v10521 = vunpack.c.h.b16 %v9373
    %v10522 = vunpack.c.l.b16 %v9374
    %v10523 = vunpack.c.h.b16 %v9374
    %v10524 = vunpack.c.l.b16 %v9375
    %v10525 = vunpack.c.h.b16 %v9375
    %v10526 = vunpack.c.l.b16 %v9376
    %v10527 = vunpack.c.h.b16 %v9376
    %v10528 = vunpack.c.l.b16 %v9377
    %v10529 = vunpack.c.h.b16 %v9377
    %v10530 = vunpack.c.l.b16 %v9378
    %v10531 = vunpack.c.h.b16 %v9378
    %v10532 = vunpack.c.l.b16 %v9379
    %v10533 = vunpack.c.h.b16 %v9379
    %v10534 = vunpack.c.l.b16 %v9380
    %v10535 = vunpack.c.h.b16 %v9380
    %v10536 = vunpack.c.l.b16 %v9381
    %v10537 = vunpack.c.h.b16 %v9381
    %v10538 = vunpack.c.l.b16 %v9382
    %v10539 = vunpack.c.h.b16 %v9382
    %v10540 = vunpack.c.l.b16 %v9383
    %v10541 = vunpack.c.h.b16 %v9383
    %v10542 = vunpack.c.l.b16 %v9384
    %v10543 = vunpack.c.h.b16 %v9384
    %v10544 = vunpack.c.l.b16 %v9385
    %v10545 = vunpack.c.h.b16 %v9385
    %v10546 = vunpack.c.l.b16 %v9386
    %v10547 = vunpack.c.h.b16 %v9386
    %v10548 = vunpack.c.l.b16 %v9387
    %v10549 = vunpack.c.h.b16 %v9387
    %v10550 = vunpack.c.l.b16 %v9388
    %v10551 = vunpack.c.h.b16 %v9388
    %v10552 = vunpack.c.l.b16 %v9389
    %v10553 = vunpack.c.h.b16 %v9389
    %v10554 = vunpack.c.l.b16 %v9390
    %v10555 = vunpack.c.h.b16 %v9390
    %v10556 = vunpack.c.l.b16 %v9391
    %v10557 = vunpack.c.h.b16 %v9391
    %v10558 = vunpack.c.l.b16 %v9392
    %v10559 = vunpack.c.h.b16 %v9392
    %v10560 = vunpack.c.l.b16 %v9393
    %v10561 = vunpack.c.h.b16 %v9393
    %v10562 = vunpack.c.l.b16 %v9394
    %v10563 = vunpack.c.h.b16 %v9394
    %v10564 = vunpack.c.l.b16 %v9395
    %v10565 = vunpack.c.h.b16 %v9395
    %v10566 = vunpack.c.l.b16 %v9396
    %v10567 = vunpack.c.h.b16 %v9396
    %v10568 = vunpack.c.l.b16 %v9397
    %v10569 = vunpack.c.h.b16 %v9397
    %v10570 = vunpack.c.l.b16 %v9398
    %v10571 = vunpack.c.h.b16 %v9398
    %v10572 = vunpack.c.l.b16 %v9399
    %v10573 = vunpack.c.h.b16 %v9399
    %v10574 = vunpack.c.l.b16 %v9400
    %v10575 = vunpack.c.h.b16 %v9400
    %v10576 = vunpack.c.l.b16 %v9401
    %v10577 = vunpack.c.h.b16 %v9401
    %v10578 = vunpack.c.l.b16 %v9402
    %v10579 = vunpack.c.h.b16 %v9402
    %v10580 = vunpack.c.l.b16 %v9403
    %v10581 = vunpack.c.h.b16 %v9403
    %v10582 = vunpack.c.l.b16 %v9404
    %v10583 = vunpack.c.h.b16 %v9404
    %v10584 = vunpack.c.l.b16 %v9405
    %v10585 = vunpack.c.h.b16 %v9405
    %v10586 = vunpack.c.l.b16 %v9406
    %v10587 = vunpack.c.h.b16 %v9406
    %v10588 = vunpack.c.l.b16 %v9407
    %v10589 = vunpack.c.h.b16 %v9407
    %v10590 = vunpack.c.l.b16 %v9408
    %v10591 = vunpack.c.h.b16 %v9408
    %v10592 = vunpack.c.l.b16 %v9409
    %v10593 = vunpack.c.h.b16 %v9409
    %v10594 = vunpack.c.l.b16 %v9410
    %v10595 = vunpack.c.h.b16 %v9410
    %v10596 = vunpack.c.l.b16 %v9411
    %v10597 = vunpack.c.h.b16 %v9411
    %v10598 = vunpack.c.l.b16 %v9412
    %v10599 = vunpack.c.h.b16 %v9412
    %v10600 = vunpack.c.l.b16 %v9413
    %v10601 = vunpack.c.h.b16 %v9413
    %v10602 = vunpack.c.l.b16 %v9414
    %v10603 = vunpack.c.h.b16 %v9414
    %v10604 = vunpack.c.l.b16 %v9415
    %v10605 = vunpack.c.h.b16 %v9415
    %v10606 = vunpack.c.l.b16 %v9416
    %v10607 = vunpack.c.h.b16 %v9416
    %v10608 = vunpack.c.l.b16 %v9417
    %v10609 = vunpack.c.h.b16 %v9417
    %v10610 = vunpack.c.l.b16 %v9418
    %v10611 = vunpack.c.h.b16 %v9418
    %v10612 = vunpack.c.l.b16 %v9419
    %v10613 = vunpack.c.h.b16 %v9419
    %v10614 = vunpack.c.l.b16 %v9420
    %v10615 = vunpack.c.h.b16 %v9420
    %v10616 = vunpack.c.l.b16 %v9421
    %v10617 = vunpack.c.h.b16 %v9421
    %v10618 = vunpack.c.l.b16 %v9422
    %v10619 = vunpack.c.h.b16 %v9422
    %v10620 = vunpack.c.l.b16 %v9423
    %v10621 = vunpack.c.h.b16 %v9423
    %v10622 = vunpack.c.l.b16 %v9424
    %v10623 = vunpack.c.h.b16 %v9424
    %v10624 = vunpack.c.l.b16 %v9425
    %v10625 = vunpack.c.h.b16 %v9425
    %v10626 = vunpack.c.l.b16 %v9426
    %v10627 = vunpack.c.h.b16 %v9426
    %v10628 = vunpack.c.l.b16 %v9427
    %v10629 = vunpack.c.h.b16 %v9427
    %v10630 = vunpack.c.l.b16 %v9428
    %v10631 = vunpack.c.h.b16 %v9428
    %v10632 = vunpack.c.l.b16 %v9429
    %v10633 = vunpack.c.h.b16 %v9429
    %v10634 = vunpack.c.l.b16 %v9430
    %v10635 = vunpack.c.h.b16 %v9430
    %v10636 = vunpack.c.l.b16 %v9431
    %v10637 = vunpack.c.h.b16 %v9431
    %v10638 = vunpack.c.l.b16 %v9432
    %v10639 = vunpack.c.h.b16 %v9432
    %v10640 = vunpack.c.l.b16 %v9433
    %v10641 = vunpack.c.h.b16 %v9433
    %v10642 = vunpack.c.l.b16 %v9434
    %v10643 = vunpack.c.h.b16 %v9434
    %v10644 = vunpack.c.l.b16 %v9435
    %v10645 = vunpack.c.h.b16 %v9435
    %v10646 = vunpack.c.l.b16 %v9436
    %v10647 = vunpack.c.h.b16 %v9436
    %v10648 = vunpack.c.l.b16 %v9437
    %v10649 = vunpack.c.h.b16 %v9437
    %v10650 = vunpack.c.l.b16 %v9438
    %v10651 = vunpack.c.h.b16 %v9438
    %v10652 = vunpack.c.l.b16 %v9439
    %v10653 = vunpack.c.h.b16 %v9439
    %v10654 = vunpack.c.l.b16 %v9440
    %v10655 = vunpack.c.h.b16 %v9440
    %v10656 = vunpack.c.l.b16 %v9441
    %v10657 = vunpack.c.h.b16 %v9441
    %v10658 = vunpack.c.l.b16 %v9442
    %v10659 = vunpack.c.h.b16 %v9442
    %v10660 = vunpack.c.l.b16 %v9443
    %v10661 = vunpack.c.h.b16 %v9443
    %v10662 = vunpack.c.l.b16 %v9444
    %v10663 = vunpack.c.h.b16 %v9444
    %v10664 = vunpack.c.l.b16 %v9445
    %v10665 = vunpack.c.h.b16 %v9445
    %v10666 = vunpack.c.l.b16 %v9446
    %v10667 = vunpack.c.h.b16 %v9446
    %v10668 = vunpack.c.l.b16 %v9447
    %v10669 = vunpack.c.h.b16 %v9447
    %v10670 = vunpack.c.l.b16 %v9448
    %v10671 = vunpack.c.h.b16 %v9448
    %v10672 = vunpack.c.l.b16 %v9449
    %v10673 = vunpack.c.h.b16 %v9449
    %v10674 = vunpack.c.l.b16 %v9450
    %v10675 = vunpack.c.h.b16 %v9450
    %v10676 = vunpack.c.l.b16 %v9451
    %v10677 = vunpack.c.h.b16 %v9451
    %v10678 = vunpack.c.l.b16 %v9452
    %v10679 = vunpack.c.h.b16 %v9452
    %v10680 = vunpack.c.l.b16 %v9453
    %v10681 = vunpack.c.h.b16 %v9453
    %v10682 = vunpack.c.l.b16 %v9454
    %v10683 = vunpack.c.h.b16 %v9454
    %v10684 = vunpack.c.l.b16 %v9455
    %v10685 = vunpack.c.h.b16 %v9455
    %v10686 = vunpack.c.l.b16 %v9456
    %v10687 = vunpack.c.h.b16 %v9456
    %v10688 = vunpack.c.l.b16 %v9457
    %v10689 = vunpack.c.h.b16 %v9457
    %v10690 = vunpack.c.l.b16 %v9458
    %v10691 = vunpack.c.h.b16 %v9458
    %v10692 = vunpack.c.l.b16 %v9459
    %v10693 = vunpack.c.h.b16 %v9459
    %v10694 = vunpack.c.l.b16 %v9460
    %v10695 = vunpack.c.h.b16 %v9460
    %v10696 = vunpack.c.l.b16 %v9461
    %v10697 = vunpack.c.h.b16 %v9461
    %v10698 = vunpack.c.l.b16 %v9462
    %v10699 = vunpack.c.h.b16 %v9462
    %v10700 = vunpack.c.l.b16 %v9463
    %v10701 = vunpack.c.h.b16 %v9463
    %v10702 = vunpack.c.l.b16 %v9464
    %v10703 = vunpack.c.h.b16 %v9464
    %v10704 = vunpack.c.l.b16 %v9465
    %v10705 = vunpack.c.h.b16 %v9465
    %v10706 = vunpack.c.l.b16 %v9466
    %v10707 = vunpack.c.h.b16 %v9466
    %v10708 = vunpack.c.l.b16 %v9467
    %v10709 = vunpack.c.h.b16 %v9467
    %v10710 = vunpack.c.l.b16 %v9468
    %v10711 = vunpack.c.h.b16 %v9468
    %v10712 = vunpack.c.l.b16 %v9469
    %v10713 = vunpack.c.h.b16 %v9469
    %v10714 = vunpack.c.l.b16 %v9470
    %v10715 = vunpack.c.h.b16 %v9470
    %v10716 = vunpack.c.l.b16 %v9471
    %v10717 = vunpack.c.h.b16 %v9471
    %v10718 = vunpack.c.l.b16 %v9472
    %v10719 = vunpack.c.h.b16 %v9472
    %v10720 = vunpack.c.l.b16 %v9473
    %v10721 = vunpack.c.h.b16 %v9473
    %v10722 = vunpack.c.l.b16 %v9474
    %v10723 = vunpack.c.h.b16 %v9474
    %v10724 = vunpack.c.l.b16 %v9475
    %v10725 = vunpack.c.h.b16 %v9475
    %v10726 = vunpack.c.l.b16 %v9476
    %v10727 = vunpack.c.h.b16 %v9476
    %v10728 = vunpack.c.l.b16 %v9477
    %v10729 = vunpack.c.h.b16 %v9477
    %v10730 = vunpack.c.l.b16 %v9478
    %v10731 = vunpack.c.h.b16 %v9478
    %v10732 = vunpack.c.l.b16 %v9479
    %v10733 = vunpack.c.h.b16 %v9479
    %v10734 = vunpack.c.l.b16 %v9480
    %v10735 = vunpack.c.h.b16 %v9480
    %v10736 = vunpack.c.l.b16 %v9481
    %v10737 = vunpack.c.h.b16 %v9481
    %v10738 = vunpack.c.l.b16 %v9482
    %v10739 = vunpack.c.h.b16 %v9482
    %v10740 = vunpack.c.l.b16 %v9483
    %v10741 = vunpack.c.h.b16 %v9483
    %v10742 = vunpack.c.l.b16 %v9484
    %v10743 = vunpack.c.h.b16 %v9484
    %v10744 = vunpack.c.l.b16 %v9485
    %v10745 = vunpack.c.h.b16 %v9485
    %v10746 = vunpack.c.l.b16 %v9486
    %v10747 = vunpack.c.h.b16 %v9486
    %v10748 = vunpack.c.l.b16 %v9487
    %v10749 = vunpack.c.h.b16 %v9487
    %v10750 = vunpack.c.l.b16 %v9488
    %v10751 = vunpack.c.h.b16 %v9488
    %v10752 = vunpack.c.l.b16 %v9489
    %v10753 = vunpack.c.h.b16 %v9489
    %v10754 = vunpack.c.l.b16 %v9490
    %v10755 = vunpack.c.h.b16 %v9490
    %v10756 = vunpack.c.l.b16 %v9491
    %v10757 = vunpack.c.h.b16 %v9491
    %v10758 = vunpack.c.l.b16 %v9492
    %v10759 = vunpack.c.h.b16 %v9492
    %v10760 = vunpack.c.l.b16 %v9493
    %v10761 = vunpack.c.h.b16 %v9493
    %v10762 = vunpack.c.l.b16 %v9494
    %v10763 = vunpack.c.h.b16 %v9494
    %v10764 = vunpack.c.l.b16 %v9495
    %v10765 = vunpack.c.h.b16 %v9495
    %v10766 = vunpack.c.l.b16 %v9496
    %v10767 = vunpack.c.h.b16 %v9496
    %v10768 = vunpack.c.l.b16 %v9497
    %v10769 = vunpack.c.h.b16 %v9497
    %v10770 = vunpack.c.l.b16 %v9498
    %v10771 = vunpack.c.h.b16 %v9498
    %v10772 = vunpack.c.l.b16 %v9499
    %v10773 = vunpack.c.h.b16 %v9499
    %v10774 = vunpack.c.l.b16 %v9500
    %v10775 = vunpack.c.h.b16 %v9500
    %v10776 = vunpack.c.l.b16 %v9501
    %v10777 = vunpack.c.h.b16 %v9501
    %v10778 = vunpack.c.l.b16 %v9502
    %v10779 = vunpack.c.h.b16 %v9502
    %v10780 = vunpack.c.l.b16 %v9503
    %v10781 = vunpack.c.h.b16 %v9503
    %v10782 = vunpack.c.l.b16 %v9504
    %v10783 = vunpack.c.h.b16 %v9504
    %v10784 = vunpack.c.l.b16 %v9505
    %v10785 = vunpack.c.h.b16 %v9505
    %v10786 = vunpack.c.l.b16 %v9506
    %v10787 = vunpack.c.h.b16 %v9506
    %v10788 = vunpack.c.l.b16 %v9507
    %v10789 = vunpack.c.h.b16 %v9507
    %v10790 = vunpack.c.l.b16 %v9508
    %v10791 = vunpack.c.h.b16 %v9508
    %v10792 = vunpack.c.l.b16 %v9509
    %v10793 = vunpack.c.h.b16 %v9509
    %v10794 = vunpack.c.l.b16 %v9510
    %v10795 = vunpack.c.h.b16 %v9510
    %v10796 = vunpack.c.l.b16 %v9511
    %v10797 = vunpack.c.h.b16 %v9511
    %v10798 = vunpack.c.l.b16 %v9512
    %v10799 = vunpack.c.h.b16 %v9512
    %v10800 = vunpack.c.l.b16 %v9513
    %v10801 = vunpack.c.h.b16 %v9513
    %v10802 = vunpack.c.l.b16 %v9514
    %v10803 = vunpack.c.h.b16 %v9514
    %v10804 = vunpack.c.l.b16 %v9515
    %v10805 = vunpack.c.h.b16 %v9515
    %v10806 = vunpack.c.l.b16 %v9516
    %v10807 = vunpack.c.h.b16 %v9516
    %v10808 = vunpack.c.l.b16 %v9517
    %v10809 = vunpack.c.h.b16 %v9517
    %v10810 = vunpack.c.l.b16 %v9518
    %v10811 = vunpack.c.h.b16 %v9518
    %v10812 = vunpack.c.l.b16 %v9519
    %v10813 = vunpack.c.h.b16 %v9519
    %v10814 = vunpack.c.l.b16 %v9520
    %v10815 = vunpack.c.h.b16 %v9520
    %v10816 = vunpack.c.l.b16 %v9521
    %v10817 = vunpack.c.h.b16 %v9521
    %v10818 = vunpack.c.l.b16 %v9522
    %v10819 = vunpack.c.h.b16 %v9522
    %v10820 = vunpack.c.l.b16 %v9523
    %v10821 = vunpack.c.h.b16 %v9523
    %v10822 = vunpack.c.l.b16 %v9524
    %v10823 = vunpack.c.h.b16 %v9524
    %v10824 = vunpack.c.l.b16 %v9525
    %v10825 = vunpack.c.h.b16 %v9525
    %v10826 = vunpack.c.l.b16 %v9526
    %v10827 = vunpack.c.h.b16 %v9526
    %v10828 = vunpack.c.l.b16 %v9527
    %v10829 = vunpack.c.h.b16 %v9527
    %v10830 = vunpack.c.l.b16 %v9528
    %v10831 = vunpack.c.h.b16 %v9528
    %v10832 = vunpack.c.l.b16 %v9529
    %v10833 = vunpack.c.h.b16 %v9529
    %v10834 = vunpack.c.l.b16 %v9530
    %v10835 = vunpack.c.h.b16 %v9530
    %v10836 = vunpack.c.l.b16 %v9531
    %v10837 = vunpack.c.h.b16 %v9531
    %v10838 = vunpack.c.l.b16 %v9532
    %v10839 = vunpack.c.h.b16 %v9532
    %v10840 = vunpack.c.l.b16 %v9533
    %v10841 = vunpack.c.h.b16 %v9533
    %v10842 = vunpack.c.l.b16 %v9534
    %v10843 = vunpack.c.h.b16 %v9534
    %v10844 = vunpack.c.l.b16 %v9535
    %v10845 = vunpack.c.h.b16 %v9535
    %v10846 = vunpack.c.l.b16 %v9536
    %v10847 = vunpack.c.h.b16 %v9536
    %v10848 = vunpack.c.l.b16 %v9537
    %v10849 = vunpack.c.h.b16 %v9537
    %v10850 = vunpack.c.l.b16 %v9538
    %v10851 = vunpack.c.h.b16 %v9538
    %v10852 = vunpack.c.l.b16 %v9539
    %v10853 = vunpack.c.h.b16 %v9539
    %v10854 = vunpack.c.l.b16 %v9540
    %v10855 = vunpack.c.h.b16 %v9540
    %v10856 = vunpack.c.l.b16 %v9541
    %v10857 = vunpack.c.h.b16 %v9541
    %v10858 = vunpack.c.l.b16 %v9542
    %v10859 = vunpack.c.h.b16 %v9542
    %v10860 = vunpack.c.l.b16 %v9543
    %v10861 = vunpack.c.h.b16 %v9543
    %v10862 = vunpack.c.l.b16 %v9544
    %v10863 = vunpack.c.h.b16 %v9544
    %v10864 = vunpack.c.l.b16 %v9545
    %v10865 = vunpack.c.h.b16 %v9545
    %v10866 = vunpack.c.l.b16 %v9546
    %v10867 = vunpack.c.h.b16 %v9546
    %v10868 = vunpack.c.l.b16 %v9547
    %v10869 = vunpack.c.h.b16 %v9547
    %v10870 = vunpack.c.l.b16 %v9548
    %v10871 = vunpack.c.h.b16 %v9548
    %v10872 = vunpack.c.l.b16 %v9549
    %v10873 = vunpack.c.h.b16 %v9549
    %v10874 = vunpack.c.l.b16 %v9550
    %v10875 = vunpack.c.h.b16 %v9550
    %v10876 = vunpack.c.l.b16 %v9551
    %v10877 = vunpack.c.h.b16 %v9551
    %v10878 = vunpack.c.l.b16 %v9552
    %v10879 = vunpack.c.h.b16 %v9552
    %v10880 = vunpack.c.l.b16 %v9553
    %v10881 = vunpack.c.h.b16 %v9553
    %v10882 = vunpack.c.l.b16 %v9554
    %v10883 = vunpack.c.h.b16 %v9554
    %v10884 = vunpack.c.l.b16 %v9555
    %v10885 = vunpack.c.h.b16 %v9555
    %v10886 = vunpack.c.l.b16 %v9556
    %v10887 = vunpack.c.h.b16 %v9556
    %v10888 = vunpack.c.l.b16 %v9557
    %v10889 = vunpack.c.h.b16 %v9557
    %v10890 = vunpack.c.l.b16 %v9558
    %v10891 = vunpack.c.h.b16 %v9558
    %v10892 = vunpack.c.l.b16 %v9559
    %v10893 = vunpack.c.h.b16 %v9559
    %v10894 = vunpack.c.l.b16 %v9560
    %v10895 = vunpack.c.h.b16 %v9560
    %v10896 = vunpack.c.l.b16 %v9561
    %v10897 = vunpack.c.h.b16 %v9561
    %v10898 = vunpack.c.l.b16 %v9562
    %v10899 = vunpack.c.h.b16 %v9562
    %v10900 = vunpack.c.l.b16 %v9563
    %v10901 = vunpack.c.h.b16 %v9563
    %v10902 = vunpack.c.l.b16 %v9564
    %v10903 = vunpack.c.h.b16 %v9564
    %v10904 = vunpack.c.l.b16 %v9565
    %v10905 = vunpack.c.h.b16 %v9565
    %v10906 = vunpack.c.l.b16 %v9566
    %v10907 = vunpack.c.h.b16 %v9566
    %v10908 = vunpack.c.l.b16 %v9567
    %v10909 = vunpack.c.h.b16 %v9567
    %v10910 = vunpack.c.l.b16 %v9568
    %v10911 = vunpack.c.h.b16 %v9568
    %v10912 = vunpack.c.l.b16 %v9569
    %v10913 = vunpack.c.h.b16 %v9569
    %v10914 = vunpack.c.l.b16 %v9570
    %v10915 = vunpack.c.h.b16 %v9570
    %v10916 = vunpack.c.l.b16 %v9571
    %v10917 = vunpack.c.h.b16 %v9571
    %v10918 = vunpack.c.l.b16 %v9572
    %v10919 = vunpack.c.h.b16 %v9572
    %v10920 = vunpack.c.l.b16 %v9573
    %v10921 = vunpack.c.h.b16 %v9573
    %v10922 = vunpack.c.l.b16 %v9574
    %v10923 = vunpack.c.h.b16 %v9574
    %v10924 = vunpack.c.l.b16 %v9575
    %v10925 = vunpack.c.h.b16 %v9575
    %v10926 = vunpack.c.l.b16 %v9576
    %v10927 = vunpack.c.h.b16 %v9576
    %v10928 = vunpack.c.l.b16 %v9577
    %v10929 = vunpack.c.h.b16 %v9577
    %v10930 = vunpack.c.l.b16 %v9578
    %v10931 = vunpack.c.h.b16 %v9578
    %v10932 = vunpack.c.l.b16 %v9579
    %v10933 = vunpack.c.h.b16 %v9579
    %v10934 = vunpack.c.l.b16 %v9580
    %v10935 = vunpack.c.h.b16 %v9580
    %v10936 = vunpack.c.l.b16 %v9581
    %v10937 = vunpack.c.h.b16 %v9581
    %v10938 = vunpack.c.l.b16 %v9582
    %v10939 = vunpack.c.h.b16 %v9582
    %v10940 = vunpack.c.l.b16 %v9583
    %v10941 = vunpack.c.h.b16 %v9583
    %v10942 = vunpack.c.l.b16 %v9584
    %v10943 = vunpack.c.h.b16 %v9584
    %v10944 = vunpack.c.l.b16 %v9585
    %v10945 = vunpack.c.h.b16 %v9585
    %v10946 = vunpack.c.l.b16 %v9586
    %v10947 = vunpack.c.h.b16 %v9586
    %v10948 = vunpack.c.l.b16 %v9587
    %v10949 = vunpack.c.h.b16 %v9587
    %v10950 = vunpack.c.l.b16 %v9588
    %v10951 = vunpack.c.h.b16 %v9588
    %v10952 = vunpack.c.l.b16 %v9589
    %v10953 = vunpack.c.h.b16 %v9589
    %v10954 = vunpack.c.l.b16 %v9590
    %v10955 = vunpack.c.h.b16 %v9590
    %v10956 = vunpack.c.l.b16 %v9591
    %v10957 = vunpack.c.h.b16 %v9591
    %v10958 = vunpack.c.l.b16 %v9592
    %v10959 = vunpack.c.h.b16 %v9592
    %v10960 = vunpack.c.l.b16 %v9593
    %v10961 = vunpack.c.h.b16 %v9593
    %v10962 = vunpack.c.l.b16 %v9594
    %v10963 = vunpack.c.h.b16 %v9594
    %v10964 = vunpack.c.l.b16 %v9595
    %v10965 = vunpack.c.h.b16 %v9595
    %v10966 = vunpack.c.l.b16 %v9596
    %v10967 = vunpack.c.h.b16 %v9596
    %v10968 = vunpack.c.l.b16 %v9597
    %v10969 = vunpack.c.h.b16 %v9597
    %v10970 = vunpack.c.l.b16 %v9598
    %v10971 = vunpack.c.h.b16 %v9598
    %v10972 = vunpack.c.l.b16 %v9599
    %v10973 = vunpack.c.h.b16 %v9599
    %v10974 = vunpack.c.l.b16 %v9600
    %v10975 = vunpack.c.h.b16 %v9600
    %v10976 = vunpack.c.l.b16 %v9601
    %v10977 = vunpack.c.h.b16 %v9601
    %v10978 = vunpack.c.l.b16 %v9602
    %v10979 = vunpack.c.h.b16 %v9602
    %v10980 = vunpack.c.l.b16 %v9603
    %v10981 = vunpack.c.h.b16 %v9603
    %v10982 = vunpack.c.l.b16 %v9604
    %v10983 = vunpack.c.h.b16 %v9604
    %v10984 = vunpack.c.l.b16 %v9605
    %v10985 = vunpack.c.h.b16 %v9605
    %v10986 = vunpack.c.l.b16 %v9606
    %v10987 = vunpack.c.h.b16 %v9606
    %v10988 = vunpack.c.l.b16 %v9607
    %v10989 = vunpack.c.h.b16 %v9607
    %v10990 = vunpack.c.l.b16 %v9608
    %v10991 = vunpack.c.h.b16 %v9608
    %v10992 = vunpack.c.l.b16 %v9609
    %v10993 = vunpack.c.h.b16 %v9609
    %v10994 = vunpack.c.l.b16 %v9610
    %v10995 = vunpack.c.h.b16 %v9610
    %v10996 = vunpack.c.l.b16 %v9611
    %v10997 = vunpack.c.h.b16 %v9611
    %v10998 = vunpack.c.l.b16 %v9612
    %v10999 = vunpack.c.h.b16 %v9612
    %v11000 = vunpack.c.l.b16 %v9613
    %v11001 = vunpack.c.h.b16 %v9613
    %v11002 = vunpack.c.l.b16 %v9614
    %v11003 = vunpack.c.h.b16 %v9614
    %v11004 = vunpack.c.l.b16 %v9615
    %v11005 = vunpack.c.h.b16 %v9615
    %v11006 = vunpack.c.l.b16 %v9616
    %v11007 = vunpack.c.h.b16 %v9616
    %v11008 = vunpack.c.l.b16 %v9617
    %v11009 = vunpack.c.h.b16 %v9617
    %v11010 = vunpack.c.l.b16 %v9618
    %v11011 = vunpack.c.h.b16 %v9618
    %v11012 = vunpack.c.l.b16 %v9619
    %v11013 = vunpack.c.h.b16 %v9619
    %v11014 = vunpack.c.l.b16 %v9620
    %v11015 = vunpack.c.h.b16 %v9620
    %v11016 = vunpack.c.l.b16 %v9621
    %v11017 = vunpack.c.h.b16 %v9621
    %v11018 = vunpack.c.l.b16 %v9622
    %v11019 = vunpack.c.h.b16 %v9622
    %v11020 = vunpack.c.l.b16 %v9623
    %v11021 = vunpack.c.h.b16 %v9623
    %v11022 = vunpack.c.l.b16 %v9624
    %v11023 = vunpack.c.h.b16 %v9624
    %v11024 = vunpack.c.l.b16 %v9625
    %v11025 = vunpack.c.h.b16 %v9625
    %v11026 = vunpack.c.l.b16 %v9626
    %v11027 = vunpack.c.h.b16 %v9626
    %v11028 = vunpack.c.l.b16 %v9627
    %v11029 = vunpack.c.h.b16 %v9627
    %v11030 = vunpack.c.l.b16 %v9628
    %v11031 = vunpack.c.h.b16 %v9628
    %v11032 = vunpack.c.l.b16 %v9629
    %v11033 = vunpack.c.h.b16 %v9629
    %v11034 = vunpack.c.l.b16 %v9630
    %v11035 = vunpack.c.h.b16 %v9630
    %v11036 = vunpack.c.l.b16 %v9631
    %v11037 = vunpack.c.h.b16 %v9631
    %v11038 = vunpack.c.l.b16 %v9632
    %v11039 = vunpack.c.h.b16 %v9632
    %v11040 = vunpack.c.l.b16 %v9633
    %v11041 = vunpack.c.h.b16 %v9633
    %v11042 = vunpack.c.l.b16 %v9634
    %v11043 = vunpack.c.h.b16 %v9634
    %v11044 = vunpack.c.l.b16 %v9635
    %v11045 = vunpack.c.h.b16 %v9635
    %v11046 = vunpack.c.l.b16 %v9636
    %v11047 = vunpack.c.h.b16 %v9636
    %v11048 = vunpack.c.l.b16 %v9637
    %v11049 = vunpack.c.h.b16 %v9637
    %v11050 = vunpack.c.l.b16 %v9638
    %v11051 = vunpack.c.h.b16 %v9638
    %v11052 = vunpack.c.l.b16 %v9639
    %v11053 = vunpack.c.h.b16 %v9639
    %v11054 = vunpack.c.l.b16 %v9640
    %v11055 = vunpack.c.h.b16 %v9640
    %v11056 = vunpack.c.l.b16 %v9641
    %v11057 = vunpack.c.h.b16 %v9641
    %v11058 = vunpack.c.l.b16 %v9642
    %v11059 = vunpack.c.h.b16 %v9642
    %v11060 = vunpack.c.l.b16 %v9643
    %v11061 = vunpack.c.h.b16 %v9643
    %v11062 = vunpack.c.l.b16 %v9644
    %v11063 = vunpack.c.h.b16 %v9644
    %v11064 = vunpack.c.l.b16 %v9645
    %v11065 = vunpack.c.h.b16 %v9645
    %v11066 = vunpack.c.l.b16 %v9646
    %v11067 = vunpack.c.h.b16 %v9646
    %v11068 = vunpack.c.l.b16 %v9647
    %v11069 = vunpack.c.h.b16 %v9647
    %v11070 = vunpack.c.l.b16 %v9648
    %v11071 = vunpack.c.h.b16 %v9648
    %v11072 = vunpack.c.l.b16 %v9649
    %v11073 = vunpack.c.h.b16 %v9649
    %v11074 = vunpack.c.l.b16 %v9650
    %v11075 = vunpack.c.h.b16 %v9650
    %v11076 = vunpack.c.l.b16 %v9651
    %v11077 = vunpack.c.h.b16 %v9651
    %v11078 = vunpack.c.l.b16 %v9652
    %v11079 = vunpack.c.h.b16 %v9652
    %v11080 = vunpack.c.l.b16 %v9653
    %v11081 = vunpack.c.h.b16 %v9653
    %v11082 = vunpack.c.l.b16 %v9654
    %v11083 = vunpack.c.h.b16 %v9654
    %v11084 = vunpack.c.l.b16 %v9655
    %v11085 = vunpack.c.h.b16 %v9655
    %v11086 = vunpack.c.l.b16 %v9656
    %v11087 = vunpack.c.h.b16 %v9656
    %v11088 = vunpack.c.l.b16 %v9657
    %v11089 = vunpack.c.h.b16 %v9657
    %v11090 = vunpack.c.l.b16 %v9658
    %v11091 = vunpack.c.h.b16 %v9658
    %v11092 = vunpack.c.l.b16 %v9659
    %v11093 = vunpack.c.h.b16 %v9659
    %v11094 = vunpack.c.l.b16 %v9660
    %v11095 = vunpack.c.h.b16 %v9660
    %v11096 = vunpack.c.l.b16 %v9661
    %v11097 = vunpack.c.h.b16 %v9661
    %v11098 = vunpack.c.l.b16 %v9662
    %v11099 = vunpack.c.h.b16 %v9662
    %v11100 = vunpack.c.l.b16 %v9663
    %v11101 = vunpack.c.h.b16 %v9663
    %v11102 = vunpack.c.l.b16 %v9664
    %v11103 = vunpack.c.h.b16 %v9664
    %v11104 = vunpack.c.l.b16 %v9665
    %v11105 = vunpack.c.h.b16 %v9665
    %v11106 = vunpack.c.l.b16 %v9666
    %v11107 = vunpack.c.h.b16 %v9666
    %v11108 = vunpack.c.l.b16 %v9667
    %v11109 = vunpack.c.h.b16 %v9667
    %v11110 = vunpack.c.l.b16 %v9668
    %v11111 = vunpack.c.h.b16 %v9668
    %v11112 = vunpack.c.l.b16 %v9669
    %v11113 = vunpack.c.h.b16 %v9669
    %v11114 = vunpack.c.l.b16 %v9670
    %v11115 = vunpack.c.h.b16 %v9670
    %v11116 = vunpack.c.l.b16 %v9671
    %v11117 = vunpack.c.h.b16 %v9671
    %v11118 = vunpack.c.l.b16 %v9672
    %v11119 = vunpack.c.h.b16 %v9672
    %v11120 = vunpack.c.l.b16 %v9673
    %v11121 = vunpack.c.h.b16 %v9673
    %v11122 = vunpack.c.l.b16 %v9674
    %v11123 = vunpack.c.h.b16 %v9674
    %v11124 = vunpack.c.l.b16 %v9675
    %v11125 = vunpack.c.h.b16 %v9675
    %v11126 = vunpack.c.l.b16 %v9676
    %v11127 = vunpack.c.h.b16 %v9676
    %v11128 = vunpack.c.l.b16 %v9677
    %v11129 = vunpack.c.h.b16 %v9677
    %v11130 = vunpack.c.l.b16 %v9678
    %v11131 = vunpack.c.h.b16 %v9678
    %v11132 = vunpack.c.l.b16 %v9679
    %v11133 = vunpack.c.h.b16 %v9679
    %v11134 = vunpack.c.l.b16 %v9680
    %v11135 = vunpack.c.h.b16 %v9680
    %v11136 = vunpack.c.l.b16 %v9681
    %v11137 = vunpack.c.h.b16 %v9681
    %v11138 = vunpack.c.l.b16 %v9682
    %v11139 = vunpack.c.h.b16 %v9682
    %v11140 = vunpack.c.l.b16 %v9683
    %v11141 = vunpack.c.h.b16 %v9683
    %v11142 = vunpack.c.l.b16 %v9684
    %v11143 = vunpack.c.h.b16 %v9684
    %v11144 = vunpack.c.l.b16 %v9685
    %v11145 = vunpack.c.h.b16 %v9685
    %v11146 = vunpack.c.l.b16 %v9686
    %v11147 = vunpack.c.h.b16 %v9686
    %v11148 = vunpack.c.l.b16 %v9687
    %v11149 = vunpack.c.h.b16 %v9687
    %v11150 = vunpack.c.l.b16 %v9688
    %v11151 = vunpack.c.h.b16 %v9688
    %v11152 = vunpack.c.l.b16 %v9689
    %v11153 = vunpack.c.h.b16 %v9689
    %v11154 = vunpack.c.l.b16 %v9690
    %v11155 = vunpack.c.h.b16 %v9690
    %v11156 = vunpack.c.l.b16 %v9691
    %v11157 = vunpack.c.h.b16 %v9691
    %v11158 = vunpack.c.l.b16 %v9692
    %v11159 = vunpack.c.h.b16 %v9692
    %v11160 = vunpack.c.l.b16 %v9693
    %v11161 = vunpack.c.h.b16 %v9693
    %v11162 = vunpack.c.l.b16 %v9694
    %v11163 = vunpack.c.h.b16 %v9694
    %v11164 = vunpack.c.l.b16 %v9695
    %v11165 = vunpack.c.h.b16 %v9695
    %v11166 = vunpack.c.l.b16 %v9696
    %v11167 = vunpack.c.h.b16 %v9696
    %v11168 = vunpack.c.l.b16 %v9697
    %v11169 = vunpack.c.h.b16 %v9697
    %v11170 = vunpack.c.l.b16 %v9698
    %v11171 = vunpack.c.h.b16 %v9698
    %v11172 = vunpack.c.l.b16 %v9699
    %v11173 = vunpack.c.h.b16 %v9699
    %v11174 = vunpack.c.l.b16 %v9700
    %v11175 = vunpack.c.h.b16 %v9700
    %v11176 = vunpack.c.l.b16 %v9701
    %v11177 = vunpack.c.h.b16 %v9701
    %v11178 = vunpack.c.l.b16 %v9702
    %v11179 = vunpack.c.h.b16 %v9702
    %v11180 = vunpack.c.l.b16 %v9703
    %v11181 = vunpack.c.h.b16 %v9703
    %v11182 = vunpack.c.l.b16 %v9704
    %v11183 = vunpack.c.h.b16 %v9704
    %v11184 = vunpack.c.l.b16 %v9705
    %v11185 = vunpack.c.h.b16 %v9705
    %v11186 = vunpack.c.l.b16 %v9706
    %v11187 = vunpack.c.h.b16 %v9706
    %v11188 = vunpack.c.l.b16 %v9707
    %v11189 = vunpack.c.h.b16 %v9707
    %v11190 = vunpack.c.l.b16 %v9708
    %v11191 = vunpack.c.h.b16 %v9708
    %v11192 = vunpack.c.l.b16 %v9709
    %v11193 = vunpack.c.h.b16 %v9709
    %v11194 = vunpack.c.l.b16 %v9710
    %v11195 = vunpack.c.h.b16 %v9710
    %v11196 = vunpack.c.l.b16 %v9711
    %v11197 = vunpack.c.h.b16 %v9711
    %v11198 = vunpack.c.l.b16 %v9712
    %v11199 = vunpack.c.h.b16 %v9712
    %v11200 = vunpack.c.l.b16 %v9713
    %v11201 = vunpack.c.h.b16 %v9713
    %v11202 = vunpack.c.l.b16 %v9714
    %v11203 = vunpack.c.h.b16 %v9714
    %v11204 = vunpack.c.l.b16 %v9715
    %v11205 = vunpack.c.h.b16 %v9715
    %v11206 = vunpack.c.l.b16 %v9716
    %v11207 = vunpack.c.h.b16 %v9716
    %v11208 = vunpack.c.l.b16 %v9717
    %v11209 = vunpack.c.h.b16 %v9717
    %v11210 = vunpack.c.l.b16 %v9718
    %v11211 = vunpack.c.h.b16 %v9718
    %v11212 = vunpack.c.l.b16 %v9719
    %v11213 = vunpack.c.h.b16 %v9719
    %v11214 = vunpack.c.l.b16 %v9720
    %v11215 = vunpack.c.h.b16 %v9720
    %v11216 = vunpack.c.l.b16 %v9721
    %v11217 = vunpack.c.h.b16 %v9721
    %v11218 = vunpack.c.l.b16 %v9722
    %v11219 = vunpack.c.h.b16 %v9722
    %v11220 = vunpack.c.l.b16 %v9723
    %v11221 = vunpack.c.h.b16 %v9723
    %v11222 = vunpack.c.l.b16 %v9724
    %v11223 = vunpack.c.h.b16 %v9724
    %v11224 = vunpack.c.l.b16 %v9725
    %v11225 = vunpack.c.h.b16 %v9725
    %v11226 = vunpack.c.l.b16 %v9726
    %v11227 = vunpack.c.h.b16 %v9726
    %v11228 = vunpack.c.l.b16 %v9727
    %v11229 = vunpack.c.h.b16 %v9727
    %v11230 = vunpack.c.l.b16 %v9728
    %v11231 = vunpack.c.h.b16 %v9728
    %v11232 = vunpack.c.l.b16 %v9729
    %v11233 = vunpack.c.h.b16 %v9729
    %v11234 = vunpack.c.l.b16 %v9730
    %v11235 = vunpack.c.h.b16 %v9730
    %v11236 = vunpack.c.l.b16 %v9731
    %v11237 = vunpack.c.h.b16 %v9731
    %v11238 = vunpack.c.l.b16 %v9732
    %v11239 = vunpack.c.h.b16 %v9732
    %v11240 = vunpack.c.l.b16 %v9733
    %v11241 = vunpack.c.h.b16 %v9733
    %v11242 = vunpack.c.l.b16 %v9734
    %v11243 = vunpack.c.h.b16 %v9734
    %v11244 = vunpack.c.l.b16 %v9735
    %v11245 = vunpack.c.h.b16 %v9735
    %v11246 = vunpack.c.l.b16 %v9736
    %v11247 = vunpack.c.h.b16 %v9736
    %v11248 = vunpack.c.l.b16 %v9737
    %v11249 = vunpack.c.h.b16 %v9737
    %v11250 = vunpack.c.l.b16 %v9738
    %v11251 = vunpack.c.h.b16 %v9738
    %v11252 = vunpack.c.l.b16 %v9739
    %v11253 = vunpack.c.h.b16 %v9739
    %v11254 = vunpack.c.l.b16 %v9740
    %v11255 = vunpack.c.h.b16 %v9740
    %v11256 = vunpack.c.l.b16 %v9741
    %v11257 = vunpack.c.h.b16 %v9741
    %v11258 = vunpack.c.l.b16 %v9742
    %v11259 = vunpack.c.h.b16 %v9742
    %v11260 = vunpack.c.l.b16 %v9743
    %v11261 = vunpack.c.h.b16 %v9743
    %v11262 = vunpack.c.l.b16 %v9744
    %v11263 = vunpack.c.h.b16 %v9744
    %v11264 = vunpack.c.l.b16 %v9745
    %v11265 = vunpack.c.h.b16 %v9745
    %v11266 = vunpack.c.l.b16 %v9746
    %v11267 = vunpack.c.h.b16 %v9746
    %v11268 = vunpack.c.l.b16 %v9747
    %v11269 = vunpack.c.h.b16 %v9747
    %v11270 = vunpack.c.l.b16 %v9748
    %v11271 = vunpack.c.h.b16 %v9748
    %v11272 = vunpack.c.l.b16 %v9749
    %v11273 = vunpack.c.h.b16 %v9749
    %v11274 = vunpack.c.l.b16 %v9750
    %v11275 = vunpack.c.h.b16 %v9750
    %v11276 = vunpack.c.l.b16 %v9751
    %v11277 = vunpack.c.h.b16 %v9751
    %v11278 = vunpack.c.l.b16 %v9752
    %v11279 = vunpack.c.h.b16 %v9752
    %v11280 = vunpack.c.l.b16 %v9753
    %v11281 = vunpack.c.h.b16 %v9753
    %v11282 = vunpack.c.l.b16 %v9754
    %v11283 = vunpack.c.h.b16 %v9754
    %v11284 = vunpack.c.l.b16 %v9755
    %v11285 = vunpack.c.h.b16 %v9755
    %v11286 = vunpack.c.l.b16 %v9756
    %v11287 = vunpack.c.h.b16 %v9756
    %v11288 = vunpack.c.l.b16 %v9757
    %v11289 = vunpack.c.h.b16 %v9757
    %v11290 = vunpack.c.l.b16 %v9758
    %v11291 = vunpack.c.h.b16 %v9758
    %v11292 = vunpack.c.l.b16 %v9759
    %v11293 = vunpack.c.h.b16 %v9759
    %v11294 = vunpack.c.l.b16 %v9760
    %v11295 = vunpack.c.h.b16 %v9760
    %v11296 = vunpack.c.l.b16 %v9761
    %v11297 = vunpack.c.h.b16 %v9761
    %v11298 = vunpack.c.l.b16 %v9762
    %v11299 = vunpack.c.h.b16 %v9762
    %v11300 = vunpack.c.l.b16 %v9763
    %v11301 = vunpack.c.h.b16 %v9763
    %v11302 = vunpack.c.l.b16 %v9764
    %v11303 = vunpack.c.h.b16 %v9764
    %v11304 = vunpack.c.l.b16 %v9765
    %v11305 = vunpack.c.h.b16 %v9765
    %v11306 = vunpack.c.l.b16 %v9766
    %v11307 = vunpack.c.h.b16 %v9766
    %v11308 = vunpack.c.l.b16 %v9767
    %v11309 = vunpack.c.h.b16 %v9767
    %v11310 = vunpack.c.l.b16 %v9768
    %v11311 = vunpack.c.h.b16 %v9768
    %v11312 = vunpack.c.l.b16 %v9769
    %v11313 = vunpack.c.h.b16 %v9769
    %v11314 = vunpack.c.l.b16 %v9770
    %v11315 = vunpack.c.h.b16 %v9770
    %v11316 = vunpack.c.l.b16 %v9771
    %v11317 = vunpack.c.h.b16 %v9771
    %v11318 = vunpack.c.l.b16 %v9772
    %v11319 = vunpack.c.h.b16 %v9772
    %v11320 = vunpack.c.l.b16 %v9773
    %v11321 = vunpack.c.h.b16 %v9773
    %v11322 = vunpack.c.l.b16 %v9774
    %v11323 = vunpack.c.h.b16 %v9774
    %v11324 = vunpack.c.l.b16 %v9775
    %v11325 = vunpack.c.h.b16 %v9775
    %v11326 = vunpack.c.l.b16 %v9776
    %v11327 = vunpack.c.h.b16 %v9776
    %v11328 = vunpack.c.l.b16 %v9777
    %v11329 = vunpack.c.h.b16 %v9777
    %v11330 = vunpack.c.l.b16 %v9778
    %v11331 = vunpack.c.h.b16 %v9778
    %v11332 = vunpack.c.l.b16 %v9779
    %v11333 = vunpack.c.h.b16 %v9779
    %v11334 = vunpack.c.l.b16 %v9780
    %v11335 = vunpack.c.h.b16 %v9780
    %v11336 = vunpack.c.l.b16 %v9781
    %v11337 = vunpack.c.h.b16 %v9781
    %v11338 = vunpack.c.l.b16 %v9782
    %v11339 = vunpack.c.h.b16 %v9782
    %v11340 = vunpack.c.l.b16 %v9783
    %v11341 = vunpack.c.h.b16 %v9783
    %v11342 = vunpack.c.l.b16 %v9784
    %v11343 = vunpack.c.h.b16 %v9784
    %v11344 = vunpack.c.l.b16 %v9785
    %v11345 = vunpack.c.h.b16 %v9785
    %v11346 = vunpack.c.l.b16 %v9786
    %v11347 = vunpack.c.h.b16 %v9786
    %v11348 = vunpack.c.l.b16 %v9787
    %v11349 = vunpack.c.h.b16 %v9787
    %v11350 = vunpack.c.l.b16 %v9788
    %v11351 = vunpack.c.h.b16 %v9788
    %v11352 = vunpack.c.l.b16 %v9789
    %v11353 = vunpack.c.h.b16 %v9789
    %v11354 = vunpack.c.l.b16 %v9790
    %v11355 = vunpack.c.h.b16 %v9790
    %v11356 = vunpack.c.l.b16 %v9791
    %v11357 = vunpack.c.h.b16 %v9791
    %v11358 = vunpack.c.l.b16 %v9792
    %v11359 = vunpack.c.h.b16 %v9792
    %v11360 = vunpack.c.l.b16 %v9793
    %v11361 = vunpack.c.h.b16 %v9793
    %v11362 = vunpack.c.l.b16 %v9794
    %v11363 = vunpack.c.h.b16 %v9794
    %v11364 = vunpack.c.l.b16 %v9795
    %v11365 = vunpack.c.h.b16 %v9795
    %v11366 = vunpack.c.l.b16 %v9796
    %v11367 = vunpack.c.h.b16 %v9796
    %v11368 = vunpack.c.l.b16 %v9797
    %v11369 = vunpack.c.h.b16 %v9797
    %v11370 = vunpack.c.l.b16 %v9798
    %v11371 = vunpack.c.h.b16 %v9798
    %v11372 = vunpack.c.l.b16 %v9799
    %v11373 = vunpack.c.h.b16 %v9799
    %v11374 = vunpack.c.l.b16 %v9800
    %v11375 = vunpack.c.h.b16 %v9800
    %v11376 = vunpack.c.l.b16 %v9801
    %v11377 = vunpack.c.h.b16 %v9801
    %v11378 = vunpack.c.l.b16 %v9802
    %v11379 = vunpack.c.h.b16 %v9802
    %v11380 = vunpack.c.l.b16 %v9803
    %v11381 = vunpack.c.h.b16 %v9803
    %v11382 = vunpack.c.l.b16 %v9804
    %v11383 = vunpack.c.h.b16 %v9804
    %v11384 = vunpack.c.l.b16 %v9805
    %v11385 = vunpack.c.h.b16 %v9805
    %v11386 = vunpack.c.l.b16 %v9806
    %v11387 = vunpack.c.h.b16 %v9806
    %v11388 = vunpack.c.l.b16 %v9807
    %v11389 = vunpack.c.h.b16 %v9807
    %v11390 = vunpack.c.l.b16 %v9808
    %v11391 = vunpack.c.h.b16 %v9808
    %v11392 = vunpack.c.l.b16 %v9809
    %v11393 = vunpack.c.h.b16 %v9809
    %v11394 = vunpack.c.l.b16 %v9810
    %v11395 = vunpack.c.h.b16 %v9810
    %v11396 = vunpack.c.l.b16 %v9811
    %v11397 = vunpack.c.h.b16 %v9811
    %v11398 = vpack.c.b16 %v10382, %v10374
    %v11399 = vpack.c.b16 %v10383, %v10375
    %v11400 = vpack.c.b16 %v10384, %v10376
    %v11401 = vpack.c.b16 %v10385, %v10377
    %v11402 = vpack.c.b16 %v10386, %v10378
    %v11403 = vpack.c.b16 %v10387, %v10379
    %v11404 = vpack.c.b16 %v10388, %v10380
    %v11405 = vpack.c.b16 %v10389, %v10381
    %v11406 = vpack.c.b16 %v10398, %v10390
    %v11407 = vpack.c.b16 %v10399, %v10391
    %v11408 = vpack.c.b16 %v10400, %v10392
    %v11409 = vpack.c.b16 %v10401, %v10393
    %v11410 = vpack.c.b16 %v10402, %v10394
    %v11411 = vpack.c.b16 %v10403, %v10395
    %v11412 = vpack.c.b16 %v10404, %v10396
    %v11413 = vpack.c.b16 %v10405, %v10397
    %v11414 = vpack.c.b16 %v10414, %v10406
    %v11415 = vpack.c.b16 %v10415, %v10407
    %v11416 = vpack.c.b16 %v10416, %v10408
    %v11417 = vpack.c.b16 %v10417, %v10409
    %v11418 = vpack.c.b16 %v10418, %v10410
    %v11419 = vpack.c.b16 %v10419, %v10411
    %v11420 = vpack.c.b16 %v10420, %v10412
    %v11421 = vpack.c.b16 %v10421, %v10413
    %v11422 = vpack.c.b16 %v10430, %v10422
    %v11423 = vpack.c.b16 %v10431, %v10423
    %v11424 = vpack.c.b16 %v10432, %v10424
    %v11425 = vpack.c.b16 %v10433, %v10425
    %v11426 = vpack.c.b16 %v10434, %v10426
    %v11427 = vpack.c.b16 %v10435, %v10427
    %v11428 = vpack.c.b16 %v10436, %v10428
    %v11429 = vpack.c.b16 %v10437, %v10429
    %v11430 = vpack.c.b16 %v10446, %v10438
    %v11431 = vpack.c.b16 %v10447, %v10439
    %v11432 = vpack.c.b16 %v10448, %v10440
    %v11433 = vpack.c.b16 %v10449, %v10441
    %v11434 = vpack.c.b16 %v10450, %v10442
    %v11435 = vpack.c.b16 %v10451, %v10443
    %v11436 = vpack.c.b16 %v10452, %v10444
    %v11437 = vpack.c.b16 %v10453, %v10445
    %v11438 = vpack.c.b16 %v10462, %v10454
    %v11439 = vpack.c.b16 %v10463, %v10455
    %v11440 = vpack.c.b16 %v10464, %v10456
    %v11441 = vpack.c.b16 %v10465, %v10457
    %v11442 = vpack.c.b16 %v10466, %v10458
    %v11443 = vpack.c.b16 %v10467, %v10459
    %v11444 = vpack.c.b16 %v10468, %v10460
    %v11445 = vpack.c.b16 %v10469, %v10461
    %v11446 = vpack.c.b16 %v10478, %v10470
    %v11447 = vpack.c.b16 %v10479, %v10471
    %v11448 = vpack.c.b16 %v10480, %v10472
    %v11449 = vpack.c.b16 %v10481, %v10473
    %v11450 = vpack.c.b16 %v10482, %v10474
    %v11451 = vpack.c.b16 %v10483, %v10475
    %v11452 = vpack.c.b16 %v10484, %v10476
    %v11453 = vpack.c.b16 %v10485, %v10477
    %v11454 = vpack.c.b16 %v10494, %v10486
    %v11455 = vpack.c.b16 %v10495, %v10487
    %v11456 = vpack.c.b16 %v10496, %v10488
    %v11457 = vpack.c.b16 %v10497, %v10489
    %v11458 = vpack.c.b16 %v10498, %v10490
    %v11459 = vpack.c.b16 %v10499, %v10491
    %v11460 = vpack.c.b16 %v10500, %v10492
    %v11461 = vpack.c.b16 %v10501, %v10493
    %v11462 = vpack.c.b16 %v10510, %v10502
    %v11463 = vpack.c.b16 %v10511, %v10503
    %v11464 = vpack.c.b16 %v10512, %v10504
    %v11465 = vpack.c.b16 %v10513, %v10505
    %v11466 = vpack.c.b16 %v10514, %v10506
    %v11467 = vpack.c.b16 %v10515, %v10507
    %v11468 = vpack.c.b16 %v10516, %v10508
    %v11469 = vpack.c.b16 %v10517, %v10509
    %v11470 = vpack.c.b16 %v10526, %v10518
    %v11471 = vpack.c.b16 %v10527, %v10519
    %v11472 = vpack.c.b16 %v10528, %v10520
    %v11473 = vpack.c.b16 %v10529, %v10521
    %v11474 = vpack.c.b16 %v10530, %v10522
    %v11475 = vpack.c.b16 %v10531, %v10523
    %v11476 = vpack.c.b16 %v10532, %v10524
    %v11477 = vpack.c.b16 %v10533, %v10525
    %v11478 = vpack.c.b16 %v10542, %v10534
    %v11479 = vpack.c.b16 %v10543, %v10535
    %v11480 = vpack.c.b16 %v10544, %v10536
    %v11481 = vpack.c.b16 %v10545, %v10537
    %v11482 = vpack.c.b16 %v10546, %v10538
    %v11483 = vpack.c.b16 %v10547, %v10539
    %v11484 = vpack.c.b16 %v10548, %v10540
    %v11485 = vpack.c.b16 %v10549, %v10541
    %v11486 = vpack.c.b16 %v10558, %v10550
    %v11487 = vpack.c.b16 %v10559, %v10551
    %v11488 = vpack.c.b16 %v10560, %v10552
    %v11489 = vpack.c.b16 %v10561, %v10553
    %v11490 = vpack.c.b16 %v10562, %v10554
    %v11491 = vpack.c.b16 %v10563, %v10555
    %v11492 = vpack.c.b16 %v10564, %v10556
    %v11493 = vpack.c.b16 %v10565, %v10557
    %v11494 = vpack.c.b16 %v10574, %v10566
    %v11495 = vpack.c.b16 %v10575, %v10567
    %v11496 = vpack.c.b16 %v10576, %v10568
    %v11497 = vpack.c.b16 %v10577, %v10569
    %v11498 = vpack.c.b16 %v10578, %v10570
    %v11499 = vpack.c.b16 %v10579, %v10571
    %v11500 = vpack.c.b16 %v10580, %v10572
    %v11501 = vpack.c.b16 %v10581, %v10573
    %v11502 = vpack.c.b16 %v10590, %v10582
    %v11503 = vpack.c.b16 %v10591, %v10583
    %v11504 = vpack.c.b16 %v10592, %v10584
    %v11505 = vpack.c.b16 %v10593, %v10585
    %v11506 = vpack.c.b16 %v10594, %v10586
    %v11507 = vpack.c.b16 %v10595, %v10587
    %v11508 = vpack.c.b16 %v10596, %v10588
    %v11509 = vpack.c.b16 %v10597, %v10589
    %v11510 = vpack.c.b16 %v10606, %v10598
    %v11511 = vpack.c.b16 %v10607, %v10599
    %v11512 = vpack.c.b16 %v10608, %v10600
    %v11513 = vpack.c.b16 %v10609, %v10601
    %v11514 = vpack.c.b16 %v10610, %v10602
    %v11515 = vpack.c.b16 %v10611, %v10603
    %v11516 = vpack.c.b16 %v10612, %v10604
    %v11517 = vpack.c.b16 %v10613, %v10605
    %v11518 = vpack.c.b16 %v10622, %v10614
    %v11519 = vpack.c.b16 %v10623, %v10615
    %v11520 = vpack.c.b16 %v10624, %v10616
    %v11521 = vpack.c.b16 %v10625, %v10617
    %v11522 = vpack.c.b16 %v10626, %v10618
    %v11523 = vpack.c.b16 %v10627, %v10619
    %v11524 = vpack.c.b16 %v10628, %v10620
    %v11525 = vpack.c.b16 %v10629, %v10621
    %v11526 = vpack.c.b16 %v10638, %v10630
    %v11527 = vpack.c.b16 %v10639, %v10631
    %v11528 = vpack.c.b16 %v10640, %v10632
    %v11529 = vpack.c.b16 %v10641, %v10633
    %v11530 = vpack.c.b16 %v10642, %v10634
    %v11531 = vpack.c.b16 %v10643, %v10635
    %v11532 = vpack.c.b16 %v10644, %v10636
    %v11533 = vpack.c.b16 %v10645, %v10637
    %v11534 = vpack.c.b16 %v10654, %v10646
    %v11535 = vpack.c.b16 %v10655, %v10647
    %v11536 = vpack.c.b16 %v10656, %v10648
    %v11537 = vpack.c.b16 %v10657, %v10649
    %v11538 = vpack.c.b16 %v10658, %v10650
    %v11539 = vpack.c.b16 %v10659, %v10651
    %v11540 = vpack.c.b16 %v10660, %v10652
    %v11541 = vpack.c.b16 %v10661, %v10653
    %v11542 = vpack.c.b16 %v10670, %v10662
    %v11543 = vpack.c.b16 %v10671, %v10663
    %v11544 = vpack.c.b16 %v10672, %v10664
    %v11545 = vpack.c.b16 %v10673, %v10665
    %v11546 = vpack.c.b16 %v10674, %v10666
    %v11547 = vpack.c.b16 %v10675, %v10667
    %v11548 = vpack.c.b16 %v10676, %v10668
    %v11549 = vpack.c.b16 %v10677, %v10669
    %v11550 = vpack.c.b16 %v10686, %v10678
    %v11551 = vpack.c.b16 %v10687, %v10679
    %v11552 = vpack.c.b16 %v10688, %v10680
    %v11553 = vpack.c.b16 %v10689, %v10681
    %v11554 = vpack.c.b16 %v10690, %v10682
    %v11555 = vpack.c.b16 %v10691, %v10683
    %v11556 = vpack.c.b16 %v10692, %v10684
    %v11557 = vpack.c.b16 %v10693, %v10685
    %v11558 = vpack.c.b16 %v10702, %v10694
    %v11559 = vpack.c.b16 %v10703, %v10695
    %v11560 = vpack.c.b16 %v10704, %v10696
    %v11561 = vpack.c.b16 %v10705, %v10697
    %v11562 = vpack.c.b16 %v10706, %v10698
    %v11563 = vpack.c.b16 %v10707, %v10699
    %v11564 = vpack.c.b16 %v10708, %v10700
    %v11565 = vpack.c.b16 %v10709, %v10701
    %v11566 = vpack.c.b16 %v10718, %v10710
    %v11567 = vpack.c.b16 %v10719, %v10711
    %v11568 = vpack.c.b16 %v10720, %v10712
    %v11569 = vpack.c.b16 %v10721, %v10713
    %v11570 = vpack.c.b16 %v10722, %v10714
    %v11571 = vpack.c.b16 %v10723, %v10715
    %v11572 = vpack.c.b16 %v10724, %v10716
    %v11573 = vpack.c.b16 %v10725, %v10717
    %v11574 = vpack.c.b16 %v10734, %v10726
    %v11575 = vpack.c.b16 %v10735, %v10727
    %v11576 = vpack.c.b16 %v10736, %v10728
    %v11577 = vpack.c.b16 %v10737, %v10729
    %v11578 = vpack.c.b16 %v10738, %v10730
    %v11579 = vpack.c.b16 %v10739, %v10731
    %v11580 = vpack.c.b16 %v10740, %v10732
    %v11581 = vpack.c.b16 %v10741, %v10733
    %v11582 = vpack.c.b16 %v10750, %v10742
    %v11583 = vpack.c.b16 %v10751, %v10743
    %v11584 = vpack.c.b16 %v10752, %v10744
    %v11585 = vpack.c.b16 %v10753, %v10745
    %v11586 = vpack.c.b16 %v10754, %v10746
    %v11587 = vpack.c.b16 %v10755, %v10747
    %v11588 = vpack.c.b16 %v10756, %v10748
    %v11589 = vpack.c.b16 %v10757, %v10749
    %v11590 = vpack.c.b16 %v10766, %v10758
    %v11591 = vpack.c.b16 %v10767, %v10759
    %v11592 = vpack.c.b16 %v10768, %v10760
    %v11593 = vpack.c.b16 %v10769, %v10761
    %v11594 = vpack.c.b16 %v10770, %v10762
    %v11595 = vpack.c.b16 %v10771, %v10763
    %v11596 = vpack.c.b16 %v10772, %v10764
    %v11597 = vpack.c.b16 %v10773, %v10765
    %v11598 = vpack.c.b16 %v10782, %v10774
    %v11599 = vpack.c.b16 %v10783, %v10775
    %v11600 = vpack.c.b16 %v10784, %v10776
    %v11601 = vpack.c.b16 %v10785, %v10777
    %v11602 = vpack.c.b16 %v10786, %v10778
    %v11603 = vpack.c.b16 %v10787, %v10779
    %v11604 = vpack.c.b16 %v10788, %v10780
    %v11605 = vpack.c.b16 %v10789, %v10781
    %v11606 = vpack.c.b16 %v10798, %v10790
    %v11607 = vpack.c.b16 %v10799, %v10791
    %v11608 = vpack.c.b16 %v10800, %v10792
    %v11609 = vpack.c.b16 %v10801, %v10793
    %v11610 = vpack.c.b16 %v10802, %v10794
    %v11611 = vpack.c.b16 %v10803, %v10795
    %v11612 = vpack.c.b16 %v10804, %v10796
    %v11613 = vpack.c.b16 %v10805, %v10797
    %v11614 = vpack.c.b16 %v10814, %v10806
    %v11615 = vpack.c.b16 %v10815, %v10807
    %v11616 = vpack.c.b16 %v10816, %v10808
    %v11617 = vpack.c.b16 %v10817, %v10809
    %v11618 = vpack.c.b16 %v10818, %v10810
    %v11619 = vpack.c.b16 %v10819, %v10811
    %v11620 = vpack.c.b16 %v10820, %v10812
    %v11621 = vpack.c.b16 %v10821, %v10813
    %v11622 = vpack.c.b16 %v10830, %v10822
    %v11623 = vpack.c.b16 %v10831, %v10823
    %v11624 = vpack.c.b16 %v10832, %v10824
    %v11625 = vpack.c.b16 %v10833, %v10825
    %v11626 = vpack.c.b16 %v10834, %v10826
    %v11627 = vpack.c.b16 %v10835, %v10827
    %v11628 = vpack.c.b16 %v10836, %v10828
    %v11629 = vpack.c.b16 %v10837, %v10829
    %v11630 = vpack.c.b16 %v10846, %v10838
    %v11631 = vpack.c.b16 %v10847, %v10839
    %v11632 = vpack.c.b16 %v10848, %v10840
    %v11633 = vpack.c.b16 %v10849, %v10841
    %v11634 = vpack.c.b16 %v10850, %v10842
    %v11635 = vpack.c.b16 %v10851, %v10843
    %v11636 = vpack.c.b16 %v10852, %v10844
    %v11637 = vpack.c.b16 %v10853, %v10845
    %v11638 = vpack.c.b16 %v10862, %v10854
    %v11639 = vpack.c.b16 %v10863, %v10855
    %v11640 = vpack.c.b16 %v10864, %v10856
    %v11641 = vpack.c.b16 %v10865, %v10857
    %v11642 = vpack.c.b16 %v10866, %v10858
    %v11643 = vpack.c.b16 %v10867, %v10859
    %v11644 = vpack.c.b16 %v10868, %v10860
    %v11645 = vpack.c.b16 %v10869, %v10861
    %v11646 = vpack.c.b16 %v10878, %v10870
    %v11647 = vpack.c.b16 %v10879, %v10871
    %v11648 = vpack.c.b16 %v10880, %v10872
    %v11649 = vpack.c.b16 %v10881, %v10873
    %v11650 = vpack.c.b16 %v10882, %v10874
    %v11651 = vpack.c.b16 %v10883, %v10875
    %v11652 = vpack.c.b16 %v10884, %v10876
    %v11653 = vpack.c.b16 %v10885, %v10877
    %v11654 = vpack.c.b16 %v10894, %v10886
    %v11655 = vpack.c.b16 %v10895, %v10887
    %v11656 = vpack.c.b16 %v10896, %v10888
    %v11657 = vpack.c.b16 %v10897, %v10889
    %v11658 = vpack.c.b16 %v10898, %v10890
    %v11659 = vpack.c.b16 %v10899, %v10891
    %v11660 = vpack.c.b16 %v10900, %v10892
    %v11661 = vpack.c.b16 %v10901, %v10893
    %v11662 = vpack.c.b16 %v10910, %v10902
    %v11663 = vpack.c.b16 %v10911, %v10903
    %v11664 = vpack.c.b16 %v10912, %v10904
    %v11665 = vpack.c.b16 %v10913, %v10905
    %v11666 = vpack.c.b16 %v10914, %v10906
    %v11667 = vpack.c.b16 %v10915, %v10907
    %v11668 = vpack.c.b16 %v10916, %v10908
    %v11669 = vpack.c.b16 %v10917, %v10909
    %v11670 = vpack.c.b16 %v10926, %v10918
    %v11671 = vpack.c.b16 %v10927, %v10919
    %v11672 = vpack.c.b16 %v10928, %v10920
    %v11673 = vpack.c.b16 %v10929, %v10921
    %v11674 = vpack.c.b16 %v10930, %v10922
    %v11675 = vpack.c.b16 %v10931, %v10923
    %v11676 = vpack.c.b16 %v10932, %v10924
    %v11677 = vpack.c.b16 %v10933, %v10925
    %v11678 = vpack.c.b16 %v10942, %v10934
    %v11679 = vpack.c.b16 %v10943, %v10935
    %v11680 = vpack.c.b16 %v10944, %v10936
    %v11681 = vpack.c.b16 %v10945, %v10937
    %v11682 = vpack.c.b16 %v10946, %v10938
    %v11683 = vpack.c.b16 %v10947, %v10939
    %v11684 = vpack.c.b16 %v10948, %v10940
    %v11685 = vpack.c.b16 %v10949, %v10941
    %v11686 = vpack.c.b16 %v10958, %v10950
    %v11687 = vpack.c.b16 %v10959, %v10951
    %v11688 = vpack.c.b16 %v10960, %v10952
    %v11689 = vpack.c.b16 %v10961, %v10953
    %v11690 = vpack.c.b16 %v10962, %v10954
    %v11691 = vpack.c.b16 %v10963, %v10955
    %v11692 = vpack.c.b16 %v10964, %v10956
    %v11693 = vpack.c.b16 %v10965, %v10957
    %v11694 = vpack.c.b16 %v10974, %v10966
    %v11695 = vpack.c.b16 %v10975, %v10967
    %v11696 = vpack.c.b16 %v10976, %v10968
    %v11697 = vpack.c.b16 %v10977, %v10969
    %v11698 = vpack.c.b16 %v10978, %v10970
    %v11699 = vpack.c.b16 %v10979, %v10971
    %v11700 = vpack.c.b16 %v10980, %v10972
    %v11701 = vpack.c.b16 %v10981, %v10973
    %v11702 = vpack.c.b16 %v10990, %v10982
    %v11703 = vpack.c.b16 %v10991, %v10983
    %v11704 = vpack.c.b16 %v10992, %v10984
    %v11705 = vpack.c.b16 %v10993, %v10985
    %v11706 = vpack.c.b16 %v10994, %v10986
    %v11707 = vpack.c.b16 %v10995, %v10987
    %v11708 = vpack.c.b16 %v10996, %v10988
    %v11709 = vpack.c.b16 %v10997, %v10989
    %v11710 = vpack.c.b16 %v11006, %v10998
    %v11711 = vpack.c.b16 %v11007, %v10999
    %v11712 = vpack.c.b16 %v11008, %v11000
    %v11713 = vpack.c.b16 %v11009, %v11001
    %v11714 = vpack.c.b16 %v11010, %v11002
    %v11715 = vpack.c.b16 %v11011, %v11003
    %v11716 = vpack.c.b16 %v11012, %v11004
    %v11717 = vpack.c.b16 %v11013, %v11005
    %v11718 = vpack.c.b16 %v11022, %v11014
    %v11719 = vpack.c.b16 %v11023, %v11015
    %v11720 = vpack.c.b16 %v11024, %v11016
    %v11721 = vpack.c.b16 %v11025, %v11017
    %v11722 = vpack.c.b16 %v11026, %v11018
    %v11723 = vpack.c.b16 %v11027, %v11019
    %v11724 = vpack.c.b16 %v11028, %v11020
    %v11725 = vpack.c.b16 %v11029, %v11021
    %v11726 = vpack.c.b16 %v11038, %v11030
    %v11727 = vpack.c.b16 %v11039, %v11031
    %v11728 = vpack.c.b16 %v11040, %v11032
    %v11729 = vpack.c.b16 %v11041, %v11033
    %v11730 = vpack.c.b16 %v11042, %v11034
    %v11731 = vpack.c.b16 %v11043, %v11035
    %v11732 = vpack.c.b16 %v11044, %v11036
    %v11733 = vpack.c.b16 %v11045, %v11037
    %v11734 = vpack.c.b16 %v11054, %v11046
    %v11735 = vpack.c.b16 %v11055, %v11047
    %v11736 = vpack.c.b16 %v11056, %v11048
    %v11737 = vpack.c.b16 %v11057, %v11049
    %v11738 = vpack.c.b16 %v11058, %v11050
    %v11739 = vpack.c.b16 %v11059, %v11051
    %v11740 = vpack.c.b16 %v11060, %v11052
    %v11741 = vpack.c.b16 %v11061, %v11053
    %v11742 = vpack.c.b16 %v11070, %v11062
    %v11743 = vpack.c.b16 %v11071, %v11063
    %v11744 = vpack.c.b16 %v11072, %v11064
    %v11745 = vpack.c.b16 %v11073, %v11065
    %v11746 = vpack.c.b16 %v11074, %v11066
    %v11747 = vpack.c.b16 %v11075, %v11067
    %v11748 = vpack.c.b16 %v11076, %v11068
    %v11749 = vpack.c.b16 %v11077, %v11069
    %v11750 = vpack.c.b16 %v11086, %v11078
    %v11751 = vpack.c.b16 %v11087, %v11079
    %v11752 = vpack.c.b16 %v11088, %v11080
    %v11753 = vpack.c.b16 %v11089, %v11081
    %v11754 = vpack.c.b16 %v11090, %v11082
    %v11755 = vpack.c.b16 %v11091, %v11083
    %v11756 = vpack.c.b16 %v11092, %v11084
    %v11757 = vpack.c.b16 %v11093, %v11085
    %v11758 = vpack.c.b16 %v11102, %v11094
    %v11759 = vpack.c.b16 %v11103, %v11095
    %v11760 = vpack.c.b16 %v11104, %v11096
    %v11761 = vpack.c.b16 %v11105, %v11097
    %v11762 = vpack.c.b16 %v11106, %v11098
    %v11763 = vpack.c.b16 %v11107, %v11099
    %v11764 = vpack.c.b16 %v11108, %v11100
    %v11765 = vpack.c.b16 %v11109, %v11101
    %v11766 = vpack.c.b16 %v11118, %v11110
    %v11767 = vpack.c.b16 %v11119, %v11111
    %v11768 = vpack.c.b16 %v11120, %v11112
    %v11769 = vpack.c.b16 %v11121, %v11113
    %v11770 = vpack.c.b16 %v11122, %v11114
    %v11771 = vpack.c.b16 %v11123, %v11115
    %v11772 = vpack.c.b16 %v11124, %v11116
    %v11773 = vpack.c.b16 %v11125, %v11117
    %v11774 = vpack.c.b16 %v11134, %v11126
    %v11775 = vpack.c.b16 %v11135, %v11127
    %v11776 = vpack.c.b16 %v11136, %v11128
    %v11777 = vpack.c.b16 %v11137, %v11129
    %v11778 = vpack.c.b16 %v11138, %v11130
    %v11779 = vpack.c.b16 %v11139, %v11131
    %v11780 = vpack.c.b16 %v11140, %v11132
    %v11781 = vpack.c.b16 %v11141, %v11133
    %v11782 = vpack.c.b16 %v11150, %v11142
    %v11783 = vpack.c.b16 %v11151, %v11143
    %v11784 = vpack.c.b16 %v11152, %v11144
    %v11785 = vpack.c.b16 %v11153, %v11145
    %v11786 = vpack.c.b16 %v11154, %v11146
    %v11787 = vpack.c.b16 %v11155, %v11147
    %v11788 = vpack.c.b16 %v11156, %v11148
    %v11789 = vpack.c.b16 %v11157, %v11149
    %v11790 = vpack.c.b16 %v11166, %v11158
    %v11791 = vpack.c.b16 %v11167, %v11159
    %v11792 = vpack.c.b16 %v11168, %v11160
    %v11793 = vpack.c.b16 %v11169, %v11161
    %v11794 = vpack.c.b16 %v11170, %v11162
    %v11795 = vpack.c.b16 %v11171, %v11163
    %v11796 = vpack.c.b16 %v11172, %v11164
    %v11797 = vpack.c.b16 %v11173, %v11165
    %v11798 = vpack.c.b16 %v11182, %v11174
    %v11799 = vpack.c.b16 %v11183, %v11175
    %v11800 = vpack.c.b16 %v11184, %v11176
    %v11801 = vpack.c.b16 %v11185, %v11177
    %v11802 = vpack.c.b16 %v11186, %v11178
    %v11803 = vpack.c.b16 %v11187, %v11179
    %v11804 = vpack.c.b16 %v11188, %v11180
    %v11805 = vpack.c.b16 %v11189, %v11181
    %v11806 = vpack.c.b16 %v11198, %v11190
    %v11807 = vpack.c.b16 %v11199, %v11191
    %v11808 = vpack.c.b16 %v11200, %v11192
    %v11809 = vpack.c.b16 %v11201, %v11193
    %v11810 = vpack.c.b16 %v11202, %v11194
    %v11811 = vpack.c.b16 %v11203, %v11195
    %v11812 = vpack.c.b16 %v11204, %v11196
    %v11813 = vpack.c.b16 %v11205, %v11197
    %v11814 = vpack.c.b16 %v11214, %v11206
    %v11815 = vpack.c.b16 %v11215, %v11207
    %v11816 = vpack.c.b16 %v11216, %v11208
    %v11817 = vpack.c.b16 %v11217, %v11209
    %v11818 = vpack.c.b16 %v11218, %v11210
    %v11819 = vpack.c.b16 %v11219, %v11211
    %v11820 = vpack.c.b16 %v11220, %v11212
    %v11821 = vpack.c.b16 %v11221, %v11213
    %v11822 = vpack.c.b16 %v11230, %v11222
    %v11823 = vpack.c.b16 %v11231, %v11223
    %v11824 = vpack.c.b16 %v11232, %v11224
    %v11825 = vpack.c.b16 %v11233, %v11225
    %v11826 = vpack.c.b16 %v11234, %v11226
    %v11827 = vpack.c.b16 %v11235, %v11227
    %v11828 = vpack.c.b16 %v11236, %v11228
    %v11829 = vpack.c.b16 %v11237, %v11229
    %v11830 = vpack.c.b16 %v11246, %v11238
    %v11831 = vpack.c.b16 %v11247, %v11239
    %v11832 = vpack.c.b16 %v11248, %v11240
    %v11833 = vpack.c.b16 %v11249, %v11241
    %v11834 = vpack.c.b16 %v11250, %v11242
    %v11835 = vpack.c.b16 %v11251, %v11243
    %v11836 = vpack.c.b16 %v11252, %v11244
    %v11837 = vpack.c.b16 %v11253, %v11245
    %v11838 = vpack.c.b16 %v11262, %v11254
    %v11839 = vpack.c.b16 %v11263, %v11255
    %v11840 = vpack.c.b16 %v11264, %v11256
    %v11841 = vpack.c.b16 %v11265, %v11257
    %v11842 = vpack.c.b16 %v11266, %v11258
    %v11843 = vpack.c.b16 %v11267, %v11259
    %v11844 = vpack.c.b16 %v11268, %v11260
    %v11845 = vpack.c.b16 %v11269, %v11261
    %v11846 = vpack.c.b16 %v11278, %v11270
    %v11847 = vpack.c.b16 %v11279, %v11271
    %v11848 = vpack.c.b16 %v11280, %v11272
    %v11849 = vpack.c.b16 %v11281, %v11273
    %v11850 = vpack.c.b16 %v11282, %v11274
    %v11851 = vpack.c.b16 %v11283, %v11275
    %v11852 = vpack.c.b16 %v11284, %v11276
    %v11853 = vpack.c.b16 %v11285, %v11277
    %v11854 = vpack.c.b16 %v11294, %v11286
    %v11855 = vpack.c.b16 %v11295, %v11287
    %v11856 = vpack.c.b16 %v11296, %v11288
    %v11857 = vpack.c.b16 %v11297, %v11289
    %v11858 = vpack.c.b16 %v11298, %v11290
    %v11859 = vpack.c.b16 %v11299, %v11291
    %v11860 = vpack.c.b16 %v11300, %v11292
    %v11861 = vpack.c.b16 %v11301, %v11293
    %v11862 = vpack.c.b16 %v11310, %v11302
    %v11863 = vpack.c.b16 %v11311, %v11303
    %v11864 = vpack.c.b16 %v11312, %v11304
    %v11865 = vpack.c.b16 %v11313, %v11305
    %v11866 = vpack.c.b16 %v11314, %v11306
    %v11867 = vpack.c.b16 %v11315, %v11307
    %v11868 = vpack.c.b16 %v11316, %v11308
    %v11869 = vpack.c.b16 %v11317, %v11309
    %v11870 = vpack.c.b16 %v11326, %v11318
    %v11871 = vpack.c.b16 %v11327, %v11319
    %v11872 = vpack.c.b16 %v11328, %v11320
    %v11873 = vpack.c.b16 %v11329, %v11321
    %v11874 = vpack.c.b16 %v11330, %v11322
    %v11875 = vpack.c.b16 %v11331, %v11323
    %v11876 = vpack.c.b16 %v11332, %v11324
    %v11877 = vpack.c.b16 %v11333, %v11325
    %v11878 = vpack.c.b16 %v11342, %v11334
    %v11879 = vpack.c.b16 %v11343, %v11335
    %v11880 = vpack.c.b16 %v11344, %v11336
    %v11881 = vpack.c.b16 %v11345, %v11337
    %v11882 = vpack.c.b16 %v11346, %v11338
    %v11883 = vpack.c.b16 %v11347, %v11339
    %v11884 = vpack.c.b16 %v11348, %v11340
    %v11885 = vpack.c.b16 %v11349, %v11341
    %v11886 = vpack.c.b16 %v11358, %v11350
    %v11887 = vpack.c.b16 %v11359, %v11351
    %v11888 = vpack.c.b16 %v11360, %v11352
    %v11889 = vpack.c.b16 %v11361, %v11353
    %v11890 = vpack.c.b16 %v11362, %v11354
    %v11891 = vpack.c.b16 %v11363, %v11355
    %v11892 = vpack.c.b16 %v11364, %v11356
    %v11893 = vpack.c.b16 %v11365, %v11357
    %v11894 = vpack.c.b16 %v11374, %v11366
    %v11895 = vpack.c.b16 %v11375, %v11367
    %v11896 = vpack.c.b16 %v11376, %v11368
    %v11897 = vpack.c.b16 %v11377, %v11369
    %v11898 = vpack.c.b16 %v11378, %v11370
    %v11899 = vpack.c.b16 %v11379, %v11371
    %v11900 = vpack.c.b16 %v11380, %v11372
    %v11901 = vpack.c.b16 %v11381, %v11373
    %v11902 = vpack.c.b16 %v11390, %v11382
    %v11903 = vpack.c.b16 %v11391, %v11383
    %v11904 = vpack.c.b16 %v11392, %v11384
    %v11905 = vpack.c.b16 %v11393, %v11385
    %v11906 = vpack.c.b16 %v11394, %v11386
    %v11907 = vpack.c.b16 %v11395, %v11387
    %v11908 = vpack.c.b16 %v11396, %v11388
    %v11909 = vpack.c.b16 %v11397, %v11389
    %12422 = vmatprep.subr.bf16.mxu0 %v11399
    %12423 = vmatpush1.bf16.msra.mxu0 %v11398
    %12424 = vmatprep.subr.bf16.mxu0 %v11407
    %12425 = vmatpush1.bf16.msra.mxu0 %v11406
    %12426 = vmatprep.subr.bf16.mxu0 %v11415
    %12427 = vmatpush1.bf16.msra.mxu0 %v11414
    %12428 = vmatprep.subr.bf16.mxu0 %v11423
    %12429 = vmatpush1.bf16.msra.mxu0 %v11422
    %12430 = vmatprep.subr.bf16.mxu0 %v11431
    %12431 = vmatpush1.bf16.msra.mxu0 %v11430
    %12432 = vmatprep.subr.bf16.mxu0 %v11439
    %12433 = vmatpush1.bf16.msra.mxu0 %v11438
    %12434 = vmatprep.subr.bf16.mxu0 %v11447
    %12435 = vmatpush1.bf16.msra.mxu0 %v11446
    %12436 = vmatprep.subr.bf16.mxu0 %v11455
    %12437 = vmatpush1.bf16.msra.mxu0 %v11454
    %12438 = vmatprep.subr.bf16.mxu0 %v11463
    %12439 = vmatpush1.bf16.msra.mxu0 %v11462
    %12440 = vmatprep.subr.bf16.mxu0 %v11471
    %12441 = vmatpush1.bf16.msra.mxu0 %v11470
    %12442 = vmatprep.subr.bf16.mxu0 %v11479
    %12443 = vmatpush1.bf16.msra.mxu0 %v11478
    %12444 = vmatprep.subr.bf16.mxu0 %v11487
    %12445 = vmatpush1.bf16.msra.mxu0 %v11486
    %12446 = vmatprep.subr.bf16.mxu0 %v11495
    %12447 = vmatpush1.bf16.msra.mxu0 %v11494
    %12448 = vmatprep.subr.bf16.mxu0 %v11503
    %12449 = vmatpush1.bf16.msra.mxu0 %v11502
    %12450 = vmatprep.subr.bf16.mxu0 %v11511
    %12451 = vmatpush1.bf16.msra.mxu0 %v11510
    %12452 = vmatprep.subr.bf16.mxu0 %v11519
    %12453 = vmatpush1.bf16.msra.mxu0 %v11518
    %12454 = vmatprep.mubr.bf16.mxu0 %v9814
    %12455 = vmatmul.mubr.bf16.gmra.mrb[0].mxu0 %v9813
    %v12456 = vpop.f32.mrb[0].mxu0
    %v12457 = vadd.f32 %v9825, %v12456
    %v12458 = vpop.f32.mrb[0].mxu0
    %v12459 = vadd.f32 %v9829, %v12458
    %v12460 = vpop.f32.mrb[0].mxu0
    %v12461 = vadd.f32 %v9825, %v12460
    %v12462 = vpop.f32.mrb[0].mxu0
    %v12463 = vadd.f32 %v9829, %v12462
    %12464 = vdwg.mxu0
    %12465 = vmatprep.subr.bf16.mxu0 %v11527
    %12466 = vmatpush1.bf16.msra.mxu0 %v11526
    %12467 = vmatprep.subr.bf16.mxu0 %v11535
    %12468 = vmatpush1.bf16.msra.mxu0 %v11534
    %12469 = vmatprep.subr.bf16.mxu0 %v11543
    %12470 = vmatpush1.bf16.msra.mxu0 %v11542
    %12471 = vmatprep.subr.bf16.mxu0 %v11551
    %12472 = vmatpush1.bf16.msra.mxu0 %v11550
    %12473 = vmatprep.subr.bf16.mxu0 %v11559
    %12474 = vmatpush1.bf16.msra.mxu0 %v11558
    %12475 = vmatprep.subr.bf16.mxu0 %v11567
    %12476 = vmatpush1.bf16.msra.mxu0 %v11566
    %12477 = vmatprep.subr.bf16.mxu0 %v11575
    %12478 = vmatpush1.bf16.msra.mxu0 %v11574
    %12479 = vmatprep.subr.bf16.mxu0 %v11583
    %12480 = vmatpush1.bf16.msra.mxu0 %v11582
    %12481 = vmatprep.subr.bf16.mxu0 %v11591
    %12482 = vmatpush1.bf16.msra.mxu0 %v11590
    %12483 = vmatprep.subr.bf16.mxu0 %v11599
    %12484 = vmatpush1.bf16.msra.mxu0 %v11598
    %12485 = vmatprep.subr.bf16.mxu0 %v11607
    %12486 = vmatpush1.bf16.msra.mxu0 %v11606
    %12487 = vmatprep.subr.bf16.mxu0 %v11615
    %12488 = vmatpush1.bf16.msra.mxu0 %v11614
    %12489 = vmatprep.subr.bf16.mxu0 %v11623
    %12490 = vmatpush1.bf16.msra.mxu0 %v11622
    %12491 = vmatprep.subr.bf16.mxu0 %v11631
    %12492 = vmatpush1.bf16.msra.mxu0 %v11630
    %12493 = vmatprep.subr.bf16.mxu0 %v11639
    %12494 = vmatpush1.bf16.msra.mxu0 %v11638
    %12495 = vmatprep.subr.bf16.mxu0 %v11647
    %12496 = vmatpush1.bf16.msra.mxu0 %v11646
    %12497 = vmatprep.mubr.bf16.mxu0 %v9816
    %12498 = vmatmul.mubr.bf16.gmra.mrb[0].mxu0 %v9815
    %v12499 = vpop.f32.mrb[0].mxu0
    %v12500 = vadd.f32 %v12457, %v12499
    %v12501 = vpop.f32.mrb[0].mxu0
    %v12502 = vadd.f32 %v12459, %v12501
    %v12503 = vpop.f32.mrb[0].mxu0
    %v12504 = vadd.f32 %v12461, %v12503
    %v12505 = vpop.f32.mrb[0].mxu0
    %v12506 = vadd.f32 %v12463, %v12505
    %12507 = vdwg.mxu0
    %12508 = vmatprep.subr.bf16.mxu0 %v11655
    %12509 = vmatpush1.bf16.msra.mxu0 %v11654
    %12510 = vmatprep.subr.bf16.mxu0 %v11663
    %12511 = vmatpush1.bf16.msra.mxu0 %v11662
    %12512 = vmatprep.subr.bf16.mxu0 %v11671
    %12513 = vmatpush1.bf16.msra.mxu0 %v11670
    %12514 = vmatprep.subr.bf16.mxu0 %v11679
    %12515 = vmatpush1.bf16.msra.mxu0 %v11678
    %12516 = vmatprep.subr.bf16.mxu0 %v11687
    %12517 = vmatpush1.bf16.msra.mxu0 %v11686
    %12518 = vmatprep.subr.bf16.mxu0 %v11695
    %12519 = vmatpush1.bf16.msra.mxu0 %v11694
    %12520 = vmatprep.subr.bf16.mxu0 %v11703
    %12521 = vmatpush1.bf16.msra.mxu0 %v11702
    %12522 = vmatprep.subr.bf16.mxu0 %v11711
    %12523 = vmatpush1.bf16.msra.mxu0 %v11710
    %12524 = vmatprep.subr.bf16.mxu0 %v11719
    %12525 = vmatpush1.bf16.msra.mxu0 %v11718
    %12526 = vmatprep.subr.bf16.mxu0 %v11727
    %12527 = vmatpush1.bf16.msra.mxu0 %v11726
    %12528 = vmatprep.subr.bf16.mxu0 %v11735
    %12529 = vmatpush1.bf16.msra.mxu0 %v11734
    %12530 = vmatprep.subr.bf16.mxu0 %v11743
    %12531 = vmatpush1.bf16.msra.mxu0 %v11742
    %12532 = vmatprep.subr.bf16.mxu0 %v11751
    %12533 = vmatpush1.bf16.msra.mxu0 %v11750
    %12534 = vmatprep.subr.bf16.mxu0 %v11759
    %12535 = vmatpush1.bf16.msra.mxu0 %v11758
    %12536 = vmatprep.subr.bf16.mxu0 %v11767
    %12537 = vmatpush1.bf16.msra.mxu0 %v11766
    %12538 = vmatprep.subr.bf16.mxu0 %v11775
    %12539 = vmatpush1.bf16.msra.mxu0 %v11774
    %12540 = vmatprep.mubr.bf16.mxu0 %v9818
    %12541 = vmatmul.mubr.bf16.gmra.mrb[0].mxu0 %v9817
    %v12542 = vpop.f32.mrb[0].mxu0
    %v12543 = vadd.f32 %v12500, %v12542
    %v12544 = vpop.f32.mrb[0].mxu0
    %v12545 = vadd.f32 %v12502, %v12544
    %v12546 = vpop.f32.mrb[0].mxu0
    %v12547 = vadd.f32 %v12504, %v12546
    %v12548 = vpop.f32.mrb[0].mxu0
    %v12549 = vadd.f32 %v12506, %v12548
    %12550 = vdwg.mxu0
    %12551 = vmatprep.subr.bf16.mxu0 %v11783
    %12552 = vmatpush1.bf16.msra.mxu0 %v11782
    %12553 = vmatprep.subr.bf16.mxu0 %v11791
    %12554 = vmatpush1.bf16.msra.mxu0 %v11790
    %12555 = vmatprep.subr.bf16.mxu0 %v11799
    %12556 = vmatpush1.bf16.msra.mxu0 %v11798
    %12557 = vmatprep.subr.bf16.mxu0 %v11807
    %12558 = vmatpush1.bf16.msra.mxu0 %v11806
    %12559 = vmatprep.subr.bf16.mxu0 %v11815
    %12560 = vmatpush1.bf16.msra.mxu0 %v11814
    %12561 = vmatprep.subr.bf16.mxu0 %v11823
    %12562 = vmatpush1.bf16.msra.mxu0 %v11822
    %12563 = vmatprep.subr.bf16.mxu0 %v11831
    %12564 = vmatpush1.bf16.msra.mxu0 %v11830
    %12565 = vmatprep.subr.bf16.mxu0 %v11839
    %12566 = vmatpush1.bf16.msra.mxu0 %v11838
    %12567 = vmatprep.subr.bf16.mxu0 %v11847
    %12568 = vmatpush1.bf16.msra.mxu0 %v11846
    %12569 = vmatprep.subr.bf16.mxu0 %v11855
    %12570 = vmatpush1.bf16.msra.mxu0 %v11854
    %12571 = vmatprep.subr.bf16.mxu0 %v11863
    %12572 = vmatpush1.bf16.msra.mxu0 %v11862
    %12573 = vmatprep.subr.bf16.mxu0 %v11871
    %12574 = vmatpush1.bf16.msra.mxu0 %v11870
    %12575 = vmatprep.subr.bf16.mxu0 %v11879
    %12576 = vmatpush1.bf16.msra.mxu0 %v11878
    %12577 = vmatprep.subr.bf16.mxu0 %v11887
    %12578 = vmatpush1.bf16.msra.mxu0 %v11886
    %12579 = vmatprep.subr.bf16.mxu0 %v11895
    %12580 = vmatpush1.bf16.msra.mxu0 %v11894
    %12581 = vmatprep.subr.bf16.mxu0 %v11903
    %12582 = vmatpush1.bf16.msra.mxu0 %v11902
    %12583 = vmatprep.mubr.bf16.mxu0 %v9820
    %12584 = vmatmul.mubr.bf16.gmra.mrb[0].mxu0 %v9819
    %v12585 = vpop.f32.mrb[0].mxu0
    %v12586 = vadd.f32 %v12543, %v12585
    %v12587 = vpop.f32.mrb[0].mxu0
    %v12588 = vadd.f32 %v12545, %v12587
    %v12589 = vpop.f32.mrb[0].mxu0
    %v12590 = vadd.f32 %v12547, %v12589
    %v12591 = vpop.f32.mrb[0].mxu0
    %v12592 = vadd.f32 %v12549, %v12591
    %12593 = vdwg.mxu0
    %12594 = vmatprep.subr.bf16.mxu0 %v11401
    %12595 = vmatpush1.bf16.msra.mxu0 %v11400
    %12596 = vmatprep.subr.bf16.mxu0 %v11409
    %12597 = vmatpush1.bf16.msra.mxu0 %v11408
    %12598 = vmatprep.subr.bf16.mxu0 %v11417
    %12599 = vmatpush1.bf16.msra.mxu0 %v11416
    %12600 = vmatprep.subr.bf16.mxu0 %v11425
    %12601 = vmatpush1.bf16.msra.mxu0 %v11424
    %12602 = vmatprep.subr.bf16.mxu0 %v11433
    %12603 = vmatpush1.bf16.msra.mxu0 %v11432
    %12604 = vmatprep.subr.bf16.mxu0 %v11441
    %12605 = vmatpush1.bf16.msra.mxu0 %v11440
    %12606 = vmatprep.subr.bf16.mxu0 %v11449
    %12607 = vmatpush1.bf16.msra.mxu0 %v11448
    %12608 = vmatprep.subr.bf16.mxu0 %v11457
    %12609 = vmatpush1.bf16.msra.mxu0 %v11456
    %12610 = vmatprep.subr.bf16.mxu0 %v11465
    %12611 = vmatpush1.bf16.msra.mxu0 %v11464
    %12612 = vmatprep.subr.bf16.mxu0 %v11473
    %12613 = vmatpush1.bf16.msra.mxu0 %v11472
    %12614 = vmatprep.subr.bf16.mxu0 %v11481
    %12615 = vmatpush1.bf16.msra.mxu0 %v11480
    %12616 = vmatprep.subr.bf16.mxu0 %v11489
    %12617 = vmatpush1.bf16.msra.mxu0 %v11488
    %12618 = vmatprep.subr.bf16.mxu0 %v11497
    %12619 = vmatpush1.bf16.msra.mxu0 %v11496
    %12620 = vmatprep.subr.bf16.mxu0 %v11505
    %12621 = vmatpush1.bf16.msra.mxu0 %v11504
    %12622 = vmatprep.subr.bf16.mxu0 %v11513
    %12623 = vmatpush1.bf16.msra.mxu0 %v11512
    %12624 = vmatprep.subr.bf16.mxu0 %v11521
    %12625 = vmatpush1.bf16.msra.mxu0 %v11520
    %12626 = vmatprep.mubr.bf16.mxu0 %v9814
    %12627 = vmatmul.mubr.bf16.gmra.mrb[0].mxu0 %v9813
    %v12628 = vpop.f32.mrb[0].mxu0
    %v12629 = vadd.f32 %v9833, %v12628
    %v12630 = vpop.f32.mrb[0].mxu0
    %v12631 = vadd.f32 %v9837, %v12630
    %v12632 = vpop.f32.mrb[0].mxu0
    %v12633 = vadd.f32 %v9833, %v12632
    %v12634 = vpop.f32.mrb[0].mxu0
    %v12635 = vadd.f32 %v9837, %v12634
    %12636 = vdwg.mxu0
    %12637 = vmatprep.subr.bf16.mxu0 %v11529
    %12638 = vmatpush1.bf16.msra.mxu0 %v11528
    %12639 = vmatprep.subr.bf16.mxu0 %v11537
    %12640 = vmatpush1.bf16.msra.mxu0 %v11536
    %12641 = vmatprep.subr.bf16.mxu0 %v11545
    %12642 = vmatpush1.bf16.msra.mxu0 %v11544
    %12643 = vmatprep.subr.bf16.mxu0 %v11553
    %12644 = vmatpush1.bf16.msra.mxu0 %v11552
    %12645 = vmatprep.subr.bf16.mxu0 %v11561
    %12646 = vmatpush1.bf16.msra.mxu0 %v11560
    %12647 = vmatprep.subr.bf16.mxu0 %v11569
    %12648 = vmatpush1.bf16.msra.mxu0 %v11568
    %12649 = vmatprep.subr.bf16.mxu0 %v11577
    %12650 = vmatpush1.bf16.msra.mxu0 %v11576
    %12651 = vmatprep.subr.bf16.mxu0 %v11585
    %12652 = vmatpush1.bf16.msra.mxu0 %v11584
    %12653 = vmatprep.subr.bf16.mxu0 %v11593
    %12654 = vmatpush1.bf16.msra.mxu0 %v11592
    %12655 = vmatprep.subr.bf16.mxu0 %v11601
    %12656 = vmatpush1.bf16.msra.mxu0 %v11600
    %12657 = vmatprep.subr.bf16.mxu0 %v11609
    %12658 = vmatpush1.bf16.msra.mxu0 %v11608
    %12659 = vmatprep.subr.bf16.mxu0 %v11617
    %12660 = vmatpush1.bf16.msra.mxu0 %v11616
    %12661 = vmatprep.subr.bf16.mxu0 %v11625
    %12662 = vmatpush1.bf16.msra.mxu0 %v11624
    %12663 = vmatprep.subr.bf16.mxu0 %v11633
    %12664 = vmatpush1.bf16.msra.mxu0 %v11632
    %12665 = vmatprep.subr.bf16.mxu0 %v11641
    %12666 = vmatpush1.bf16.msra.mxu0 %v11640
    %12667 = vmatprep.subr.bf16.mxu0 %v11649
    %12668 = vmatpush1.bf16.msra.mxu0 %v11648
    %12669 = vmatprep.mubr.bf16.mxu0 %v9816
    %12670 = vmatmul.mubr.bf16.gmra.mrb[0].mxu0 %v9815
    %v12671 = vpop.f32.mrb[0].mxu0
    %v12672 = vadd.f32 %v12629, %v12671
    %v12673 = vpop.f32.mrb[0].mxu0
    %v12674 = vadd.f32 %v12631, %v12673
    %v12675 = vpop.f32.mrb[0].mxu0
    %v12676 = vadd.f32 %v12633, %v12675
    %v12677 = vpop.f32.mrb[0].mxu0
    %v12678 = vadd.f32 %v12635, %v12677
    %12679 = vdwg.mxu0
    %12680 = vmatprep.subr.bf16.mxu0 %v11657
    %12681 = vmatpush1.bf16.msra.mxu0 %v11656
    %12682 = vmatprep.subr.bf16.mxu0 %v11665
    %12683 = vmatpush1.bf16.msra.mxu0 %v11664
    %12684 = vmatprep.subr.bf16.mxu0 %v11673
    %12685 = vmatpush1.bf16.msra.mxu0 %v11672
    %12686 = vmatprep.subr.bf16.mxu0 %v11681
    %12687 = vmatpush1.bf16.msra.mxu0 %v11680
    %12688 = vmatprep.subr.bf16.mxu0 %v11689
    %12689 = vmatpush1.bf16.msra.mxu0 %v11688
    %12690 = vmatprep.subr.bf16.mxu0 %v11697
    %12691 = vmatpush1.bf16.msra.mxu0 %v11696
    %12692 = vmatprep.subr.bf16.mxu0 %v11705
    %12693 = vmatpush1.bf16.msra.mxu0 %v11704
    %12694 = vmatprep.subr.bf16.mxu0 %v11713
    %12695 = vmatpush1.bf16.msra.mxu0 %v11712
    %12696 = vmatprep.subr.bf16.mxu0 %v11721
    %12697 = vmatpush1.bf16.msra.mxu0 %v11720
    %12698 = vmatprep.subr.bf16.mxu0 %v11729
    %12699 = vmatpush1.bf16.msra.mxu0 %v11728
    %12700 = vmatprep.subr.bf16.mxu0 %v11737
    %12701 = vmatpush1.bf16.msra.mxu0 %v11736
    %12702 = vmatprep.subr.bf16.mxu0 %v11745
    %12703 = vmatpush1.bf16.msra.mxu0 %v11744
    %12704 = vmatprep.subr.bf16.mxu0 %v11753
    %12705 = vmatpush1.bf16.msra.mxu0 %v11752
    %12706 = vmatprep.subr.bf16.mxu0 %v11761
    %12707 = vmatpush1.bf16.msra.mxu0 %v11760
    %12708 = vmatprep.subr.bf16.mxu0 %v11769
    %12709 = vmatpush1.bf16.msra.mxu0 %v11768
    %12710 = vmatprep.subr.bf16.mxu0 %v11777
    %12711 = vmatpush1.bf16.msra.mxu0 %v11776
    %12712 = vmatprep.mubr.bf16.mxu0 %v9818
    %12713 = vmatmul.mubr.bf16.gmra.mrb[0].mxu0 %v9817
    %v12714 = vpop.f32.mrb[0].mxu0
    %v12715 = vadd.f32 %v12672, %v12714
    %v12716 = vpop.f32.mrb[0].mxu0
    %v12717 = vadd.f32 %v12674, %v12716
    %v12718 = vpop.f32.mrb[0].mxu0
    %v12719 = vadd.f32 %v12676, %v12718
    %v12720 = vpop.f32.mrb[0].mxu0
    %v12721 = vadd.f32 %v12678, %v12720
    %12722 = vdwg.mxu0
    %12723 = vmatprep.subr.bf16.mxu0 %v11785
    %12724 = vmatpush1.bf16.msra.mxu0 %v11784
    %12725 = vmatprep.subr.bf16.mxu0 %v11793
    %12726 = vmatpush1.bf16.msra.mxu0 %v11792
    %12727 = vmatprep.subr.bf16.mxu0 %v11801
    %12728 = vmatpush1.bf16.msra.mxu0 %v11800
    %12729 = vmatprep.subr.bf16.mxu0 %v11809
    %12730 = vmatpush1.bf16.msra.mxu0 %v11808
    %12731 = vmatprep.subr.bf16.mxu0 %v11817
    %12732 = vmatpush1.bf16.msra.mxu0 %v11816
    %12733 = vmatprep.subr.bf16.mxu0 %v11825
    %12734 = vmatpush1.bf16.msra.mxu0 %v11824
    %12735 = vmatprep.subr.bf16.mxu0 %v11833
    %12736 = vmatpush1.bf16.msra.mxu0 %v11832
    %12737 = vmatprep.subr.bf16.mxu0 %v11841
    %12738 = vmatpush1.bf16.msra.mxu0 %v11840
    %12739 = vmatprep.subr.bf16.mxu0 %v11849
    %12740 = vmatpush1.bf16.msra.mxu0 %v11848
    %12741 = vmatprep.subr.bf16.mxu0 %v11857
    %12742 = vmatpush1.bf16.msra.mxu0 %v11856
    %12743 = vmatprep.subr.bf16.mxu0 %v11865
    %12744 = vmatpush1.bf16.msra.mxu0 %v11864
    %12745 = vmatprep.subr.bf16.mxu0 %v11873
    %12746 = vmatpush1.bf16.msra.mxu0 %v11872
    %12747 = vmatprep.subr.bf16.mxu0 %v11881
    %12748 = vmatpush1.bf16.msra.mxu0 %v11880
    %12749 = vmatprep.subr.bf16.mxu0 %v11889
    %12750 = vmatpush1.bf16.msra.mxu0 %v11888
    %12751 = vmatprep.subr.bf16.mxu0 %v11897
    %12752 = vmatpush1.bf16.msra.mxu0 %v11896
    %12753 = vmatprep.subr.bf16.mxu0 %v11905
    %12754 = vmatpush1.bf16.msra.mxu0 %v11904
    %12755 = vmatprep.mubr.bf16.mxu0 %v9820
    %12756 = vmatmul.mubr.bf16.gmra.mrb[0].mxu0 %v9819
    %v12757 = vpop.f32.mrb[0].mxu0
    %v12758 = vadd.f32 %v12715, %v12757
    %v12759 = vpop.f32.mrb[0].mxu0
    %v12760 = vadd.f32 %v12717, %v12759
    %v12761 = vpop.f32.mrb[0].mxu0
    %v12762 = vadd.f32 %v12719, %v12761
    %v12763 = vpop.f32.mrb[0].mxu0
    %v12764 = vadd.f32 %v12721, %v12763
    %12765 = vdwg.mxu0
    %12766 = vmatprep.subr.bf16.mxu0 %v11403
    %12767 = vmatpush1.bf16.msra.mxu0 %v11402
    %12768 = vmatprep.subr.bf16.mxu0 %v11411
    %12769 = vmatpush1.bf16.msra.mxu0 %v11410
    %12770 = vmatprep.subr.bf16.mxu0 %v11419
    %12771 = vmatpush1.bf16.msra.mxu0 %v11418
    %12772 = vmatprep.subr.bf16.mxu0 %v11427
    %12773 = vmatpush1.bf16.msra.mxu0 %v11426
    %12774 = vmatprep.subr.bf16.mxu0 %v11435
    %12775 = vmatpush1.bf16.msra.mxu0 %v11434
    %12776 = vmatprep.subr.bf16.mxu0 %v11443
    %12777 = vmatpush1.bf16.msra.mxu0 %v11442
    %12778 = vmatprep.subr.bf16.mxu0 %v11451
    %12779 = vmatpush1.bf16.msra.mxu0 %v11450
    %12780 = vmatprep.subr.bf16.mxu0 %v11459
    %12781 = vmatpush1.bf16.msra.mxu0 %v11458
    %12782 = vmatprep.subr.bf16.mxu0 %v11467
    %12783 = vmatpush1.bf16.msra.mxu0 %v11466
    %12784 = vmatprep.subr.bf16.mxu0 %v11475
    %12785 = vmatpush1.bf16.msra.mxu0 %v11474
    %12786 = vmatprep.subr.bf16.mxu0 %v11483
    %12787 = vmatpush1.bf16.msra.mxu0 %v11482
    %12788 = vmatprep.subr.bf16.mxu0 %v11491
    %12789 = vmatpush1.bf16.msra.mxu0 %v11490
    %12790 = vmatprep.subr.bf16.mxu0 %v11499
    %12791 = vmatpush1.bf16.msra.mxu0 %v11498
    %12792 = vmatprep.subr.bf16.mxu0 %v11507
    %12793 = vmatpush1.bf16.msra.mxu0 %v11506
    %12794 = vmatprep.subr.bf16.mxu0 %v11515
    %12795 = vmatpush1.bf16.msra.mxu0 %v11514
    %12796 = vmatprep.subr.bf16.mxu0 %v11523
    %12797 = vmatpush1.bf16.msra.mxu0 %v11522
    %12798 = vmatprep.mubr.bf16.mxu0 %v9814
    %12799 = vmatmul.mubr.bf16.gmra.mrb[0].mxu0 %v9813
    %v12800 = vpop.f32.mrb[0].mxu0
    %v12801 = vadd.f32 %v9841, %v12800
    %v12802 = vpop.f32.mrb[0].mxu0
    %v12803 = vadd.f32 %v9845, %v12802
    %v12804 = vpop.f32.mrb[0].mxu0
    %v12805 = vadd.f32 %v9841, %v12804
    %v12806 = vpop.f32.mrb[0].mxu0
    %v12807 = vadd.f32 %v9845, %v12806
    %12808 = vdwg.mxu0
    %12809 = vmatprep.subr.bf16.mxu0 %v11531
    %12810 = vmatpush1.bf16.msra.mxu0 %v11530
    %12811 = vmatprep.subr.bf16.mxu0 %v11539
    %12812 = vmatpush1.bf16.msra.mxu0 %v11538
    %12813 = vmatprep.subr.bf16.mxu0 %v11547
    %12814 = vmatpush1.bf16.msra.mxu0 %v11546
    %12815 = vmatprep.subr.bf16.mxu0 %v11555
    %12816 = vmatpush1.bf16.msra.mxu0 %v11554
    %12817 = vmatprep.subr.bf16.mxu0 %v11563
    %12818 = vmatpush1.bf16.msra.mxu0 %v11562
    %12819 = vmatprep.subr.bf16.mxu0 %v11571
    %12820 = vmatpush1.bf16.msra.mxu0 %v11570
    %12821 = vmatprep.subr.bf16.mxu0 %v11579
    %12822 = vmatpush1.bf16.msra.mxu0 %v11578
    %12823 = vmatprep.subr.bf16.mxu0 %v11587
    %12824 = vmatpush1.bf16.msra.mxu0 %v11586
    %12825 = vmatprep.subr.bf16.mxu0 %v11595
    %12826 = vmatpush1.bf16.msra.mxu0 %v11594
    %12827 = vmatprep.subr.bf16.mxu0 %v11603
    %12828 = vmatpush1.bf16.msra.mxu0 %v11602
    %12829 = vmatprep.subr.bf16.mxu0 %v11611
    %12830 = vmatpush1.bf16.msra.mxu0 %v11610
    %12831 = vmatprep.subr.bf16.mxu0 %v11619
    %12832 = vmatpush1.bf16.msra.mxu0 %v11618
    %12833 = vmatprep.subr.bf16.mxu0 %v11627
    %12834 = vmatpush1.bf16.msra.mxu0 %v11626
    %12835 = vmatprep.subr.bf16.mxu0 %v11635
    %12836 = vmatpush1.bf16.msra.mxu0 %v11634
    %12837 = vmatprep.subr.bf16.mxu0 %v11643
    %12838 = vmatpush1.bf16.msra.mxu0 %v11642
    %12839 = vmatprep.subr.bf16.mxu0 %v11651
    %12840 = vmatpush1.bf16.msra.mxu0 %v11650
    %12841 = vmatprep.mubr.bf16.mxu0 %v9816
    %12842 = vmatmul.mubr.bf16.gmra.mrb[0].mxu0 %v9815
    %v12843 = vpop.f32.mrb[0].mxu0
    %v12844 = vadd.f32 %v12801, %v12843
    %v12845 = vpop.f32.mrb[0].mxu0
    %v12846 = vadd.f32 %v12803, %v12845
    %v12847 = vpop.f32.mrb[0].mxu0
    %v12848 = vadd.f32 %v12805, %v12847
    %v12849 = vpop.f32.mrb[0].mxu0
    %v12850 = vadd.f32 %v12807, %v12849
    %12851 = vdwg.mxu0
    %12852 = vmatprep.subr.bf16.mxu0 %v11659
    %12853 = vmatpush1.bf16.msra.mxu0 %v11658
    %12854 = vmatprep.subr.bf16.mxu0 %v11667
    %12855 = vmatpush1.bf16.msra.mxu0 %v11666
    %12856 = vmatprep.subr.bf16.mxu0 %v11675
    %12857 = vmatpush1.bf16.msra.mxu0 %v11674
    %12858 = vmatprep.subr.bf16.mxu0 %v11683
    %12859 = vmatpush1.bf16.msra.mxu0 %v11682
    %12860 = vmatprep.subr.bf16.mxu0 %v11691
    %12861 = vmatpush1.bf16.msra.mxu0 %v11690
    %12862 = vmatprep.subr.bf16.mxu0 %v11699
    %12863 = vmatpush1.bf16.msra.mxu0 %v11698
    %12864 = vmatprep.subr.bf16.mxu0 %v11707
    %12865 = vmatpush1.bf16.msra.mxu0 %v11706
    %12866 = vmatprep.subr.bf16.mxu0 %v11715
    %12867 = vmatpush1.bf16.msra.mxu0 %v11714
    %12868 = vmatprep.subr.bf16.mxu0 %v11723
    %12869 = vmatpush1.bf16.msra.mxu0 %v11722
    %12870 = vmatprep.subr.bf16.mxu0 %v11731
    %12871 = vmatpush1.bf16.msra.mxu0 %v11730
    %12872 = vmatprep.subr.bf16.mxu0 %v11739
    %12873 = vmatpush1.bf16.msra.mxu0 %v11738
    %12874 = vmatprep.subr.bf16.mxu0 %v11747
    %12875 = vmatpush1.bf16.msra.mxu0 %v11746
    %12876 = vmatprep.subr.bf16.mxu0 %v11755
    %12877 = vmatpush1.bf16.msra.mxu0 %v11754
    %12878 = vmatprep.subr.bf16.mxu0 %v11763
    %12879 = vmatpush1.bf16.msra.mxu0 %v11762
    %12880 = vmatprep.subr.bf16.mxu0 %v11771
    %12881 = vmatpush1.bf16.msra.mxu0 %v11770
    %12882 = vmatprep.subr.bf16.mxu0 %v11779
    %12883 = vmatpush1.bf16.msra.mxu0 %v11778
    %12884 = vmatprep.mubr.bf16.mxu0 %v9818
    %12885 = vmatmul.mubr.bf16.gmra.mrb[0].mxu0 %v9817
    %v12886 = vpop.f32.mrb[0].mxu0
    %v12887 = vadd.f32 %v12844, %v12886
    %v12888 = vpop.f32.mrb[0].mxu0
    %v12889 = vadd.f32 %v12846, %v12888
    %v12890 = vpop.f32.mrb[0].mxu0
    %v12891 = vadd.f32 %v12848, %v12890
    %v12892 = vpop.f32.mrb[0].mxu0
    %v12893 = vadd.f32 %v12850, %v12892
    %12894 = vdwg.mxu0
    %12895 = vmatprep.subr.bf16.mxu0 %v11787
    %12896 = vmatpush1.bf16.msra.mxu0 %v11786
    %12897 = vmatprep.subr.bf16.mxu0 %v11795
    %12898 = vmatpush1.bf16.msra.mxu0 %v11794
    %12899 = vmatprep.subr.bf16.mxu0 %v11803
    %12900 = vmatpush1.bf16.msra.mxu0 %v11802
    %12901 = vmatprep.subr.bf16.mxu0 %v11811
    %12902 = vmatpush1.bf16.msra.mxu0 %v11810
    %12903 = vmatprep.subr.bf16.mxu0 %v11819
    %12904 = vmatpush1.bf16.msra.mxu0 %v11818
    %12905 = vmatprep.subr.bf16.mxu0 %v11827
    %12906 = vmatpush1.bf16.msra.mxu0 %v11826
    %12907 = vmatprep.subr.bf16.mxu0 %v11835
    %12908 = vmatpush1.bf16.msra.mxu0 %v11834
    %12909 = vmatprep.subr.bf16.mxu0 %v11843
    %12910 = vmatpush1.bf16.msra.mxu0 %v11842
    %12911 = vmatprep.subr.bf16.mxu0 %v11851
    %12912 = vmatpush1.bf16.msra.mxu0 %v11850
    %12913 = vmatprep.subr.bf16.mxu0 %v11859
    %12914 = vmatpush1.bf16.msra.mxu0 %v11858
    %12915 = vmatprep.subr.bf16.mxu0 %v11867
    %12916 = vmatpush1.bf16.msra.mxu0 %v11866
    %12917 = vmatprep.subr.bf16.mxu0 %v11875
    %12918 = vmatpush1.bf16.msra.mxu0 %v11874
    %12919 = vmatprep.subr.bf16.mxu0 %v11883
    %12920 = vmatpush1.bf16.msra.mxu0 %v11882
    %12921 = vmatprep.subr.bf16.mxu0 %v11891
    %12922 = vmatpush1.bf16.msra.mxu0 %v11890
    %12923 = vmatprep.subr.bf16.mxu0 %v11899
    %12924 = vmatpush1.bf16.msra.mxu0 %v11898
    %12925 = vmatprep.subr.bf16.mxu0 %v11907
    %12926 = vmatpush1.bf16.msra.mxu0 %v11906
    %12927 = vmatprep.mubr.bf16.mxu0 %v9820
    %12928 = vmatmul.mubr.bf16.gmra.mrb[0].mxu0 %v9819
    %v12929 = vpop.f32.mrb[0].mxu0
    %v12930 = vadd.f32 %v12887, %v12929
    %v12931 = vpop.f32.mrb[0].mxu0
    %v12932 = vadd.f32 %v12889, %v12931
    %v12933 = vpop.f32.mrb[0].mxu0
    %v12934 = vadd.f32 %v12891, %v12933
    %v12935 = vpop.f32.mrb[0].mxu0
    %v12936 = vadd.f32 %v12893, %v12935
    %12937 = vdwg.mxu0
    %12938 = vmatprep.subr.bf16.mxu0 %v11405
    %12939 = vmatpush1.bf16.msra.mxu0 %v11404
    %12940 = vmatprep.subr.bf16.mxu0 %v11413
    %12941 = vmatpush1.bf16.msra.mxu0 %v11412
    %12942 = vmatprep.subr.bf16.mxu0 %v11421
    %12943 = vmatpush1.bf16.msra.mxu0 %v11420
    %12944 = vmatprep.subr.bf16.mxu0 %v11429
    %12945 = vmatpush1.bf16.msra.mxu0 %v11428
    %12946 = vmatprep.subr.bf16.mxu0 %v11437
    %12947 = vmatpush1.bf16.msra.mxu0 %v11436
    %12948 = vmatprep.subr.bf16.mxu0 %v11445
    %12949 = vmatpush1.bf16.msra.mxu0 %v11444
    %12950 = vmatprep.subr.bf16.mxu0 %v11453
    %12951 = vmatpush1.bf16.msra.mxu0 %v11452
    %12952 = vmatprep.subr.bf16.mxu0 %v11461
    %12953 = vmatpush1.bf16.msra.mxu0 %v11460
    %12954 = vmatprep.subr.bf16.mxu0 %v11469
    %12955 = vmatpush1.bf16.msra.mxu0 %v11468
    %12956 = vmatprep.subr.bf16.mxu0 %v11477
    %12957 = vmatpush1.bf16.msra.mxu0 %v11476
    %12958 = vmatprep.subr.bf16.mxu0 %v11485
    %12959 = vmatpush1.bf16.msra.mxu0 %v11484
    %12960 = vmatprep.subr.bf16.mxu0 %v11493
    %12961 = vmatpush1.bf16.msra.mxu0 %v11492
    %12962 = vmatprep.subr.bf16.mxu0 %v11501
    %12963 = vmatpush1.bf16.msra.mxu0 %v11500
    %12964 = vmatprep.subr.bf16.mxu0 %v11509
    %12965 = vmatpush1.bf16.msra.mxu0 %v11508
    %12966 = vmatprep.subr.bf16.mxu0 %v11517
    %12967 = vmatpush1.bf16.msra.mxu0 %v11516
    %12968 = vmatprep.subr.bf16.mxu0 %v11525
    %12969 = vmatpush1.bf16.msra.mxu0 %v11524
    %12970 = vmatprep.mubr.bf16.mxu0 %v9814
    %12971 = vmatmul.mubr.bf16.gmra.mrb[0].mxu0 %v9813
    %v12972 = vpop.f32.mrb[0].mxu0
    %v12973 = vadd.f32 %v9849, %v12972
    %v12974 = vpop.f32.mrb[0].mxu0
    %v12975 = vadd.f32 %v9853, %v12974
    %v12976 = vpop.f32.mrb[0].mxu0
    %v12977 = vadd.f32 %v9849, %v12976
    %v12978 = vpop.f32.mrb[0].mxu0
    %v12979 = vadd.f32 %v9853, %v12978
    %12980 = vdwg.mxu0
    %12981 = vmatprep.subr.bf16.mxu0 %v11533
    %12982 = vmatpush1.bf16.msra.mxu0 %v11532
    %12983 = vmatprep.subr.bf16.mxu0 %v11541
    %12984 = vmatpush1.bf16.msra.mxu0 %v11540
    %12985 = vmatprep.subr.bf16.mxu0 %v11549
    %12986 = vmatpush1.bf16.msra.mxu0 %v11548
    %12987 = vmatprep.subr.bf16.mxu0 %v11557
    %12988 = vmatpush1.bf16.msra.mxu0 %v11556
    %12989 = vmatprep.subr.bf16.mxu0 %v11565
    %12990 = vmatpush1.bf16.msra.mxu0 %v11564
    %12991 = vmatprep.subr.bf16.mxu0 %v11573
    %12992 = vmatpush1.bf16.msra.mxu0 %v11572
    %12993 = vmatprep.subr.bf16.mxu0 %v11581
    %12994 = vmatpush1.bf16.msra.mxu0 %v11580
    %12995 = vmatprep.subr.bf16.mxu0 %v11589
    %12996 = vmatpush1.bf16.msra.mxu0 %v11588
    %12997 = vmatprep.subr.bf16.mxu0 %v11597
    %12998 = vmatpush1.bf16.msra.mxu0 %v11596
    %12999 = vmatprep.subr.bf16.mxu0 %v11605
    %13000 = vmatpush1.bf16.msra.mxu0 %v11604
    %13001 = vmatprep.subr.bf16.mxu0 %v11613
    %13002 = vmatpush1.bf16.msra.mxu0 %v11612
    %13003 = vmatprep.subr.bf16.mxu0 %v11621
    %13004 = vmatpush1.bf16.msra.mxu0 %v11620
    %13005 = vmatprep.subr.bf16.mxu0 %v11629
    %13006 = vmatpush1.bf16.msra.mxu0 %v11628
    %13007 = vmatprep.subr.bf16.mxu0 %v11637
    %13008 = vmatpush1.bf16.msra.mxu0 %v11636
    %13009 = vmatprep.subr.bf16.mxu0 %v11645
    %13010 = vmatpush1.bf16.msra.mxu0 %v11644
    %13011 = vmatprep.subr.bf16.mxu0 %v11653
    %13012 = vmatpush1.bf16.msra.mxu0 %v11652
    %13013 = vmatprep.mubr.bf16.mxu0 %v9816
    %13014 = vmatmul.mubr.bf16.gmra.mrb[0].mxu0 %v9815
    %v13015 = vpop.f32.mrb[0].mxu0
    %v13016 = vadd.f32 %v12973, %v13015
    %v13017 = vpop.f32.mrb[0].mxu0
    %v13018 = vadd.f32 %v12975, %v13017
    %v13019 = vpop.f32.mrb[0].mxu0
    %v13020 = vadd.f32 %v12977, %v13019
    %v13021 = vpop.f32.mrb[0].mxu0
    %v13022 = vadd.f32 %v12979, %v13021
    %13023 = vdwg.mxu0
    %13024 = vmatprep.subr.bf16.mxu0 %v11661
    %13025 = vmatpush1.bf16.msra.mxu0 %v11660
    %13026 = vmatprep.subr.bf16.mxu0 %v11669
    %13027 = vmatpush1.bf16.msra.mxu0 %v11668
    %13028 = vmatprep.subr.bf16.mxu0 %v11677
    %13029 = vmatpush1.bf16.msra.mxu0 %v11676
    %13030 = vmatprep.subr.bf16.mxu0 %v11685
    %13031 = vmatpush1.bf16.msra.mxu0 %v11684
    %13032 = vmatprep.subr.bf16.mxu0 %v11693
    %13033 = vmatpush1.bf16.msra.mxu0 %v11692
    %13034 = vmatprep.subr.bf16.mxu0 %v11701
    %13035 = vmatpush1.bf16.msra.mxu0 %v11700
    %13036 = vmatprep.subr.bf16.mxu0 %v11709
    %13037 = vmatpush1.bf16.msra.mxu0 %v11708
    %13038 = vmatprep.subr.bf16.mxu0 %v11717
    %13039 = vmatpush1.bf16.msra.mxu0 %v11716
    %13040 = vmatprep.subr.bf16.mxu0 %v11725
    %13041 = vmatpush1.bf16.msra.mxu0 %v11724
    %13042 = vmatprep.subr.bf16.mxu0 %v11733
    %13043 = vmatpush1.bf16.msra.mxu0 %v11732
    %13044 = vmatprep.subr.bf16.mxu0 %v11741
    %13045 = vmatpush1.bf16.msra.mxu0 %v11740
    %13046 = vmatprep.subr.bf16.mxu0 %v11749
    %13047 = vmatpush1.bf16.msra.mxu0 %v11748
    %13048 = vmatprep.subr.bf16.mxu0 %v11757
    %13049 = vmatpush1.bf16.msra.mxu0 %v11756
    %13050 = vmatprep.subr.bf16.mxu0 %v11765
    %13051 = vmatpush1.bf16.msra.mxu0 %v11764
    %13052 = vmatprep.subr.bf16.mxu0 %v11773
    %13053 = vmatpush1.bf16.msra.mxu0 %v11772
    %13054 = vmatprep.subr.bf16.mxu0 %v11781
    %13055 = vmatpush1.bf16.msra.mxu0 %v11780
    %13056 = vmatprep.mubr.bf16.mxu0 %v9818
    %13057 = vmatmul.mubr.bf16.gmra.mrb[0].mxu0 %v9817
    %v13058 = vpop.f32.mrb[0].mxu0
    %v13059 = vadd.f32 %v13016, %v13058
    %v13060 = vpop.f32.mrb[0].mxu0
    %v13061 = vadd.f32 %v13018, %v13060
    %v13062 = vpop.f32.mrb[0].mxu0
    %v13063 = vadd.f32 %v13020, %v13062
    %v13064 = vpop.f32.mrb[0].mxu0
    %v13065 = vadd.f32 %v13022, %v13064
    %13066 = vdwg.mxu0
    %13067 = vmatprep.subr.bf16.mxu0 %v11789
    %13068 = vmatpush1.bf16.msra.mxu0 %v11788
    %13069 = vmatprep.subr.bf16.mxu0 %v11797
    %13070 = vmatpush1.bf16.msra.mxu0 %v11796
    %13071 = vmatprep.subr.bf16.mxu0 %v11805
    %13072 = vmatpush1.bf16.msra.mxu0 %v11804
    %13073 = vmatprep.subr.bf16.mxu0 %v11813
    %13074 = vmatpush1.bf16.msra.mxu0 %v11812
    %13075 = vmatprep.subr.bf16.mxu0 %v11821
    %13076 = vmatpush1.bf16.msra.mxu0 %v11820
    %13077 = vmatprep.subr.bf16.mxu0 %v11829
    %13078 = vmatpush1.bf16.msra.mxu0 %v11828
    %13079 = vmatprep.subr.bf16.mxu0 %v11837
    %13080 = vmatpush1.bf16.msra.mxu0 %v11836
    %13081 = vmatprep.subr.bf16.mxu0 %v11845
    %13082 = vmatpush1.bf16.msra.mxu0 %v11844
    %13083 = vmatprep.subr.bf16.mxu0 %v11853
    %13084 = vmatpush1.bf16.msra.mxu0 %v11852
    %13085 = vmatprep.subr.bf16.mxu0 %v11861
    %13086 = vmatpush1.bf16.msra.mxu0 %v11860
    %13087 = vmatprep.subr.bf16.mxu0 %v11869
    %13088 = vmatpush1.bf16.msra.mxu0 %v11868
    %13089 = vmatprep.subr.bf16.mxu0 %v11877
    %13090 = vmatpush1.bf16.msra.mxu0 %v11876
    %13091 = vmatprep.subr.bf16.mxu0 %v11885
    %13092 = vmatpush1.bf16.msra.mxu0 %v11884
    %13093 = vmatprep.subr.bf16.mxu0 %v11893
    %13094 = vmatpush1.bf16.msra.mxu0 %v11892
    %13095 = vmatprep.subr.bf16.mxu0 %v11901
    %13096 = vmatpush1.bf16.msra.mxu0 %v11900
    %13097 = vmatprep.subr.bf16.mxu0 %v11909
    %13098 = vmatpush1.bf16.msra.mxu0 %v11908
    %13099 = vmatprep.mubr.bf16.mxu0 %v9820
    %13100 = vmatmul.mubr.bf16.gmra.mrb[0].mxu0 %v9819
    %v13101 = vpop.f32.mrb[0].mxu0
    %v13102 = vadd.f32 %v13059, %v13101
    %v13103 = vpop.f32.mrb[0].mxu0
    %v13104 = vadd.f32 %v13061, %v13103
    %v13105 = vpop.f32.mrb[0].mxu0
    %v13106 = vadd.f32 %v13063, %v13105
    %v13107 = vpop.f32.mrb[0].mxu0
    %v13108 = vadd.f32 %v13065, %v13107
    %13109 = vdwg.mxu0
    %13110 = vst [vmem:[#allocation29] sm:$0xff] %v12586
    %13111 = vst [vmem:[#allocation29 + $0x8] sm:$0xff] %v12588
    %13112 = vst [vmem:[#allocation29 + $0x10] sm:$0xff] %v12758
    %13113 = vst [vmem:[#allocation29 + $0x18] sm:$0xff] %v12760
    %13114 = vst [vmem:[#allocation29 + $0x20] sm:$0xff] %v12930
    %13115 = vst [vmem:[#allocation29 + $0x28] sm:$0xff] %v12932
    %13116 = vst [vmem:[#allocation29 + $0x30] sm:$0xff] %v13102
    %13117 = vst [vmem:[#allocation29 + $0x38] sm:$0xff] %v13104
    %13118 = vst [vmem:[#allocation29 + $0x40] sm:$0xff] %v12590
    %13119 = vst [vmem:[#allocation29 + $0x48] sm:$0xff] %v12592
    %13120 = vst [vmem:[#allocation29 + $0x50] sm:$0xff] %v12762
    %13121 = vst [vmem:[#allocation29 + $0x58] sm:$0xff] %v12764
    %13122 = vst [vmem:[#allocation29 + $0x60] sm:$0xff] %v12934
    %13123 = vst [vmem:[#allocation29 + $0x68] sm:$0xff] %v12936
    %13124 = vst [vmem:[#allocation29 + $0x70] sm:$0xff] %v13106
    %13125 = vst [vmem:[#allocation29 + $0x78] sm:$0xff] %v13108
    // Predicated region
    $region138: #{tpu_custom_call.1} parent=1 // pred_check
      _
    $region139: #{tpu_custom_call.1} parent=1 // pred_check_branch
      %13127 = sbr.rel (0) target = $region141
    $region140: #{tpu_custom_call.1} parent=1 // pred_region
      %s13129 = ssub.s32 2048, 2048
      %13130 = vsyncadd [#allocation4], %s13129
      %s13131 = sshll.u32 [#allocation29], 4
      %s13132 = int_to_ptr.vmem [resolvable:$true] %s13131
      %13137 = dma.vmem_to_hbm [thread:$0]  %s13132, 2048, %s17, [#allocation4], 1024, 1024, 64
    $region141: #{tpu_custom_call.1} parent=1 // pred_fallthru
      _
    // Predicated region
    $region142: #{tpu_custom_call.1} parent=1 // pred_check
      _
    $region143: #{tpu_custom_call.1} parent=1 // pred_check_branch
      %13139 = sbr.rel (0) target = $region145
    $region144: #{tpu_custom_call.1} parent=1 // pred_region
      %13140 = dma.done [#allocation4], 2048
    $region145: #{tpu_custom_call.1} parent=1 // pred_fallthru
      _
    %13141 = vsyncpa [#allocation3], 1
    %13142 = vsyncpa [#allocation6], 1
    %13143 = vsyncpa [#allocation9], 1
    %13144 = vsyncpa [#allocation12], 1
    %13145 = vsyncpa [#allocation15], 1
    %13146 = vsyncpa [#allocation18], 1
    %13147 = vsyncpa [#allocation21], 1
    %13148 = vsyncpa [#allocation24], 1
    %13149 = vsyncpa [#allocation27], 1
    %13150 = vsyncpa [#allocation4], 1

</llo_original>
